<compile_context>
chip_gen: v7x
topology: tpu7x:2x2x1
jax: 0.10.0
libtpu: 0.0.40
codegen_flags: <defaults>
</compile_context>

<pallas_src>
import jax
import jax.numpy as jnp
from jax.experimental import pallas as pl
from jax.experimental.pallas import tpu as pltpu


# ---------------------------------------------------------------------------
# The fused kernel (one grid step == one image)
# ---------------------------------------------------------------------------
def _cnn_fused_kernel(x_ref, wt1_ref, b1_ref, s1e_ref, s1o_ref, l1e_ref, l1o_ref,
                      wt2_ref, b2_ref, s2e_ref, s2o_ref, l2e_ref, l2o_ref,
                      fc1w_ref, fc1b_ref, fc2w_ref, fc2b_ref, fc3w_ref, fc3b_ref,
                      o_ref):
    f32 = jnp.float32
    x = x_ref[0]                                            # (96, 32) == (C*H, W)

    # ---- conv1 + bias + relu : rows of a1 are (oc*28 + i), cols are j ----
    a1 = jnp.dot(wt1_ref[0], x[:, 0:28], preferred_element_type=f32)
    for kw in range(1, 5):
        a1 = a1 + jnp.dot(wt1_ref[kw], x[:, kw:kw + 28], preferred_element_type=f32)
    a1 = jnp.maximum(a1 + b1_ref[...], 0.0)                 # (168, 28)

    # ---- 2x2 max pool (stride 2) via even/odd selection matmuls ----
    bw = jnp.maximum(jnp.dot(a1, s1e_ref[...], preferred_element_type=f32),
                     jnp.dot(a1, s1o_ref[...], preferred_element_type=f32))   # (168, 14)
    p1 = jnp.maximum(jnp.dot(l1e_ref[...], bw, preferred_element_type=f32),
                     jnp.dot(l1o_ref[...], bw, preferred_element_type=f32))   # (84, 14) rows ic*14+h

    # ---- conv2 + bias + relu : rows (oc*10 + i) ----
    a2 = jnp.dot(wt2_ref[0], p1[:, 0:10], preferred_element_type=f32)
    for kw in range(1, 5):
        a2 = a2 + jnp.dot(wt2_ref[kw], p1[:, kw:kw + 10], preferred_element_type=f32)
    a2 = jnp.maximum(a2 + b2_ref[...], 0.0)                 # (160, 10)

    # ---- 2x2 max pool ----
    bw2 = jnp.maximum(jnp.dot(a2, s2e_ref[...], preferred_element_type=f32),
                      jnp.dot(a2, s2o_ref[...], preferred_element_type=f32))  # (160, 5)
    p2 = jnp.maximum(jnp.dot(l2e_ref[...], bw2, preferred_element_type=f32),
                     jnp.dot(l2o_ref[...], bw2, preferred_element_type=f32))  # (80, 5) rows c*5+h

    # ---- fc1 (PyTorch (c,h,w) flatten folded into per-column weight blocks) ----
    h = jnp.dot(fc1w_ref[0], p2[:, 0:1], preferred_element_type=f32)
    for col in range(1, 5):
        h = h + jnp.dot(fc1w_ref[col], p2[:, col:col + 1], preferred_element_type=f32)
    h = jnp.maximum(h + fc1b_ref[...], 0.0)                 # (120, 1)

    # ---- fc2 + relu ----
    h = jnp.maximum(jnp.dot(fc2w_ref[...], h, preferred_element_type=f32) + fc2b_ref[...], 0.0)  # (84, 1)

    # ---- fc3 ----
    out = jnp.dot(fc3w_ref[...], h, preferred_element_type=f32) + fc3b_ref[...]                  # (4, 1)
    o_ref[0] = out


# ---------------------------------------------------------------------------
# Host-side weight / selector preparation (tiny tensors, fused under jit)
# ---------------------------------------------------------------------------
def _toeplitz_conv_weight(w, in_h, out_h):
    """w: (OC, IC, KH, KW) -> (KW, OC*out_h, IC*in_h) Toeplitz-over-H weight."""
    oc, ic, kh, kw = w.shape
    dh = jnp.arange(in_h)[None, :] - jnp.arange(out_h)[:, None]        # (out_h, in_h)
    valid = (dh >= 0) & (dh < kh)
    wt = w[:, :, jnp.clip(dh, 0, kh - 1), :]                           # (OC, IC, out_h, in_h, KW)
    wt = wt * valid[None, None, :, :, None].astype(w.dtype)
    return wt.transpose(4, 0, 2, 1, 3).reshape(kw, oc * out_h, ic * in_h)


def _pool_selectors(rows_per_ch, n_ch, width):
    """0/1 selectors for a 2x2 stride-2 max pool on a (n_ch*rows_per_ch, width) slab."""
    wo = width // 2
    col = jnp.arange(width)[:, None]
    s_e = (col == 2 * jnp.arange(wo)[None, :]).astype(jnp.float32)          # (width, wo)
    s_o = (col == 2 * jnp.arange(wo)[None, :] + 1).astype(jnp.float32)
    ho = rows_per_ch // 2
    r = jnp.arange(n_ch * ho)
    tgt = (r // ho) * rows_per_ch + 2 * (r % ho)
    c = jnp.arange(n_ch * rows_per_ch)[None, :]
    l_e = (c == tgt[:, None]).astype(jnp.float32)                           # (n_ch*ho, n_ch*rows)
    l_o = (c == tgt[:, None] + 1).astype(jnp.float32)
    return s_e, s_o, l_e, l_o


def _prepare_kernel_operands(params):
    w1, b1 = params["conv1_w"], params["conv1_b"]
    w2, b2 = params["conv2_w"], params["conv2_b"]

    wt1 = _toeplitz_conv_weight(w1, in_h=32, out_h=28)       # (5, 168, 96)
    b1c = jnp.repeat(b1, 28)[:, None]                        # (168, 1)
    s1e, s1o, l1e, l1o = _pool_selectors(28, 6, 28)          # (28,14) x2, (84,168) x2

    wt2 = _toeplitz_conv_weight(w2, in_h=14, out_h=10)       # (5, 160, 84)
    b2c = jnp.repeat(b2, 10)[:, None]                        # (160, 1)
    s2e, s2o, l2e, l2o = _pool_selectors(10, 16, 10)         # (10,5) x2, (80,160) x2

    # fold the (C=16,H=5,W=5) flatten (index c*25+h*5+w) into fc1's layout
    fc1w = params["fc1_w"].reshape(16, 5, 5, 120).transpose(2, 3, 0, 1).reshape(5, 120, 80)
    fc1b = params["fc1_b"][:, None]                          # (120, 1)
    fc2w = params["fc2_w"].T                                 # (84, 120)
    fc2b = params["fc2_b"][:, None]                          # (84, 1)
    fc3w = params["fc3_w"].T                                 # (4, 84)
    fc3b = params["fc3_b"][:, None]                          # (4, 1)

    return (wt1, b1c, s1e, s1o, l1e, l1o,
            wt2, b2c, s2e, s2o, l2e, l2o,
            fc1w, fc1b, fc2w, fc2b, fc3w, fc3b)


def _full_block_spec(shape):
    zeros = (0,) * len(shape)
    return pl.BlockSpec(shape, lambda n, _z=zeros: _z)


@jax.jit
def cnn_forward_pallas(params, x):
    n, c, hh, ww = x.shape
    assert (c, hh, ww) == (3, 32, 32), x.shape
    operands = _prepare_kernel_operands(params)
    x2d = x.reshape(n, c * hh, ww)                           # (N, 96, 32)

    in_specs = [pl.BlockSpec((1, c * hh, ww), lambda i: (i, 0, 0))]
    in_specs += [_full_block_spec(op.shape) for op in operands]

    out = pl.pallas_call(
        _cnn_fused_kernel,
        out_shape=jax.ShapeDtypeStruct((n, 4, 1), jnp.float32),
        grid=(n,),
        in_specs=in_specs,
        out_specs=pl.BlockSpec((1, 4, 1), lambda i: (i, 0, 0)),
        compiler_params=pltpu.CompilerParams(
            dimension_semantics=("parallel",)),
    )(x2d, *operands)
    return out.reshape(n, 4)


# ---------------------------------------------------------------------------
# Parameter init (deterministic, PyTorch-like uniform(-1/sqrt(fan_in), +))
# ---------------------------------------------------------------------------
def _init_conv(key, oc, ic, kh, kw):
    k1, k2 = jax.random.split(key)
    bound = 1.0 / jnp.sqrt(ic * kh * kw)
    w = jax.random.uniform(k1, (oc, ic, kh, kw), jnp.float32, -bound, bound)
    b = jax.random.uniform(k2, (oc,), jnp.float32, -bound, bound)
    return w, b


def _init_linear(key, in_f, out_f):
    k1, k2 = jax.random.split(key)
    bound = 1.0 / jnp.sqrt(in_f)
    w = jax.random.uniform(k1, (in_f, out_f), jnp.float32, -bound, bound)
    b = jax.random.uniform(k2, (out_f,), jnp.float32, -bound, bound)
    return w, b


def init_params(key):
    ks = jax.random.split(key, 5)
    p = {}
    p["conv1_w"], p["conv1_b"] = _init_conv(ks[0], 6, 3, 5, 5)
    p["conv2_w"], p["conv2_b"] = _init_conv(ks[1], 16, 6, 5, 5)
    p["fc1_w"], p["fc1_b"] = _init_linear(ks[2], 16 * 5 * 5, 120)
    p["fc2_w"], p["fc2_b"] = _init_linear(ks[3], 120, 84)
    p["fc3_w"], p["fc3_b"] = _init_linear(ks[4], 84, 4)
    return p


# ---------------------------------------------------------------------------
# Pure-JAX reference for checking
# ---------------------------------------------------------------------------
def cnn_forward_ref(params, x):
    def conv(x, w, b):
        y = jax.lax.conv_general_dilated(
            x, w, window_strides=(1, 1), padding="VALID",
            dimension_numbers=("NCHW", "OIHW", "NCHW"))
        return jnp.maximum(y + b[None, :, None, None], 0.0)

    def pool(x):
        n, c, h, w = x.shape
        return jnp.max(x.reshape(n, c, h // 2, 2, w // 2, 2), axis=(3, 5))

    x = pool(conv(x, params["conv1_w"], params["conv1_b"]))
    x = pool(conv(x, params["conv2_w"], params["conv2_b"]))
    x = x.reshape(-1, 16 * 5 * 5)
    x = jnp.maximum(x @ params["fc1_w"] + params["fc1_b"], 0.0)
    x = jnp.maximum(x @ params["fc2_w"] + params["fc2_b"], 0.0)
    x = x @ params["fc3_w"] + params["fc3_b"]
    return x


if __name__ == "__main__":
    key = jax.random.PRNGKey(0)
    k_x, k_p = jax.random.split(key)
    # LeNet geometry implies 32x32 spatial input (so the 16*5*5 flatten matches).
    x = jax.random.normal(k_x, (2, 3, 32, 32), jnp.float32)
    params = init_params(k_p)

    out = cnn_forward_pallas(params, x)
    out = jax.block_until_ready(out)

    ref = cnn_forward_ref(params, x)
    assert out.shape == (2, 4), out.shape
    assert jnp.allclose(out, ref, atol=1e-3, rtol=1e-3), (out, ref)

    print("KERNEL_OK")
</pallas_src>

<mosaic_0001>
module attributes {stable_mosaic.version = 11 : i64} {
  func.func @_cnn_fused_kernel(%arg0: i32, %arg1: memref<1x96x32xf32, #tpu.memory_space<vmem>>, %arg2: memref<5x168x96xf32, #tpu.memory_space<vmem>>, %arg3: memref<168x1xf32, #tpu.memory_space<vmem>>, %arg4: memref<28x14xf32, #tpu.memory_space<vmem>>, %arg5: memref<28x14xf32, #tpu.memory_space<vmem>>, %arg6: memref<84x168xf32, #tpu.memory_space<vmem>>, %arg7: memref<84x168xf32, #tpu.memory_space<vmem>>, %arg8: memref<5x160x84xf32, #tpu.memory_space<vmem>>, %arg9: memref<160x1xf32, #tpu.memory_space<vmem>>, %arg10: memref<10x5xf32, #tpu.memory_space<vmem>>, %arg11: memref<10x5xf32, #tpu.memory_space<vmem>>, %arg12: memref<80x160xf32, #tpu.memory_space<vmem>>, %arg13: memref<80x160xf32, #tpu.memory_space<vmem>>, %arg14: memref<5x120x80xf32, #tpu.memory_space<vmem>>, %arg15: memref<120x1xf32, #tpu.memory_space<vmem>>, %arg16: memref<84x120xf32, #tpu.memory_space<vmem>>, %arg17: memref<84x1xf32, #tpu.memory_space<vmem>>, %arg18: memref<4x84xf32, #tpu.memory_space<vmem>>, %arg19: memref<4x1xf32, #tpu.memory_space<vmem>>, %arg20: memref<1x4x1xf32, #tpu.memory_space<vmem>>) attributes {dimension_semantics = [#tpu.dimension_semantics<parallel>], iteration_bounds = array<i64: 2>, scalar_prefetch = 0 : i64, scratch_operands = 0 : i64, tpu.core_type = #tpu.core_type<tc>, window_params = [{transform_indices = @transform_0, window_bounds = array<i64: 1, 96, 32>}, {pipeline_mode = #tpu.pipeline_mode<synchronous>, transform_indices = @transform_1, window_bounds = array<i64: 5, 168, 96>}, {pipeline_mode = #tpu.pipeline_mode<synchronous>, transform_indices = @transform_2, window_bounds = array<i64: 168, 1>}, {pipeline_mode = #tpu.pipeline_mode<synchronous>, transform_indices = @transform_3, window_bounds = array<i64: 28, 14>}, {pipeline_mode = #tpu.pipeline_mode<synchronous>, transform_indices = @transform_4, window_bounds = array<i64: 28, 14>}, {pipeline_mode = #tpu.pipeline_mode<synchronous>, transform_indices = @transform_5, window_bounds = array<i64: 84, 168>}, {pipeline_mode = #tpu.pipeline_mode<synchronous>, transform_indices = @transform_6, window_bounds = array<i64: 84, 168>}, {pipeline_mode = #tpu.pipeline_mode<synchronous>, transform_indices = @transform_7, window_bounds = array<i64: 5, 160, 84>}, {pipeline_mode = #tpu.pipeline_mode<synchronous>, transform_indices = @transform_8, window_bounds = array<i64: 160, 1>}, {pipeline_mode = #tpu.pipeline_mode<synchronous>, transform_indices = @transform_9, window_bounds = array<i64: 10, 5>}, {pipeline_mode = #tpu.pipeline_mode<synchronous>, transform_indices = @transform_10, window_bounds = array<i64: 10, 5>}, {pipeline_mode = #tpu.pipeline_mode<synchronous>, transform_indices = @transform_11, window_bounds = array<i64: 80, 160>}, {pipeline_mode = #tpu.pipeline_mode<synchronous>, transform_indices = @transform_12, window_bounds = array<i64: 80, 160>}, {pipeline_mode = #tpu.pipeline_mode<synchronous>, transform_indices = @transform_13, window_bounds = array<i64: 5, 120, 80>}, {pipeline_mode = #tpu.pipeline_mode<synchronous>, transform_indices = @transform_14, window_bounds = array<i64: 120, 1>}, {pipeline_mode = #tpu.pipeline_mode<synchronous>, transform_indices = @transform_15, window_bounds = array<i64: 84, 120>}, {pipeline_mode = #tpu.pipeline_mode<synchronous>, transform_indices = @transform_16, window_bounds = array<i64: 84, 1>}, {pipeline_mode = #tpu.pipeline_mode<synchronous>, transform_indices = @transform_17, window_bounds = array<i64: 4, 84>}, {pipeline_mode = #tpu.pipeline_mode<synchronous>, transform_indices = @transform_18, window_bounds = array<i64: 4, 1>}, {transform_indices = @transform_19, window_bounds = array<i64: 1, 4, 1>}]} {
    %c0 = arith.constant 0 : index
    %c0_0 = arith.constant 0 : index
    %c0_1 = arith.constant 0 : index
    %0 = vector.load %arg1[%c0, %c0_0, %c0_1] : memref<1x96x32xf32, #tpu.memory_space<vmem>>, vector<1x96x32xf32>
    %1 = vector.shape_cast %0 : vector<1x96x32xf32> to vector<96x32xf32>
    %c0_2 = arith.constant 0 : index
    %c0_3 = arith.constant 0 : index
    %c0_4 = arith.constant 0 : index
    %2 = vector.load %arg2[%c0_2, %c0_3, %c0_4] : memref<5x168x96xf32, #tpu.memory_space<vmem>>, vector<1x168x96xf32>
    %3 = vector.shape_cast %2 : vector<1x168x96xf32> to vector<168x96xf32>
    %4 = vector.extract_strided_slice %1 {offsets = [0, 0], sizes = [96, 28], strides = [1, 1]} : vector<96x32xf32> to vector<96x28xf32>
    %cst = arith.constant dense<0.000000e+00> : vector<168x28xf32>
    %5 = tpu.matmul %3, %4, %cst {dimension_numbers = #tpu.dot_dimension_numbers<[1], [0], [0], [1], [0, 0, 1, 1], [], []>} : vector<168x96xf32>, vector<96x28xf32>, vector<168x28xf32> -> vector<168x28xf32>
    %c1 = arith.constant 1 : index
    %c0_5 = arith.constant 0 : index
    %c0_6 = arith.constant 0 : index
    %6 = vector.load %arg2[%c1, %c0_5, %c0_6] : memref<5x168x96xf32, #tpu.memory_space<vmem>>, vector<1x168x96xf32>
    %7 = vector.shape_cast %6 : vector<1x168x96xf32> to vector<168x96xf32>
    %8 = vector.extract_strided_slice %1 {offsets = [0, 1], sizes = [96, 28], strides = [1, 1]} : vector<96x32xf32> to vector<96x28xf32>
    %cst_7 = arith.constant dense<0.000000e+00> : vector<168x28xf32>
    %9 = tpu.matmul %7, %8, %cst_7 {dimension_numbers = #tpu.dot_dimension_numbers<[1], [0], [0], [1], [0, 0, 1, 1], [], []>} : vector<168x96xf32>, vector<96x28xf32>, vector<168x28xf32> -> vector<168x28xf32>
    %10 = arith.addf %5, %9 : vector<168x28xf32>
    %c2 = arith.constant 2 : index
    %c0_8 = arith.constant 0 : index
    %c0_9 = arith.constant 0 : index
    %11 = vector.load %arg2[%c2, %c0_8, %c0_9] : memref<5x168x96xf32, #tpu.memory_space<vmem>>, vector<1x168x96xf32>
    %12 = vector.shape_cast %11 : vector<1x168x96xf32> to vector<168x96xf32>
    %13 = vector.extract_strided_slice %1 {offsets = [0, 2], sizes = [96, 28], strides = [1, 1]} : vector<96x32xf32> to vector<96x28xf32>
    %cst_10 = arith.constant dense<0.000000e+00> : vector<168x28xf32>
    %14 = tpu.matmul %12, %13, %cst_10 {dimension_numbers = #tpu.dot_dimension_numbers<[1], [0], [0], [1], [0, 0, 1, 1], [], []>} : vector<168x96xf32>, vector<96x28xf32>, vector<168x28xf32> -> vector<168x28xf32>
    %15 = arith.addf %10, %14 : vector<168x28xf32>
    %c3 = arith.constant 3 : index
    %c0_11 = arith.constant 0 : index
    %c0_12 = arith.constant 0 : index
    %16 = vector.load %arg2[%c3, %c0_11, %c0_12] : memref<5x168x96xf32, #tpu.memory_space<vmem>>, vector<1x168x96xf32>
    %17 = vector.shape_cast %16 : vector<1x168x96xf32> to vector<168x96xf32>
    %18 = vector.extract_strided_slice %1 {offsets = [0, 3], sizes = [96, 28], strides = [1, 1]} : vector<96x32xf32> to vector<96x28xf32>
    %cst_13 = arith.constant dense<0.000000e+00> : vector<168x28xf32>
    %19 = tpu.matmul %17, %18, %cst_13 {dimension_numbers = #tpu.dot_dimension_numbers<[1], [0], [0], [1], [0, 0, 1, 1], [], []>} : vector<168x96xf32>, vector<96x28xf32>, vector<168x28xf32> -> vector<168x28xf32>
    %20 = arith.addf %15, %19 : vector<168x28xf32>
    %c4 = arith.constant 4 : index
    %c0_14 = arith.constant 0 : index
    %c0_15 = arith.constant 0 : index
    %21 = vector.load %arg2[%c4, %c0_14, %c0_15] : memref<5x168x96xf32, #tpu.memory_space<vmem>>, vector<1x168x96xf32>
    %22 = vector.shape_cast %21 : vector<1x168x96xf32> to vector<168x96xf32>
    %23 = vector.extract_strided_slice %1 {offsets = [0, 4], sizes = [96, 28], strides = [1, 1]} : vector<96x32xf32> to vector<96x28xf32>
    %cst_16 = arith.constant dense<0.000000e+00> : vector<168x28xf32>
    %24 = tpu.matmul %22, %23, %cst_16 {dimension_numbers = #tpu.dot_dimension_numbers<[1], [0], [0], [1], [0, 0, 1, 1], [], []>} : vector<168x96xf32>, vector<96x28xf32>, vector<168x28xf32> -> vector<168x28xf32>
    %25 = arith.addf %20, %24 : vector<168x28xf32>
    %c0_17 = arith.constant 0 : index
    %c0_18 = arith.constant 0 : index
    %26 = vector.load %arg3[%c0_17, %c0_18] : memref<168x1xf32, #tpu.memory_space<vmem>>, vector<168x1xf32>
    %27 = vector.broadcast %26 : vector<168x1xf32> to vector<168x28xf32>
    %28 = arith.addf %25, %27 : vector<168x28xf32>
    %cst_19 = arith.constant 0.000000e+00 : f32
    %29 = vector.broadcast %cst_19 : f32 to vector<168x28xf32>
    %30 = arith.maximumf %28, %29 : vector<168x28xf32>
    %c0_20 = arith.constant 0 : index
    %c0_21 = arith.constant 0 : index
    %31 = vector.load %arg4[%c0_20, %c0_21] : memref<28x14xf32, #tpu.memory_space<vmem>>, vector<28x14xf32>
    %cst_22 = arith.constant dense<0.000000e+00> : vector<168x14xf32>
    %32 = tpu.matmul %30, %31, %cst_22 {dimension_numbers = #tpu.dot_dimension_numbers<[1], [0], [0], [1], [0, 0, 1, 1], [], []>} : vector<168x28xf32>, vector<28x14xf32>, vector<168x14xf32> -> vector<168x14xf32>
    %c0_23 = arith.constant 0 : index
    %c0_24 = arith.constant 0 : index
    %33 = vector.load %arg5[%c0_23, %c0_24] : memref<28x14xf32, #tpu.memory_space<vmem>>, vector<28x14xf32>
    %cst_25 = arith.constant dense<0.000000e+00> : vector<168x14xf32>
    %34 = tpu.matmul %30, %33, %cst_25 {dimension_numbers = #tpu.dot_dimension_numbers<[1], [0], [0], [1], [0, 0, 1, 1], [], []>} : vector<168x28xf32>, vector<28x14xf32>, vector<168x14xf32> -> vector<168x14xf32>
    %35 = arith.maximumf %32, %34 : vector<168x14xf32>
    %c0_26 = arith.constant 0 : index
    %c0_27 = arith.constant 0 : index
    %36 = vector.load %arg6[%c0_26, %c0_27] : memref<84x168xf32, #tpu.memory_space<vmem>>, vector<84x168xf32>
    %cst_28 = arith.constant dense<0.000000e+00> : vector<84x14xf32>
    %37 = tpu.matmul %36, %35, %cst_28 {dimension_numbers = #tpu.dot_dimension_numbers<[1], [0], [0], [1], [0, 0, 1, 1], [], []>} : vector<84x168xf32>, vector<168x14xf32>, vector<84x14xf32> -> vector<84x14xf32>
    %c0_29 = arith.constant 0 : index
    %c0_30 = arith.constant 0 : index
    %38 = vector.load %arg7[%c0_29, %c0_30] : memref<84x168xf32, #tpu.memory_space<vmem>>, vector<84x168xf32>
    %cst_31 = arith.constant dense<0.000000e+00> : vector<84x14xf32>
    %39 = tpu.matmul %38, %35, %cst_31 {dimension_numbers = #tpu.dot_dimension_numbers<[1], [0], [0], [1], [0, 0, 1, 1], [], []>} : vector<84x168xf32>, vector<168x14xf32>, vector<84x14xf32> -> vector<84x14xf32>
    %40 = arith.maximumf %37, %39 : vector<84x14xf32>
    %c0_32 = arith.constant 0 : index
    %c0_33 = arith.constant 0 : index
    %c0_34 = arith.constant 0 : index
    %41 = vector.load %arg8[%c0_32, %c0_33, %c0_34] : memref<5x160x84xf32, #tpu.memory_space<vmem>>, vector<1x160x84xf32>
    %42 = vector.shape_cast %41 : vector<1x160x84xf32> to vector<160x84xf32>
    %43 = vector.extract_strided_slice %40 {offsets = [0, 0], sizes = [84, 10], strides = [1, 1]} : vector<84x14xf32> to vector<84x10xf32>
    %cst_35 = arith.constant dense<0.000000e+00> : vector<160x10xf32>
    %44 = tpu.matmul %42, %43, %cst_35 {dimension_numbers = #tpu.dot_dimension_numbers<[1], [0], [0], [1], [0, 0, 1, 1], [], []>} : vector<160x84xf32>, vector<84x10xf32>, vector<160x10xf32> -> vector<160x10xf32>
    %c1_36 = arith.constant 1 : index
    %c0_37 = arith.constant 0 : index
    %c0_38 = arith.constant 0 : index
    %45 = vector.load %arg8[%c1_36, %c0_37, %c0_38] : memref<5x160x84xf32, #tpu.memory_space<vmem>>, vector<1x160x84xf32>
    %46 = vector.shape_cast %45 : vector<1x160x84xf32> to vector<160x84xf32>
    %47 = vector.extract_strided_slice %40 {offsets = [0, 1], sizes = [84, 10], strides = [1, 1]} : vector<84x14xf32> to vector<84x10xf32>
    %cst_39 = arith.constant dense<0.000000e+00> : vector<160x10xf32>
    %48 = tpu.matmul %46, %47, %cst_39 {dimension_numbers = #tpu.dot_dimension_numbers<[1], [0], [0], [1], [0, 0, 1, 1], [], []>} : vector<160x84xf32>, vector<84x10xf32>, vector<160x10xf32> -> vector<160x10xf32>
    %49 = arith.addf %44, %48 : vector<160x10xf32>
    %c2_40 = arith.constant 2 : index
    %c0_41 = arith.constant 0 : index
    %c0_42 = arith.constant 0 : index
    %50 = vector.load %arg8[%c2_40, %c0_41, %c0_42] : memref<5x160x84xf32, #tpu.memory_space<vmem>>, vector<1x160x84xf32>
    %51 = vector.shape_cast %50 : vector<1x160x84xf32> to vector<160x84xf32>
    %52 = vector.extract_strided_slice %40 {offsets = [0, 2], sizes = [84, 10], strides = [1, 1]} : vector<84x14xf32> to vector<84x10xf32>
    %cst_43 = arith.constant dense<0.000000e+00> : vector<160x10xf32>
    %53 = tpu.matmul %51, %52, %cst_43 {dimension_numbers = #tpu.dot_dimension_numbers<[1], [0], [0], [1], [0, 0, 1, 1], [], []>} : vector<160x84xf32>, vector<84x10xf32>, vector<160x10xf32> -> vector<160x10xf32>
    %54 = arith.addf %49, %53 : vector<160x10xf32>
    %c3_44 = arith.constant 3 : index
    %c0_45 = arith.constant 0 : index
    %c0_46 = arith.constant 0 : index
    %55 = vector.load %arg8[%c3_44, %c0_45, %c0_46] : memref<5x160x84xf32, #tpu.memory_space<vmem>>, vector<1x160x84xf32>
    %56 = vector.shape_cast %55 : vector<1x160x84xf32> to vector<160x84xf32>
    %57 = vector.extract_strided_slice %40 {offsets = [0, 3], sizes = [84, 10], strides = [1, 1]} : vector<84x14xf32> to vector<84x10xf32>
    %cst_47 = arith.constant dense<0.000000e+00> : vector<160x10xf32>
    %58 = tpu.matmul %56, %57, %cst_47 {dimension_numbers = #tpu.dot_dimension_numbers<[1], [0], [0], [1], [0, 0, 1, 1], [], []>} : vector<160x84xf32>, vector<84x10xf32>, vector<160x10xf32> -> vector<160x10xf32>
    %59 = arith.addf %54, %58 : vector<160x10xf32>
    %c4_48 = arith.constant 4 : index
    %c0_49 = arith.constant 0 : index
    %c0_50 = arith.constant 0 : index
    %60 = vector.load %arg8[%c4_48, %c0_49, %c0_50] : memref<5x160x84xf32, #tpu.memory_space<vmem>>, vector<1x160x84xf32>
    %61 = vector.shape_cast %60 : vector<1x160x84xf32> to vector<160x84xf32>
    %62 = vector.extract_strided_slice %40 {offsets = [0, 4], sizes = [84, 10], strides = [1, 1]} : vector<84x14xf32> to vector<84x10xf32>
    %cst_51 = arith.constant dense<0.000000e+00> : vector<160x10xf32>
    %63 = tpu.matmul %61, %62, %cst_51 {dimension_numbers = #tpu.dot_dimension_numbers<[1], [0], [0], [1], [0, 0, 1, 1], [], []>} : vector<160x84xf32>, vector<84x10xf32>, vector<160x10xf32> -> vector<160x10xf32>
    %64 = arith.addf %59, %63 : vector<160x10xf32>
    %c0_52 = arith.constant 0 : index
    %c0_53 = arith.constant 0 : index
    %65 = vector.load %arg9[%c0_52, %c0_53] : memref<160x1xf32, #tpu.memory_space<vmem>>, vector<160x1xf32>
    %66 = vector.broadcast %65 : vector<160x1xf32> to vector<160x10xf32>
    %67 = arith.addf %64, %66 : vector<160x10xf32>
    %cst_54 = arith.constant 0.000000e+00 : f32
    %68 = vector.broadcast %cst_54 : f32 to vector<160x10xf32>
    %69 = arith.maximumf %67, %68 : vector<160x10xf32>
    %c0_55 = arith.constant 0 : index
    %c0_56 = arith.constant 0 : index
    %70 = vector.load %arg10[%c0_55, %c0_56] : memref<10x5xf32, #tpu.memory_space<vmem>>, vector<10x5xf32>
    %cst_57 = arith.constant dense<0.000000e+00> : vector<160x5xf32>
    %71 = tpu.matmul %69, %70, %cst_57 {dimension_numbers = #tpu.dot_dimension_numbers<[1], [0], [0], [1], [0, 0, 1, 1], [], []>} : vector<160x10xf32>, vector<10x5xf32>, vector<160x5xf32> -> vector<160x5xf32>
    %c0_58 = arith.constant 0 : index
    %c0_59 = arith.constant 0 : index
    %72 = vector.load %arg11[%c0_58, %c0_59] : memref<10x5xf32, #tpu.memory_space<vmem>>, vector<10x5xf32>
    %cst_60 = arith.constant dense<0.000000e+00> : vector<160x5xf32>
    %73 = tpu.matmul %69, %72, %cst_60 {dimension_numbers = #tpu.dot_dimension_numbers<[1], [0], [0], [1], [0, 0, 1, 1], [], []>} : vector<160x10xf32>, vector<10x5xf32>, vector<160x5xf32> -> vector<160x5xf32>
    %74 = arith.maximumf %71, %73 : vector<160x5xf32>
    %c0_61 = arith.constant 0 : index
    %c0_62 = arith.constant 0 : index
    %75 = vector.load %arg12[%c0_61, %c0_62] : memref<80x160xf32, #tpu.memory_space<vmem>>, vector<80x160xf32>
    %cst_63 = arith.constant dense<0.000000e+00> : vector<80x5xf32>
    %76 = tpu.matmul %75, %74, %cst_63 {dimension_numbers = #tpu.dot_dimension_numbers<[1], [0], [0], [1], [0, 0, 1, 1], [], []>} : vector<80x160xf32>, vector<160x5xf32>, vector<80x5xf32> -> vector<80x5xf32>
    %c0_64 = arith.constant 0 : index
    %c0_65 = arith.constant 0 : index
    %77 = vector.load %arg13[%c0_64, %c0_65] : memref<80x160xf32, #tpu.memory_space<vmem>>, vector<80x160xf32>
    %cst_66 = arith.constant dense<0.000000e+00> : vector<80x5xf32>
    %78 = tpu.matmul %77, %74, %cst_66 {dimension_numbers = #tpu.dot_dimension_numbers<[1], [0], [0], [1], [0, 0, 1, 1], [], []>} : vector<80x160xf32>, vector<160x5xf32>, vector<80x5xf32> -> vector<80x5xf32>
    %79 = arith.maximumf %76, %78 : vector<80x5xf32>
    %c0_67 = arith.constant 0 : index
    %c0_68 = arith.constant 0 : index
    %c0_69 = arith.constant 0 : index
    %80 = vector.load %arg14[%c0_67, %c0_68, %c0_69] : memref<5x120x80xf32, #tpu.memory_space<vmem>>, vector<1x120x80xf32>
    %81 = vector.shape_cast %80 : vector<1x120x80xf32> to vector<120x80xf32>
    %82 = vector.extract_strided_slice %79 {offsets = [0, 0], sizes = [80, 1], strides = [1, 1]} : vector<80x5xf32> to vector<80x1xf32>
    %cst_70 = arith.constant dense<0.000000e+00> : vector<120x1xf32>
    %83 = tpu.matmul %81, %82, %cst_70 {dimension_numbers = #tpu.dot_dimension_numbers<[1], [0], [0], [1], [0, 0, 1, 1], [], []>} : vector<120x80xf32>, vector<80x1xf32>, vector<120x1xf32> -> vector<120x1xf32>
    %c1_71 = arith.constant 1 : index
    %c0_72 = arith.constant 0 : index
    %c0_73 = arith.constant 0 : index
    %84 = vector.load %arg14[%c1_71, %c0_72, %c0_73] : memref<5x120x80xf32, #tpu.memory_space<vmem>>, vector<1x120x80xf32>
    %85 = vector.shape_cast %84 : vector<1x120x80xf32> to vector<120x80xf32>
    %86 = vector.extract_strided_slice %79 {offsets = [0, 1], sizes = [80, 1], strides = [1, 1]} : vector<80x5xf32> to vector<80x1xf32>
    %cst_74 = arith.constant dense<0.000000e+00> : vector<120x1xf32>
    %87 = tpu.matmul %85, %86, %cst_74 {dimension_numbers = #tpu.dot_dimension_numbers<[1], [0], [0], [1], [0, 0, 1, 1], [], []>} : vector<120x80xf32>, vector<80x1xf32>, vector<120x1xf32> -> vector<120x1xf32>
    %88 = arith.addf %83, %87 : vector<120x1xf32>
    %c2_75 = arith.constant 2 : index
    %c0_76 = arith.constant 0 : index
    %c0_77 = arith.constant 0 : index
    %89 = vector.load %arg14[%c2_75, %c0_76, %c0_77] : memref<5x120x80xf32, #tpu.memory_space<vmem>>, vector<1x120x80xf32>
    %90 = vector.shape_cast %89 : vector<1x120x80xf32> to vector<120x80xf32>
    %91 = vector.extract_strided_slice %79 {offsets = [0, 2], sizes = [80, 1], strides = [1, 1]} : vector<80x5xf32> to vector<80x1xf32>
    %cst_78 = arith.constant dense<0.000000e+00> : vector<120x1xf32>
    %92 = tpu.matmul %90, %91, %cst_78 {dimension_numbers = #tpu.dot_dimension_numbers<[1], [0], [0], [1], [0, 0, 1, 1], [], []>} : vector<120x80xf32>, vector<80x1xf32>, vector<120x1xf32> -> vector<120x1xf32>
    %93 = arith.addf %88, %92 : vector<120x1xf32>
    %c3_79 = arith.constant 3 : index
    %c0_80 = arith.constant 0 : index
    %c0_81 = arith.constant 0 : index
    %94 = vector.load %arg14[%c3_79, %c0_80, %c0_81] : memref<5x120x80xf32, #tpu.memory_space<vmem>>, vector<1x120x80xf32>
    %95 = vector.shape_cast %94 : vector<1x120x80xf32> to vector<120x80xf32>
    %96 = vector.extract_strided_slice %79 {offsets = [0, 3], sizes = [80, 1], strides = [1, 1]} : vector<80x5xf32> to vector<80x1xf32>
    %cst_82 = arith.constant dense<0.000000e+00> : vector<120x1xf32>
    %97 = tpu.matmul %95, %96, %cst_82 {dimension_numbers = #tpu.dot_dimension_numbers<[1], [0], [0], [1], [0, 0, 1, 1], [], []>} : vector<120x80xf32>, vector<80x1xf32>, vector<120x1xf32> -> vector<120x1xf32>
    %98 = arith.addf %93, %97 : vector<120x1xf32>
    %c4_83 = arith.constant 4 : index
    %c0_84 = arith.constant 0 : index
    %c0_85 = arith.constant 0 : index
    %99 = vector.load %arg14[%c4_83, %c0_84, %c0_85] : memref<5x120x80xf32, #tpu.memory_space<vmem>>, vector<1x120x80xf32>
    %100 = vector.shape_cast %99 : vector<1x120x80xf32> to vector<120x80xf32>
    %101 = vector.extract_strided_slice %79 {offsets = [0, 4], sizes = [80, 1], strides = [1, 1]} : vector<80x5xf32> to vector<80x1xf32>
    %cst_86 = arith.constant dense<0.000000e+00> : vector<120x1xf32>
    %102 = tpu.matmul %100, %101, %cst_86 {dimension_numbers = #tpu.dot_dimension_numbers<[1], [0], [0], [1], [0, 0, 1, 1], [], []>} : vector<120x80xf32>, vector<80x1xf32>, vector<120x1xf32> -> vector<120x1xf32>
    %103 = arith.addf %98, %102 : vector<120x1xf32>
    %c0_87 = arith.constant 0 : index
    %c0_88 = arith.constant 0 : index
    %104 = vector.load %arg15[%c0_87, %c0_88] : memref<120x1xf32, #tpu.memory_space<vmem>>, vector<120x1xf32>
    %105 = arith.addf %103, %104 : vector<120x1xf32>
    %cst_89 = arith.constant 0.000000e+00 : f32
    %106 = vector.broadcast %cst_89 : f32 to vector<120x1xf32>
    %107 = arith.maximumf %105, %106 : vector<120x1xf32>
    %c0_90 = arith.constant 0 : index
    %c0_91 = arith.constant 0 : index
    %108 = vector.load %arg16[%c0_90, %c0_91] : memref<84x120xf32, #tpu.memory_space<vmem>>, vector<84x120xf32>
    %cst_92 = arith.constant dense<0.000000e+00> : vector<84x1xf32>
    %109 = tpu.matmul %108, %107, %cst_92 {dimension_numbers = #tpu.dot_dimension_numbers<[1], [0], [0], [1], [0, 0, 1, 1], [], []>} : vector<84x120xf32>, vector<120x1xf32>, vector<84x1xf32> -> vector<84x1xf32>
    %c0_93 = arith.constant 0 : index
    %c0_94 = arith.constant 0 : index
    %110 = vector.load %arg17[%c0_93, %c0_94] : memref<84x1xf32, #tpu.memory_space<vmem>>, vector<84x1xf32>
    %111 = arith.addf %109, %110 : vector<84x1xf32>
    %cst_95 = arith.constant 0.000000e+00 : f32
    %112 = vector.broadcast %cst_95 : f32 to vector<84x1xf32>
    %113 = arith.maximumf %111, %112 : vector<84x1xf32>
    %c0_96 = arith.constant 0 : index
    %c0_97 = arith.constant 0 : index
    %114 = vector.load %arg18[%c0_96, %c0_97] : memref<4x84xf32, #tpu.memory_space<vmem>>, vector<4x84xf32>
    %cst_98 = arith.constant dense<0.000000e+00> : vector<4x1xf32>
    %115 = tpu.matmul %114, %113, %cst_98 {dimension_numbers = #tpu.dot_dimension_numbers<[1], [0], [0], [1], [0, 0, 1, 1], [], []>} : vector<4x84xf32>, vector<84x1xf32>, vector<4x1xf32> -> vector<4x1xf32>
    %c0_99 = arith.constant 0 : index
    %c0_100 = arith.constant 0 : index
    %116 = vector.load %arg19[%c0_99, %c0_100] : memref<4x1xf32, #tpu.memory_space<vmem>>, vector<4x1xf32>
    %117 = arith.addf %115, %116 : vector<4x1xf32>
    %c0_101 = arith.constant 0 : index
    %c0_102 = arith.constant 0 : index
    %c0_103 = arith.constant 0 : index
    %118 = vector.load %arg20[%c0_101, %c0_102, %c0_103] : memref<1x4x1xf32, #tpu.memory_space<vmem>>, vector<1x4x1xf32>
    %119 = vector.shape_cast %118 : vector<1x4x1xf32> to vector<4x1xf32>
    %120 = vector.shape_cast %117 : vector<4x1xf32> to vector<1x4x1xf32>
    tpu.vector_store %arg20[%c0_101, %c0_102, %c0_103], %120 {strides = array<i32>} : memref<1x4x1xf32, #tpu.memory_space<vmem>>, vector<1x4x1xf32>,
    return
  }
  func.func @transform_0(%arg0: i32) -> (i32, i32, i32) {
    %c0_i32 = arith.constant 0 : i32
    %c0_i32_0 = arith.constant 0 : i32
    %c0_i32_1 = arith.constant 0 : i32
    return %arg0, %c0_i32, %c0_i32_0 : i32, i32, i32
  }
  func.func @transform_1(%arg0: i32) -> (i32, i32, i32) {
    %c0_i32 = arith.constant 0 : i32
    %c0_i32_0 = arith.constant 0 : i32
    %c0_i32_1 = arith.constant 0 : i32
    %c0_i32_2 = arith.constant 0 : i32
    return %c0_i32, %c0_i32_0, %c0_i32_1 : i32, i32, i32
  }
  func.func @transform_2(%arg0: i32) -> (i32, i32) {
    %c0_i32 = arith.constant 0 : i32
    %c0_i32_0 = arith.constant 0 : i32
    %c0_i32_1 = arith.constant 0 : i32
    return %c0_i32, %c0_i32_0 : i32, i32
  }
  func.func @transform_3(%arg0: i32) -> (i32, i32) {
    %c0_i32 = arith.constant 0 : i32
    %c0_i32_0 = arith.constant 0 : i32
    %c0_i32_1 = arith.constant 0 : i32
    return %c0_i32, %c0_i32_0 : i32, i32
  }
  func.func @transform_4(%arg0: i32) -> (i32, i32) {
    %c0_i32 = arith.constant 0 : i32
    %c0_i32_0 = arith.constant 0 : i32
    %c0_i32_1 = arith.constant 0 : i32
    return %c0_i32, %c0_i32_0 : i32, i32
  }
  func.func @transform_5(%arg0: i32) -> (i32, i32) {
    %c0_i32 = arith.constant 0 : i32
    %c0_i32_0 = arith.constant 0 : i32
    %c0_i32_1 = arith.constant 0 : i32
    return %c0_i32, %c0_i32_0 : i32, i32
  }
  func.func @transform_6(%arg0: i32) -> (i32, i32) {
    %c0_i32 = arith.constant 0 : i32
    %c0_i32_0 = arith.constant 0 : i32
    %c0_i32_1 = arith.constant 0 : i32
    return %c0_i32, %c0_i32_0 : i32, i32
  }
  func.func @transform_7(%arg0: i32) -> (i32, i32, i32) {
    %c0_i32 = arith.constant 0 : i32
    %c0_i32_0 = arith.constant 0 : i32
    %c0_i32_1 = arith.constant 0 : i32
    %c0_i32_2 = arith.constant 0 : i32
    return %c0_i32, %c0_i32_0, %c0_i32_1 : i32, i32, i32
  }
  func.func @transform_8(%arg0: i32) -> (i32, i32) {
    %c0_i32 = arith.constant 0 : i32
    %c0_i32_0 = arith.constant 0 : i32
    %c0_i32_1 = arith.constant 0 : i32
    return %c0_i32, %c0_i32_0 : i32, i32
  }
  func.func @transform_9(%arg0: i32) -> (i32, i32) {
    %c0_i32 = arith.constant 0 : i32
    %c0_i32_0 = arith.constant 0 : i32
    %c0_i32_1 = arith.constant 0 : i32
    return %c0_i32, %c0_i32_0 : i32, i32
  }
  func.func @transform_10(%arg0: i32) -> (i32, i32) {
    %c0_i32 = arith.constant 0 : i32
    %c0_i32_0 = arith.constant 0 : i32
    %c0_i32_1 = arith.constant 0 : i32
    return %c0_i32, %c0_i32_0 : i32, i32
  }
  func.func @transform_11(%arg0: i32) -> (i32, i32) {
    %c0_i32 = arith.constant 0 : i32
    %c0_i32_0 = arith.constant 0 : i32
    %c0_i32_1 = arith.constant 0 : i32
    return %c0_i32, %c0_i32_0 : i32, i32
  }
  func.func @transform_12(%arg0: i32) -> (i32, i32) {
    %c0_i32 = arith.constant 0 : i32
    %c0_i32_0 = arith.constant 0 : i32
    %c0_i32_1 = arith.constant 0 : i32
    return %c0_i32, %c0_i32_0 : i32, i32
  }
  func.func @transform_13(%arg0: i32) -> (i32, i32, i32) {
    %c0_i32 = arith.constant 0 : i32
    %c0_i32_0 = arith.constant 0 : i32
    %c0_i32_1 = arith.constant 0 : i32
    %c0_i32_2 = arith.constant 0 : i32
    return %c0_i32, %c0_i32_0, %c0_i32_1 : i32, i32, i32
  }
  func.func @transform_14(%arg0: i32) -> (i32, i32) {
    %c0_i32 = arith.constant 0 : i32
    %c0_i32_0 = arith.constant 0 : i32
    %c0_i32_1 = arith.constant 0 : i32
    return %c0_i32, %c0_i32_0 : i32, i32
  }
  func.func @transform_15(%arg0: i32) -> (i32, i32) {
    %c0_i32 = arith.constant 0 : i32
    %c0_i32_0 = arith.constant 0 : i32
    %c0_i32_1 = arith.constant 0 : i32
    return %c0_i32, %c0_i32_0 : i32, i32
  }
  func.func @transform_16(%arg0: i32) -> (i32, i32) {
    %c0_i32 = arith.constant 0 : i32
    %c0_i32_0 = arith.constant 0 : i32
    %c0_i32_1 = arith.constant 0 : i32
    return %c0_i32, %c0_i32_0 : i32, i32
  }
  func.func @transform_17(%arg0: i32) -> (i32, i32) {
    %c0_i32 = arith.constant 0 : i32
    %c0_i32_0 = arith.constant 0 : i32
    %c0_i32_1 = arith.constant 0 : i32
    return %c0_i32, %c0_i32_0 : i32, i32
  }
  func.func @transform_18(%arg0: i32) -> (i32, i32) {
    %c0_i32 = arith.constant 0 : i32
    %c0_i32_0 = arith.constant 0 : i32
    %c0_i32_1 = arith.constant 0 : i32
    return %c0_i32, %c0_i32_0 : i32, i32
  }
  func.func @transform_19(%arg0: i32) -> (i32, i32, i32) {
    %c0_i32 = arith.constant 0 : i32
    %c0_i32_0 = arith.constant 0 : i32
    %c0_i32_1 = arith.constant 0 : i32
    return %arg0, %c0_i32, %c0_i32_0 : i32, i32, i32
  }
}

</mosaic_0001>

<llo_original>
// kernel: cnn_forward_pallas.1
$region0: #{cnn_forward_pallas.1}
  #allocation0 [shape = 'u32[]', space=smem, size = 0x4, offset = 0x4, fixed_abs, tag = 'smem constant byte address 0x4 - core index']
  #allocation1 [shape = 'u32[144,128]{1,0:T(1,128)}', space=vmem, size = 0x12000, scoped, tag = 'internal scratch']
  %s0 = inlined_call_operand.vmem [shape: f32[2,96,32], index: 0, kind: input, shape index: {}]
  %s1 = inlined_call_operand.vmem [shape: f32[5,168,96], index: 1, kind: input, shape index: {}]
  %s2 = inlined_call_operand.vmem [shape: f32[168,1], index: 2, kind: input, shape index: {}]
  %s3 = inlined_call_operand.vmem [shape: f32[28,14], index: 3, kind: input, shape index: {}]
  %s4 = inlined_call_operand.vmem [shape: f32[28,14], index: 4, kind: input, shape index: {}]
  %s5 = inlined_call_operand.vmem [shape: f32[84,168], index: 5, kind: input, shape index: {}]
  %s6 = inlined_call_operand.vmem [shape: f32[84,168], index: 6, kind: input, shape index: {}]
  %s7 = inlined_call_operand.vmem [shape: f32[5,160,84], index: 7, kind: input, shape index: {}]
  %s8 = inlined_call_operand.vmem [shape: f32[160,1], index: 8, kind: input, shape index: {}]
  %s9 = inlined_call_operand.vmem [shape: f32[10,5], index: 9, kind: input, shape index: {}]
  %s10 = inlined_call_operand.vmem [shape: f32[10,5], index: 10, kind: input, shape index: {}]
  %s11 = inlined_call_operand.vmem [shape: f32[80,160], index: 11, kind: input, shape index: {}]
  %s12 = inlined_call_operand.vmem [shape: f32[80,160], index: 12, kind: input, shape index: {}]
  %s13 = inlined_call_operand.vmem [shape: f32[5,120,80], index: 13, kind: input, shape index: {}]
  %s14 = inlined_call_operand.vmem [shape: f32[120,1], index: 14, kind: input, shape index: {}]
  %s15 = inlined_call_operand.vmem [shape: f32[84,120], index: 15, kind: input, shape index: {}]
  %s16 = inlined_call_operand.vmem [shape: f32[84,1], index: 16, kind: input, shape index: {}]
  %s17 = inlined_call_operand.vmem [shape: f32[4,84], index: 17, kind: input, shape index: {}]
  %s18 = inlined_call_operand.vmem [shape: f32[4,1], index: 18, kind: input, shape index: {}]
  %s19 = inlined_call_operand.vmem [shape: f32[2,4,1], index: 19, kind: output, shape index: {}]
  %s20 = sld [smem:[#allocation0]]
  $region109: #{cnn_forward_pallas.1} parent=0
    _
  %s22 = ssub.s32 1, %s20
  %s23 = scalar_select 0, %s22, %s20
  loop: start=0, step=1, limit=4
  $region2: #{cnn_forward_pallas.1} parent=0 // loop_pre_header
    _
  $region3: #{cnn_forward_pallas.1} parent=0 // loop_header
    %s25 = sphi 0, %s29
    %p26 = scmp.ge.s32.totalorder %s25, 4
    %s35 = sphi 0, %s37
    %s38 = sphi 0, %s35
    %s39 = sphi 0, %s38
    %s55 = sphi 0, %s39
    %s59 = sphi 0, %s59
    %s61 = sphi 0, %s59
    %s62 = sphi 0, %s61
    %s76 = sphi 0, %s62
    %s80 = sphi 0, %s80
    %s82 = sphi 0, %s80
    %s83 = sphi 0, %s82
    %s97 = sphi 0, %s83
    %s101 = sphi 0, %s101
    %s103 = sphi 0, %s101
    %s104 = sphi 0, %s103
    %s118 = sphi 0, %s104
    %s122 = sphi 0, %s122
    %s124 = sphi 0, %s122
    %s125 = sphi 0, %s124
    %s139 = sphi 0, %s125
    %s143 = sphi 0, %s143
    %s145 = sphi 0, %s143
    %s146 = sphi 0, %s145
    %s160 = sphi 0, %s146
    %s164 = sphi 0, %s164
    %s166 = sphi 0, %s164
    %s167 = sphi 0, %s166
    %s181 = sphi 0, %s167
    %s185 = sphi 0, %s185
    %s187 = sphi 0, %s185
    %s188 = sphi 0, %s187
    %s202 = sphi 0, %s188
    %s206 = sphi 0, %s206
    %s208 = sphi 0, %s206
    %s209 = sphi 0, %s208
    %s223 = sphi 0, %s209
    %s227 = sphi 0, %s227
    %s229 = sphi 0, %s227
    %s230 = sphi 0, %s229
    %s244 = sphi 0, %s230
    %s248 = sphi 0, %s248
    %s250 = sphi 0, %s248
    %s251 = sphi 0, %s250
    %s265 = sphi 0, %s251
    %s269 = sphi 0, %s269
    %s271 = sphi 0, %s269
    %s272 = sphi 0, %s271
    %s286 = sphi 0, %s272
    %s290 = sphi 0, %s290
    %s292 = sphi 0, %s290
    %s293 = sphi 0, %s292
    %s307 = sphi 0, %s293
    %s311 = sphi 0, %s311
    %s313 = sphi 0, %s311
    %s314 = sphi 0, %s313
    %s328 = sphi 0, %s314
    %s332 = sphi 0, %s332
    %s334 = sphi 0, %s332
    %s335 = sphi 0, %s334
    %s349 = sphi 0, %s335
    %s353 = sphi 0, %s353
    %s355 = sphi 0, %s353
    %s356 = sphi 0, %s355
    %s370 = sphi 0, %s356
    %s374 = sphi 0, %s374
    %s376 = sphi 0, %s374
    %s377 = sphi 0, %s376
    %s391 = sphi 0, %s377
    %s395 = sphi 0, %s395
    %s397 = sphi 0, %s395
    %s398 = sphi 0, %s397
    %s412 = sphi 0, %s398
    %s416 = sphi 0, %s416
    %s418 = sphi 0, %s416
    %s419 = sphi 0, %s418
    %s433 = sphi 0, %s419
    %s439 = sphi 0, %s441
    %s442 = sphi 0, %s439
    %s443 = sphi 0, %s442
    %s459 = sphi 0, %s443
  $region4: #{cnn_forward_pallas.1} parent=0 // loop_header_branch
    %28 = sbr.rel (%p26) target = $region8
  $region5: #{cnn_forward_pallas.1} parent=0 // loop_body
    %s30 = ssub.s32 %s25, 1
    %s31 = ssub.s32 %s25, 2
    %s32 = sadd.s32 %s25, 1
    %s33 = ssub.s32 %s25, %s32
    %p34 = scmp.eq.s32.totalorder %s33, 0
    %s36 = sadd.s32 %s35, 1
    %s37 = scalar_select %p34, %s35, %s36
    %p40 = pneg %p34
    %p41 = scmp.eq.s32.totalorder %s25, 1
    %p42 = por %p40, %p41
    %p43 = scmp.ne.s32.totalorder %s35, %s38
    %p44 = scmp.eq.s32.totalorder %s25, 0
    %p45 = por %p43, %p44
    %p46 = scmp.ne.s32.totalorder %s35, %s38
    %p47 = scmp.eq.s32.totalorder %s30, 1
    %p48 = por %p46, %p47
    %p49 = scmp.ne.s32.totalorder %s38, %s39
    %p50 = scmp.eq.s32.totalorder %s30, 0
    %p51 = por %p49, %p50
    %p52 = scmp.ne.s32.totalorder %s38, %s39
    %p53 = scmp.eq.s32.totalorder %s31, 1
    %p54 = por %p52, %p53
    %p56 = scmp.ne.s32.totalorder %s39, %s55
    %p57 = scmp.eq.s32.totalorder %s31, 0
    %p58 = por %p56, %p57
    %s60 = sadd.s32 %s59, 1
    %p63 = scmp.eq.s32.totalorder %s25, 1
    %p64 = scmp.ne.s32.totalorder %s59, %s61
    %p65 = scmp.eq.s32.totalorder %s25, 0
    %p66 = por %p64, %p65
    %p67 = scmp.ne.s32.totalorder %s59, %s61
    %p68 = scmp.eq.s32.totalorder %s30, 1
    %p69 = por %p67, %p68
    %p70 = scmp.ne.s32.totalorder %s61, %s62
    %p71 = scmp.eq.s32.totalorder %s30, 0
    %p72 = por %p70, %p71
    %p73 = scmp.ne.s32.totalorder %s61, %s62
    %p74 = scmp.eq.s32.totalorder %s31, 1
    %p75 = por %p73, %p74
    %p77 = scmp.ne.s32.totalorder %s62, %s76
    %p78 = scmp.eq.s32.totalorder %s31, 0
    %p79 = por %p77, %p78
    %s81 = sadd.s32 %s80, 1
    %p84 = scmp.eq.s32.totalorder %s25, 1
    %p85 = scmp.ne.s32.totalorder %s80, %s82
    %p86 = scmp.eq.s32.totalorder %s25, 0
    %p87 = por %p85, %p86
    %p88 = scmp.ne.s32.totalorder %s80, %s82
    %p89 = scmp.eq.s32.totalorder %s30, 1
    %p90 = por %p88, %p89
    %p91 = scmp.ne.s32.totalorder %s82, %s83
    %p92 = scmp.eq.s32.totalorder %s30, 0
    %p93 = por %p91, %p92
    %p94 = scmp.ne.s32.totalorder %s82, %s83
    %p95 = scmp.eq.s32.totalorder %s31, 1
    %p96 = por %p94, %p95
    %p98 = scmp.ne.s32.totalorder %s83, %s97
    %p99 = scmp.eq.s32.totalorder %s31, 0
    %p100 = por %p98, %p99
    %s102 = sadd.s32 %s101, 1
    %p105 = scmp.eq.s32.totalorder %s25, 1
    %p106 = scmp.ne.s32.totalorder %s101, %s103
    %p107 = scmp.eq.s32.totalorder %s25, 0
    %p108 = por %p106, %p107
    %p109 = scmp.ne.s32.totalorder %s101, %s103
    %p110 = scmp.eq.s32.totalorder %s30, 1
    %p111 = por %p109, %p110
    %p112 = scmp.ne.s32.totalorder %s103, %s104
    %p113 = scmp.eq.s32.totalorder %s30, 0
    %p114 = por %p112, %p113
    %p115 = scmp.ne.s32.totalorder %s103, %s104
    %p116 = scmp.eq.s32.totalorder %s31, 1
    %p117 = por %p115, %p116
    %p119 = scmp.ne.s32.totalorder %s104, %s118
    %p120 = scmp.eq.s32.totalorder %s31, 0
    %p121 = por %p119, %p120
    %s123 = sadd.s32 %s122, 1
    %p126 = scmp.eq.s32.totalorder %s25, 1
    %p127 = scmp.ne.s32.totalorder %s122, %s124
    %p128 = scmp.eq.s32.totalorder %s25, 0
    %p129 = por %p127, %p128
    %p130 = scmp.ne.s32.totalorder %s122, %s124
    %p131 = scmp.eq.s32.totalorder %s30, 1
    %p132 = por %p130, %p131
    %p133 = scmp.ne.s32.totalorder %s124, %s125
    %p134 = scmp.eq.s32.totalorder %s30, 0
    %p135 = por %p133, %p134
    %p136 = scmp.ne.s32.totalorder %s124, %s125
    %p137 = scmp.eq.s32.totalorder %s31, 1
    %p138 = por %p136, %p137
    %p140 = scmp.ne.s32.totalorder %s125, %s139
    %p141 = scmp.eq.s32.totalorder %s31, 0
    %p142 = por %p140, %p141
    %s144 = sadd.s32 %s143, 1
    %p147 = scmp.eq.s32.totalorder %s25, 1
    %p148 = scmp.ne.s32.totalorder %s143, %s145
    %p149 = scmp.eq.s32.totalorder %s25, 0
    %p150 = por %p148, %p149
    %p151 = scmp.ne.s32.totalorder %s143, %s145
    %p152 = scmp.eq.s32.totalorder %s30, 1
    %p153 = por %p151, %p152
    %p154 = scmp.ne.s32.totalorder %s145, %s146
    %p155 = scmp.eq.s32.totalorder %s30, 0
    %p156 = por %p154, %p155
    %p157 = scmp.ne.s32.totalorder %s145, %s146
    %p158 = scmp.eq.s32.totalorder %s31, 1
    %p159 = por %p157, %p158
    %p161 = scmp.ne.s32.totalorder %s146, %s160
    %p162 = scmp.eq.s32.totalorder %s31, 0
    %p163 = por %p161, %p162
    %s165 = sadd.s32 %s164, 1
    %p168 = scmp.eq.s32.totalorder %s25, 1
    %p169 = scmp.ne.s32.totalorder %s164, %s166
    %p170 = scmp.eq.s32.totalorder %s25, 0
    %p171 = por %p169, %p170
    %p172 = scmp.ne.s32.totalorder %s164, %s166
    %p173 = scmp.eq.s32.totalorder %s30, 1
    %p174 = por %p172, %p173
    %p175 = scmp.ne.s32.totalorder %s166, %s167
    %p176 = scmp.eq.s32.totalorder %s30, 0
    %p177 = por %p175, %p176
    %p178 = scmp.ne.s32.totalorder %s166, %s167
    %p179 = scmp.eq.s32.totalorder %s31, 1
    %p180 = por %p178, %p179
    %p182 = scmp.ne.s32.totalorder %s167, %s181
    %p183 = scmp.eq.s32.totalorder %s31, 0
    %p184 = por %p182, %p183
    %s186 = sadd.s32 %s185, 1
    %p189 = scmp.eq.s32.totalorder %s25, 1
    %p190 = scmp.ne.s32.totalorder %s185, %s187
    %p191 = scmp.eq.s32.totalorder %s25, 0
    %p192 = por %p190, %p191
    %p193 = scmp.ne.s32.totalorder %s185, %s187
    %p194 = scmp.eq.s32.totalorder %s30, 1
    %p195 = por %p193, %p194
    %p196 = scmp.ne.s32.totalorder %s187, %s188
    %p197 = scmp.eq.s32.totalorder %s30, 0
    %p198 = por %p196, %p197
    %p199 = scmp.ne.s32.totalorder %s187, %s188
    %p200 = scmp.eq.s32.totalorder %s31, 1
    %p201 = por %p199, %p200
    %p203 = scmp.ne.s32.totalorder %s188, %s202
    %p204 = scmp.eq.s32.totalorder %s31, 0
    %p205 = por %p203, %p204
    %s207 = sadd.s32 %s206, 1
    %p210 = scmp.eq.s32.totalorder %s25, 1
    %p211 = scmp.ne.s32.totalorder %s206, %s208
    %p212 = scmp.eq.s32.totalorder %s25, 0
    %p213 = por %p211, %p212
    %p214 = scmp.ne.s32.totalorder %s206, %s208
    %p215 = scmp.eq.s32.totalorder %s30, 1
    %p216 = por %p214, %p215
    %p217 = scmp.ne.s32.totalorder %s208, %s209
    %p218 = scmp.eq.s32.totalorder %s30, 0
    %p219 = por %p217, %p218
    %p220 = scmp.ne.s32.totalorder %s208, %s209
    %p221 = scmp.eq.s32.totalorder %s31, 1
    %p222 = por %p220, %p221
    %p224 = scmp.ne.s32.totalorder %s209, %s223
    %p225 = scmp.eq.s32.totalorder %s31, 0
    %p226 = por %p224, %p225
    %s228 = sadd.s32 %s227, 1
    %p231 = scmp.eq.s32.totalorder %s25, 1
    %p232 = scmp.ne.s32.totalorder %s227, %s229
    %p233 = scmp.eq.s32.totalorder %s25, 0
    %p234 = por %p232, %p233
    %p235 = scmp.ne.s32.totalorder %s227, %s229
    %p236 = scmp.eq.s32.totalorder %s30, 1
    %p237 = por %p235, %p236
    %p238 = scmp.ne.s32.totalorder %s229, %s230
    %p239 = scmp.eq.s32.totalorder %s30, 0
    %p240 = por %p238, %p239
    %p241 = scmp.ne.s32.totalorder %s229, %s230
    %p242 = scmp.eq.s32.totalorder %s31, 1
    %p243 = por %p241, %p242
    %p245 = scmp.ne.s32.totalorder %s230, %s244
    %p246 = scmp.eq.s32.totalorder %s31, 0
    %p247 = por %p245, %p246
    %s249 = sadd.s32 %s248, 1
    %p252 = scmp.eq.s32.totalorder %s25, 1
    %p253 = scmp.ne.s32.totalorder %s248, %s250
    %p254 = scmp.eq.s32.totalorder %s25, 0
    %p255 = por %p253, %p254
    %p256 = scmp.ne.s32.totalorder %s248, %s250
    %p257 = scmp.eq.s32.totalorder %s30, 1
    %p258 = por %p256, %p257
    %p259 = scmp.ne.s32.totalorder %s250, %s251
    %p260 = scmp.eq.s32.totalorder %s30, 0
    %p261 = por %p259, %p260
    %p262 = scmp.ne.s32.totalorder %s250, %s251
    %p263 = scmp.eq.s32.totalorder %s31, 1
    %p264 = por %p262, %p263
    %p266 = scmp.ne.s32.totalorder %s251, %s265
    %p267 = scmp.eq.s32.totalorder %s31, 0
    %p268 = por %p266, %p267
    %s270 = sadd.s32 %s269, 1
    %p273 = scmp.eq.s32.totalorder %s25, 1
    %p274 = scmp.ne.s32.totalorder %s269, %s271
    %p275 = scmp.eq.s32.totalorder %s25, 0
    %p276 = por %p274, %p275
    %p277 = scmp.ne.s32.totalorder %s269, %s271
    %p278 = scmp.eq.s32.totalorder %s30, 1
    %p279 = por %p277, %p278
    %p280 = scmp.ne.s32.totalorder %s271, %s272
    %p281 = scmp.eq.s32.totalorder %s30, 0
    %p282 = por %p280, %p281
    %p283 = scmp.ne.s32.totalorder %s271, %s272
    %p284 = scmp.eq.s32.totalorder %s31, 1
    %p285 = por %p283, %p284
    %p287 = scmp.ne.s32.totalorder %s272, %s286
    %p288 = scmp.eq.s32.totalorder %s31, 0
    %p289 = por %p287, %p288
    %s291 = sadd.s32 %s290, 1
    %p294 = scmp.eq.s32.totalorder %s25, 1
    %p295 = scmp.ne.s32.totalorder %s290, %s292
    %p296 = scmp.eq.s32.totalorder %s25, 0
    %p297 = por %p295, %p296
    %p298 = scmp.ne.s32.totalorder %s290, %s292
    %p299 = scmp.eq.s32.totalorder %s30, 1
    %p300 = por %p298, %p299
    %p301 = scmp.ne.s32.totalorder %s292, %s293
    %p302 = scmp.eq.s32.totalorder %s30, 0
    %p303 = por %p301, %p302
    %p304 = scmp.ne.s32.totalorder %s292, %s293
    %p305 = scmp.eq.s32.totalorder %s31, 1
    %p306 = por %p304, %p305
    %p308 = scmp.ne.s32.totalorder %s293, %s307
    %p309 = scmp.eq.s32.totalorder %s31, 0
    %p310 = por %p308, %p309
    %s312 = sadd.s32 %s311, 1
    %p315 = scmp.eq.s32.totalorder %s25, 1
    %p316 = scmp.ne.s32.totalorder %s311, %s313
    %p317 = scmp.eq.s32.totalorder %s25, 0
    %p318 = por %p316, %p317
    %p319 = scmp.ne.s32.totalorder %s311, %s313
    %p320 = scmp.eq.s32.totalorder %s30, 1
    %p321 = por %p319, %p320
    %p322 = scmp.ne.s32.totalorder %s313, %s314
    %p323 = scmp.eq.s32.totalorder %s30, 0
    %p324 = por %p322, %p323
    %p325 = scmp.ne.s32.totalorder %s313, %s314
    %p326 = scmp.eq.s32.totalorder %s31, 1
    %p327 = por %p325, %p326
    %p329 = scmp.ne.s32.totalorder %s314, %s328
    %p330 = scmp.eq.s32.totalorder %s31, 0
    %p331 = por %p329, %p330
    %s333 = sadd.s32 %s332, 1
    %p336 = scmp.eq.s32.totalorder %s25, 1
    %p337 = scmp.ne.s32.totalorder %s332, %s334
    %p338 = scmp.eq.s32.totalorder %s25, 0
    %p339 = por %p337, %p338
    %p340 = scmp.ne.s32.totalorder %s332, %s334
    %p341 = scmp.eq.s32.totalorder %s30, 1
    %p342 = por %p340, %p341
    %p343 = scmp.ne.s32.totalorder %s334, %s335
    %p344 = scmp.eq.s32.totalorder %s30, 0
    %p345 = por %p343, %p344
    %p346 = scmp.ne.s32.totalorder %s334, %s335
    %p347 = scmp.eq.s32.totalorder %s31, 1
    %p348 = por %p346, %p347
    %p350 = scmp.ne.s32.totalorder %s335, %s349
    %p351 = scmp.eq.s32.totalorder %s31, 0
    %p352 = por %p350, %p351
    %s354 = sadd.s32 %s353, 1
    %p357 = scmp.eq.s32.totalorder %s25, 1
    %p358 = scmp.ne.s32.totalorder %s353, %s355
    %p359 = scmp.eq.s32.totalorder %s25, 0
    %p360 = por %p358, %p359
    %p361 = scmp.ne.s32.totalorder %s353, %s355
    %p362 = scmp.eq.s32.totalorder %s30, 1
    %p363 = por %p361, %p362
    %p364 = scmp.ne.s32.totalorder %s355, %s356
    %p365 = scmp.eq.s32.totalorder %s30, 0
    %p366 = por %p364, %p365
    %p367 = scmp.ne.s32.totalorder %s355, %s356
    %p368 = scmp.eq.s32.totalorder %s31, 1
    %p369 = por %p367, %p368
    %p371 = scmp.ne.s32.totalorder %s356, %s370
    %p372 = scmp.eq.s32.totalorder %s31, 0
    %p373 = por %p371, %p372
    %s375 = sadd.s32 %s374, 1
    %p378 = scmp.eq.s32.totalorder %s25, 1
    %p379 = scmp.ne.s32.totalorder %s374, %s376
    %p380 = scmp.eq.s32.totalorder %s25, 0
    %p381 = por %p379, %p380
    %p382 = scmp.ne.s32.totalorder %s374, %s376
    %p383 = scmp.eq.s32.totalorder %s30, 1
    %p384 = por %p382, %p383
    %p385 = scmp.ne.s32.totalorder %s376, %s377
    %p386 = scmp.eq.s32.totalorder %s30, 0
    %p387 = por %p385, %p386
    %p388 = scmp.ne.s32.totalorder %s376, %s377
    %p389 = scmp.eq.s32.totalorder %s31, 1
    %p390 = por %p388, %p389
    %p392 = scmp.ne.s32.totalorder %s377, %s391
    %p393 = scmp.eq.s32.totalorder %s31, 0
    %p394 = por %p392, %p393
    %s396 = sadd.s32 %s395, 1
    %p399 = scmp.eq.s32.totalorder %s25, 1
    %p400 = scmp.ne.s32.totalorder %s395, %s397
    %p401 = scmp.eq.s32.totalorder %s25, 0
    %p402 = por %p400, %p401
    %p403 = scmp.ne.s32.totalorder %s395, %s397
    %p404 = scmp.eq.s32.totalorder %s30, 1
    %p405 = por %p403, %p404
    %p406 = scmp.ne.s32.totalorder %s397, %s398
    %p407 = scmp.eq.s32.totalorder %s30, 0
    %p408 = por %p406, %p407
    %p409 = scmp.ne.s32.totalorder %s397, %s398
    %p410 = scmp.eq.s32.totalorder %s31, 1
    %p411 = por %p409, %p410
    %p413 = scmp.ne.s32.totalorder %s398, %s412
    %p414 = scmp.eq.s32.totalorder %s31, 0
    %p415 = por %p413, %p414
    %s417 = sadd.s32 %s416, 1
    %p420 = scmp.eq.s32.totalorder %s25, 1
    %p421 = scmp.ne.s32.totalorder %s416, %s418
    %p422 = scmp.eq.s32.totalorder %s25, 0
    %p423 = por %p421, %p422
    %p424 = scmp.ne.s32.totalorder %s416, %s418
    %p425 = scmp.eq.s32.totalorder %s30, 1
    %p426 = por %p424, %p425
    %p427 = scmp.ne.s32.totalorder %s418, %s419
    %p428 = scmp.eq.s32.totalorder %s30, 0
    %p429 = por %p427, %p428
    %p430 = scmp.ne.s32.totalorder %s418, %s419
    %p431 = scmp.eq.s32.totalorder %s31, 1
    %p432 = por %p430, %p431
    %p434 = scmp.ne.s32.totalorder %s419, %s433
    %p435 = scmp.eq.s32.totalorder %s31, 0
    %p436 = por %p434, %p435
    %s437 = ssub.s32 %s25, %s32
    %p438 = scmp.eq.s32.totalorder %s437, 0
    %s440 = sadd.s32 %s439, 1
    %s441 = scalar_select %p438, %s439, %s440
    %p444 = pneg %p438
    %p445 = scmp.eq.s32.totalorder %s25, 1
    %p446 = por %p444, %p445
    %p447 = scmp.ne.s32.totalorder %s439, %s442
    %p448 = scmp.eq.s32.totalorder %s25, 0
    %p449 = por %p447, %p448
    %p450 = scmp.ne.s32.totalorder %s439, %s442
    %p451 = scmp.eq.s32.totalorder %s30, 1
    %p452 = por %p450, %p451
    %p453 = scmp.ne.s32.totalorder %s442, %s443
    %p454 = scmp.eq.s32.totalorder %s30, 0
    %p455 = por %p453, %p454
    %p456 = scmp.ne.s32.totalorder %s442, %s443
    %p457 = scmp.eq.s32.totalorder %s31, 1
    %p458 = por %p456, %p457
    %p460 = scmp.ne.s32.totalorder %s443, %s459
    %p461 = scmp.eq.s32.totalorder %s31, 0
    %p462 = por %p460, %p461
    %p463 = scmp.le.s32.totalorder 1, %s25
    %p464 = scmp.lt.s32.totalorder %s25, 3
    %p465 = pnand %p463, %p464
    %p466 = pneg %p465
    // Predicated region
    $region9: #{cnn_forward_pallas.1} parent=5 // pred_check
      _
    $region10: #{cnn_forward_pallas.1} parent=5 // pred_check_branch
      %468 = sbr.rel (%p465) target = $region12
    $region11: #{cnn_forward_pallas.1} parent=5 // pred_region
      %s469 = ssub.s32 %s25, 1
      // Predicated region
      $region13: #{cnn_forward_pallas.1} parent=11 // pred_check
        %p470 = pneg %p72
      $region14: #{cnn_forward_pallas.1} parent=11 // pred_check_branch
        %472 = sbr.rel (%p470) target = $region16
      $region15: #{cnn_forward_pallas.1} parent=11 // pred_region
        _
      $region16: #{cnn_forward_pallas.1} parent=11 // pred_fallthru
        _
      // Predicated region
      $region17: #{cnn_forward_pallas.1} parent=11 // pred_check
        %p473 = pneg %p93
      $region18: #{cnn_forward_pallas.1} parent=11 // pred_check_branch
        %475 = sbr.rel (%p473) target = $region20
      $region19: #{cnn_forward_pallas.1} parent=11 // pred_region
        _
      $region20: #{cnn_forward_pallas.1} parent=11 // pred_fallthru
        _
      // Predicated region
      $region21: #{cnn_forward_pallas.1} parent=11 // pred_check
        %p476 = pneg %p114
      $region22: #{cnn_forward_pallas.1} parent=11 // pred_check_branch
        %478 = sbr.rel (%p476) target = $region24
      $region23: #{cnn_forward_pallas.1} parent=11 // pred_region
        _
      $region24: #{cnn_forward_pallas.1} parent=11 // pred_fallthru
        _
      // Predicated region
      $region25: #{cnn_forward_pallas.1} parent=11 // pred_check
        %p479 = pneg %p135
      $region26: #{cnn_forward_pallas.1} parent=11 // pred_check_branch
        %481 = sbr.rel (%p479) target = $region28
      $region27: #{cnn_forward_pallas.1} parent=11 // pred_region
        _
      $region28: #{cnn_forward_pallas.1} parent=11 // pred_fallthru
        _
      // Predicated region
      $region29: #{cnn_forward_pallas.1} parent=11 // pred_check
        %p482 = pneg %p156
      $region30: #{cnn_forward_pallas.1} parent=11 // pred_check_branch
        %484 = sbr.rel (%p482) target = $region32
      $region31: #{cnn_forward_pallas.1} parent=11 // pred_region
        _
      $region32: #{cnn_forward_pallas.1} parent=11 // pred_fallthru
        _
      // Predicated region
      $region33: #{cnn_forward_pallas.1} parent=11 // pred_check
        %p485 = pneg %p177
      $region34: #{cnn_forward_pallas.1} parent=11 // pred_check_branch
        %487 = sbr.rel (%p485) target = $region36
      $region35: #{cnn_forward_pallas.1} parent=11 // pred_region
        _
      $region36: #{cnn_forward_pallas.1} parent=11 // pred_fallthru
        _
      // Predicated region
      $region37: #{cnn_forward_pallas.1} parent=11 // pred_check
        %p488 = pneg %p198
      $region38: #{cnn_forward_pallas.1} parent=11 // pred_check_branch
        %490 = sbr.rel (%p488) target = $region40
      $region39: #{cnn_forward_pallas.1} parent=11 // pred_region
        _
      $region40: #{cnn_forward_pallas.1} parent=11 // pred_fallthru
        _
      // Predicated region
      $region41: #{cnn_forward_pallas.1} parent=11 // pred_check
        %p491 = pneg %p219
      $region42: #{cnn_forward_pallas.1} parent=11 // pred_check_branch
        %493 = sbr.rel (%p491) target = $region44
      $region43: #{cnn_forward_pallas.1} parent=11 // pred_region
        _
      $region44: #{cnn_forward_pallas.1} parent=11 // pred_fallthru
        _
      // Predicated region
      $region45: #{cnn_forward_pallas.1} parent=11 // pred_check
        %p494 = pneg %p240
      $region46: #{cnn_forward_pallas.1} parent=11 // pred_check_branch
        %496 = sbr.rel (%p494) target = $region48
      $region47: #{cnn_forward_pallas.1} parent=11 // pred_region
        _
      $region48: #{cnn_forward_pallas.1} parent=11 // pred_fallthru
        _
      // Predicated region
      $region49: #{cnn_forward_pallas.1} parent=11 // pred_check
        %p497 = pneg %p261
      $region50: #{cnn_forward_pallas.1} parent=11 // pred_check_branch
        %499 = sbr.rel (%p497) target = $region52
      $region51: #{cnn_forward_pallas.1} parent=11 // pred_region
        _
      $region52: #{cnn_forward_pallas.1} parent=11 // pred_fallthru
        _
      // Predicated region
      $region53: #{cnn_forward_pallas.1} parent=11 // pred_check
        %p500 = pneg %p282
      $region54: #{cnn_forward_pallas.1} parent=11 // pred_check_branch
        %502 = sbr.rel (%p500) target = $region56
      $region55: #{cnn_forward_pallas.1} parent=11 // pred_region
        _
      $region56: #{cnn_forward_pallas.1} parent=11 // pred_fallthru
        _
      // Predicated region
      $region57: #{cnn_forward_pallas.1} parent=11 // pred_check
        %p503 = pneg %p303
      $region58: #{cnn_forward_pallas.1} parent=11 // pred_check_branch
        %505 = sbr.rel (%p503) target = $region60
      $region59: #{cnn_forward_pallas.1} parent=11 // pred_region
        _
      $region60: #{cnn_forward_pallas.1} parent=11 // pred_fallthru
        _
      // Predicated region
      $region61: #{cnn_forward_pallas.1} parent=11 // pred_check
        %p506 = pneg %p324
      $region62: #{cnn_forward_pallas.1} parent=11 // pred_check_branch
        %508 = sbr.rel (%p506) target = $region64
      $region63: #{cnn_forward_pallas.1} parent=11 // pred_region
        _
      $region64: #{cnn_forward_pallas.1} parent=11 // pred_fallthru
        _
      // Predicated region
      $region65: #{cnn_forward_pallas.1} parent=11 // pred_check
        %p509 = pneg %p345
      $region66: #{cnn_forward_pallas.1} parent=11 // pred_check_branch
        %511 = sbr.rel (%p509) target = $region68
      $region67: #{cnn_forward_pallas.1} parent=11 // pred_region
        _
      $region68: #{cnn_forward_pallas.1} parent=11 // pred_fallthru
        _
      // Predicated region
      $region69: #{cnn_forward_pallas.1} parent=11 // pred_check
        %p512 = pneg %p366
      $region70: #{cnn_forward_pallas.1} parent=11 // pred_check_branch
        %514 = sbr.rel (%p512) target = $region72
      $region71: #{cnn_forward_pallas.1} parent=11 // pred_region
        _
      $region72: #{cnn_forward_pallas.1} parent=11 // pred_fallthru
        _
      // Predicated region
      $region73: #{cnn_forward_pallas.1} parent=11 // pred_check
        %p515 = pneg %p387
      $region74: #{cnn_forward_pallas.1} parent=11 // pred_check_branch
        %517 = sbr.rel (%p515) target = $region76
      $region75: #{cnn_forward_pallas.1} parent=11 // pred_region
        _
      $region76: #{cnn_forward_pallas.1} parent=11 // pred_fallthru
        _
      // Predicated region
      $region77: #{cnn_forward_pallas.1} parent=11 // pred_check
        %p518 = pneg %p408
      $region78: #{cnn_forward_pallas.1} parent=11 // pred_check_branch
        %520 = sbr.rel (%p518) target = $region80
      $region79: #{cnn_forward_pallas.1} parent=11 // pred_region
        _
      $region80: #{cnn_forward_pallas.1} parent=11 // pred_fallthru
        _
      // Predicated region
      $region81: #{cnn_forward_pallas.1} parent=11 // pred_check
        %p521 = pneg %p429
      $region82: #{cnn_forward_pallas.1} parent=11 // pred_check_branch
        %523 = sbr.rel (%p521) target = $region84
      $region83: #{cnn_forward_pallas.1} parent=11 // pred_region
        _
      $region84: #{cnn_forward_pallas.1} parent=11 // pred_fallthru
        _
    $region12: #{cnn_forward_pallas.1} parent=5 // pred_fallthru
      _
    %p524 = scmp.lt.s32.totalorder %s25, 2
    // Predicated region
    $region85: #{cnn_forward_pallas.1} parent=5 // pred_check
      %p525 = pneg %p524
    $region86: #{cnn_forward_pallas.1} parent=5 // pred_check_branch
      %527 = sbr.rel (%p525) target = $region88
    $region87: #{cnn_forward_pallas.1} parent=5 // pred_region
      // Predicated region
      $region89: #{cnn_forward_pallas.1} parent=87 // pred_check
        %p528 = pneg %p45
      $region90: #{cnn_forward_pallas.1} parent=87 // pred_check_branch
        %530 = sbr.rel (%p528) target = $region92
      $region91: #{cnn_forward_pallas.1} parent=87 // pred_region
        %p531 = scmp.lt.s32.totalorder %s25, 1
        %s532 = scalar_select %p531, %s25, 1
        %s533 = smul.addr %s532, 12
        %s534 = smul.addr %s533, 8
        %s535 = scalar_lea.vmem %s0, %s534
      $region92: #{cnn_forward_pallas.1} parent=87 // pred_fallthru
        _
    $region88: #{cnn_forward_pallas.1} parent=5 // pred_fallthru
      _
    %p536 = scmp.le.s32.totalorder 1, %s25
    %p537 = scmp.lt.s32.totalorder %s25, 3
    %p538 = pnand %p536, %p537
    %p539 = pneg %p538
    // Predicated region
    $region93: #{cnn_forward_pallas.1} parent=5 // pred_check
      _
    $region94: #{cnn_forward_pallas.1} parent=5 // pred_check_branch
      %541 = sbr.rel (%p538) target = $region96
    $region95: #{cnn_forward_pallas.1} parent=5 // pred_region
      %s542 = ssub.s32 %s25, 1
      %p543 = scmp.lt.s32.totalorder %s30, 1
      %s544 = scalar_select %p543, %s30, 1
      %s545 = smul.addr %s544, 12
      %s546 = smul.addr %s545, 8
      %s547 = scalar_lea.vmem %s0, %s546
      %p548 = pneg %p51
      %p549 = pneg %p48
      %p550 = pneg %p72
      %p551 = pneg %p69
      %p552 = pneg %p93
      %p553 = pneg %p90
      %p554 = pneg %p114
      %p555 = pneg %p111
      %p556 = pneg %p135
      %p557 = pneg %p132
      %p558 = pneg %p156
      %p559 = pneg %p153
      %p560 = pneg %p177
      %p561 = pneg %p174
      %p562 = pneg %p198
      %p563 = pneg %p195
      %p564 = pneg %p219
      %p565 = pneg %p216
      %p566 = pneg %p240
      %p567 = pneg %p237
      %p568 = pneg %p261
      %p569 = pneg %p258
      %p570 = pneg %p282
      %p571 = pneg %p279
      %p572 = pneg %p303
      %p573 = pneg %p300
      %p574 = pneg %p324
      %p575 = pneg %p321
      %p576 = pneg %p345
      %p577 = pneg %p342
      %p578 = pneg %p366
      %p579 = pneg %p363
      %p580 = pneg %p387
      %p581 = pneg %p384
      %p582 = pneg %p408
      %p583 = pneg %p405
      %p584 = pneg %p429
      %p585 = pneg %p426
      %p586 = pneg %p455
      %p587 = pneg %p452
      %p588 = scmp.lt.s32.totalorder %s30, 1
      %s589 = scalar_select %p588, %s30, 1
      %s590 = smul.addr %s589, 4
      %s591 = scalar_lea.vmem %s19, %s590
      %p592 = scmp.lt.s32.totalorder %s30, 1
      %s593 = scalar_select %p592, %s30, 1
      %s594 = smul.addr %s593, 12
      %s595 = smul.addr %s594, 8
      %s596 = scalar_lea.vmem %s0, %s595
      %p597 = scmp.lt.s32.totalorder %s30, 1
      %s598 = scalar_select %p597, %s30, 1
      %s599 = smul.addr %s598, 4
      %s600 = scalar_lea.vmem %s19, %s599
      %v601 = vld [vmem:[%s596] sm:$0xff]
      %v602 = vld [vmem:[%s596 + $0x8] sm:$0xff]
      %v603 = vld [vmem:[%s596 + $0x10] sm:$0xff]
      %v604 = vld [vmem:[%s596 + $0x18] sm:$0xff]
      %v605 = vld [vmem:[%s596 + $0x20] sm:$0xff]
      %v606 = vld [vmem:[%s596 + $0x28] sm:$0xff]
      %v607 = vld [vmem:[%s596 + $0x30] sm:$0xff]
      %v608 = vld [vmem:[%s596 + $0x38] sm:$0xff]
      %v609 = vld [vmem:[%s596 + $0x40] sm:$0xff]
      %v610 = vld [vmem:[%s596 + $0x48] sm:$0xff]
      %v611 = vld [vmem:[%s596 + $0x50] sm:$0xff]
      %v612 = vld [vmem:[%s596 + $0x58] sm:$0xff]
      %v613 = vld [vmem:[%s1] sm:$0xff]
      %v614 = vld [vmem:[%s1 + $0x8] sm:$0xff]
      %v615 = vld [vmem:[%s1 + $0x10] sm:$0xff]
      %v616 = vld [vmem:[%s1 + $0x18] sm:$0xff]
      %v617 = vld [vmem:[%s1 + $0x20] sm:$0xff]
      %v618 = vld [vmem:[%s1 + $0x28] sm:$0xff]
      %v619 = vld [vmem:[%s1 + $0x30] sm:$0xff]
      %v620 = vld [vmem:[%s1 + $0x38] sm:$0xff]
      %v621 = vld [vmem:[%s1 + $0x40] sm:$0xff]
      %v622 = vld [vmem:[%s1 + $0x48] sm:$0xff]
      %v623 = vld [vmem:[%s1 + $0x50] sm:$0xff]
      %v624 = vld [vmem:[%s1 + $0x58] sm:$0xff]
      %v625 = vld [vmem:[%s1 + $0x60] sm:$0xff]
      %v626 = vld [vmem:[%s1 + $0x68] sm:$0xff]
      %v627 = vld [vmem:[%s1 + $0x70] sm:$0xff]
      %v628 = vld [vmem:[%s1 + $0x78] sm:$0xff]
      %v629 = vld [vmem:[%s1 + $0x80] sm:$0xff]
      %v630 = vld [vmem:[%s1 + $0x88] sm:$0xff]
      %v631 = vld [vmem:[%s1 + $0x90] sm:$0xff]
      %v632 = vld [vmem:[%s1 + $0x98] sm:$0xff]
      %v633 = vld [vmem:[%s1 + $0xa0] sm:$0xff]
      %s634 = scalar_lea.vmem %s1, 168
      %v635 = vld [vmem:[%s634] sm:$0xff]
      %v636 = vld [vmem:[%s634 + $0x8] sm:$0xff]
      %v637 = vld [vmem:[%s634 + $0x10] sm:$0xff]
      %v638 = vld [vmem:[%s634 + $0x18] sm:$0xff]
      %v639 = vld [vmem:[%s634 + $0x20] sm:$0xff]
      %v640 = vld [vmem:[%s634 + $0x28] sm:$0xff]
      %v641 = vld [vmem:[%s634 + $0x30] sm:$0xff]
      %v642 = vld [vmem:[%s634 + $0x38] sm:$0xff]
      %v643 = vld [vmem:[%s634 + $0x40] sm:$0xff]
      %v644 = vld [vmem:[%s634 + $0x48] sm:$0xff]
      %v645 = vld [vmem:[%s634 + $0x50] sm:$0xff]
      %v646 = vld [vmem:[%s634 + $0x58] sm:$0xff]
      %v647 = vld [vmem:[%s634 + $0x60] sm:$0xff]
      %v648 = vld [vmem:[%s634 + $0x68] sm:$0xff]
      %v649 = vld [vmem:[%s634 + $0x70] sm:$0xff]
      %v650 = vld [vmem:[%s634 + $0x78] sm:$0xff]
      %v651 = vld [vmem:[%s634 + $0x80] sm:$0xff]
      %v652 = vld [vmem:[%s634 + $0x88] sm:$0xff]
      %v653 = vld [vmem:[%s634 + $0x90] sm:$0xff]
      %v654 = vld [vmem:[%s634 + $0x98] sm:$0xff]
      %v655 = vld [vmem:[%s634 + $0xa0] sm:$0xff]
      %668 = vrot.lane.b32.xlu0 %v601, 127
      %v669 = vpop.permute.xlu0 %668
      %670 = vrot.lane.b32.xlu0 %v602, 127
      %v671 = vpop.permute.xlu0 %670
      %672 = vrot.lane.b32.xlu0 %v603, 127
      %v673 = vpop.permute.xlu0 %672
      %674 = vrot.lane.b32.xlu0 %v604, 127
      %v675 = vpop.permute.xlu0 %674
      %676 = vrot.lane.b32.xlu0 %v605, 127
      %v677 = vpop.permute.xlu0 %676
      %678 = vrot.lane.b32.xlu0 %v606, 127
      %v679 = vpop.permute.xlu0 %678
      %680 = vrot.lane.b32.xlu0 %v607, 127
      %v681 = vpop.permute.xlu0 %680
      %682 = vrot.lane.b32.xlu0 %v608, 127
      %v683 = vpop.permute.xlu0 %682
      %684 = vrot.lane.b32.xlu0 %v609, 127
      %v685 = vpop.permute.xlu0 %684
      %686 = vrot.lane.b32.xlu0 %v610, 127
      %v687 = vpop.permute.xlu0 %686
      %688 = vrot.lane.b32.xlu0 %v611, 127
      %v689 = vpop.permute.xlu0 %688
      %690 = vrot.lane.b32.xlu0 %v612, 127
      %v691 = vpop.permute.xlu0 %690
      %vm704 = vcmask 785408
      %v706 = vsel %vm704, %v635, 0
      %v709 = vsel %vm704, %v636, 0
      %v712 = vsel %vm704, %v637, 0
      %v715 = vsel %vm704, %v638, 0
      %v718 = vsel %vm704, %v639, 0
      %v721 = vsel %vm704, %v640, 0
      %v724 = vsel %vm704, %v641, 0
      %v727 = vsel %vm704, %v642, 0
      %v730 = vsel %vm704, %v643, 0
      %v733 = vsel %vm704, %v644, 0
      %v736 = vsel %vm704, %v645, 0
      %v739 = vsel %vm704, %v646, 0
      %v742 = vsel %vm704, %v647, 0
      %v745 = vsel %vm704, %v648, 0
      %v748 = vsel %vm704, %v649, 0
      %v751 = vsel %vm704, %v650, 0
      %v754 = vsel %vm704, %v651, 0
      %v757 = vsel %vm704, %v652, 0
      %v760 = vsel %vm704, %v653, 0
      %v763 = vsel %vm704, %v654, 0
      %v766 = vsel %vm704, %v655, 0
      %768 = vmatprep.subr.mxu0 0.0
      %769 = vmatpush1.msra.mxu0 %v669
      %770 = vmatprep.subr.mxu0 0.0
      %771 = vmatpush1.msra.mxu0 %v671
      %772 = vmatprep.subr.mxu0 0.0
      %773 = vmatpush1.msra.mxu0 %v673
      %774 = vmatprep.subr.mxu0 0.0
      %775 = vmatpush1.msra.mxu0 %v675
      %776 = vmatprep.subr.mxu0 0.0
      %777 = vmatpush1.msra.mxu0 %v677
      %778 = vmatprep.subr.mxu0 0.0
      %779 = vmatpush1.msra.mxu0 %v679
      %780 = vmatprep.subr.mxu0 0.0
      %781 = vmatpush1.msra.mxu0 %v681
      %782 = vmatprep.subr.mxu0 0.0
      %783 = vmatpush1.msra.mxu0 %v683
      %784 = vmatprep.subr.mxu0 0.0
      %785 = vmatpush1.msra.mxu0 %v685
      %786 = vmatprep.subr.mxu0 0.0
      %787 = vmatpush1.msra.mxu0 %v687
      %788 = vmatprep.subr.mxu0 0.0
      %789 = vmatpush1.msra.mxu0 %v689
      %790 = vmatprep.subr.mxu0 0.0
      %791 = vmatpush1.msra.mxu0 %v691
      %792 = vmatprep.subr.mxu0 0.0
      %793 = vmatpush1.msra.mxu0 0.0
      %794 = vmatprep.subr.mxu0 0.0
      %795 = vmatpush1.msra.mxu0 0.0
      %796 = vmatprep.subr.mxu0 0.0
      %797 = vmatpush1.msra.mxu0 0.0
      %798 = vmatprep.subr.mxu0 0.0
      %799 = vmatpush1.msra.mxu0 0.0
      %800 = vmatprep.subr.mxu0 0.0
      %801 = vmatpush1.msra.mxu0 0.0
      %802 = vmatprep.subr.mxu0 0.0
      %803 = vmatpush1.msra.mxu0 0.0
      %804 = vmatprep.subr.mxu0 0.0
      %805 = vmatpush1.msra.mxu0 0.0
      %806 = vmatprep.subr.mxu0 0.0
      %807 = vmatpush1.msra.mxu0 0.0
      %808 = vmatprep.subr.mxu0 0.0
      %809 = vmatpush1.msra.mxu0 0.0
      %810 = vmatprep.subr.mxu0 0.0
      %811 = vmatpush1.msra.mxu0 0.0
      %812 = vmatprep.subr.mxu0 0.0
      %813 = vmatpush1.msra.mxu0 0.0
      %814 = vmatprep.subr.mxu0 0.0
      %815 = vmatpush1.msra.mxu0 0.0
      %816 = vmatprep.subr.mxu0 0.0
      %817 = vmatpush1.msra.mxu0 0.0
      %818 = vmatprep.subr.mxu0 0.0
      %819 = vmatpush1.msra.mxu0 0.0
      %820 = vmatprep.subr.mxu0 0.0
      %821 = vmatpush1.msra.mxu0 0.0
      %822 = vmatprep.subr.mxu0 0.0
      %823 = vmatpush1.msra.mxu0 0.0
      %824 = vmatprep.subr.mxu0 0.0
      %825 = vmatpush1.msra.mxu0 0.0
      %826 = vmatprep.subr.mxu0 0.0
      %827 = vmatpush1.msra.mxu0 0.0
      %828 = vmatprep.subr.mxu0 0.0
      %829 = vmatpush1.msra.mxu0 0.0
      %830 = vmatprep.subr.mxu0 0.0
      %831 = vmatpush1.msra.mxu0 0.0
      %832 = vmatprep.mubr.f32.mxu0 0.0
      %833 = vmatmul.mubr.f32.gmra.mrb[0].mxu0 %v706
      %v834 = vpop.f32.mrb[0].mxu0
      %v835 = vadd.f32 0.0, %v834
      %v836 = vpop.f32.mrb[0].mxu0
      %837 = vmatprep.mubr.f32.mxu0 0.0
      %838 = vmatmul.mubr.f32.gmra.mrb[0].mxu0 %v709
      %v839 = vpop.f32.mrb[0].mxu0
      %v840 = vadd.f32 0.0, %v839
      %v841 = vpop.f32.mrb[0].mxu0
      %842 = vmatprep.mubr.f32.mxu0 0.0
      %843 = vmatmul.mubr.f32.gmra.mrb[0].mxu0 %v712
      %v844 = vpop.f32.mrb[0].mxu0
      %v845 = vadd.f32 0.0, %v844
      %v846 = vpop.f32.mrb[0].mxu0
      %847 = vmatprep.mubr.f32.mxu0 0.0
      %848 = vmatmul.mubr.f32.gmra.mrb[0].mxu0 %v715
      %v849 = vpop.f32.mrb[0].mxu0
      %v850 = vadd.f32 0.0, %v849
      %v851 = vpop.f32.mrb[0].mxu0
      %852 = vmatprep.mubr.f32.mxu0 0.0
      %853 = vmatmul.mubr.f32.gmra.mrb[0].mxu0 %v718
      %v854 = vpop.f32.mrb[0].mxu0
      %v855 = vadd.f32 0.0, %v854
      %v856 = vpop.f32.mrb[0].mxu0
      %857 = vmatprep.mubr.f32.mxu0 0.0
      %858 = vmatmul.mubr.f32.gmra.mrb[0].mxu0 %v721
      %v859 = vpop.f32.mrb[0].mxu0
      %v860 = vadd.f32 0.0, %v859
      %v861 = vpop.f32.mrb[0].mxu0
      %862 = vmatprep.mubr.f32.mxu0 0.0
      %863 = vmatmul.mubr.f32.gmra.mrb[0].mxu0 %v724
      %v864 = vpop.f32.mrb[0].mxu0
      %v865 = vadd.f32 0.0, %v864
      %v866 = vpop.f32.mrb[0].mxu0
      %867 = vmatprep.mubr.f32.mxu0 0.0
      %868 = vmatmul.mubr.f32.gmra.mrb[0].mxu0 %v727
      %v869 = vpop.f32.mrb[0].mxu0
      %v870 = vadd.f32 0.0, %v869
      %v871 = vpop.f32.mrb[0].mxu0
      %872 = vmatprep.mubr.f32.mxu0 0.0
      %873 = vmatmul.mubr.f32.gmra.mrb[0].mxu0 %v730
      %v874 = vpop.f32.mrb[0].mxu0
      %v875 = vadd.f32 0.0, %v874
      %v876 = vpop.f32.mrb[0].mxu0
      %877 = vmatprep.mubr.f32.mxu0 0.0
      %878 = vmatmul.mubr.f32.gmra.mrb[0].mxu0 %v733
      %v879 = vpop.f32.mrb[0].mxu0
      %v880 = vadd.f32 0.0, %v879
      %v881 = vpop.f32.mrb[0].mxu0
      %882 = vmatprep.mubr.f32.mxu0 0.0
      %883 = vmatmul.mubr.f32.gmra.mrb[0].mxu0 %v736
      %v884 = vpop.f32.mrb[0].mxu0
      %v885 = vadd.f32 0.0, %v884
      %v886 = vpop.f32.mrb[0].mxu0
      %887 = vmatprep.mubr.f32.mxu0 0.0
      %888 = vmatmul.mubr.f32.gmra.mrb[0].mxu0 %v739
      %v889 = vpop.f32.mrb[0].mxu0
      %v890 = vadd.f32 0.0, %v889
      %v891 = vpop.f32.mrb[0].mxu0
      %892 = vmatprep.mubr.f32.mxu0 0.0
      %893 = vmatmul.mubr.f32.gmra.mrb[0].mxu0 %v742
      %v894 = vpop.f32.mrb[0].mxu0
      %v895 = vadd.f32 0.0, %v894
      %v896 = vpop.f32.mrb[0].mxu0
      %897 = vmatprep.mubr.f32.mxu0 0.0
      %898 = vmatmul.mubr.f32.gmra.mrb[0].mxu0 %v745
      %v899 = vpop.f32.mrb[0].mxu0
      %v900 = vadd.f32 0.0, %v899
      %v901 = vpop.f32.mrb[0].mxu0
      %902 = vmatprep.mubr.f32.mxu0 0.0
      %903 = vmatmul.mubr.f32.gmra.mrb[0].mxu0 %v748
      %v904 = vpop.f32.mrb[0].mxu0
      %v905 = vadd.f32 0.0, %v904
      %v906 = vpop.f32.mrb[0].mxu0
      %907 = vmatprep.mubr.f32.mxu0 0.0
      %908 = vmatmul.mubr.f32.gmra.mrb[0].mxu0 %v751
      %v909 = vpop.f32.mrb[0].mxu0
      %v910 = vadd.f32 0.0, %v909
      %v911 = vpop.f32.mrb[0].mxu0
      %912 = vmatprep.mubr.f32.mxu0 0.0
      %913 = vmatmul.mubr.f32.gmra.mrb[0].mxu0 %v754
      %v914 = vpop.f32.mrb[0].mxu0
      %v915 = vadd.f32 0.0, %v914
      %v916 = vpop.f32.mrb[0].mxu0
      %917 = vmatprep.mubr.f32.mxu0 0.0
      %918 = vmatmul.mubr.f32.gmra.mrb[0].mxu0 %v757
      %v919 = vpop.f32.mrb[0].mxu0
      %v920 = vadd.f32 0.0, %v919
      %v921 = vpop.f32.mrb[0].mxu0
      %922 = vmatprep.mubr.f32.mxu0 0.0
      %923 = vmatmul.mubr.f32.gmra.mrb[0].mxu0 %v760
      %v924 = vpop.f32.mrb[0].mxu0
      %v925 = vadd.f32 0.0, %v924
      %v926 = vpop.f32.mrb[0].mxu0
      %927 = vmatprep.mubr.f32.mxu0 0.0
      %928 = vmatmul.mubr.f32.gmra.mrb[0].mxu0 %v763
      %v929 = vpop.f32.mrb[0].mxu0
      %v930 = vadd.f32 0.0, %v929
      %v931 = vpop.f32.mrb[0].mxu0
      %932 = vmatprep.mubr.f32.mxu0 0.0
      %933 = vmatmul.mubr.f32.gmra.mrb[0].mxu0 %v766
      %v934 = vpop.f32.mrb[0].mxu0
      %v935 = vadd.f32 0.0, %v934
      %v936 = vpop.f32.mrb[0].mxu0
      %937 = vdwg.mxu0
      %v939 = vsel %vm704, %v613, 0
      %v942 = vsel %vm704, %v614, 0
      %v945 = vsel %vm704, %v615, 0
      %v948 = vsel %vm704, %v616, 0
      %v951 = vsel %vm704, %v617, 0
      %v954 = vsel %vm704, %v618, 0
      %v957 = vsel %vm704, %v619, 0
      %v960 = vsel %vm704, %v620, 0
      %v963 = vsel %vm704, %v621, 0
      %v966 = vsel %vm704, %v622, 0
      %v969 = vsel %vm704, %v623, 0
      %v972 = vsel %vm704, %v624, 0
      %v975 = vsel %vm704, %v625, 0
      %v978 = vsel %vm704, %v626, 0
      %v981 = vsel %vm704, %v627, 0
      %v984 = vsel %vm704, %v628, 0
      %v987 = vsel %vm704, %v629, 0
      %v990 = vsel %vm704, %v630, 0
      %v993 = vsel %vm704, %v631, 0
      %v996 = vsel %vm704, %v632, 0
      %v999 = vsel %vm704, %v633, 0
      %1001 = vmatprep.subr.mxu0 0.0
      %1002 = vmatpush1.msra.mxu0 %v601
      %1003 = vmatprep.subr.mxu0 0.0
      %1004 = vmatpush1.msra.mxu0 %v602
      %1005 = vmatprep.subr.mxu0 0.0
      %1006 = vmatpush1.msra.mxu0 %v603
      %1007 = vmatprep.subr.mxu0 0.0
      %1008 = vmatpush1.msra.mxu0 %v604
      %1009 = vmatprep.subr.mxu0 0.0
      %1010 = vmatpush1.msra.mxu0 %v605
      %1011 = vmatprep.subr.mxu0 0.0
      %1012 = vmatpush1.msra.mxu0 %v606
      %1013 = vmatprep.subr.mxu0 0.0
      %1014 = vmatpush1.msra.mxu0 %v607
      %1015 = vmatprep.subr.mxu0 0.0
      %1016 = vmatpush1.msra.mxu0 %v608
      %1017 = vmatprep.subr.mxu0 0.0
      %1018 = vmatpush1.msra.mxu0 %v609
      %1019 = vmatprep.subr.mxu0 0.0
      %1020 = vmatpush1.msra.mxu0 %v610
      %1021 = vmatprep.subr.mxu0 0.0
      %1022 = vmatpush1.msra.mxu0 %v611
      %1023 = vmatprep.subr.mxu0 0.0
      %1024 = vmatpush1.msra.mxu0 %v612
      %1025 = vmatprep.subr.mxu0 0.0
      %1026 = vmatpush1.msra.mxu0 0.0
      %1027 = vmatprep.subr.mxu0 0.0
      %1028 = vmatpush1.msra.mxu0 0.0
      %1029 = vmatprep.subr.mxu0 0.0
      %1030 = vmatpush1.msra.mxu0 0.0
      %1031 = vmatprep.subr.mxu0 0.0
      %1032 = vmatpush1.msra.mxu0 0.0
      %1033 = vmatprep.subr.mxu0 0.0
      %1034 = vmatpush1.msra.mxu0 0.0
      %1035 = vmatprep.subr.mxu0 0.0
      %1036 = vmatpush1.msra.mxu0 0.0
      %1037 = vmatprep.subr.mxu0 0.0
      %1038 = vmatpush1.msra.mxu0 0.0
      %1039 = vmatprep.subr.mxu0 0.0
      %1040 = vmatpush1.msra.mxu0 0.0
      %1041 = vmatprep.subr.mxu0 0.0
      %1042 = vmatpush1.msra.mxu0 0.0
      %1043 = vmatprep.subr.mxu0 0.0
      %1044 = vmatpush1.msra.mxu0 0.0
      %1045 = vmatprep.subr.mxu0 0.0
      %1046 = vmatpush1.msra.mxu0 0.0
      %1047 = vmatprep.subr.mxu0 0.0
      %1048 = vmatpush1.msra.mxu0 0.0
      %1049 = vmatprep.subr.mxu0 0.0
      %1050 = vmatpush1.msra.mxu0 0.0
      %1051 = vmatprep.subr.mxu0 0.0
      %1052 = vmatpush1.msra.mxu0 0.0
      %1053 = vmatprep.subr.mxu0 0.0
      %1054 = vmatpush1.msra.mxu0 0.0
      %1055 = vmatprep.subr.mxu0 0.0
      %1056 = vmatpush1.msra.mxu0 0.0
      %1057 = vmatprep.subr.mxu0 0.0
      %1058 = vmatpush1.msra.mxu0 0.0
      %1059 = vmatprep.subr.mxu0 0.0
      %1060 = vmatpush1.msra.mxu0 0.0
      %1061 = vmatprep.subr.mxu0 0.0
      %1062 = vmatpush1.msra.mxu0 0.0
      %1063 = vmatprep.subr.mxu0 0.0
      %1064 = vmatpush1.msra.mxu0 0.0
      %1065 = vmatprep.mubr.f32.mxu0 0.0
      %1066 = vmatmul.mubr.f32.gmra.mrb[0].mxu0 %v939
      %v1067 = vpop.f32.mrb[0].mxu0
      %v1068 = vadd.f32 %v835, %v1067
      %v1069 = vpop.f32.mrb[0].mxu0
      %1070 = vmatprep.mubr.f32.mxu0 0.0
      %1071 = vmatmul.mubr.f32.gmra.mrb[0].mxu0 %v942
      %v1072 = vpop.f32.mrb[0].mxu0
      %v1073 = vadd.f32 %v840, %v1072
      %v1074 = vpop.f32.mrb[0].mxu0
      %1075 = vmatprep.mubr.f32.mxu0 0.0
      %1076 = vmatmul.mubr.f32.gmra.mrb[0].mxu0 %v945
      %v1077 = vpop.f32.mrb[0].mxu0
      %v1078 = vadd.f32 %v845, %v1077
      %v1079 = vpop.f32.mrb[0].mxu0
      %1080 = vmatprep.mubr.f32.mxu0 0.0
      %1081 = vmatmul.mubr.f32.gmra.mrb[0].mxu0 %v948
      %v1082 = vpop.f32.mrb[0].mxu0
      %v1083 = vadd.f32 %v850, %v1082
      %v1084 = vpop.f32.mrb[0].mxu0
      %1085 = vmatprep.mubr.f32.mxu0 0.0
      %1086 = vmatmul.mubr.f32.gmra.mrb[0].mxu0 %v951
      %v1087 = vpop.f32.mrb[0].mxu0
      %v1088 = vadd.f32 %v855, %v1087
      %v1089 = vpop.f32.mrb[0].mxu0
      %1090 = vmatprep.mubr.f32.mxu0 0.0
      %1091 = vmatmul.mubr.f32.gmra.mrb[0].mxu0 %v954
      %v1092 = vpop.f32.mrb[0].mxu0
      %v1093 = vadd.f32 %v860, %v1092
      %v1094 = vpop.f32.mrb[0].mxu0
      %1095 = vmatprep.mubr.f32.mxu0 0.0
      %1096 = vmatmul.mubr.f32.gmra.mrb[0].mxu0 %v957
      %v1097 = vpop.f32.mrb[0].mxu0
      %v1098 = vadd.f32 %v865, %v1097
      %v1099 = vpop.f32.mrb[0].mxu0
      %1100 = vmatprep.mubr.f32.mxu0 0.0
      %1101 = vmatmul.mubr.f32.gmra.mrb[0].mxu0 %v960
      %v1102 = vpop.f32.mrb[0].mxu0
      %v1103 = vadd.f32 %v870, %v1102
      %v1104 = vpop.f32.mrb[0].mxu0
      %1105 = vmatprep.mubr.f32.mxu0 0.0
      %1106 = vmatmul.mubr.f32.gmra.mrb[0].mxu0 %v963
      %v1107 = vpop.f32.mrb[0].mxu0
      %v1108 = vadd.f32 %v875, %v1107
      %v1109 = vpop.f32.mrb[0].mxu0
      %1110 = vmatprep.mubr.f32.mxu0 0.0
      %1111 = vmatmul.mubr.f32.gmra.mrb[0].mxu0 %v966
      %v1112 = vpop.f32.mrb[0].mxu0
      %v1113 = vadd.f32 %v880, %v1112
      %v1114 = vpop.f32.mrb[0].mxu0
      %1115 = vmatprep.mubr.f32.mxu0 0.0
      %1116 = vmatmul.mubr.f32.gmra.mrb[0].mxu0 %v969
      %v1117 = vpop.f32.mrb[0].mxu0
      %v1118 = vadd.f32 %v885, %v1117
      %v1119 = vpop.f32.mrb[0].mxu0
      %1120 = vmatprep.mubr.f32.mxu0 0.0
      %1121 = vmatmul.mubr.f32.gmra.mrb[0].mxu0 %v972
      %v1122 = vpop.f32.mrb[0].mxu0
      %v1123 = vadd.f32 %v890, %v1122
      %v1124 = vpop.f32.mrb[0].mxu0
      %1125 = vmatprep.mubr.f32.mxu0 0.0
      %1126 = vmatmul.mubr.f32.gmra.mrb[0].mxu0 %v975
      %v1127 = vpop.f32.mrb[0].mxu0
      %v1128 = vadd.f32 %v895, %v1127
      %v1129 = vpop.f32.mrb[0].mxu0
      %1130 = vmatprep.mubr.f32.mxu0 0.0
      %1131 = vmatmul.mubr.f32.gmra.mrb[0].mxu0 %v978
      %v1132 = vpop.f32.mrb[0].mxu0
      %v1133 = vadd.f32 %v900, %v1132
      %v1134 = vpop.f32.mrb[0].mxu0
      %1135 = vmatprep.mubr.f32.mxu0 0.0
      %1136 = vmatmul.mubr.f32.gmra.mrb[0].mxu0 %v981
      %v1137 = vpop.f32.mrb[0].mxu0
      %v1138 = vadd.f32 %v905, %v1137
      %v1139 = vpop.f32.mrb[0].mxu0
      %1140 = vmatprep.mubr.f32.mxu0 0.0
      %1141 = vmatmul.mubr.f32.gmra.mrb[0].mxu0 %v984
      %v1142 = vpop.f32.mrb[0].mxu0
      %v1143 = vadd.f32 %v910, %v1142
      %v1144 = vpop.f32.mrb[0].mxu0
      %1145 = vmatprep.mubr.f32.mxu0 0.0
      %1146 = vmatmul.mubr.f32.gmra.mrb[0].mxu0 %v987
      %v1147 = vpop.f32.mrb[0].mxu0
      %v1148 = vadd.f32 %v915, %v1147
      %v1149 = vpop.f32.mrb[0].mxu0
      %1150 = vmatprep.mubr.f32.mxu0 0.0
      %1151 = vmatmul.mubr.f32.gmra.mrb[0].mxu0 %v990
      %v1152 = vpop.f32.mrb[0].mxu0
      %v1153 = vadd.f32 %v920, %v1152
      %v1154 = vpop.f32.mrb[0].mxu0
      %1155 = vmatprep.mubr.f32.mxu0 0.0
      %1156 = vmatmul.mubr.f32.gmra.mrb[0].mxu0 %v993
      %v1157 = vpop.f32.mrb[0].mxu0
      %v1158 = vadd.f32 %v925, %v1157
      %v1159 = vpop.f32.mrb[0].mxu0
      %1160 = vmatprep.mubr.f32.mxu0 0.0
      %1161 = vmatmul.mubr.f32.gmra.mrb[0].mxu0 %v996
      %v1162 = vpop.f32.mrb[0].mxu0
      %v1163 = vadd.f32 %v930, %v1162
      %v1164 = vpop.f32.mrb[0].mxu0
      %1165 = vmatprep.mubr.f32.mxu0 0.0
      %1166 = vmatmul.mubr.f32.gmra.mrb[0].mxu0 %v999
      %v1167 = vpop.f32.mrb[0].mxu0
      %v1168 = vadd.f32 %v935, %v1167
      %v1169 = vpop.f32.mrb[0].mxu0
      %1170 = vdwg.mxu0
      %s1171 = scalar_lea.vmem %s1, 336
      %v1172 = vld [vmem:[%s1171] sm:$0xff]
      %v1173 = vld [vmem:[%s1171 + $0x8] sm:$0xff]
      %v1174 = vld [vmem:[%s1171 + $0x10] sm:$0xff]
      %v1175 = vld [vmem:[%s1171 + $0x18] sm:$0xff]
      %v1176 = vld [vmem:[%s1171 + $0x20] sm:$0xff]
      %v1177 = vld [vmem:[%s1171 + $0x28] sm:$0xff]
      %v1178 = vld [vmem:[%s1171 + $0x30] sm:$0xff]
      %v1179 = vld [vmem:[%s1171 + $0x38] sm:$0xff]
      %v1180 = vld [vmem:[%s1171 + $0x40] sm:$0xff]
      %v1181 = vld [vmem:[%s1171 + $0x48] sm:$0xff]
      %v1182 = vld [vmem:[%s1171 + $0x50] sm:$0xff]
      %v1183 = vld [vmem:[%s1171 + $0x58] sm:$0xff]
      %v1184 = vld [vmem:[%s1171 + $0x60] sm:$0xff]
      %v1185 = vld [vmem:[%s1171 + $0x68] sm:$0xff]
      %v1186 = vld [vmem:[%s1171 + $0x70] sm:$0xff]
      %v1187 = vld [vmem:[%s1171 + $0x78] sm:$0xff]
      %v1188 = vld [vmem:[%s1171 + $0x80] sm:$0xff]
      %v1189 = vld [vmem:[%s1171 + $0x88] sm:$0xff]
      %v1190 = vld [vmem:[%s1171 + $0x90] sm:$0xff]
      %v1191 = vld [vmem:[%s1171 + $0x98] sm:$0xff]
      %v1192 = vld [vmem:[%s1171 + $0xa0] sm:$0xff]
      %1193 = vrot.lane.b32.xlu0 %v601, 126
      %v1194 = vpop.permute.xlu0 %1193
      %1195 = vrot.lane.b32.xlu0 %v602, 126
      %v1196 = vpop.permute.xlu0 %1195
      %1197 = vrot.lane.b32.xlu0 %v603, 126
      %v1198 = vpop.permute.xlu0 %1197
      %1199 = vrot.lane.b32.xlu0 %v604, 126
      %v1200 = vpop.permute.xlu0 %1199
      %1201 = vrot.lane.b32.xlu0 %v605, 126
      %v1202 = vpop.permute.xlu0 %1201
      %1203 = vrot.lane.b32.xlu0 %v606, 126
      %v1204 = vpop.permute.xlu0 %1203
      %1205 = vrot.lane.b32.xlu0 %v607, 126
      %v1206 = vpop.permute.xlu0 %1205
      %1207 = vrot.lane.b32.xlu0 %v608, 126
      %v1208 = vpop.permute.xlu0 %1207
      %1209 = vrot.lane.b32.xlu0 %v609, 126
      %v1210 = vpop.permute.xlu0 %1209
      %1211 = vrot.lane.b32.xlu0 %v610, 126
      %v1212 = vpop.permute.xlu0 %1211
      %1213 = vrot.lane.b32.xlu0 %v611, 126
      %v1214 = vpop.permute.xlu0 %1213
      %1215 = vrot.lane.b32.xlu0 %v612, 126
      %v1216 = vpop.permute.xlu0 %1215
      %v1230 = vsel %vm704, %v1172, 0
      %v1233 = vsel %vm704, %v1173, 0
      %v1236 = vsel %vm704, %v1174, 0
      %v1239 = vsel %vm704, %v1175, 0
      %v1242 = vsel %vm704, %v1176, 0
      %v1245 = vsel %vm704, %v1177, 0
      %v1248 = vsel %vm704, %v1178, 0
      %v1251 = vsel %vm704, %v1179, 0
      %v1254 = vsel %vm704, %v1180, 0
      %v1257 = vsel %vm704, %v1181, 0
      %v1260 = vsel %vm704, %v1182, 0
      %v1263 = vsel %vm704, %v1183, 0
      %v1266 = vsel %vm704, %v1184, 0
      %v1269 = vsel %vm704, %v1185, 0
      %v1272 = vsel %vm704, %v1186, 0
      %v1275 = vsel %vm704, %v1187, 0
      %v1278 = vsel %vm704, %v1188, 0
      %v1281 = vsel %vm704, %v1189, 0
      %v1284 = vsel %vm704, %v1190, 0
      %v1287 = vsel %vm704, %v1191, 0
      %v1290 = vsel %vm704, %v1192, 0
      %1292 = vmatprep.subr.mxu0 0.0
      %1293 = vmatpush1.msra.mxu0 %v1194
      %1294 = vmatprep.subr.mxu0 0.0
      %1295 = vmatpush1.msra.mxu0 %v1196
      %1296 = vmatprep.subr.mxu0 0.0
      %1297 = vmatpush1.msra.mxu0 %v1198
      %1298 = vmatprep.subr.mxu0 0.0
      %1299 = vmatpush1.msra.mxu0 %v1200
      %1300 = vmatprep.subr.mxu0 0.0
      %1301 = vmatpush1.msra.mxu0 %v1202
      %1302 = vmatprep.subr.mxu0 0.0
      %1303 = vmatpush1.msra.mxu0 %v1204
      %1304 = vmatprep.subr.mxu0 0.0
      %1305 = vmatpush1.msra.mxu0 %v1206
      %1306 = vmatprep.subr.mxu0 0.0
      %1307 = vmatpush1.msra.mxu0 %v1208
      %1308 = vmatprep.subr.mxu0 0.0
      %1309 = vmatpush1.msra.mxu0 %v1210
      %1310 = vmatprep.subr.mxu0 0.0
      %1311 = vmatpush1.msra.mxu0 %v1212
      %1312 = vmatprep.subr.mxu0 0.0
      %1313 = vmatpush1.msra.mxu0 %v1214
      %1314 = vmatprep.subr.mxu0 0.0
      %1315 = vmatpush1.msra.mxu0 %v1216
      %1316 = vmatprep.subr.mxu0 0.0
      %1317 = vmatpush1.msra.mxu0 0.0
      %1318 = vmatprep.subr.mxu0 0.0
      %1319 = vmatpush1.msra.mxu0 0.0
      %1320 = vmatprep.subr.mxu0 0.0
      %1321 = vmatpush1.msra.mxu0 0.0
      %1322 = vmatprep.subr.mxu0 0.0
      %1323 = vmatpush1.msra.mxu0 0.0
      %1324 = vmatprep.subr.mxu0 0.0
      %1325 = vmatpush1.msra.mxu0 0.0
      %1326 = vmatprep.subr.mxu0 0.0
      %1327 = vmatpush1.msra.mxu0 0.0
      %1328 = vmatprep.subr.mxu0 0.0
      %1329 = vmatpush1.msra.mxu0 0.0
      %1330 = vmatprep.subr.mxu0 0.0
      %1331 = vmatpush1.msra.mxu0 0.0
      %1332 = vmatprep.subr.mxu0 0.0
      %1333 = vmatpush1.msra.mxu0 0.0
      %1334 = vmatprep.subr.mxu0 0.0
      %1335 = vmatpush1.msra.mxu0 0.0
      %1336 = vmatprep.subr.mxu0 0.0
      %1337 = vmatpush1.msra.mxu0 0.0
      %1338 = vmatprep.subr.mxu0 0.0
      %1339 = vmatpush1.msra.mxu0 0.0
      %1340 = vmatprep.subr.mxu0 0.0
      %1341 = vmatpush1.msra.mxu0 0.0
      %1342 = vmatprep.subr.mxu0 0.0
      %1343 = vmatpush1.msra.mxu0 0.0
      %1344 = vmatprep.subr.mxu0 0.0
      %1345 = vmatpush1.msra.mxu0 0.0
      %1346 = vmatprep.subr.mxu0 0.0
      %1347 = vmatpush1.msra.mxu0 0.0
      %1348 = vmatprep.subr.mxu0 0.0
      %1349 = vmatpush1.msra.mxu0 0.0
      %1350 = vmatprep.subr.mxu0 0.0
      %1351 = vmatpush1.msra.mxu0 0.0
      %1352 = vmatprep.subr.mxu0 0.0
      %1353 = vmatpush1.msra.mxu0 0.0
      %1354 = vmatprep.subr.mxu0 0.0
      %1355 = vmatpush1.msra.mxu0 0.0
      %1356 = vmatprep.mubr.f32.mxu0 0.0
      %1357 = vmatmul.mubr.f32.gmra.mrb[0].mxu0 %v1230
      %v1358 = vpop.f32.mrb[0].mxu0
      %v1359 = vadd.f32 0.0, %v1358
      %v1360 = vpop.f32.mrb[0].mxu0
      %1361 = vmatprep.mubr.f32.mxu0 0.0
      %1362 = vmatmul.mubr.f32.gmra.mrb[0].mxu0 %v1233
      %v1363 = vpop.f32.mrb[0].mxu0
      %v1364 = vadd.f32 0.0, %v1363
      %v1365 = vpop.f32.mrb[0].mxu0
      %1366 = vmatprep.mubr.f32.mxu0 0.0
      %1367 = vmatmul.mubr.f32.gmra.mrb[0].mxu0 %v1236
      %v1368 = vpop.f32.mrb[0].mxu0
      %v1369 = vadd.f32 0.0, %v1368
      %v1370 = vpop.f32.mrb[0].mxu0
      %1371 = vmatprep.mubr.f32.mxu0 0.0
      %1372 = vmatmul.mubr.f32.gmra.mrb[0].mxu0 %v1239
      %v1373 = vpop.f32.mrb[0].mxu0
      %v1374 = vadd.f32 0.0, %v1373
      %v1375 = vpop.f32.mrb[0].mxu0
      %1376 = vmatprep.mubr.f32.mxu0 0.0
      %1377 = vmatmul.mubr.f32.gmra.mrb[0].mxu0 %v1242
      %v1378 = vpop.f32.mrb[0].mxu0
      %v1379 = vadd.f32 0.0, %v1378
      %v1380 = vpop.f32.mrb[0].mxu0
      %1381 = vmatprep.mubr.f32.mxu0 0.0
      %1382 = vmatmul.mubr.f32.gmra.mrb[0].mxu0 %v1245
      %v1383 = vpop.f32.mrb[0].mxu0
      %v1384 = vadd.f32 0.0, %v1383
      %v1385 = vpop.f32.mrb[0].mxu0
      %1386 = vmatprep.mubr.f32.mxu0 0.0
      %1387 = vmatmul.mubr.f32.gmra.mrb[0].mxu0 %v1248
      %v1388 = vpop.f32.mrb[0].mxu0
      %v1389 = vadd.f32 0.0, %v1388
      %v1390 = vpop.f32.mrb[0].mxu0
      %1391 = vmatprep.mubr.f32.mxu0 0.0
      %1392 = vmatmul.mubr.f32.gmra.mrb[0].mxu0 %v1251
      %v1393 = vpop.f32.mrb[0].mxu0
      %v1394 = vadd.f32 0.0, %v1393
      %v1395 = vpop.f32.mrb[0].mxu0
      %1396 = vmatprep.mubr.f32.mxu0 0.0
      %1397 = vmatmul.mubr.f32.gmra.mrb[0].mxu0 %v1254
      %v1398 = vpop.f32.mrb[0].mxu0
      %v1399 = vadd.f32 0.0, %v1398
      %v1400 = vpop.f32.mrb[0].mxu0
      %1401 = vmatprep.mubr.f32.mxu0 0.0
      %1402 = vmatmul.mubr.f32.gmra.mrb[0].mxu0 %v1257
      %v1403 = vpop.f32.mrb[0].mxu0
      %v1404 = vadd.f32 0.0, %v1403
      %v1405 = vpop.f32.mrb[0].mxu0
      %1406 = vmatprep.mubr.f32.mxu0 0.0
      %1407 = vmatmul.mubr.f32.gmra.mrb[0].mxu0 %v1260
      %v1408 = vpop.f32.mrb[0].mxu0
      %v1409 = vadd.f32 0.0, %v1408
      %v1410 = vpop.f32.mrb[0].mxu0
      %1411 = vmatprep.mubr.f32.mxu0 0.0
      %1412 = vmatmul.mubr.f32.gmra.mrb[0].mxu0 %v1263
      %v1413 = vpop.f32.mrb[0].mxu0
      %v1414 = vadd.f32 0.0, %v1413
      %v1415 = vpop.f32.mrb[0].mxu0
      %1416 = vmatprep.mubr.f32.mxu0 0.0
      %1417 = vmatmul.mubr.f32.gmra.mrb[0].mxu0 %v1266
      %v1418 = vpop.f32.mrb[0].mxu0
      %v1419 = vadd.f32 0.0, %v1418
      %v1420 = vpop.f32.mrb[0].mxu0
      %1421 = vmatprep.mubr.f32.mxu0 0.0
      %1422 = vmatmul.mubr.f32.gmra.mrb[0].mxu0 %v1269
      %v1423 = vpop.f32.mrb[0].mxu0
      %v1424 = vadd.f32 0.0, %v1423
      %v1425 = vpop.f32.mrb[0].mxu0
      %1426 = vmatprep.mubr.f32.mxu0 0.0
      %1427 = vmatmul.mubr.f32.gmra.mrb[0].mxu0 %v1272
      %v1428 = vpop.f32.mrb[0].mxu0
      %v1429 = vadd.f32 0.0, %v1428
      %v1430 = vpop.f32.mrb[0].mxu0
      %1431 = vmatprep.mubr.f32.mxu0 0.0
      %1432 = vmatmul.mubr.f32.gmra.mrb[0].mxu0 %v1275
      %v1433 = vpop.f32.mrb[0].mxu0
      %v1434 = vadd.f32 0.0, %v1433
      %v1435 = vpop.f32.mrb[0].mxu0
      %1436 = vmatprep.mubr.f32.mxu0 0.0
      %1437 = vmatmul.mubr.f32.gmra.mrb[0].mxu0 %v1278
      %v1438 = vpop.f32.mrb[0].mxu0
      %v1439 = vadd.f32 0.0, %v1438
      %v1440 = vpop.f32.mrb[0].mxu0
      %1441 = vmatprep.mubr.f32.mxu0 0.0
      %1442 = vmatmul.mubr.f32.gmra.mrb[0].mxu0 %v1281
      %v1443 = vpop.f32.mrb[0].mxu0
      %v1444 = vadd.f32 0.0, %v1443
      %v1445 = vpop.f32.mrb[0].mxu0
      %1446 = vmatprep.mubr.f32.mxu0 0.0
      %1447 = vmatmul.mubr.f32.gmra.mrb[0].mxu0 %v1284
      %v1448 = vpop.f32.mrb[0].mxu0
      %v1449 = vadd.f32 0.0, %v1448
      %v1450 = vpop.f32.mrb[0].mxu0
      %1451 = vmatprep.mubr.f32.mxu0 0.0
      %1452 = vmatmul.mubr.f32.gmra.mrb[0].mxu0 %v1287
      %v1453 = vpop.f32.mrb[0].mxu0
      %v1454 = vadd.f32 0.0, %v1453
      %v1455 = vpop.f32.mrb[0].mxu0
      %1456 = vmatprep.mubr.f32.mxu0 0.0
      %1457 = vmatmul.mubr.f32.gmra.mrb[0].mxu0 %v1290
      %v1458 = vpop.f32.mrb[0].mxu0
      %v1459 = vadd.f32 0.0, %v1458
      %v1460 = vpop.f32.mrb[0].mxu0
      %1461 = vdwg.mxu0
      %v1462 = vadd.f32 %v1068, %v1359
      %v1463 = vadd.f32 %v1073, %v1364
      %v1464 = vadd.f32 %v1078, %v1369
      %v1465 = vadd.f32 %v1083, %v1374
      %v1466 = vadd.f32 %v1088, %v1379
      %v1467 = vadd.f32 %v1093, %v1384
      %v1468 = vadd.f32 %v1098, %v1389
      %v1469 = vadd.f32 %v1103, %v1394
      %v1470 = vadd.f32 %v1108, %v1399
      %v1471 = vadd.f32 %v1113, %v1404
      %v1472 = vadd.f32 %v1118, %v1409
      %v1473 = vadd.f32 %v1123, %v1414
      %v1474 = vadd.f32 %v1128, %v1419
      %v1475 = vadd.f32 %v1133, %v1424
      %v1476 = vadd.f32 %v1138, %v1429
      %v1477 = vadd.f32 %v1143, %v1434
      %v1478 = vadd.f32 %v1148, %v1439
      %v1479 = vadd.f32 %v1153, %v1444
      %v1480 = vadd.f32 %v1158, %v1449
      %v1481 = vadd.f32 %v1163, %v1454
      %v1482 = vadd.f32 %v1168, %v1459
      %s1483 = scalar_lea.vmem %s1, 504
      %v1484 = vld [vmem:[%s1483] sm:$0xff]
      %v1485 = vld [vmem:[%s1483 + $0x8] sm:$0xff]
      %v1486 = vld [vmem:[%s1483 + $0x10] sm:$0xff]
      %v1487 = vld [vmem:[%s1483 + $0x18] sm:$0xff]
      %v1488 = vld [vmem:[%s1483 + $0x20] sm:$0xff]
      %v1489 = vld [vmem:[%s1483 + $0x28] sm:$0xff]
      %v1490 = vld [vmem:[%s1483 + $0x30] sm:$0xff]
      %v1491 = vld [vmem:[%s1483 + $0x38] sm:$0xff]
      %v1492 = vld [vmem:[%s1483 + $0x40] sm:$0xff]
      %v1493 = vld [vmem:[%s1483 + $0x48] sm:$0xff]
      %v1494 = vld [vmem:[%s1483 + $0x50] sm:$0xff]
      %v1495 = vld [vmem:[%s1483 + $0x58] sm:$0xff]
      %v1496 = vld [vmem:[%s1483 + $0x60] sm:$0xff]
      %v1497 = vld [vmem:[%s1483 + $0x68] sm:$0xff]
      %v1498 = vld [vmem:[%s1483 + $0x70] sm:$0xff]
      %v1499 = vld [vmem:[%s1483 + $0x78] sm:$0xff]
      %v1500 = vld [vmem:[%s1483 + $0x80] sm:$0xff]
      %v1501 = vld [vmem:[%s1483 + $0x88] sm:$0xff]
      %v1502 = vld [vmem:[%s1483 + $0x90] sm:$0xff]
      %v1503 = vld [vmem:[%s1483 + $0x98] sm:$0xff]
      %v1504 = vld [vmem:[%s1483 + $0xa0] sm:$0xff]
      %1505 = vrot.lane.b32.xlu0 %v601, 125
      %v1506 = vpop.permute.xlu0 %1505
      %1507 = vrot.lane.b32.xlu0 %v602, 125
      %v1508 = vpop.permute.xlu0 %1507
      %1509 = vrot.lane.b32.xlu0 %v603, 125
      %v1510 = vpop.permute.xlu0 %1509
      %1511 = vrot.lane.b32.xlu0 %v604, 125
      %v1512 = vpop.permute.xlu0 %1511
      %1513 = vrot.lane.b32.xlu0 %v605, 125
      %v1514 = vpop.permute.xlu0 %1513
      %1515 = vrot.lane.b32.xlu0 %v606, 125
      %v1516 = vpop.permute.xlu0 %1515
      %1517 = vrot.lane.b32.xlu0 %v607, 125
      %v1518 = vpop.permute.xlu0 %1517
      %1519 = vrot.lane.b32.xlu0 %v608, 125
      %v1520 = vpop.permute.xlu0 %1519
      %1521 = vrot.lane.b32.xlu0 %v609, 125
      %v1522 = vpop.permute.xlu0 %1521
      %1523 = vrot.lane.b32.xlu0 %v610, 125
      %v1524 = vpop.permute.xlu0 %1523
      %1525 = vrot.lane.b32.xlu0 %v611, 125
      %v1526 = vpop.permute.xlu0 %1525
      %1527 = vrot.lane.b32.xlu0 %v612, 125
      %v1528 = vpop.permute.xlu0 %1527
      %v1542 = vsel %vm704, %v1484, 0
      %v1545 = vsel %vm704, %v1485, 0
      %v1548 = vsel %vm704, %v1486, 0
      %v1551 = vsel %vm704, %v1487, 0
      %v1554 = vsel %vm704, %v1488, 0
      %v1557 = vsel %vm704, %v1489, 0
      %v1560 = vsel %vm704, %v1490, 0
      %v1563 = vsel %vm704, %v1491, 0
      %v1566 = vsel %vm704, %v1492, 0
      %v1569 = vsel %vm704, %v1493, 0
      %v1572 = vsel %vm704, %v1494, 0
      %v1575 = vsel %vm704, %v1495, 0
      %v1578 = vsel %vm704, %v1496, 0
      %v1581 = vsel %vm704, %v1497, 0
      %v1584 = vsel %vm704, %v1498, 0
      %v1587 = vsel %vm704, %v1499, 0
      %v1590 = vsel %vm704, %v1500, 0
      %v1593 = vsel %vm704, %v1501, 0
      %v1596 = vsel %vm704, %v1502, 0
      %v1599 = vsel %vm704, %v1503, 0
      %v1602 = vsel %vm704, %v1504, 0
      %1604 = vmatprep.subr.mxu0 0.0
      %1605 = vmatpush1.msra.mxu0 %v1506
      %1606 = vmatprep.subr.mxu0 0.0
      %1607 = vmatpush1.msra.mxu0 %v1508
      %1608 = vmatprep.subr.mxu0 0.0
      %1609 = vmatpush1.msra.mxu0 %v1510
      %1610 = vmatprep.subr.mxu0 0.0
      %1611 = vmatpush1.msra.mxu0 %v1512
      %1612 = vmatprep.subr.mxu0 0.0
      %1613 = vmatpush1.msra.mxu0 %v1514
      %1614 = vmatprep.subr.mxu0 0.0
      %1615 = vmatpush1.msra.mxu0 %v1516
      %1616 = vmatprep.subr.mxu0 0.0
      %1617 = vmatpush1.msra.mxu0 %v1518
      %1618 = vmatprep.subr.mxu0 0.0
      %1619 = vmatpush1.msra.mxu0 %v1520
      %1620 = vmatprep.subr.mxu0 0.0
      %1621 = vmatpush1.msra.mxu0 %v1522
      %1622 = vmatprep.subr.mxu0 0.0
      %1623 = vmatpush1.msra.mxu0 %v1524
      %1624 = vmatprep.subr.mxu0 0.0
      %1625 = vmatpush1.msra.mxu0 %v1526
      %1626 = vmatprep.subr.mxu0 0.0
      %1627 = vmatpush1.msra.mxu0 %v1528
      %1628 = vmatprep.subr.mxu0 0.0
      %1629 = vmatpush1.msra.mxu0 0.0
      %1630 = vmatprep.subr.mxu0 0.0
      %1631 = vmatpush1.msra.mxu0 0.0
      %1632 = vmatprep.subr.mxu0 0.0
      %1633 = vmatpush1.msra.mxu0 0.0
      %1634 = vmatprep.subr.mxu0 0.0
      %1635 = vmatpush1.msra.mxu0 0.0
      %1636 = vmatprep.subr.mxu0 0.0
      %1637 = vmatpush1.msra.mxu0 0.0
      %1638 = vmatprep.subr.mxu0 0.0
      %1639 = vmatpush1.msra.mxu0 0.0
      %1640 = vmatprep.subr.mxu0 0.0
      %1641 = vmatpush1.msra.mxu0 0.0
      %1642 = vmatprep.subr.mxu0 0.0
      %1643 = vmatpush1.msra.mxu0 0.0
      %1644 = vmatprep.subr.mxu0 0.0
      %1645 = vmatpush1.msra.mxu0 0.0
      %1646 = vmatprep.subr.mxu0 0.0
      %1647 = vmatpush1.msra.mxu0 0.0
      %1648 = vmatprep.subr.mxu0 0.0
      %1649 = vmatpush1.msra.mxu0 0.0
      %1650 = vmatprep.subr.mxu0 0.0
      %1651 = vmatpush1.msra.mxu0 0.0
      %1652 = vmatprep.subr.mxu0 0.0
      %1653 = vmatpush1.msra.mxu0 0.0
      %1654 = vmatprep.subr.mxu0 0.0
      %1655 = vmatpush1.msra.mxu0 0.0
      %1656 = vmatprep.subr.mxu0 0.0
      %1657 = vmatpush1.msra.mxu0 0.0
      %1658 = vmatprep.subr.mxu0 0.0
      %1659 = vmatpush1.msra.mxu0 0.0
      %1660 = vmatprep.subr.mxu0 0.0
      %1661 = vmatpush1.msra.mxu0 0.0
      %1662 = vmatprep.subr.mxu0 0.0
      %1663 = vmatpush1.msra.mxu0 0.0
      %1664 = vmatprep.subr.mxu0 0.0
      %1665 = vmatpush1.msra.mxu0 0.0
      %1666 = vmatprep.subr.mxu0 0.0
      %1667 = vmatpush1.msra.mxu0 0.0
      %1668 = vmatprep.mubr.f32.mxu0 0.0
      %1669 = vmatmul.mubr.f32.gmra.mrb[0].mxu0 %v1542
      %v1670 = vpop.f32.mrb[0].mxu0
      %v1671 = vadd.f32 0.0, %v1670
      %v1672 = vpop.f32.mrb[0].mxu0
      %1673 = vmatprep.mubr.f32.mxu0 0.0
      %1674 = vmatmul.mubr.f32.gmra.mrb[0].mxu0 %v1545
      %v1675 = vpop.f32.mrb[0].mxu0
      %v1676 = vadd.f32 0.0, %v1675
      %v1677 = vpop.f32.mrb[0].mxu0
      %1678 = vmatprep.mubr.f32.mxu0 0.0
      %1679 = vmatmul.mubr.f32.gmra.mrb[0].mxu0 %v1548
      %v1680 = vpop.f32.mrb[0].mxu0
      %v1681 = vadd.f32 0.0, %v1680
      %v1682 = vpop.f32.mrb[0].mxu0
      %1683 = vmatprep.mubr.f32.mxu0 0.0
      %1684 = vmatmul.mubr.f32.gmra.mrb[0].mxu0 %v1551
      %v1685 = vpop.f32.mrb[0].mxu0
      %v1686 = vadd.f32 0.0, %v1685
      %v1687 = vpop.f32.mrb[0].mxu0
      %1688 = vmatprep.mubr.f32.mxu0 0.0
      %1689 = vmatmul.mubr.f32.gmra.mrb[0].mxu0 %v1554
      %v1690 = vpop.f32.mrb[0].mxu0
      %v1691 = vadd.f32 0.0, %v1690
      %v1692 = vpop.f32.mrb[0].mxu0
      %1693 = vmatprep.mubr.f32.mxu0 0.0
      %1694 = vmatmul.mubr.f32.gmra.mrb[0].mxu0 %v1557
      %v1695 = vpop.f32.mrb[0].mxu0
      %v1696 = vadd.f32 0.0, %v1695
      %v1697 = vpop.f32.mrb[0].mxu0
      %1698 = vmatprep.mubr.f32.mxu0 0.0
      %1699 = vmatmul.mubr.f32.gmra.mrb[0].mxu0 %v1560
      %v1700 = vpop.f32.mrb[0].mxu0
      %v1701 = vadd.f32 0.0, %v1700
      %v1702 = vpop.f32.mrb[0].mxu0
      %1703 = vmatprep.mubr.f32.mxu0 0.0
      %1704 = vmatmul.mubr.f32.gmra.mrb[0].mxu0 %v1563
      %v1705 = vpop.f32.mrb[0].mxu0
      %v1706 = vadd.f32 0.0, %v1705
      %v1707 = vpop.f32.mrb[0].mxu0
      %1708 = vmatprep.mubr.f32.mxu0 0.0
      %1709 = vmatmul.mubr.f32.gmra.mrb[0].mxu0 %v1566
      %v1710 = vpop.f32.mrb[0].mxu0
      %v1711 = vadd.f32 0.0, %v1710
      %v1712 = vpop.f32.mrb[0].mxu0
      %1713 = vmatprep.mubr.f32.mxu0 0.0
      %1714 = vmatmul.mubr.f32.gmra.mrb[0].mxu0 %v1569
      %v1715 = vpop.f32.mrb[0].mxu0
      %v1716 = vadd.f32 0.0, %v1715
      %v1717 = vpop.f32.mrb[0].mxu0
      %1718 = vmatprep.mubr.f32.mxu0 0.0
      %1719 = vmatmul.mubr.f32.gmra.mrb[0].mxu0 %v1572
      %v1720 = vpop.f32.mrb[0].mxu0
      %v1721 = vadd.f32 0.0, %v1720
      %v1722 = vpop.f32.mrb[0].mxu0
      %1723 = vmatprep.mubr.f32.mxu0 0.0
      %1724 = vmatmul.mubr.f32.gmra.mrb[0].mxu0 %v1575
      %v1725 = vpop.f32.mrb[0].mxu0
      %v1726 = vadd.f32 0.0, %v1725
      %v1727 = vpop.f32.mrb[0].mxu0
      %1728 = vmatprep.mubr.f32.mxu0 0.0
      %1729 = vmatmul.mubr.f32.gmra.mrb[0].mxu0 %v1578
      %v1730 = vpop.f32.mrb[0].mxu0
      %v1731 = vadd.f32 0.0, %v1730
      %v1732 = vpop.f32.mrb[0].mxu0
      %1733 = vmatprep.mubr.f32.mxu0 0.0
      %1734 = vmatmul.mubr.f32.gmra.mrb[0].mxu0 %v1581
      %v1735 = vpop.f32.mrb[0].mxu0
      %v1736 = vadd.f32 0.0, %v1735
      %v1737 = vpop.f32.mrb[0].mxu0
      %1738 = vmatprep.mubr.f32.mxu0 0.0
      %1739 = vmatmul.mubr.f32.gmra.mrb[0].mxu0 %v1584
      %v1740 = vpop.f32.mrb[0].mxu0
      %v1741 = vadd.f32 0.0, %v1740
      %v1742 = vpop.f32.mrb[0].mxu0
      %1743 = vmatprep.mubr.f32.mxu0 0.0
      %1744 = vmatmul.mubr.f32.gmra.mrb[0].mxu0 %v1587
      %v1745 = vpop.f32.mrb[0].mxu0
      %v1746 = vadd.f32 0.0, %v1745
      %v1747 = vpop.f32.mrb[0].mxu0
      %1748 = vmatprep.mubr.f32.mxu0 0.0
      %1749 = vmatmul.mubr.f32.gmra.mrb[0].mxu0 %v1590
      %v1750 = vpop.f32.mrb[0].mxu0
      %v1751 = vadd.f32 0.0, %v1750
      %v1752 = vpop.f32.mrb[0].mxu0
      %1753 = vmatprep.mubr.f32.mxu0 0.0
      %1754 = vmatmul.mubr.f32.gmra.mrb[0].mxu0 %v1593
      %v1755 = vpop.f32.mrb[0].mxu0
      %v1756 = vadd.f32 0.0, %v1755
      %v1757 = vpop.f32.mrb[0].mxu0
      %1758 = vmatprep.mubr.f32.mxu0 0.0
      %1759 = vmatmul.mubr.f32.gmra.mrb[0].mxu0 %v1596
      %v1760 = vpop.f32.mrb[0].mxu0
      %v1761 = vadd.f32 0.0, %v1760
      %v1762 = vpop.f32.mrb[0].mxu0
      %1763 = vmatprep.mubr.f32.mxu0 0.0
      %1764 = vmatmul.mubr.f32.gmra.mrb[0].mxu0 %v1599
      %v1765 = vpop.f32.mrb[0].mxu0
      %v1766 = vadd.f32 0.0, %v1765
      %v1767 = vpop.f32.mrb[0].mxu0
      %1768 = vmatprep.mubr.f32.mxu0 0.0
      %1769 = vmatmul.mubr.f32.gmra.mrb[0].mxu0 %v1602
      %v1770 = vpop.f32.mrb[0].mxu0
      %v1771 = vadd.f32 0.0, %v1770
      %v1772 = vpop.f32.mrb[0].mxu0
      %1773 = vdwg.mxu0
      %v1774 = vadd.f32 %v1462, %v1671
      %v1775 = vadd.f32 %v1463, %v1676
      %v1776 = vadd.f32 %v1464, %v1681
      %v1777 = vadd.f32 %v1465, %v1686
      %v1778 = vadd.f32 %v1466, %v1691
      %v1779 = vadd.f32 %v1467, %v1696
      %v1780 = vadd.f32 %v1468, %v1701
      %v1781 = vadd.f32 %v1469, %v1706
      %v1782 = vadd.f32 %v1470, %v1711
      %v1783 = vadd.f32 %v1471, %v1716
      %v1784 = vadd.f32 %v1472, %v1721
      %v1785 = vadd.f32 %v1473, %v1726
      %v1786 = vadd.f32 %v1474, %v1731
      %v1787 = vadd.f32 %v1475, %v1736
      %v1788 = vadd.f32 %v1476, %v1741
      %v1789 = vadd.f32 %v1477, %v1746
      %v1790 = vadd.f32 %v1478, %v1751
      %v1791 = vadd.f32 %v1479, %v1756
      %v1792 = vadd.f32 %v1480, %v1761
      %v1793 = vadd.f32 %v1481, %v1766
      %v1794 = vadd.f32 %v1482, %v1771
      %s1795 = scalar_lea.vmem %s1, 672
      %v1796 = vld [vmem:[%s1795] sm:$0xff]
      %v1797 = vld [vmem:[%s1795 + $0x8] sm:$0xff]
      %v1798 = vld [vmem:[%s1795 + $0x10] sm:$0xff]
      %v1799 = vld [vmem:[%s1795 + $0x18] sm:$0xff]
      %v1800 = vld [vmem:[%s1795 + $0x20] sm:$0xff]
      %v1801 = vld [vmem:[%s1795 + $0x28] sm:$0xff]
      %v1802 = vld [vmem:[%s1795 + $0x30] sm:$0xff]
      %v1803 = vld [vmem:[%s1795 + $0x38] sm:$0xff]
      %v1804 = vld [vmem:[%s1795 + $0x40] sm:$0xff]
      %v1805 = vld [vmem:[%s1795 + $0x48] sm:$0xff]
      %v1806 = vld [vmem:[%s1795 + $0x50] sm:$0xff]
      %v1807 = vld [vmem:[%s1795 + $0x58] sm:$0xff]
      %v1808 = vld [vmem:[%s1795 + $0x60] sm:$0xff]
      %v1809 = vld [vmem:[%s1795 + $0x68] sm:$0xff]
      %v1810 = vld [vmem:[%s1795 + $0x70] sm:$0xff]
      %v1811 = vld [vmem:[%s1795 + $0x78] sm:$0xff]
      %v1812 = vld [vmem:[%s1795 + $0x80] sm:$0xff]
      %v1813 = vld [vmem:[%s1795 + $0x88] sm:$0xff]
      %v1814 = vld [vmem:[%s1795 + $0x90] sm:$0xff]
      %v1815 = vld [vmem:[%s1795 + $0x98] sm:$0xff]
      %v1816 = vld [vmem:[%s1795 + $0xa0] sm:$0xff]
      %1817 = vrot.lane.b32.xlu0 %v601, 124
      %v1818 = vpop.permute.xlu0 %1817
      %1819 = vrot.lane.b32.xlu0 %v602, 124
      %v1820 = vpop.permute.xlu0 %1819
      %1821 = vrot.lane.b32.xlu0 %v603, 124
      %v1822 = vpop.permute.xlu0 %1821
      %1823 = vrot.lane.b32.xlu0 %v604, 124
      %v1824 = vpop.permute.xlu0 %1823
      %1825 = vrot.lane.b32.xlu0 %v605, 124
      %v1826 = vpop.permute.xlu0 %1825
      %1827 = vrot.lane.b32.xlu0 %v606, 124
      %v1828 = vpop.permute.xlu0 %1827
      %1829 = vrot.lane.b32.xlu0 %v607, 124
      %v1830 = vpop.permute.xlu0 %1829
      %1831 = vrot.lane.b32.xlu0 %v608, 124
      %v1832 = vpop.permute.xlu0 %1831
      %1833 = vrot.lane.b32.xlu0 %v609, 124
      %v1834 = vpop.permute.xlu0 %1833
      %1835 = vrot.lane.b32.xlu0 %v610, 124
      %v1836 = vpop.permute.xlu0 %1835
      %1837 = vrot.lane.b32.xlu0 %v611, 124
      %v1838 = vpop.permute.xlu0 %1837
      %1839 = vrot.lane.b32.xlu0 %v612, 124
      %v1840 = vpop.permute.xlu0 %1839
      %v1854 = vsel %vm704, %v1796, 0
      %v1857 = vsel %vm704, %v1797, 0
      %v1860 = vsel %vm704, %v1798, 0
      %v1863 = vsel %vm704, %v1799, 0
      %v1866 = vsel %vm704, %v1800, 0
      %v1869 = vsel %vm704, %v1801, 0
      %v1872 = vsel %vm704, %v1802, 0
      %v1875 = vsel %vm704, %v1803, 0
      %v1878 = vsel %vm704, %v1804, 0
      %v1881 = vsel %vm704, %v1805, 0
      %v1884 = vsel %vm704, %v1806, 0
      %v1887 = vsel %vm704, %v1807, 0
      %v1890 = vsel %vm704, %v1808, 0
      %v1893 = vsel %vm704, %v1809, 0
      %v1896 = vsel %vm704, %v1810, 0
      %v1899 = vsel %vm704, %v1811, 0
      %v1902 = vsel %vm704, %v1812, 0
      %v1905 = vsel %vm704, %v1813, 0
      %v1908 = vsel %vm704, %v1814, 0
      %v1911 = vsel %vm704, %v1815, 0
      %v1914 = vsel %vm704, %v1816, 0
      %1916 = vmatprep.subr.mxu0 0.0
      %1917 = vmatpush1.msra.mxu0 %v1818
      %1918 = vmatprep.subr.mxu0 0.0
      %1919 = vmatpush1.msra.mxu0 %v1820
      %1920 = vmatprep.subr.mxu0 0.0
      %1921 = vmatpush1.msra.mxu0 %v1822
      %1922 = vmatprep.subr.mxu0 0.0
      %1923 = vmatpush1.msra.mxu0 %v1824
      %1924 = vmatprep.subr.mxu0 0.0
      %1925 = vmatpush1.msra.mxu0 %v1826
      %1926 = vmatprep.subr.mxu0 0.0
      %1927 = vmatpush1.msra.mxu0 %v1828
      %1928 = vmatprep.subr.mxu0 0.0
      %1929 = vmatpush1.msra.mxu0 %v1830
      %1930 = vmatprep.subr.mxu0 0.0
      %1931 = vmatpush1.msra.mxu0 %v1832
      %1932 = vmatprep.subr.mxu0 0.0
      %1933 = vmatpush1.msra.mxu0 %v1834
      %1934 = vmatprep.subr.mxu0 0.0
      %1935 = vmatpush1.msra.mxu0 %v1836
      %1936 = vmatprep.subr.mxu0 0.0
      %1937 = vmatpush1.msra.mxu0 %v1838
      %1938 = vmatprep.subr.mxu0 0.0
      %1939 = vmatpush1.msra.mxu0 %v1840
      %1940 = vmatprep.subr.mxu0 0.0
      %1941 = vmatpush1.msra.mxu0 0.0
      %1942 = vmatprep.subr.mxu0 0.0
      %1943 = vmatpush1.msra.mxu0 0.0
      %1944 = vmatprep.subr.mxu0 0.0
      %1945 = vmatpush1.msra.mxu0 0.0
      %1946 = vmatprep.subr.mxu0 0.0
      %1947 = vmatpush1.msra.mxu0 0.0
      %1948 = vmatprep.subr.mxu0 0.0
      %1949 = vmatpush1.msra.mxu0 0.0
      %1950 = vmatprep.subr.mxu0 0.0
      %1951 = vmatpush1.msra.mxu0 0.0
      %1952 = vmatprep.subr.mxu0 0.0
      %1953 = vmatpush1.msra.mxu0 0.0
      %1954 = vmatprep.subr.mxu0 0.0
      %1955 = vmatpush1.msra.mxu0 0.0
      %1956 = vmatprep.subr.mxu0 0.0
      %1957 = vmatpush1.msra.mxu0 0.0
      %1958 = vmatprep.subr.mxu0 0.0
      %1959 = vmatpush1.msra.mxu0 0.0
      %1960 = vmatprep.subr.mxu0 0.0
      %1961 = vmatpush1.msra.mxu0 0.0
      %1962 = vmatprep.subr.mxu0 0.0
      %1963 = vmatpush1.msra.mxu0 0.0
      %1964 = vmatprep.subr.mxu0 0.0
      %1965 = vmatpush1.msra.mxu0 0.0
      %1966 = vmatprep.subr.mxu0 0.0
      %1967 = vmatpush1.msra.mxu0 0.0
      %1968 = vmatprep.subr.mxu0 0.0
      %1969 = vmatpush1.msra.mxu0 0.0
      %1970 = vmatprep.subr.mxu0 0.0
      %1971 = vmatpush1.msra.mxu0 0.0
      %1972 = vmatprep.subr.mxu0 0.0
      %1973 = vmatpush1.msra.mxu0 0.0
      %1974 = vmatprep.subr.mxu0 0.0
      %1975 = vmatpush1.msra.mxu0 0.0
      %1976 = vmatprep.subr.mxu0 0.0
      %1977 = vmatpush1.msra.mxu0 0.0
      %1978 = vmatprep.subr.mxu0 0.0
      %1979 = vmatpush1.msra.mxu0 0.0
      %1980 = vmatprep.mubr.f32.mxu0 0.0
      %1981 = vmatmul.mubr.f32.gmra.mrb[0].mxu0 %v1854
      %v1982 = vpop.f32.mrb[0].mxu0
      %v1983 = vadd.f32 0.0, %v1982
      %v1984 = vpop.f32.mrb[0].mxu0
      %1985 = vmatprep.mubr.f32.mxu0 0.0
      %1986 = vmatmul.mubr.f32.gmra.mrb[0].mxu0 %v1857
      %v1987 = vpop.f32.mrb[0].mxu0
      %v1988 = vadd.f32 0.0, %v1987
      %v1989 = vpop.f32.mrb[0].mxu0
      %1990 = vmatprep.mubr.f32.mxu0 0.0
      %1991 = vmatmul.mubr.f32.gmra.mrb[0].mxu0 %v1860
      %v1992 = vpop.f32.mrb[0].mxu0
      %v1993 = vadd.f32 0.0, %v1992
      %v1994 = vpop.f32.mrb[0].mxu0
      %1995 = vmatprep.mubr.f32.mxu0 0.0
      %1996 = vmatmul.mubr.f32.gmra.mrb[0].mxu0 %v1863
      %v1997 = vpop.f32.mrb[0].mxu0
      %v1998 = vadd.f32 0.0, %v1997
      %v1999 = vpop.f32.mrb[0].mxu0
      %2000 = vmatprep.mubr.f32.mxu0 0.0
      %2001 = vmatmul.mubr.f32.gmra.mrb[0].mxu0 %v1866
      %v2002 = vpop.f32.mrb[0].mxu0
      %v2003 = vadd.f32 0.0, %v2002
      %v2004 = vpop.f32.mrb[0].mxu0
      %2005 = vmatprep.mubr.f32.mxu0 0.0
      %2006 = vmatmul.mubr.f32.gmra.mrb[0].mxu0 %v1869
      %v2007 = vpop.f32.mrb[0].mxu0
      %v2008 = vadd.f32 0.0, %v2007
      %v2009 = vpop.f32.mrb[0].mxu0
      %2010 = vmatprep.mubr.f32.mxu0 0.0
      %2011 = vmatmul.mubr.f32.gmra.mrb[0].mxu0 %v1872
      %v2012 = vpop.f32.mrb[0].mxu0
      %v2013 = vadd.f32 0.0, %v2012
      %v2014 = vpop.f32.mrb[0].mxu0
      %2015 = vmatprep.mubr.f32.mxu0 0.0
      %2016 = vmatmul.mubr.f32.gmra.mrb[0].mxu0 %v1875
      %v2017 = vpop.f32.mrb[0].mxu0
      %v2018 = vadd.f32 0.0, %v2017
      %v2019 = vpop.f32.mrb[0].mxu0
      %2020 = vmatprep.mubr.f32.mxu0 0.0
      %2021 = vmatmul.mubr.f32.gmra.mrb[0].mxu0 %v1878
      %v2022 = vpop.f32.mrb[0].mxu0
      %v2023 = vadd.f32 0.0, %v2022
      %v2024 = vpop.f32.mrb[0].mxu0
      %2025 = vmatprep.mubr.f32.mxu0 0.0
      %2026 = vmatmul.mubr.f32.gmra.mrb[0].mxu0 %v1881
      %v2027 = vpop.f32.mrb[0].mxu0
      %v2028 = vadd.f32 0.0, %v2027
      %v2029 = vpop.f32.mrb[0].mxu0
      %2030 = vmatprep.mubr.f32.mxu0 0.0
      %2031 = vmatmul.mubr.f32.gmra.mrb[0].mxu0 %v1884
      %v2032 = vpop.f32.mrb[0].mxu0
      %v2033 = vadd.f32 0.0, %v2032
      %v2034 = vpop.f32.mrb[0].mxu0
      %2035 = vmatprep.mubr.f32.mxu0 0.0
      %2036 = vmatmul.mubr.f32.gmra.mrb[0].mxu0 %v1887
      %v2037 = vpop.f32.mrb[0].mxu0
      %v2038 = vadd.f32 0.0, %v2037
      %v2039 = vpop.f32.mrb[0].mxu0
      %2040 = vmatprep.mubr.f32.mxu0 0.0
      %2041 = vmatmul.mubr.f32.gmra.mrb[0].mxu0 %v1890
      %v2042 = vpop.f32.mrb[0].mxu0
      %v2043 = vadd.f32 0.0, %v2042
      %v2044 = vpop.f32.mrb[0].mxu0
      %2045 = vmatprep.mubr.f32.mxu0 0.0
      %2046 = vmatmul.mubr.f32.gmra.mrb[0].mxu0 %v1893
      %v2047 = vpop.f32.mrb[0].mxu0
      %v2048 = vadd.f32 0.0, %v2047
      %v2049 = vpop.f32.mrb[0].mxu0
      %2050 = vmatprep.mubr.f32.mxu0 0.0
      %2051 = vmatmul.mubr.f32.gmra.mrb[0].mxu0 %v1896
      %v2052 = vpop.f32.mrb[0].mxu0
      %v2053 = vadd.f32 0.0, %v2052
      %v2054 = vpop.f32.mrb[0].mxu0
      %2055 = vmatprep.mubr.f32.mxu0 0.0
      %2056 = vmatmul.mubr.f32.gmra.mrb[0].mxu0 %v1899
      %v2057 = vpop.f32.mrb[0].mxu0
      %v2058 = vadd.f32 0.0, %v2057
      %v2059 = vpop.f32.mrb[0].mxu0
      %2060 = vmatprep.mubr.f32.mxu0 0.0
      %2061 = vmatmul.mubr.f32.gmra.mrb[0].mxu0 %v1902
      %v2062 = vpop.f32.mrb[0].mxu0
      %v2063 = vadd.f32 0.0, %v2062
      %v2064 = vpop.f32.mrb[0].mxu0
      %2065 = vmatprep.mubr.f32.mxu0 0.0
      %2066 = vmatmul.mubr.f32.gmra.mrb[0].mxu0 %v1905
      %v2067 = vpop.f32.mrb[0].mxu0
      %v2068 = vadd.f32 0.0, %v2067
      %v2069 = vpop.f32.mrb[0].mxu0
      %2070 = vmatprep.mubr.f32.mxu0 0.0
      %2071 = vmatmul.mubr.f32.gmra.mrb[0].mxu0 %v1908
      %v2072 = vpop.f32.mrb[0].mxu0
      %v2073 = vadd.f32 0.0, %v2072
      %v2074 = vpop.f32.mrb[0].mxu0
      %2075 = vmatprep.mubr.f32.mxu0 0.0
      %2076 = vmatmul.mubr.f32.gmra.mrb[0].mxu0 %v1911
      %v2077 = vpop.f32.mrb[0].mxu0
      %v2078 = vadd.f32 0.0, %v2077
      %v2079 = vpop.f32.mrb[0].mxu0
      %2080 = vmatprep.mubr.f32.mxu0 0.0
      %2081 = vmatmul.mubr.f32.gmra.mrb[0].mxu0 %v1914
      %v2082 = vpop.f32.mrb[0].mxu0
      %v2083 = vadd.f32 0.0, %v2082
      %v2084 = vpop.f32.mrb[0].mxu0
      %2085 = vdwg.mxu0
      %v2086 = vadd.f32 %v1774, %v1983
      %v2087 = vadd.f32 %v1775, %v1988
      %v2088 = vadd.f32 %v1776, %v1993
      %v2089 = vadd.f32 %v1777, %v1998
      %v2090 = vadd.f32 %v1778, %v2003
      %v2091 = vadd.f32 %v1779, %v2008
      %v2092 = vadd.f32 %v1780, %v2013
      %v2093 = vadd.f32 %v1781, %v2018
      %v2094 = vadd.f32 %v1782, %v2023
      %v2095 = vadd.f32 %v1783, %v2028
      %v2096 = vadd.f32 %v1784, %v2033
      %v2097 = vadd.f32 %v1785, %v2038
      %v2098 = vadd.f32 %v1786, %v2043
      %v2099 = vadd.f32 %v1787, %v2048
      %v2100 = vadd.f32 %v1788, %v2053
      %v2101 = vadd.f32 %v1789, %v2058
      %v2102 = vadd.f32 %v1790, %v2063
      %v2103 = vadd.f32 %v1791, %v2068
      %v2104 = vadd.f32 %v1792, %v2073
      %v2105 = vadd.f32 %v1793, %v2078
      %v2106 = vadd.f32 %v1794, %v2083
      %v2107 = vld [vmem:[%s2] sm:$0xff]
      %v2108 = vld [vmem:[%s2 + $0x8] sm:$0xff]
      %v2109 = vld [vmem:[%s2 + $0x10] sm:$0xff]
      %v2110 = vld [vmem:[%s2 + $0x18] sm:$0xff]
      %v2111 = vld [vmem:[%s2 + $0x20] sm:$0xff]
      %v2112 = vld [vmem:[%s2 + $0x28] sm:$0xff]
      %v2113 = vld [vmem:[%s2 + $0x30] sm:$0xff]
      %v2114 = vld [vmem:[%s2 + $0x38] sm:$0xff]
      %v2115 = vld [vmem:[%s2 + $0x40] sm:$0xff]
      %v2116 = vld [vmem:[%s2 + $0x48] sm:$0xff]
      %v2117 = vld [vmem:[%s2 + $0x50] sm:$0xff]
      %v2118 = vld [vmem:[%s2 + $0x58] sm:$0xff]
      %v2119 = vld [vmem:[%s2 + $0x60] sm:$0xff]
      %v2120 = vld [vmem:[%s2 + $0x68] sm:$0xff]
      %v2121 = vld [vmem:[%s2 + $0x70] sm:$0xff]
      %v2122 = vld [vmem:[%s2 + $0x78] sm:$0xff]
      %v2123 = vld [vmem:[%s2 + $0x80] sm:$0xff]
      %v2124 = vld [vmem:[%s2 + $0x88] sm:$0xff]
      %v2125 = vld [vmem:[%s2 + $0x90] sm:$0xff]
      %v2126 = vld [vmem:[%s2 + $0x98] sm:$0xff]
      %v2127 = vld [vmem:[%s2 + $0xa0] sm:$0xff]
      %2129 = vset.pattern.permute.xlu0 0
      %2130 = vperm.xlu0 %2129, %v2107
      %v2131 = vpop.permute.xlu0 %2130
      %2134 = vset.pattern.permute.xlu0 0
      %2135 = vperm.xlu0 %2134, %v2108
      %v2136 = vpop.permute.xlu0 %2135
      %2139 = vset.pattern.permute.xlu0 0
      %2140 = vperm.xlu0 %2139, %v2109
      %v2141 = vpop.permute.xlu0 %2140
      %2144 = vset.pattern.permute.xlu0 0
      %2145 = vperm.xlu0 %2144, %v2110
      %v2146 = vpop.permute.xlu0 %2145
      %2149 = vset.pattern.permute.xlu0 0
      %2150 = vperm.xlu0 %2149, %v2111
      %v2151 = vpop.permute.xlu0 %2150
      %2154 = vset.pattern.permute.xlu0 0
      %2155 = vperm.xlu0 %2154, %v2112
      %v2156 = vpop.permute.xlu0 %2155
      %2159 = vset.pattern.permute.xlu0 0
      %2160 = vperm.xlu0 %2159, %v2113
      %v2161 = vpop.permute.xlu0 %2160
      %2164 = vset.pattern.permute.xlu0 0
      %2165 = vperm.xlu0 %2164, %v2114
      %v2166 = vpop.permute.xlu0 %2165
      %2169 = vset.pattern.permute.xlu0 0
      %2170 = vperm.xlu0 %2169, %v2115
      %v2171 = vpop.permute.xlu0 %2170
      %2174 = vset.pattern.permute.xlu0 0
      %2175 = vperm.xlu0 %2174, %v2116
      %v2176 = vpop.permute.xlu0 %2175
      %2179 = vset.pattern.permute.xlu0 0
      %2180 = vperm.xlu0 %2179, %v2117
      %v2181 = vpop.permute.xlu0 %2180
      %2184 = vset.pattern.permute.xlu0 0
      %2185 = vperm.xlu0 %2184, %v2118
      %v2186 = vpop.permute.xlu0 %2185
      %2189 = vset.pattern.permute.xlu0 0
      %2190 = vperm.xlu0 %2189, %v2119
      %v2191 = vpop.permute.xlu0 %2190
      %2194 = vset.pattern.permute.xlu0 0
      %2195 = vperm.xlu0 %2194, %v2120
      %v2196 = vpop.permute.xlu0 %2195
      %2199 = vset.pattern.permute.xlu0 0
      %2200 = vperm.xlu0 %2199, %v2121
      %v2201 = vpop.permute.xlu0 %2200
      %2204 = vset.pattern.permute.xlu0 0
      %2205 = vperm.xlu0 %2204, %v2122
      %v2206 = vpop.permute.xlu0 %2205
      %2209 = vset.pattern.permute.xlu0 0
      %2210 = vperm.xlu0 %2209, %v2123
      %v2211 = vpop.permute.xlu0 %2210
      %2214 = vset.pattern.permute.xlu0 0
      %2215 = vperm.xlu0 %2214, %v2124
      %v2216 = vpop.permute.xlu0 %2215
      %2219 = vset.pattern.permute.xlu0 0
      %2220 = vperm.xlu0 %2219, %v2125
      %v2221 = vpop.permute.xlu0 %2220
      %2224 = vset.pattern.permute.xlu0 0
      %2225 = vperm.xlu0 %2224, %v2126
      %v2226 = vpop.permute.xlu0 %2225
      %2229 = vset.pattern.permute.xlu0 0
      %2230 = vperm.xlu0 %2229, %v2127
      %v2231 = vpop.permute.xlu0 %2230
      %v2233 = vadd.f32 %v2086, %v2131
      %v2234 = vadd.f32 %v2087, %v2136
      %v2235 = vadd.f32 %v2088, %v2141
      %v2236 = vadd.f32 %v2089, %v2146
      %v2237 = vadd.f32 %v2090, %v2151
      %v2238 = vadd.f32 %v2091, %v2156
      %v2239 = vadd.f32 %v2092, %v2161
      %v2240 = vadd.f32 %v2093, %v2166
      %v2241 = vadd.f32 %v2094, %v2171
      %v2242 = vadd.f32 %v2095, %v2176
      %v2243 = vadd.f32 %v2096, %v2181
      %v2244 = vadd.f32 %v2097, %v2186
      %v2245 = vadd.f32 %v2098, %v2191
      %v2246 = vadd.f32 %v2099, %v2196
      %v2247 = vadd.f32 %v2100, %v2201
      %v2248 = vadd.f32 %v2101, %v2206
      %v2249 = vadd.f32 %v2102, %v2211
      %v2250 = vadd.f32 %v2103, %v2216
      %v2251 = vadd.f32 %v2104, %v2221
      %v2252 = vadd.f32 %v2105, %v2226
      %v2253 = vadd.f32 %v2106, %v2231
      %v2254 = vmax.f32 %v2233, 0.0
      %v2255 = vmax.f32 %v2234, 0.0
      %v2256 = vmax.f32 %v2235, 0.0
      %v2257 = vmax.f32 %v2236, 0.0
      %v2258 = vmax.f32 %v2237, 0.0
      %v2259 = vmax.f32 %v2238, 0.0
      %v2260 = vmax.f32 %v2239, 0.0
      %v2261 = vmax.f32 %v2240, 0.0
      %v2262 = vmax.f32 %v2241, 0.0
      %v2263 = vmax.f32 %v2242, 0.0
      %v2264 = vmax.f32 %v2243, 0.0
      %v2265 = vmax.f32 %v2244, 0.0
      %v2266 = vmax.f32 %v2245, 0.0
      %v2267 = vmax.f32 %v2246, 0.0
      %v2268 = vmax.f32 %v2247, 0.0
      %v2269 = vmax.f32 %v2248, 0.0
      %v2270 = vmax.f32 %v2249, 0.0
      %v2271 = vmax.f32 %v2250, 0.0
      %v2272 = vmax.f32 %v2251, 0.0
      %v2273 = vmax.f32 %v2252, 0.0
      %v2274 = vmax.f32 %v2253, 0.0
      %v2275 = vld [vmem:[%s3] sm:$0xff]
      %v2276 = vld [vmem:[%s3 + $0x8] sm:$0xff]
      %v2277 = vld [vmem:[%s3 + $0x10] sm:$0xff]
      %v2278 = vld [vmem:[%s3 + $0x18] sm:$0xf]
      %vm2279 = vcmask 228352
      %v2281 = vsel %vm2279, %v2254, 0
      %v2284 = vsel %vm2279, %v2255, 0
      %v2287 = vsel %vm2279, %v2256, 0
      %v2290 = vsel %vm2279, %v2257, 0
      %v2293 = vsel %vm2279, %v2258, 0
      %v2296 = vsel %vm2279, %v2259, 0
      %v2299 = vsel %vm2279, %v2260, 0
      %v2302 = vsel %vm2279, %v2261, 0
      %v2305 = vsel %vm2279, %v2262, 0
      %v2308 = vsel %vm2279, %v2263, 0
      %v2311 = vsel %vm2279, %v2264, 0
      %v2314 = vsel %vm2279, %v2265, 0
      %v2317 = vsel %vm2279, %v2266, 0
      %v2320 = vsel %vm2279, %v2267, 0
      %v2323 = vsel %vm2279, %v2268, 0
      %v2326 = vsel %vm2279, %v2269, 0
      %v2329 = vsel %vm2279, %v2270, 0
      %v2332 = vsel %vm2279, %v2271, 0
      %v2335 = vsel %vm2279, %v2272, 0
      %v2338 = vsel %vm2279, %v2273, 0
      %v2341 = vsel %vm2279, %v2274, 0
      %vm2343 = vcmask 1043456
      %v2345 = vsel %vm2343, %v2278, 0
      %2347 = vmatprep.subr.mxu0 0.0
      %2348 = vmatpush1.msra.mxu0 %v2275
      %2349 = vmatprep.subr.mxu0 0.0
      %2350 = vmatpush1.msra.mxu0 %v2276
      %2351 = vmatprep.subr.mxu0 0.0
      %2352 = vmatpush1.msra.mxu0 %v2277
      %2353 = vmatprep.subr.mxu0 0.0
      %2354 = vmatpush1.msra.mxu0 %v2345
      %2355 = vmatprep.subr.mxu0 0.0
      %2356 = vmatpush1.msra.mxu0 0.0
      %2357 = vmatprep.subr.mxu0 0.0
      %2358 = vmatpush1.msra.mxu0 0.0
      %2359 = vmatprep.subr.mxu0 0.0
      %2360 = vmatpush1.msra.mxu0 0.0
      %2361 = vmatprep.subr.mxu0 0.0
      %2362 = vmatpush1.msra.mxu0 0.0
      %2363 = vmatprep.subr.mxu0 0.0
      %2364 = vmatpush1.msra.mxu0 0.0
      %2365 = vmatprep.subr.mxu0 0.0
      %2366 = vmatpush1.msra.mxu0 0.0
      %2367 = vmatprep.subr.mxu0 0.0
      %2368 = vmatpush1.msra.mxu0 0.0
      %2369 = vmatprep.subr.mxu0 0.0
      %2370 = vmatpush1.msra.mxu0 0.0
      %2371 = vmatprep.subr.mxu0 0.0
      %2372 = vmatpush1.msra.mxu0 0.0
      %2373 = vmatprep.subr.mxu0 0.0
      %2374 = vmatpush1.msra.mxu0 0.0
      %2375 = vmatprep.subr.mxu0 0.0
      %2376 = vmatpush1.msra.mxu0 0.0
      %2377 = vmatprep.subr.mxu0 0.0
      %2378 = vmatpush1.msra.mxu0 0.0
      %2379 = vmatprep.subr.mxu0 0.0
      %2380 = vmatpush1.msra.mxu0 0.0
      %2381 = vmatprep.subr.mxu0 0.0
      %2382 = vmatpush1.msra.mxu0 0.0
      %2383 = vmatprep.subr.mxu0 0.0
      %2384 = vmatpush1.msra.mxu0 0.0
      %2385 = vmatprep.subr.mxu0 0.0
      %2386 = vmatpush1.msra.mxu0 0.0
      %2387 = vmatprep.subr.mxu0 0.0
      %2388 = vmatpush1.msra.mxu0 0.0
      %2389 = vmatprep.subr.mxu0 0.0
      %2390 = vmatpush1.msra.mxu0 0.0
      %2391 = vmatprep.subr.mxu0 0.0
      %2392 = vmatpush1.msra.mxu0 0.0
      %2393 = vmatprep.subr.mxu0 0.0
      %2394 = vmatpush1.msra.mxu0 0.0
      %2395 = vmatprep.subr.mxu0 0.0
      %2396 = vmatpush1.msra.mxu0 0.0
      %2397 = vmatprep.subr.mxu0 0.0
      %2398 = vmatpush1.msra.mxu0 0.0
      %2399 = vmatprep.subr.mxu0 0.0
      %2400 = vmatpush1.msra.mxu0 0.0
      %2401 = vmatprep.subr.mxu0 0.0
      %2402 = vmatpush1.msra.mxu0 0.0
      %2403 = vmatprep.subr.mxu0 0.0
      %2404 = vmatpush1.msra.mxu0 0.0
      %2405 = vmatprep.subr.mxu0 0.0
      %2406 = vmatpush1.msra.mxu0 0.0
      %2407 = vmatprep.subr.mxu0 0.0
      %2408 = vmatpush1.msra.mxu0 0.0
      %2409 = vmatprep.subr.mxu0 0.0
      %2410 = vmatpush1.msra.mxu0 0.0
      %2411 = vmatprep.mubr.f32.mxu0 0.0
      %2412 = vmatmul.mubr.f32.gmra.mrb[0].mxu0 %v2281
      %v2413 = vpop.f32.mrb[0].mxu0
      %v2414 = vadd.f32 0.0, %v2413
      %v2415 = vpop.f32.mrb[0].mxu0
      %2416 = vmatprep.mubr.f32.mxu0 0.0
      %2417 = vmatmul.mubr.f32.gmra.mrb[0].mxu0 %v2284
      %v2418 = vpop.f32.mrb[0].mxu0
      %v2419 = vadd.f32 0.0, %v2418
      %v2420 = vpop.f32.mrb[0].mxu0
      %2421 = vmatprep.mubr.f32.mxu0 0.0
      %2422 = vmatmul.mubr.f32.gmra.mrb[0].mxu0 %v2287
      %v2423 = vpop.f32.mrb[0].mxu0
      %v2424 = vadd.f32 0.0, %v2423
      %v2425 = vpop.f32.mrb[0].mxu0
      %2426 = vmatprep.mubr.f32.mxu0 0.0
      %2427 = vmatmul.mubr.f32.gmra.mrb[0].mxu0 %v2290
      %v2428 = vpop.f32.mrb[0].mxu0
      %v2429 = vadd.f32 0.0, %v2428
      %v2430 = vpop.f32.mrb[0].mxu0
      %2431 = vmatprep.mubr.f32.mxu0 0.0
      %2432 = vmatmul.mubr.f32.gmra.mrb[0].mxu0 %v2293
      %v2433 = vpop.f32.mrb[0].mxu0
      %v2434 = vadd.f32 0.0, %v2433
      %v2435 = vpop.f32.mrb[0].mxu0
      %2436 = vmatprep.mubr.f32.mxu0 0.0
      %2437 = vmatmul.mubr.f32.gmra.mrb[0].mxu0 %v2296
      %v2438 = vpop.f32.mrb[0].mxu0
      %v2439 = vadd.f32 0.0, %v2438
      %v2440 = vpop.f32.mrb[0].mxu0
      %2441 = vmatprep.mubr.f32.mxu0 0.0
      %2442 = vmatmul.mubr.f32.gmra.mrb[0].mxu0 %v2299
      %v2443 = vpop.f32.mrb[0].mxu0
      %v2444 = vadd.f32 0.0, %v2443
      %v2445 = vpop.f32.mrb[0].mxu0
      %2446 = vmatprep.mubr.f32.mxu0 0.0
      %2447 = vmatmul.mubr.f32.gmra.mrb[0].mxu0 %v2302
      %v2448 = vpop.f32.mrb[0].mxu0
      %v2449 = vadd.f32 0.0, %v2448
      %v2450 = vpop.f32.mrb[0].mxu0
      %2451 = vmatprep.mubr.f32.mxu0 0.0
      %2452 = vmatmul.mubr.f32.gmra.mrb[0].mxu0 %v2305
      %v2453 = vpop.f32.mrb[0].mxu0
      %v2454 = vadd.f32 0.0, %v2453
      %v2455 = vpop.f32.mrb[0].mxu0
      %2456 = vmatprep.mubr.f32.mxu0 0.0
      %2457 = vmatmul.mubr.f32.gmra.mrb[0].mxu0 %v2308
      %v2458 = vpop.f32.mrb[0].mxu0
      %v2459 = vadd.f32 0.0, %v2458
      %v2460 = vpop.f32.mrb[0].mxu0
      %2461 = vmatprep.mubr.f32.mxu0 0.0
      %2462 = vmatmul.mubr.f32.gmra.mrb[0].mxu0 %v2311
      %v2463 = vpop.f32.mrb[0].mxu0
      %v2464 = vadd.f32 0.0, %v2463
      %v2465 = vpop.f32.mrb[0].mxu0
      %2466 = vmatprep.mubr.f32.mxu0 0.0
      %2467 = vmatmul.mubr.f32.gmra.mrb[0].mxu0 %v2314
      %v2468 = vpop.f32.mrb[0].mxu0
      %v2469 = vadd.f32 0.0, %v2468
      %v2470 = vpop.f32.mrb[0].mxu0
      %2471 = vmatprep.mubr.f32.mxu0 0.0
      %2472 = vmatmul.mubr.f32.gmra.mrb[0].mxu0 %v2317
      %v2473 = vpop.f32.mrb[0].mxu0
      %v2474 = vadd.f32 0.0, %v2473
      %v2475 = vpop.f32.mrb[0].mxu0
      %2476 = vmatprep.mubr.f32.mxu0 0.0
      %2477 = vmatmul.mubr.f32.gmra.mrb[0].mxu0 %v2320
      %v2478 = vpop.f32.mrb[0].mxu0
      %v2479 = vadd.f32 0.0, %v2478
      %v2480 = vpop.f32.mrb[0].mxu0
      %2481 = vmatprep.mubr.f32.mxu0 0.0
      %2482 = vmatmul.mubr.f32.gmra.mrb[0].mxu0 %v2323
      %v2483 = vpop.f32.mrb[0].mxu0
      %v2484 = vadd.f32 0.0, %v2483
      %v2485 = vpop.f32.mrb[0].mxu0
      %2486 = vmatprep.mubr.f32.mxu0 0.0
      %2487 = vmatmul.mubr.f32.gmra.mrb[0].mxu0 %v2326
      %v2488 = vpop.f32.mrb[0].mxu0
      %v2489 = vadd.f32 0.0, %v2488
      %v2490 = vpop.f32.mrb[0].mxu0
      %2491 = vmatprep.mubr.f32.mxu0 0.0
      %2492 = vmatmul.mubr.f32.gmra.mrb[0].mxu0 %v2329
      %v2493 = vpop.f32.mrb[0].mxu0
      %v2494 = vadd.f32 0.0, %v2493
      %v2495 = vpop.f32.mrb[0].mxu0
      %2496 = vmatprep.mubr.f32.mxu0 0.0
      %2497 = vmatmul.mubr.f32.gmra.mrb[0].mxu0 %v2332
      %v2498 = vpop.f32.mrb[0].mxu0
      %v2499 = vadd.f32 0.0, %v2498
      %v2500 = vpop.f32.mrb[0].mxu0
      %2501 = vmatprep.mubr.f32.mxu0 0.0
      %2502 = vmatmul.mubr.f32.gmra.mrb[0].mxu0 %v2335
      %v2503 = vpop.f32.mrb[0].mxu0
      %v2504 = vadd.f32 0.0, %v2503
      %v2505 = vpop.f32.mrb[0].mxu0
      %2506 = vmatprep.mubr.f32.mxu0 0.0
      %2507 = vmatmul.mubr.f32.gmra.mrb[0].mxu0 %v2338
      %v2508 = vpop.f32.mrb[0].mxu0
      %v2509 = vadd.f32 0.0, %v2508
      %v2510 = vpop.f32.mrb[0].mxu0
      %2511 = vmatprep.mubr.f32.mxu0 0.0
      %2512 = vmatmul.mubr.f32.gmra.mrb[0].mxu0 %v2341
      %v2513 = vpop.f32.mrb[0].mxu0
      %v2514 = vadd.f32 0.0, %v2513
      %v2515 = vpop.f32.mrb[0].mxu0
      %2516 = vdwg.mxu0
      %v2517 = vld [vmem:[%s4] sm:$0xff]
      %v2518 = vld [vmem:[%s4 + $0x8] sm:$0xff]
      %v2519 = vld [vmem:[%s4 + $0x10] sm:$0xff]
      %v2520 = vld [vmem:[%s4 + $0x18] sm:$0xf]
      %v2522 = vsel %vm2343, %v2520, 0
      %2524 = vmatprep.subr.mxu0 0.0
      %2525 = vmatpush1.msra.mxu0 %v2517
      %2526 = vmatprep.subr.mxu0 0.0
      %2527 = vmatpush1.msra.mxu0 %v2518
      %2528 = vmatprep.subr.mxu0 0.0
      %2529 = vmatpush1.msra.mxu0 %v2519
      %2530 = vmatprep.subr.mxu0 0.0
      %2531 = vmatpush1.msra.mxu0 %v2522
      %2532 = vmatprep.subr.mxu0 0.0
      %2533 = vmatpush1.msra.mxu0 0.0
      %2534 = vmatprep.subr.mxu0 0.0
      %2535 = vmatpush1.msra.mxu0 0.0
      %2536 = vmatprep.subr.mxu0 0.0
      %2537 = vmatpush1.msra.mxu0 0.0
      %2538 = vmatprep.subr.mxu0 0.0
      %2539 = vmatpush1.msra.mxu0 0.0
      %2540 = vmatprep.subr.mxu0 0.0
      %2541 = vmatpush1.msra.mxu0 0.0
      %2542 = vmatprep.subr.mxu0 0.0
      %2543 = vmatpush1.msra.mxu0 0.0
      %2544 = vmatprep.subr.mxu0 0.0
      %2545 = vmatpush1.msra.mxu0 0.0
      %2546 = vmatprep.subr.mxu0 0.0
      %2547 = vmatpush1.msra.mxu0 0.0
      %2548 = vmatprep.subr.mxu0 0.0
      %2549 = vmatpush1.msra.mxu0 0.0
      %2550 = vmatprep.subr.mxu0 0.0
      %2551 = vmatpush1.msra.mxu0 0.0
      %2552 = vmatprep.subr.mxu0 0.0
      %2553 = vmatpush1.msra.mxu0 0.0
      %2554 = vmatprep.subr.mxu0 0.0
      %2555 = vmatpush1.msra.mxu0 0.0
      %2556 = vmatprep.subr.mxu0 0.0
      %2557 = vmatpush1.msra.mxu0 0.0
      %2558 = vmatprep.subr.mxu0 0.0
      %2559 = vmatpush1.msra.mxu0 0.0
      %2560 = vmatprep.subr.mxu0 0.0
      %2561 = vmatpush1.msra.mxu0 0.0
      %2562 = vmatprep.subr.mxu0 0.0
      %2563 = vmatpush1.msra.mxu0 0.0
      %2564 = vmatprep.subr.mxu0 0.0
      %2565 = vmatpush1.msra.mxu0 0.0
      %2566 = vmatprep.subr.mxu0 0.0
      %2567 = vmatpush1.msra.mxu0 0.0
      %2568 = vmatprep.subr.mxu0 0.0
      %2569 = vmatpush1.msra.mxu0 0.0
      %2570 = vmatprep.subr.mxu0 0.0
      %2571 = vmatpush1.msra.mxu0 0.0
      %2572 = vmatprep.subr.mxu0 0.0
      %2573 = vmatpush1.msra.mxu0 0.0
      %2574 = vmatprep.subr.mxu0 0.0
      %2575 = vmatpush1.msra.mxu0 0.0
      %2576 = vmatprep.subr.mxu0 0.0
      %2577 = vmatpush1.msra.mxu0 0.0
      %2578 = vmatprep.subr.mxu0 0.0
      %2579 = vmatpush1.msra.mxu0 0.0
      %2580 = vmatprep.subr.mxu0 0.0
      %2581 = vmatpush1.msra.mxu0 0.0
      %2582 = vmatprep.subr.mxu0 0.0
      %2583 = vmatpush1.msra.mxu0 0.0
      %2584 = vmatprep.subr.mxu0 0.0
      %2585 = vmatpush1.msra.mxu0 0.0
      %2586 = vmatprep.subr.mxu0 0.0
      %2587 = vmatpush1.msra.mxu0 0.0
      %2588 = vmatprep.mubr.f32.mxu0 0.0
      %2589 = vmatmul.mubr.f32.gmra.mrb[0].mxu0 %v2281
      %v2590 = vpop.f32.mrb[0].mxu0
      %v2591 = vadd.f32 0.0, %v2590
      %v2592 = vpop.f32.mrb[0].mxu0
      %2593 = vmatprep.mubr.f32.mxu0 0.0
      %2594 = vmatmul.mubr.f32.gmra.mrb[0].mxu0 %v2284
      %v2595 = vpop.f32.mrb[0].mxu0
      %v2596 = vadd.f32 0.0, %v2595
      %v2597 = vpop.f32.mrb[0].mxu0
      %2598 = vmatprep.mubr.f32.mxu0 0.0
      %2599 = vmatmul.mubr.f32.gmra.mrb[0].mxu0 %v2287
      %v2600 = vpop.f32.mrb[0].mxu0
      %v2601 = vadd.f32 0.0, %v2600
      %v2602 = vpop.f32.mrb[0].mxu0
      %2603 = vmatprep.mubr.f32.mxu0 0.0
      %2604 = vmatmul.mubr.f32.gmra.mrb[0].mxu0 %v2290
      %v2605 = vpop.f32.mrb[0].mxu0
      %v2606 = vadd.f32 0.0, %v2605
      %v2607 = vpop.f32.mrb[0].mxu0
      %2608 = vmatprep.mubr.f32.mxu0 0.0
      %2609 = vmatmul.mubr.f32.gmra.mrb[0].mxu0 %v2293
      %v2610 = vpop.f32.mrb[0].mxu0
      %v2611 = vadd.f32 0.0, %v2610
      %v2612 = vpop.f32.mrb[0].mxu0
      %2613 = vmatprep.mubr.f32.mxu0 0.0
      %2614 = vmatmul.mubr.f32.gmra.mrb[0].mxu0 %v2296
      %v2615 = vpop.f32.mrb[0].mxu0
      %v2616 = vadd.f32 0.0, %v2615
      %v2617 = vpop.f32.mrb[0].mxu0
      %2618 = vmatprep.mubr.f32.mxu0 0.0
      %2619 = vmatmul.mubr.f32.gmra.mrb[0].mxu0 %v2299
      %v2620 = vpop.f32.mrb[0].mxu0
      %v2621 = vadd.f32 0.0, %v2620
      %v2622 = vpop.f32.mrb[0].mxu0
      %2623 = vmatprep.mubr.f32.mxu0 0.0
      %2624 = vmatmul.mubr.f32.gmra.mrb[0].mxu0 %v2302
      %v2625 = vpop.f32.mrb[0].mxu0
      %v2626 = vadd.f32 0.0, %v2625
      %v2627 = vpop.f32.mrb[0].mxu0
      %2628 = vmatprep.mubr.f32.mxu0 0.0
      %2629 = vmatmul.mubr.f32.gmra.mrb[0].mxu0 %v2305
      %v2630 = vpop.f32.mrb[0].mxu0
      %v2631 = vadd.f32 0.0, %v2630
      %v2632 = vpop.f32.mrb[0].mxu0
      %2633 = vmatprep.mubr.f32.mxu0 0.0
      %2634 = vmatmul.mubr.f32.gmra.mrb[0].mxu0 %v2308
      %v2635 = vpop.f32.mrb[0].mxu0
      %v2636 = vadd.f32 0.0, %v2635
      %v2637 = vpop.f32.mrb[0].mxu0
      %2638 = vmatprep.mubr.f32.mxu0 0.0
      %2639 = vmatmul.mubr.f32.gmra.mrb[0].mxu0 %v2311
      %v2640 = vpop.f32.mrb[0].mxu0
      %v2641 = vadd.f32 0.0, %v2640
      %v2642 = vpop.f32.mrb[0].mxu0
      %2643 = vmatprep.mubr.f32.mxu0 0.0
      %2644 = vmatmul.mubr.f32.gmra.mrb[0].mxu0 %v2314
      %v2645 = vpop.f32.mrb[0].mxu0
      %v2646 = vadd.f32 0.0, %v2645
      %v2647 = vpop.f32.mrb[0].mxu0
      %2648 = vmatprep.mubr.f32.mxu0 0.0
      %2649 = vmatmul.mubr.f32.gmra.mrb[0].mxu0 %v2317
      %v2650 = vpop.f32.mrb[0].mxu0
      %v2651 = vadd.f32 0.0, %v2650
      %v2652 = vpop.f32.mrb[0].mxu0
      %2653 = vmatprep.mubr.f32.mxu0 0.0
      %2654 = vmatmul.mubr.f32.gmra.mrb[0].mxu0 %v2320
      %v2655 = vpop.f32.mrb[0].mxu0
      %v2656 = vadd.f32 0.0, %v2655
      %v2657 = vpop.f32.mrb[0].mxu0
      %2658 = vmatprep.mubr.f32.mxu0 0.0
      %2659 = vmatmul.mubr.f32.gmra.mrb[0].mxu0 %v2323
      %v2660 = vpop.f32.mrb[0].mxu0
      %v2661 = vadd.f32 0.0, %v2660
      %v2662 = vpop.f32.mrb[0].mxu0
      %2663 = vmatprep.mubr.f32.mxu0 0.0
      %2664 = vmatmul.mubr.f32.gmra.mrb[0].mxu0 %v2326
      %v2665 = vpop.f32.mrb[0].mxu0
      %v2666 = vadd.f32 0.0, %v2665
      %v2667 = vpop.f32.mrb[0].mxu0
      %2668 = vmatprep.mubr.f32.mxu0 0.0
      %2669 = vmatmul.mubr.f32.gmra.mrb[0].mxu0 %v2329
      %v2670 = vpop.f32.mrb[0].mxu0
      %v2671 = vadd.f32 0.0, %v2670
      %v2672 = vpop.f32.mrb[0].mxu0
      %2673 = vmatprep.mubr.f32.mxu0 0.0
      %2674 = vmatmul.mubr.f32.gmra.mrb[0].mxu0 %v2332
      %v2675 = vpop.f32.mrb[0].mxu0
      %v2676 = vadd.f32 0.0, %v2675
      %v2677 = vpop.f32.mrb[0].mxu0
      %2678 = vmatprep.mubr.f32.mxu0 0.0
      %2679 = vmatmul.mubr.f32.gmra.mrb[0].mxu0 %v2335
      %v2680 = vpop.f32.mrb[0].mxu0
      %v2681 = vadd.f32 0.0, %v2680
      %v2682 = vpop.f32.mrb[0].mxu0
      %2683 = vmatprep.mubr.f32.mxu0 0.0
      %2684 = vmatmul.mubr.f32.gmra.mrb[0].mxu0 %v2338
      %v2685 = vpop.f32.mrb[0].mxu0
      %v2686 = vadd.f32 0.0, %v2685
      %v2687 = vpop.f32.mrb[0].mxu0
      %2688 = vmatprep.mubr.f32.mxu0 0.0
      %2689 = vmatmul.mubr.f32.gmra.mrb[0].mxu0 %v2341
      %v2690 = vpop.f32.mrb[0].mxu0
      %v2691 = vadd.f32 0.0, %v2690
      %v2692 = vpop.f32.mrb[0].mxu0
      %2693 = vdwg.mxu0
      %v2694 = vmax.f32 %v2414, %v2591
      %v2695 = vmax.f32 %v2419, %v2596
      %v2696 = vmax.f32 %v2424, %v2601
      %v2697 = vmax.f32 %v2429, %v2606
      %v2698 = vmax.f32 %v2434, %v2611
      %v2699 = vmax.f32 %v2439, %v2616
      %v2700 = vmax.f32 %v2444, %v2621
      %v2701 = vmax.f32 %v2449, %v2626
      %v2702 = vmax.f32 %v2454, %v2631
      %v2703 = vmax.f32 %v2459, %v2636
      %v2704 = vmax.f32 %v2464, %v2641
      %v2705 = vmax.f32 %v2469, %v2646
      %v2706 = vmax.f32 %v2474, %v2651
      %v2707 = vmax.f32 %v2479, %v2656
      %v2708 = vmax.f32 %v2484, %v2661
      %v2709 = vmax.f32 %v2489, %v2666
      %v2710 = vmax.f32 %v2494, %v2671
      %v2711 = vmax.f32 %v2499, %v2676
      %v2712 = vmax.f32 %v2504, %v2681
      %v2713 = vmax.f32 %v2509, %v2686
      %v2714 = vmax.f32 %v2514, %v2691
      %v2715 = vld [vmem:[%s5] sm:$0xff]
      %v2716 = vld [vmem:[%s5 + $0x8] sm:$0xff]
      %v2717 = vld [vmem:[%s5 + $0x10] sm:$0xff]
      %v2718 = vld [vmem:[%s5 + $0x18] sm:$0xff]
      %v2719 = vld [vmem:[%s5 + $0x20] sm:$0xff]
      %v2720 = vld [vmem:[%s5 + $0x28] sm:$0xff]
      %v2721 = vld [vmem:[%s5 + $0x30] sm:$0xff]
      %v2722 = vld [vmem:[%s5 + $0x38] sm:$0xff]
      %v2723 = vld [vmem:[%s5 + $0x40] sm:$0xff]
      %v2724 = vld [vmem:[%s5 + $0x48] sm:$0xff]
      %v2725 = vld [vmem:[%s5 + $0x50] sm:$0xff]
      %v2726 = vld [vmem:[%s5 + $0x58] sm:$0xff]
      %v2727 = vld [vmem:[%s5 + $0x60] sm:$0xff]
      %v2728 = vld [vmem:[%s5 + $0x68] sm:$0xff]
      %v2729 = vld [vmem:[%s5 + $0x70] sm:$0xff]
      %v2730 = vld [vmem:[%s5 + $0x78] sm:$0xff]
      %v2731 = vld [vmem:[%s5 + $0x80] sm:$0xff]
      %v2732 = vld [vmem:[%s5 + $0x88] sm:$0xff]
      %v2733 = vld [vmem:[%s5 + $0x90] sm:$0xff]
      %v2734 = vld [vmem:[%s5 + $0x98] sm:$0xff]
      %v2735 = vld [vmem:[%s5 + $0xa0] sm:$0xf]
      %v2736 = vld [vmem:[%s5 + $0xa8] sm:$0xf]
      %vm2737 = vcmask 326656
      %v2739 = vsel %vm2737, %v2716, 0
      %v2742 = vsel %vm2737, %v2718, 0
      %v2745 = vsel %vm2737, %v2720, 0
      %v2748 = vsel %vm2737, %v2722, 0
      %v2751 = vsel %vm2737, %v2724, 0
      %v2754 = vsel %vm2737, %v2726, 0
      %v2757 = vsel %vm2737, %v2728, 0
      %v2760 = vsel %vm2737, %v2730, 0
      %v2763 = vsel %vm2737, %v2732, 0
      %v2766 = vsel %vm2737, %v2734, 0
      %v2769 = vsel %vm2737, %v2736, 0
      %2771 = vmatprep.subr.mxu0 0.0
      %2772 = vmatpush1.msra.mxu0 %v2694
      %2773 = vmatprep.subr.mxu0 0.0
      %2774 = vmatpush1.msra.mxu0 %v2695
      %2775 = vmatprep.subr.mxu0 0.0
      %2776 = vmatpush1.msra.mxu0 %v2696
      %2777 = vmatprep.subr.mxu0 0.0
      %2778 = vmatpush1.msra.mxu0 %v2697
      %2779 = vmatprep.subr.mxu0 0.0
      %2780 = vmatpush1.msra.mxu0 %v2698
      %2781 = vmatprep.subr.mxu0 0.0
      %2782 = vmatpush1.msra.mxu0 %v2699
      %2783 = vmatprep.subr.mxu0 0.0
      %2784 = vmatpush1.msra.mxu0 %v2700
      %2785 = vmatprep.subr.mxu0 0.0
      %2786 = vmatpush1.msra.mxu0 %v2701
      %2787 = vmatprep.subr.mxu0 0.0
      %2788 = vmatpush1.msra.mxu0 %v2702
      %2789 = vmatprep.subr.mxu0 0.0
      %2790 = vmatpush1.msra.mxu0 %v2703
      %2791 = vmatprep.subr.mxu0 0.0
      %2792 = vmatpush1.msra.mxu0 %v2704
      %2793 = vmatprep.subr.mxu0 0.0
      %2794 = vmatpush1.msra.mxu0 %v2705
      %2795 = vmatprep.subr.mxu0 0.0
      %2796 = vmatpush1.msra.mxu0 %v2706
      %2797 = vmatprep.subr.mxu0 0.0
      %2798 = vmatpush1.msra.mxu0 %v2707
      %2799 = vmatprep.subr.mxu0 0.0
      %2800 = vmatpush1.msra.mxu0 %v2708
      %2801 = vmatprep.subr.mxu0 0.0
      %2802 = vmatpush1.msra.mxu0 %v2709
      %2803 = vmatprep.subr.mxu0 0.0
      %2804 = vmatpush1.msra.mxu0 %v2710
      %2805 = vmatprep.subr.mxu0 0.0
      %2806 = vmatpush1.msra.mxu0 %v2711
      %2807 = vmatprep.subr.mxu0 0.0
      %2808 = vmatpush1.msra.mxu0 %v2712
      %2809 = vmatprep.subr.mxu0 0.0
      %2810 = vmatpush1.msra.mxu0 %v2713
      %2811 = vmatprep.subr.mxu0 0.0
      %2812 = vmatpush1.msra.mxu0 %v2714
      %2813 = vmatprep.subr.mxu0 0.0
      %2814 = vmatpush1.msra.mxu0 0.0
      %2815 = vmatprep.subr.mxu0 0.0
      %2816 = vmatpush1.msra.mxu0 0.0
      %2817 = vmatprep.subr.mxu0 0.0
      %2818 = vmatpush1.msra.mxu0 0.0
      %2819 = vmatprep.subr.mxu0 0.0
      %2820 = vmatpush1.msra.mxu0 0.0
      %2821 = vmatprep.subr.mxu0 0.0
      %2822 = vmatpush1.msra.mxu0 0.0
      %2823 = vmatprep.subr.mxu0 0.0
      %2824 = vmatpush1.msra.mxu0 0.0
      %2825 = vmatprep.subr.mxu0 0.0
      %2826 = vmatpush1.msra.mxu0 0.0
      %2827 = vmatprep.subr.mxu0 0.0
      %2828 = vmatpush1.msra.mxu0 0.0
      %2829 = vmatprep.subr.mxu0 0.0
      %2830 = vmatpush1.msra.mxu0 0.0
      %2831 = vmatprep.subr.mxu0 0.0
      %2832 = vmatpush1.msra.mxu0 0.0
      %2833 = vmatprep.subr.mxu0 0.0
      %2834 = vmatpush1.msra.mxu0 0.0
      %2835 = vmatprep.mubr.f32.mxu0 %v2739
      %2836 = vmatmul.mubr.f32.gmra.mrb[0].mxu0 %v2715
      %v2837 = vpop.f32.mrb[0].mxu0
      %v2838 = vadd.f32 0.0, %v2837
      %v2839 = vpop.f32.mrb[0].mxu0
      %2840 = vmatprep.mubr.f32.mxu0 %v2742
      %2841 = vmatmul.mubr.f32.gmra.mrb[0].mxu0 %v2717
      %v2842 = vpop.f32.mrb[0].mxu0
      %v2843 = vadd.f32 0.0, %v2842
      %v2844 = vpop.f32.mrb[0].mxu0
      %2845 = vmatprep.mubr.f32.mxu0 %v2745
      %2846 = vmatmul.mubr.f32.gmra.mrb[0].mxu0 %v2719
      %v2847 = vpop.f32.mrb[0].mxu0
      %v2848 = vadd.f32 0.0, %v2847
      %v2849 = vpop.f32.mrb[0].mxu0
      %2850 = vmatprep.mubr.f32.mxu0 %v2748
      %2851 = vmatmul.mubr.f32.gmra.mrb[0].mxu0 %v2721
      %v2852 = vpop.f32.mrb[0].mxu0
      %v2853 = vadd.f32 0.0, %v2852
      %v2854 = vpop.f32.mrb[0].mxu0
      %2855 = vmatprep.mubr.f32.mxu0 %v2751
      %2856 = vmatmul.mubr.f32.gmra.mrb[0].mxu0 %v2723
      %v2857 = vpop.f32.mrb[0].mxu0
      %v2858 = vadd.f32 0.0, %v2857
      %v2859 = vpop.f32.mrb[0].mxu0
      %2860 = vmatprep.mubr.f32.mxu0 %v2754
      %2861 = vmatmul.mubr.f32.gmra.mrb[0].mxu0 %v2725
      %v2862 = vpop.f32.mrb[0].mxu0
      %v2863 = vadd.f32 0.0, %v2862
      %v2864 = vpop.f32.mrb[0].mxu0
      %2865 = vmatprep.mubr.f32.mxu0 %v2757
      %2866 = vmatmul.mubr.f32.gmra.mrb[0].mxu0 %v2727
      %v2867 = vpop.f32.mrb[0].mxu0
      %v2868 = vadd.f32 0.0, %v2867
      %v2869 = vpop.f32.mrb[0].mxu0
      %2870 = vmatprep.mubr.f32.mxu0 %v2760
      %2871 = vmatmul.mubr.f32.gmra.mrb[0].mxu0 %v2729
      %v2872 = vpop.f32.mrb[0].mxu0
      %v2873 = vadd.f32 0.0, %v2872
      %v2874 = vpop.f32.mrb[0].mxu0
      %2875 = vmatprep.mubr.f32.mxu0 %v2763
      %2876 = vmatmul.mubr.f32.gmra.mrb[0].mxu0 %v2731
      %v2877 = vpop.f32.mrb[0].mxu0
      %v2878 = vadd.f32 0.0, %v2877
      %v2879 = vpop.f32.mrb[0].mxu0
      %2880 = vmatprep.mubr.f32.mxu0 %v2766
      %2881 = vmatmul.mubr.f32.gmra.mrb[0].mxu0 %v2733
      %v2882 = vpop.f32.mrb[0].mxu0
      %v2883 = vadd.f32 0.0, %v2882
      %v2884 = vpop.f32.mrb[0].mxu0
      %2885 = vmatprep.mubr.f32.mxu0 %v2769
      %2886 = vmatmul.mubr.f32.gmra.mrb[0].mxu0 %v2735
      %v2887 = vpop.f32.mrb[0].mxu0
      %v2888 = vadd.f32 0.0, %v2887
      %v2889 = vpop.f32.mrb[0].mxu0
      %2890 = vdwg.mxu0
      %v2891 = vld [vmem:[%s6] sm:$0xff]
      %v2892 = vld [vmem:[%s6 + $0x8] sm:$0xff]
      %v2893 = vld [vmem:[%s6 + $0x10] sm:$0xff]
      %v2894 = vld [vmem:[%s6 + $0x18] sm:$0xff]
      %v2895 = vld [vmem:[%s6 + $0x20] sm:$0xff]
      %v2896 = vld [vmem:[%s6 + $0x28] sm:$0xff]
      %v2897 = vld [vmem:[%s6 + $0x30] sm:$0xff]
      %v2898 = vld [vmem:[%s6 + $0x38] sm:$0xff]
      %v2899 = vld [vmem:[%s6 + $0x40] sm:$0xff]
      %v2900 = vld [vmem:[%s6 + $0x48] sm:$0xff]
      %v2901 = vld [vmem:[%s6 + $0x50] sm:$0xff]
      %v2902 = vld [vmem:[%s6 + $0x58] sm:$0xff]
      %v2903 = vld [vmem:[%s6 + $0x60] sm:$0xff]
      %v2904 = vld [vmem:[%s6 + $0x68] sm:$0xff]
      %v2905 = vld [vmem:[%s6 + $0x70] sm:$0xff]
      %v2906 = vld [vmem:[%s6 + $0x78] sm:$0xff]
      %v2907 = vld [vmem:[%s6 + $0x80] sm:$0xff]
      %v2908 = vld [vmem:[%s6 + $0x88] sm:$0xff]
      %v2909 = vld [vmem:[%s6 + $0x90] sm:$0xff]
      %v2910 = vld [vmem:[%s6 + $0x98] sm:$0xff]
      %v2911 = vld [vmem:[%s6 + $0xa0] sm:$0xf]
      %v2912 = vld [vmem:[%s6 + $0xa8] sm:$0xf]
      %v2914 = vsel %vm2737, %v2892, 0
      %v2917 = vsel %vm2737, %v2894, 0
      %v2920 = vsel %vm2737, %v2896, 0
      %v2923 = vsel %vm2737, %v2898, 0
      %v2926 = vsel %vm2737, %v2900, 0
      %v2929 = vsel %vm2737, %v2902, 0
      %v2932 = vsel %vm2737, %v2904, 0
      %v2935 = vsel %vm2737, %v2906, 0
      %v2938 = vsel %vm2737, %v2908, 0
      %v2941 = vsel %vm2737, %v2910, 0
      %v2944 = vsel %vm2737, %v2912, 0
      %2946 = vmatprep.subr.mxu0 0.0
      %2947 = vmatpush1.msra.mxu0 %v2694
      %2948 = vmatprep.subr.mxu0 0.0
      %2949 = vmatpush1.msra.mxu0 %v2695
      %2950 = vmatprep.subr.mxu0 0.0
      %2951 = vmatpush1.msra.mxu0 %v2696
      %2952 = vmatprep.subr.mxu0 0.0
      %2953 = vmatpush1.msra.mxu0 %v2697
      %2954 = vmatprep.subr.mxu0 0.0
      %2955 = vmatpush1.msra.mxu0 %v2698
      %2956 = vmatprep.subr.mxu0 0.0
      %2957 = vmatpush1.msra.mxu0 %v2699
      %2958 = vmatprep.subr.mxu0 0.0
      %2959 = vmatpush1.msra.mxu0 %v2700
      %2960 = vmatprep.subr.mxu0 0.0
      %2961 = vmatpush1.msra.mxu0 %v2701
      %2962 = vmatprep.subr.mxu0 0.0
      %2963 = vmatpush1.msra.mxu0 %v2702
      %2964 = vmatprep.subr.mxu0 0.0
      %2965 = vmatpush1.msra.mxu0 %v2703
      %2966 = vmatprep.subr.mxu0 0.0
      %2967 = vmatpush1.msra.mxu0 %v2704
      %2968 = vmatprep.subr.mxu0 0.0
      %2969 = vmatpush1.msra.mxu0 %v2705
      %2970 = vmatprep.subr.mxu0 0.0
      %2971 = vmatpush1.msra.mxu0 %v2706
      %2972 = vmatprep.subr.mxu0 0.0
      %2973 = vmatpush1.msra.mxu0 %v2707
      %2974 = vmatprep.subr.mxu0 0.0
      %2975 = vmatpush1.msra.mxu0 %v2708
      %2976 = vmatprep.subr.mxu0 0.0
      %2977 = vmatpush1.msra.mxu0 %v2709
      %2978 = vmatprep.subr.mxu0 0.0
      %2979 = vmatpush1.msra.mxu0 %v2710
      %2980 = vmatprep.subr.mxu0 0.0
      %2981 = vmatpush1.msra.mxu0 %v2711
      %2982 = vmatprep.subr.mxu0 0.0
      %2983 = vmatpush1.msra.mxu0 %v2712
      %2984 = vmatprep.subr.mxu0 0.0
      %2985 = vmatpush1.msra.mxu0 %v2713
      %2986 = vmatprep.subr.mxu0 0.0
      %2987 = vmatpush1.msra.mxu0 %v2714
      %2988 = vmatprep.subr.mxu0 0.0
      %2989 = vmatpush1.msra.mxu0 0.0
      %2990 = vmatprep.subr.mxu0 0.0
      %2991 = vmatpush1.msra.mxu0 0.0
      %2992 = vmatprep.subr.mxu0 0.0
      %2993 = vmatpush1.msra.mxu0 0.0
      %2994 = vmatprep.subr.mxu0 0.0
      %2995 = vmatpush1.msra.mxu0 0.0
      %2996 = vmatprep.subr.mxu0 0.0
      %2997 = vmatpush1.msra.mxu0 0.0
      %2998 = vmatprep.subr.mxu0 0.0
      %2999 = vmatpush1.msra.mxu0 0.0
      %3000 = vmatprep.subr.mxu0 0.0
      %3001 = vmatpush1.msra.mxu0 0.0
      %3002 = vmatprep.subr.mxu0 0.0
      %3003 = vmatpush1.msra.mxu0 0.0
      %3004 = vmatprep.subr.mxu0 0.0
      %3005 = vmatpush1.msra.mxu0 0.0
      %3006 = vmatprep.subr.mxu0 0.0
      %3007 = vmatpush1.msra.mxu0 0.0
      %3008 = vmatprep.subr.mxu0 0.0
      %3009 = vmatpush1.msra.mxu0 0.0
      %3010 = vmatprep.mubr.f32.mxu0 %v2914
      %3011 = vmatmul.mubr.f32.gmra.mrb[0].mxu0 %v2891
      %v3012 = vpop.f32.mrb[0].mxu0
      %v3013 = vadd.f32 0.0, %v3012
      %v3014 = vpop.f32.mrb[0].mxu0
      %3015 = vmatprep.mubr.f32.mxu0 %v2917
      %3016 = vmatmul.mubr.f32.gmra.mrb[0].mxu0 %v2893
      %v3017 = vpop.f32.mrb[0].mxu0
      %v3018 = vadd.f32 0.0, %v3017
      %v3019 = vpop.f32.mrb[0].mxu0
      %3020 = vmatprep.mubr.f32.mxu0 %v2920
      %3021 = vmatmul.mubr.f32.gmra.mrb[0].mxu0 %v2895
      %v3022 = vpop.f32.mrb[0].mxu0
      %v3023 = vadd.f32 0.0, %v3022
      %v3024 = vpop.f32.mrb[0].mxu0
      %3025 = vmatprep.mubr.f32.mxu0 %v2923
      %3026 = vmatmul.mubr.f32.gmra.mrb[0].mxu0 %v2897
      %v3027 = vpop.f32.mrb[0].mxu0
      %v3028 = vadd.f32 0.0, %v3027
      %v3029 = vpop.f32.mrb[0].mxu0
      %3030 = vmatprep.mubr.f32.mxu0 %v2926
      %3031 = vmatmul.mubr.f32.gmra.mrb[0].mxu0 %v2899
      %v3032 = vpop.f32.mrb[0].mxu0
      %v3033 = vadd.f32 0.0, %v3032
      %v3034 = vpop.f32.mrb[0].mxu0
      %3035 = vmatprep.mubr.f32.mxu0 %v2929
      %3036 = vmatmul.mubr.f32.gmra.mrb[0].mxu0 %v2901
      %v3037 = vpop.f32.mrb[0].mxu0
      %v3038 = vadd.f32 0.0, %v3037
      %v3039 = vpop.f32.mrb[0].mxu0
      %3040 = vmatprep.mubr.f32.mxu0 %v2932
      %3041 = vmatmul.mubr.f32.gmra.mrb[0].mxu0 %v2903
      %v3042 = vpop.f32.mrb[0].mxu0
      %v3043 = vadd.f32 0.0, %v3042
      %v3044 = vpop.f32.mrb[0].mxu0
      %3045 = vmatprep.mubr.f32.mxu0 %v2935
      %3046 = vmatmul.mubr.f32.gmra.mrb[0].mxu0 %v2905
      %v3047 = vpop.f32.mrb[0].mxu0
      %v3048 = vadd.f32 0.0, %v3047
      %v3049 = vpop.f32.mrb[0].mxu0
      %3050 = vmatprep.mubr.f32.mxu0 %v2938
      %3051 = vmatmul.mubr.f32.gmra.mrb[0].mxu0 %v2907
      %v3052 = vpop.f32.mrb[0].mxu0
      %v3053 = vadd.f32 0.0, %v3052
      %v3054 = vpop.f32.mrb[0].mxu0
      %3055 = vmatprep.mubr.f32.mxu0 %v2941
      %3056 = vmatmul.mubr.f32.gmra.mrb[0].mxu0 %v2909
      %v3057 = vpop.f32.mrb[0].mxu0
      %v3058 = vadd.f32 0.0, %v3057
      %v3059 = vpop.f32.mrb[0].mxu0
      %3060 = vmatprep.mubr.f32.mxu0 %v2944
      %3061 = vmatmul.mubr.f32.gmra.mrb[0].mxu0 %v2911
      %v3062 = vpop.f32.mrb[0].mxu0
      %v3063 = vadd.f32 0.0, %v3062
      %v3064 = vpop.f32.mrb[0].mxu0
      %3065 = vdwg.mxu0
      %v3066 = vmax.f32 %v2838, %v3013
      %v3067 = vmax.f32 %v2843, %v3018
      %v3068 = vmax.f32 %v2848, %v3023
      %v3069 = vmax.f32 %v2853, %v3028
      %v3070 = vmax.f32 %v2858, %v3033
      %v3071 = vmax.f32 %v2863, %v3038
      %v3072 = vmax.f32 %v2868, %v3043
      %v3073 = vmax.f32 %v2873, %v3048
      %v3074 = vmax.f32 %v2878, %v3053
      %v3075 = vmax.f32 %v2883, %v3058
      %v3076 = vmax.f32 %v2888, %v3063
      %v3077 = vld [vmem:[%s7] sm:$0xff]
      %v3078 = vld [vmem:[%s7 + $0x8] sm:$0xff]
      %v3079 = vld [vmem:[%s7 + $0x10] sm:$0xff]
      %v3080 = vld [vmem:[%s7 + $0x18] sm:$0xff]
      %v3081 = vld [vmem:[%s7 + $0x20] sm:$0xff]
      %v3082 = vld [vmem:[%s7 + $0x28] sm:$0xff]
      %v3083 = vld [vmem:[%s7 + $0x30] sm:$0xff]
      %v3084 = vld [vmem:[%s7 + $0x38] sm:$0xff]
      %v3085 = vld [vmem:[%s7 + $0x40] sm:$0xff]
      %v3086 = vld [vmem:[%s7 + $0x48] sm:$0xff]
      %v3087 = vld [vmem:[%s7 + $0x50] sm:$0xff]
      %v3088 = vld [vmem:[%s7 + $0x58] sm:$0xff]
      %v3089 = vld [vmem:[%s7 + $0x60] sm:$0xff]
      %v3090 = vld [vmem:[%s7 + $0x68] sm:$0xff]
      %v3091 = vld [vmem:[%s7 + $0x70] sm:$0xff]
      %v3092 = vld [vmem:[%s7 + $0x78] sm:$0xff]
      %v3093 = vld [vmem:[%s7 + $0x80] sm:$0xff]
      %v3094 = vld [vmem:[%s7 + $0x88] sm:$0xff]
      %v3095 = vld [vmem:[%s7 + $0x90] sm:$0xff]
      %v3096 = vld [vmem:[%s7 + $0x98] sm:$0xff]
      %s3097 = scalar_lea.vmem %s7, 160
      %v3098 = vld [vmem:[%s3097] sm:$0xff]
      %v3099 = vld [vmem:[%s3097 + $0x8] sm:$0xff]
      %v3100 = vld [vmem:[%s3097 + $0x10] sm:$0xff]
      %v3101 = vld [vmem:[%s3097 + $0x18] sm:$0xff]
      %v3102 = vld [vmem:[%s3097 + $0x20] sm:$0xff]
      %v3103 = vld [vmem:[%s3097 + $0x28] sm:$0xff]
      %v3104 = vld [vmem:[%s3097 + $0x30] sm:$0xff]
      %v3105 = vld [vmem:[%s3097 + $0x38] sm:$0xff]
      %v3106 = vld [vmem:[%s3097 + $0x40] sm:$0xff]
      %v3107 = vld [vmem:[%s3097 + $0x48] sm:$0xff]
      %v3108 = vld [vmem:[%s3097 + $0x50] sm:$0xff]
      %v3109 = vld [vmem:[%s3097 + $0x58] sm:$0xff]
      %v3110 = vld [vmem:[%s3097 + $0x60] sm:$0xff]
      %v3111 = vld [vmem:[%s3097 + $0x68] sm:$0xff]
      %v3112 = vld [vmem:[%s3097 + $0x70] sm:$0xff]
      %v3113 = vld [vmem:[%s3097 + $0x78] sm:$0xff]
      %v3114 = vld [vmem:[%s3097 + $0x80] sm:$0xff]
      %v3115 = vld [vmem:[%s3097 + $0x88] sm:$0xff]
      %v3116 = vld [vmem:[%s3097 + $0x90] sm:$0xff]
      %v3117 = vld [vmem:[%s3097 + $0x98] sm:$0xff]
      %3129 = vrot.lane.b32.xlu0 %v3066, 127
      %v3130 = vpop.permute.xlu0 %3129
      %3131 = vrot.lane.b32.xlu0 %v3067, 127
      %v3132 = vpop.permute.xlu0 %3131
      %3133 = vrot.lane.b32.xlu0 %v3068, 127
      %v3134 = vpop.permute.xlu0 %3133
      %3135 = vrot.lane.b32.xlu0 %v3069, 127
      %v3136 = vpop.permute.xlu0 %3135
      %3137 = vrot.lane.b32.xlu0 %v3070, 127
      %v3138 = vpop.permute.xlu0 %3137
      %3139 = vrot.lane.b32.xlu0 %v3071, 127
      %v3140 = vpop.permute.xlu0 %3139
      %3141 = vrot.lane.b32.xlu0 %v3072, 127
      %v3142 = vpop.permute.xlu0 %3141
      %3143 = vrot.lane.b32.xlu0 %v3073, 127
      %v3144 = vpop.permute.xlu0 %3143
      %3145 = vrot.lane.b32.xlu0 %v3074, 127
      %v3146 = vpop.permute.xlu0 %3145
      %3147 = vrot.lane.b32.xlu0 %v3075, 127
      %v3148 = vpop.permute.xlu0 %3147
      %3149 = vrot.lane.b32.xlu0 %v3076, 127
      %v3150 = vpop.permute.xlu0 %3149
      %vm3161 = vcmask 687104
      %v3163 = vsel %vm3161, %v3098, 0
      %v3166 = vsel %vm3161, %v3099, 0
      %v3169 = vsel %vm3161, %v3100, 0
      %v3172 = vsel %vm3161, %v3101, 0
      %v3175 = vsel %vm3161, %v3102, 0
      %v3178 = vsel %vm3161, %v3103, 0
      %v3181 = vsel %vm3161, %v3104, 0
      %v3184 = vsel %vm3161, %v3105, 0
      %v3187 = vsel %vm3161, %v3106, 0
      %v3190 = vsel %vm3161, %v3107, 0
      %v3193 = vsel %vm3161, %v3108, 0
      %v3196 = vsel %vm3161, %v3109, 0
      %v3199 = vsel %vm3161, %v3110, 0
      %v3202 = vsel %vm3161, %v3111, 0
      %v3205 = vsel %vm3161, %v3112, 0
      %v3208 = vsel %vm3161, %v3113, 0
      %v3211 = vsel %vm3161, %v3114, 0
      %v3214 = vsel %vm3161, %v3115, 0
      %v3217 = vsel %vm3161, %v3116, 0
      %v3220 = vsel %vm3161, %v3117, 0
      %v3222 = vsel %vm2343, %v3150, 0
      %3224 = vmatprep.subr.mxu0 0.0
      %3225 = vmatpush1.msra.mxu0 %v3130
      %3226 = vmatprep.subr.mxu0 0.0
      %3227 = vmatpush1.msra.mxu0 %v3132
      %3228 = vmatprep.subr.mxu0 0.0
      %3229 = vmatpush1.msra.mxu0 %v3134
      %3230 = vmatprep.subr.mxu0 0.0
      %3231 = vmatpush1.msra.mxu0 %v3136
      %3232 = vmatprep.subr.mxu0 0.0
      %3233 = vmatpush1.msra.mxu0 %v3138
      %3234 = vmatprep.subr.mxu0 0.0
      %3235 = vmatpush1.msra.mxu0 %v3140
      %3236 = vmatprep.subr.mxu0 0.0
      %3237 = vmatpush1.msra.mxu0 %v3142
      %3238 = vmatprep.subr.mxu0 0.0
      %3239 = vmatpush1.msra.mxu0 %v3144
      %3240 = vmatprep.subr.mxu0 0.0
      %3241 = vmatpush1.msra.mxu0 %v3146
      %3242 = vmatprep.subr.mxu0 0.0
      %3243 = vmatpush1.msra.mxu0 %v3148
      %3244 = vmatprep.subr.mxu0 0.0
      %3245 = vmatpush1.msra.mxu0 %v3222
      %3246 = vmatprep.subr.mxu0 0.0
      %3247 = vmatpush1.msra.mxu0 0.0
      %3248 = vmatprep.subr.mxu0 0.0
      %3249 = vmatpush1.msra.mxu0 0.0
      %3250 = vmatprep.subr.mxu0 0.0
      %3251 = vmatpush1.msra.mxu0 0.0
      %3252 = vmatprep.subr.mxu0 0.0
      %3253 = vmatpush1.msra.mxu0 0.0
      %3254 = vmatprep.subr.mxu0 0.0
      %3255 = vmatpush1.msra.mxu0 0.0
      %3256 = vmatprep.subr.mxu0 0.0
      %3257 = vmatpush1.msra.mxu0 0.0
      %3258 = vmatprep.subr.mxu0 0.0
      %3259 = vmatpush1.msra.mxu0 0.0
      %3260 = vmatprep.subr.mxu0 0.0
      %3261 = vmatpush1.msra.mxu0 0.0
      %3262 = vmatprep.subr.mxu0 0.0
      %3263 = vmatpush1.msra.mxu0 0.0
      %3264 = vmatprep.subr.mxu0 0.0
      %3265 = vmatpush1.msra.mxu0 0.0
      %3266 = vmatprep.subr.mxu0 0.0
      %3267 = vmatpush1.msra.mxu0 0.0
      %3268 = vmatprep.subr.mxu0 0.0
      %3269 = vmatpush1.msra.mxu0 0.0
      %3270 = vmatprep.subr.mxu0 0.0
      %3271 = vmatpush1.msra.mxu0 0.0
      %3272 = vmatprep.subr.mxu0 0.0
      %3273 = vmatpush1.msra.mxu0 0.0
      %3274 = vmatprep.subr.mxu0 0.0
      %3275 = vmatpush1.msra.mxu0 0.0
      %3276 = vmatprep.subr.mxu0 0.0
      %3277 = vmatpush1.msra.mxu0 0.0
      %3278 = vmatprep.subr.mxu0 0.0
      %3279 = vmatpush1.msra.mxu0 0.0
      %3280 = vmatprep.subr.mxu0 0.0
      %3281 = vmatpush1.msra.mxu0 0.0
      %3282 = vmatprep.subr.mxu0 0.0
      %3283 = vmatpush1.msra.mxu0 0.0
      %3284 = vmatprep.subr.mxu0 0.0
      %3285 = vmatpush1.msra.mxu0 0.0
      %3286 = vmatprep.subr.mxu0 0.0
      %3287 = vmatpush1.msra.mxu0 0.0
      %3288 = vmatprep.mubr.f32.mxu0 0.0
      %3289 = vmatmul.mubr.f32.gmra.mrb[0].mxu0 %v3163
      %v3290 = vpop.f32.mrb[0].mxu0
      %v3291 = vadd.f32 0.0, %v3290
      %v3292 = vpop.f32.mrb[0].mxu0
      %3293 = vmatprep.mubr.f32.mxu0 0.0
      %3294 = vmatmul.mubr.f32.gmra.mrb[0].mxu0 %v3166
      %v3295 = vpop.f32.mrb[0].mxu0
      %v3296 = vadd.f32 0.0, %v3295
      %v3297 = vpop.f32.mrb[0].mxu0
      %3298 = vmatprep.mubr.f32.mxu0 0.0
      %3299 = vmatmul.mubr.f32.gmra.mrb[0].mxu0 %v3169
      %v3300 = vpop.f32.mrb[0].mxu0
      %v3301 = vadd.f32 0.0, %v3300
      %v3302 = vpop.f32.mrb[0].mxu0
      %3303 = vmatprep.mubr.f32.mxu0 0.0
      %3304 = vmatmul.mubr.f32.gmra.mrb[0].mxu0 %v3172
      %v3305 = vpop.f32.mrb[0].mxu0
      %v3306 = vadd.f32 0.0, %v3305
      %v3307 = vpop.f32.mrb[0].mxu0
      %3308 = vmatprep.mubr.f32.mxu0 0.0
      %3309 = vmatmul.mubr.f32.gmra.mrb[0].mxu0 %v3175
      %v3310 = vpop.f32.mrb[0].mxu0
      %v3311 = vadd.f32 0.0, %v3310
      %v3312 = vpop.f32.mrb[0].mxu0
      %3313 = vmatprep.mubr.f32.mxu0 0.0
      %3314 = vmatmul.mubr.f32.gmra.mrb[0].mxu0 %v3178
      %v3315 = vpop.f32.mrb[0].mxu0
      %v3316 = vadd.f32 0.0, %v3315
      %v3317 = vpop.f32.mrb[0].mxu0
      %3318 = vmatprep.mubr.f32.mxu0 0.0
      %3319 = vmatmul.mubr.f32.gmra.mrb[0].mxu0 %v3181
      %v3320 = vpop.f32.mrb[0].mxu0
      %v3321 = vadd.f32 0.0, %v3320
      %v3322 = vpop.f32.mrb[0].mxu0
      %3323 = vmatprep.mubr.f32.mxu0 0.0
      %3324 = vmatmul.mubr.f32.gmra.mrb[0].mxu0 %v3184
      %v3325 = vpop.f32.mrb[0].mxu0
      %v3326 = vadd.f32 0.0, %v3325
      %v3327 = vpop.f32.mrb[0].mxu0
      %3328 = vmatprep.mubr.f32.mxu0 0.0
      %3329 = vmatmul.mubr.f32.gmra.mrb[0].mxu0 %v3187
      %v3330 = vpop.f32.mrb[0].mxu0
      %v3331 = vadd.f32 0.0, %v3330
      %v3332 = vpop.f32.mrb[0].mxu0
      %3333 = vmatprep.mubr.f32.mxu0 0.0
      %3334 = vmatmul.mubr.f32.gmra.mrb[0].mxu0 %v3190
      %v3335 = vpop.f32.mrb[0].mxu0
      %v3336 = vadd.f32 0.0, %v3335
      %v3337 = vpop.f32.mrb[0].mxu0
      %3338 = vmatprep.mubr.f32.mxu0 0.0
      %3339 = vmatmul.mubr.f32.gmra.mrb[0].mxu0 %v3193
      %v3340 = vpop.f32.mrb[0].mxu0
      %v3341 = vadd.f32 0.0, %v3340
      %v3342 = vpop.f32.mrb[0].mxu0
      %3343 = vmatprep.mubr.f32.mxu0 0.0
      %3344 = vmatmul.mubr.f32.gmra.mrb[0].mxu0 %v3196
      %v3345 = vpop.f32.mrb[0].mxu0
      %v3346 = vadd.f32 0.0, %v3345
      %v3347 = vpop.f32.mrb[0].mxu0
      %3348 = vmatprep.mubr.f32.mxu0 0.0
      %3349 = vmatmul.mubr.f32.gmra.mrb[0].mxu0 %v3199
      %v3350 = vpop.f32.mrb[0].mxu0
      %v3351 = vadd.f32 0.0, %v3350
      %v3352 = vpop.f32.mrb[0].mxu0
      %3353 = vmatprep.mubr.f32.mxu0 0.0
      %3354 = vmatmul.mubr.f32.gmra.mrb[0].mxu0 %v3202
      %v3355 = vpop.f32.mrb[0].mxu0
      %v3356 = vadd.f32 0.0, %v3355
      %v3357 = vpop.f32.mrb[0].mxu0
      %3358 = vmatprep.mubr.f32.mxu0 0.0
      %3359 = vmatmul.mubr.f32.gmra.mrb[0].mxu0 %v3205
      %v3360 = vpop.f32.mrb[0].mxu0
      %v3361 = vadd.f32 0.0, %v3360
      %v3362 = vpop.f32.mrb[0].mxu0
      %3363 = vmatprep.mubr.f32.mxu0 0.0
      %3364 = vmatmul.mubr.f32.gmra.mrb[0].mxu0 %v3208
      %v3365 = vpop.f32.mrb[0].mxu0
      %v3366 = vadd.f32 0.0, %v3365
      %v3367 = vpop.f32.mrb[0].mxu0
      %3368 = vmatprep.mubr.f32.mxu0 0.0
      %3369 = vmatmul.mubr.f32.gmra.mrb[0].mxu0 %v3211
      %v3370 = vpop.f32.mrb[0].mxu0
      %v3371 = vadd.f32 0.0, %v3370
      %v3372 = vpop.f32.mrb[0].mxu0
      %3373 = vmatprep.mubr.f32.mxu0 0.0
      %3374 = vmatmul.mubr.f32.gmra.mrb[0].mxu0 %v3214
      %v3375 = vpop.f32.mrb[0].mxu0
      %v3376 = vadd.f32 0.0, %v3375
      %v3377 = vpop.f32.mrb[0].mxu0
      %3378 = vmatprep.mubr.f32.mxu0 0.0
      %3379 = vmatmul.mubr.f32.gmra.mrb[0].mxu0 %v3217
      %v3380 = vpop.f32.mrb[0].mxu0
      %v3381 = vadd.f32 0.0, %v3380
      %v3382 = vpop.f32.mrb[0].mxu0
      %3383 = vmatprep.mubr.f32.mxu0 0.0
      %3384 = vmatmul.mubr.f32.gmra.mrb[0].mxu0 %v3220
      %v3385 = vpop.f32.mrb[0].mxu0
      %v3386 = vadd.f32 0.0, %v3385
      %v3387 = vpop.f32.mrb[0].mxu0
      %3388 = vdwg.mxu0
      %v3390 = vsel %vm3161, %v3077, 0
      %v3393 = vsel %vm3161, %v3078, 0
      %v3396 = vsel %vm3161, %v3079, 0
      %v3399 = vsel %vm3161, %v3080, 0
      %v3402 = vsel %vm3161, %v3081, 0
      %v3405 = vsel %vm3161, %v3082, 0
      %v3408 = vsel %vm3161, %v3083, 0
      %v3411 = vsel %vm3161, %v3084, 0
      %v3414 = vsel %vm3161, %v3085, 0
      %v3417 = vsel %vm3161, %v3086, 0
      %v3420 = vsel %vm3161, %v3087, 0
      %v3423 = vsel %vm3161, %v3088, 0
      %v3426 = vsel %vm3161, %v3089, 0
      %v3429 = vsel %vm3161, %v3090, 0
      %v3432 = vsel %vm3161, %v3091, 0
      %v3435 = vsel %vm3161, %v3092, 0
      %v3438 = vsel %vm3161, %v3093, 0
      %v3441 = vsel %vm3161, %v3094, 0
      %v3444 = vsel %vm3161, %v3095, 0
      %v3447 = vsel %vm3161, %v3096, 0
      %v3449 = vsel %vm2343, %v3076, 0
      %3451 = vmatprep.subr.mxu0 0.0
      %3452 = vmatpush1.msra.mxu0 %v3066
      %3453 = vmatprep.subr.mxu0 0.0
      %3454 = vmatpush1.msra.mxu0 %v3067
      %3455 = vmatprep.subr.mxu0 0.0
      %3456 = vmatpush1.msra.mxu0 %v3068
      %3457 = vmatprep.subr.mxu0 0.0
      %3458 = vmatpush1.msra.mxu0 %v3069
      %3459 = vmatprep.subr.mxu0 0.0
      %3460 = vmatpush1.msra.mxu0 %v3070
      %3461 = vmatprep.subr.mxu0 0.0
      %3462 = vmatpush1.msra.mxu0 %v3071
      %3463 = vmatprep.subr.mxu0 0.0
      %3464 = vmatpush1.msra.mxu0 %v3072
      %3465 = vmatprep.subr.mxu0 0.0
      %3466 = vmatpush1.msra.mxu0 %v3073
      %3467 = vmatprep.subr.mxu0 0.0
      %3468 = vmatpush1.msra.mxu0 %v3074
      %3469 = vmatprep.subr.mxu0 0.0
      %3470 = vmatpush1.msra.mxu0 %v3075
      %3471 = vmatprep.subr.mxu0 0.0
      %3472 = vmatpush1.msra.mxu0 %v3449
      %3473 = vmatprep.subr.mxu0 0.0
      %3474 = vmatpush1.msra.mxu0 0.0
      %3475 = vmatprep.subr.mxu0 0.0
      %3476 = vmatpush1.msra.mxu0 0.0
      %3477 = vmatprep.subr.mxu0 0.0
      %3478 = vmatpush1.msra.mxu0 0.0
      %3479 = vmatprep.subr.mxu0 0.0
      %3480 = vmatpush1.msra.mxu0 0.0
      %3481 = vmatprep.subr.mxu0 0.0
      %3482 = vmatpush1.msra.mxu0 0.0
      %3483 = vmatprep.subr.mxu0 0.0
      %3484 = vmatpush1.msra.mxu0 0.0
      %3485 = vmatprep.subr.mxu0 0.0
      %3486 = vmatpush1.msra.mxu0 0.0
      %3487 = vmatprep.subr.mxu0 0.0
      %3488 = vmatpush1.msra.mxu0 0.0
      %3489 = vmatprep.subr.mxu0 0.0
      %3490 = vmatpush1.msra.mxu0 0.0
      %3491 = vmatprep.subr.mxu0 0.0
      %3492 = vmatpush1.msra.mxu0 0.0
      %3493 = vmatprep.subr.mxu0 0.0
      %3494 = vmatpush1.msra.mxu0 0.0
      %3495 = vmatprep.subr.mxu0 0.0
      %3496 = vmatpush1.msra.mxu0 0.0
      %3497 = vmatprep.subr.mxu0 0.0
      %3498 = vmatpush1.msra.mxu0 0.0
      %3499 = vmatprep.subr.mxu0 0.0
      %3500 = vmatpush1.msra.mxu0 0.0
      %3501 = vmatprep.subr.mxu0 0.0
      %3502 = vmatpush1.msra.mxu0 0.0
      %3503 = vmatprep.subr.mxu0 0.0
      %3504 = vmatpush1.msra.mxu0 0.0
      %3505 = vmatprep.subr.mxu0 0.0
      %3506 = vmatpush1.msra.mxu0 0.0
      %3507 = vmatprep.subr.mxu0 0.0
      %3508 = vmatpush1.msra.mxu0 0.0
      %3509 = vmatprep.subr.mxu0 0.0
      %3510 = vmatpush1.msra.mxu0 0.0
      %3511 = vmatprep.subr.mxu0 0.0
      %3512 = vmatpush1.msra.mxu0 0.0
      %3513 = vmatprep.subr.mxu0 0.0
      %3514 = vmatpush1.msra.mxu0 0.0
      %3515 = vmatprep.mubr.f32.mxu0 0.0
      %3516 = vmatmul.mubr.f32.gmra.mrb[0].mxu0 %v3390
      %v3517 = vpop.f32.mrb[0].mxu0
      %v3518 = vadd.f32 %v3291, %v3517
      %v3519 = vpop.f32.mrb[0].mxu0
      %3520 = vmatprep.mubr.f32.mxu0 0.0
      %3521 = vmatmul.mubr.f32.gmra.mrb[0].mxu0 %v3393
      %v3522 = vpop.f32.mrb[0].mxu0
      %v3523 = vadd.f32 %v3296, %v3522
      %v3524 = vpop.f32.mrb[0].mxu0
      %3525 = vmatprep.mubr.f32.mxu0 0.0
      %3526 = vmatmul.mubr.f32.gmra.mrb[0].mxu0 %v3396
      %v3527 = vpop.f32.mrb[0].mxu0
      %v3528 = vadd.f32 %v3301, %v3527
      %v3529 = vpop.f32.mrb[0].mxu0
      %3530 = vmatprep.mubr.f32.mxu0 0.0
      %3531 = vmatmul.mubr.f32.gmra.mrb[0].mxu0 %v3399
      %v3532 = vpop.f32.mrb[0].mxu0
      %v3533 = vadd.f32 %v3306, %v3532
      %v3534 = vpop.f32.mrb[0].mxu0
      %3535 = vmatprep.mubr.f32.mxu0 0.0
      %3536 = vmatmul.mubr.f32.gmra.mrb[0].mxu0 %v3402
      %v3537 = vpop.f32.mrb[0].mxu0
      %v3538 = vadd.f32 %v3311, %v3537
      %v3539 = vpop.f32.mrb[0].mxu0
      %3540 = vmatprep.mubr.f32.mxu0 0.0
      %3541 = vmatmul.mubr.f32.gmra.mrb[0].mxu0 %v3405
      %v3542 = vpop.f32.mrb[0].mxu0
      %v3543 = vadd.f32 %v3316, %v3542
      %v3544 = vpop.f32.mrb[0].mxu0
      %3545 = vmatprep.mubr.f32.mxu0 0.0
      %3546 = vmatmul.mubr.f32.gmra.mrb[0].mxu0 %v3408
      %v3547 = vpop.f32.mrb[0].mxu0
      %v3548 = vadd.f32 %v3321, %v3547
      %v3549 = vpop.f32.mrb[0].mxu0
      %3550 = vmatprep.mubr.f32.mxu0 0.0
      %3551 = vmatmul.mubr.f32.gmra.mrb[0].mxu0 %v3411
      %v3552 = vpop.f32.mrb[0].mxu0
      %v3553 = vadd.f32 %v3326, %v3552
      %v3554 = vpop.f32.mrb[0].mxu0
      %3555 = vmatprep.mubr.f32.mxu0 0.0
      %3556 = vmatmul.mubr.f32.gmra.mrb[0].mxu0 %v3414
      %v3557 = vpop.f32.mrb[0].mxu0
      %v3558 = vadd.f32 %v3331, %v3557
      %v3559 = vpop.f32.mrb[0].mxu0
      %3560 = vmatprep.mubr.f32.mxu0 0.0
      %3561 = vmatmul.mubr.f32.gmra.mrb[0].mxu0 %v3417
      %v3562 = vpop.f32.mrb[0].mxu0
      %v3563 = vadd.f32 %v3336, %v3562
      %v3564 = vpop.f32.mrb[0].mxu0
      %3565 = vmatprep.mubr.f32.mxu0 0.0
      %3566 = vmatmul.mubr.f32.gmra.mrb[0].mxu0 %v3420
      %v3567 = vpop.f32.mrb[0].mxu0
      %v3568 = vadd.f32 %v3341, %v3567
      %v3569 = vpop.f32.mrb[0].mxu0
      %3570 = vmatprep.mubr.f32.mxu0 0.0
      %3571 = vmatmul.mubr.f32.gmra.mrb[0].mxu0 %v3423
      %v3572 = vpop.f32.mrb[0].mxu0
      %v3573 = vadd.f32 %v3346, %v3572
      %v3574 = vpop.f32.mrb[0].mxu0
      %3575 = vmatprep.mubr.f32.mxu0 0.0
      %3576 = vmatmul.mubr.f32.gmra.mrb[0].mxu0 %v3426
      %v3577 = vpop.f32.mrb[0].mxu0
      %v3578 = vadd.f32 %v3351, %v3577
      %v3579 = vpop.f32.mrb[0].mxu0
      %3580 = vmatprep.mubr.f32.mxu0 0.0
      %3581 = vmatmul.mubr.f32.gmra.mrb[0].mxu0 %v3429
      %v3582 = vpop.f32.mrb[0].mxu0
      %v3583 = vadd.f32 %v3356, %v3582
      %v3584 = vpop.f32.mrb[0].mxu0
      %3585 = vmatprep.mubr.f32.mxu0 0.0
      %3586 = vmatmul.mubr.f32.gmra.mrb[0].mxu0 %v3432
      %v3587 = vpop.f32.mrb[0].mxu0
      %v3588 = vadd.f32 %v3361, %v3587
      %v3589 = vpop.f32.mrb[0].mxu0
      %3590 = vmatprep.mubr.f32.mxu0 0.0
      %3591 = vmatmul.mubr.f32.gmra.mrb[0].mxu0 %v3435
      %v3592 = vpop.f32.mrb[0].mxu0
      %v3593 = vadd.f32 %v3366, %v3592
      %v3594 = vpop.f32.mrb[0].mxu0
      %3595 = vmatprep.mubr.f32.mxu0 0.0
      %3596 = vmatmul.mubr.f32.gmra.mrb[0].mxu0 %v3438
      %v3597 = vpop.f32.mrb[0].mxu0
      %v3598 = vadd.f32 %v3371, %v3597
      %v3599 = vpop.f32.mrb[0].mxu0
      %3600 = vmatprep.mubr.f32.mxu0 0.0
      %3601 = vmatmul.mubr.f32.gmra.mrb[0].mxu0 %v3441
      %v3602 = vpop.f32.mrb[0].mxu0
      %v3603 = vadd.f32 %v3376, %v3602
      %v3604 = vpop.f32.mrb[0].mxu0
      %3605 = vmatprep.mubr.f32.mxu0 0.0
      %3606 = vmatmul.mubr.f32.gmra.mrb[0].mxu0 %v3444
      %v3607 = vpop.f32.mrb[0].mxu0
      %v3608 = vadd.f32 %v3381, %v3607
      %v3609 = vpop.f32.mrb[0].mxu0
      %3610 = vmatprep.mubr.f32.mxu0 0.0
      %3611 = vmatmul.mubr.f32.gmra.mrb[0].mxu0 %v3447
      %v3612 = vpop.f32.mrb[0].mxu0
      %v3613 = vadd.f32 %v3386, %v3612
      %v3614 = vpop.f32.mrb[0].mxu0
      %3615 = vdwg.mxu0
      %s3616 = scalar_lea.vmem %s7, 320
      %v3617 = vld [vmem:[%s3616] sm:$0xff]
      %v3618 = vld [vmem:[%s3616 + $0x8] sm:$0xff]
      %v3619 = vld [vmem:[%s3616 + $0x10] sm:$0xff]
      %v3620 = vld [vmem:[%s3616 + $0x18] sm:$0xff]
      %v3621 = vld [vmem:[%s3616 + $0x20] sm:$0xff]
      %v3622 = vld [vmem:[%s3616 + $0x28] sm:$0xff]
      %v3623 = vld [vmem:[%s3616 + $0x30] sm:$0xff]
      %v3624 = vld [vmem:[%s3616 + $0x38] sm:$0xff]
      %v3625 = vld [vmem:[%s3616 + $0x40] sm:$0xff]
      %v3626 = vld [vmem:[%s3616 + $0x48] sm:$0xff]
      %v3627 = vld [vmem:[%s3616 + $0x50] sm:$0xff]
      %v3628 = vld [vmem:[%s3616 + $0x58] sm:$0xff]
      %v3629 = vld [vmem:[%s3616 + $0x60] sm:$0xff]
      %v3630 = vld [vmem:[%s3616 + $0x68] sm:$0xff]
      %v3631 = vld [vmem:[%s3616 + $0x70] sm:$0xff]
      %v3632 = vld [vmem:[%s3616 + $0x78] sm:$0xff]
      %v3633 = vld [vmem:[%s3616 + $0x80] sm:$0xff]
      %v3634 = vld [vmem:[%s3616 + $0x88] sm:$0xff]
      %v3635 = vld [vmem:[%s3616 + $0x90] sm:$0xff]
      %v3636 = vld [vmem:[%s3616 + $0x98] sm:$0xff]
      %3637 = vrot.lane.b32.xlu0 %v3066, 126
      %v3638 = vpop.permute.xlu0 %3637
      %3639 = vrot.lane.b32.xlu0 %v3067, 126
      %v3640 = vpop.permute.xlu0 %3639
      %3641 = vrot.lane.b32.xlu0 %v3068, 126
      %v3642 = vpop.permute.xlu0 %3641
      %3643 = vrot.lane.b32.xlu0 %v3069, 126
      %v3644 = vpop.permute.xlu0 %3643
      %3645 = vrot.lane.b32.xlu0 %v3070, 126
      %v3646 = vpop.permute.xlu0 %3645
      %3647 = vrot.lane.b32.xlu0 %v3071, 126
      %v3648 = vpop.permute.xlu0 %3647
      %3649 = vrot.lane.b32.xlu0 %v3072, 126
      %v3650 = vpop.permute.xlu0 %3649
      %3651 = vrot.lane.b32.xlu0 %v3073, 126
      %v3652 = vpop.permute.xlu0 %3651
      %3653 = vrot.lane.b32.xlu0 %v3074, 126
      %v3654 = vpop.permute.xlu0 %3653
      %3655 = vrot.lane.b32.xlu0 %v3075, 126
      %v3656 = vpop.permute.xlu0 %3655
      %3657 = vrot.lane.b32.xlu0 %v3076, 126
      %v3658 = vpop.permute.xlu0 %3657
      %v3670 = vsel %vm3161, %v3617, 0
      %v3673 = vsel %vm3161, %v3618, 0
      %v3676 = vsel %vm3161, %v3619, 0
      %v3679 = vsel %vm3161, %v3620, 0
      %v3682 = vsel %vm3161, %v3621, 0
      %v3685 = vsel %vm3161, %v3622, 0
      %v3688 = vsel %vm3161, %v3623, 0
      %v3691 = vsel %vm3161, %v3624, 0
      %v3694 = vsel %vm3161, %v3625, 0
      %v3697 = vsel %vm3161, %v3626, 0
      %v3700 = vsel %vm3161, %v3627, 0
      %v3703 = vsel %vm3161, %v3628, 0
      %v3706 = vsel %vm3161, %v3629, 0
      %v3709 = vsel %vm3161, %v3630, 0
      %v3712 = vsel %vm3161, %v3631, 0
      %v3715 = vsel %vm3161, %v3632, 0
      %v3718 = vsel %vm3161, %v3633, 0
      %v3721 = vsel %vm3161, %v3634, 0
      %v3724 = vsel %vm3161, %v3635, 0
      %v3727 = vsel %vm3161, %v3636, 0
      %v3729 = vsel %vm2343, %v3658, 0
      %3731 = vmatprep.subr.mxu0 0.0
      %3732 = vmatpush1.msra.mxu0 %v3638
      %3733 = vmatprep.subr.mxu0 0.0
      %3734 = vmatpush1.msra.mxu0 %v3640
      %3735 = vmatprep.subr.mxu0 0.0
      %3736 = vmatpush1.msra.mxu0 %v3642
      %3737 = vmatprep.subr.mxu0 0.0
      %3738 = vmatpush1.msra.mxu0 %v3644
      %3739 = vmatprep.subr.mxu0 0.0
      %3740 = vmatpush1.msra.mxu0 %v3646
      %3741 = vmatprep.subr.mxu0 0.0
      %3742 = vmatpush1.msra.mxu0 %v3648
      %3743 = vmatprep.subr.mxu0 0.0
      %3744 = vmatpush1.msra.mxu0 %v3650
      %3745 = vmatprep.subr.mxu0 0.0
      %3746 = vmatpush1.msra.mxu0 %v3652
      %3747 = vmatprep.subr.mxu0 0.0
      %3748 = vmatpush1.msra.mxu0 %v3654
      %3749 = vmatprep.subr.mxu0 0.0
      %3750 = vmatpush1.msra.mxu0 %v3656
      %3751 = vmatprep.subr.mxu0 0.0
      %3752 = vmatpush1.msra.mxu0 %v3729
      %3753 = vmatprep.subr.mxu0 0.0
      %3754 = vmatpush1.msra.mxu0 0.0
      %3755 = vmatprep.subr.mxu0 0.0
      %3756 = vmatpush1.msra.mxu0 0.0
      %3757 = vmatprep.subr.mxu0 0.0
      %3758 = vmatpush1.msra.mxu0 0.0
      %3759 = vmatprep.subr.mxu0 0.0
      %3760 = vmatpush1.msra.mxu0 0.0
      %3761 = vmatprep.subr.mxu0 0.0
      %3762 = vmatpush1.msra.mxu0 0.0
      %3763 = vmatprep.subr.mxu0 0.0
      %3764 = vmatpush1.msra.mxu0 0.0
      %3765 = vmatprep.subr.mxu0 0.0
      %3766 = vmatpush1.msra.mxu0 0.0
      %3767 = vmatprep.subr.mxu0 0.0
      %3768 = vmatpush1.msra.mxu0 0.0
      %3769 = vmatprep.subr.mxu0 0.0
      %3770 = vmatpush1.msra.mxu0 0.0
      %3771 = vmatprep.subr.mxu0 0.0
      %3772 = vmatpush1.msra.mxu0 0.0
      %3773 = vmatprep.subr.mxu0 0.0
      %3774 = vmatpush1.msra.mxu0 0.0
      %3775 = vmatprep.subr.mxu0 0.0
      %3776 = vmatpush1.msra.mxu0 0.0
      %3777 = vmatprep.subr.mxu0 0.0
      %3778 = vmatpush1.msra.mxu0 0.0
      %3779 = vmatprep.subr.mxu0 0.0
      %3780 = vmatpush1.msra.mxu0 0.0
      %3781 = vmatprep.subr.mxu0 0.0
      %3782 = vmatpush1.msra.mxu0 0.0
      %3783 = vmatprep.subr.mxu0 0.0
      %3784 = vmatpush1.msra.mxu0 0.0
      %3785 = vmatprep.subr.mxu0 0.0
      %3786 = vmatpush1.msra.mxu0 0.0
      %3787 = vmatprep.subr.mxu0 0.0
      %3788 = vmatpush1.msra.mxu0 0.0
      %3789 = vmatprep.subr.mxu0 0.0
      %3790 = vmatpush1.msra.mxu0 0.0
      %3791 = vmatprep.subr.mxu0 0.0
      %3792 = vmatpush1.msra.mxu0 0.0
      %3793 = vmatprep.subr.mxu0 0.0
      %3794 = vmatpush1.msra.mxu0 0.0
      %3795 = vmatprep.mubr.f32.mxu0 0.0
      %3796 = vmatmul.mubr.f32.gmra.mrb[0].mxu0 %v3670
      %v3797 = vpop.f32.mrb[0].mxu0
      %v3798 = vadd.f32 0.0, %v3797
      %v3799 = vpop.f32.mrb[0].mxu0
      %3800 = vmatprep.mubr.f32.mxu0 0.0
      %3801 = vmatmul.mubr.f32.gmra.mrb[0].mxu0 %v3673
      %v3802 = vpop.f32.mrb[0].mxu0
      %v3803 = vadd.f32 0.0, %v3802
      %v3804 = vpop.f32.mrb[0].mxu0
      %3805 = vmatprep.mubr.f32.mxu0 0.0
      %3806 = vmatmul.mubr.f32.gmra.mrb[0].mxu0 %v3676
      %v3807 = vpop.f32.mrb[0].mxu0
      %v3808 = vadd.f32 0.0, %v3807
      %v3809 = vpop.f32.mrb[0].mxu0
      %3810 = vmatprep.mubr.f32.mxu0 0.0
      %3811 = vmatmul.mubr.f32.gmra.mrb[0].mxu0 %v3679
      %v3812 = vpop.f32.mrb[0].mxu0
      %v3813 = vadd.f32 0.0, %v3812
      %v3814 = vpop.f32.mrb[0].mxu0
      %3815 = vmatprep.mubr.f32.mxu0 0.0
      %3816 = vmatmul.mubr.f32.gmra.mrb[0].mxu0 %v3682
      %v3817 = vpop.f32.mrb[0].mxu0
      %v3818 = vadd.f32 0.0, %v3817
      %v3819 = vpop.f32.mrb[0].mxu0
      %3820 = vmatprep.mubr.f32.mxu0 0.0
      %3821 = vmatmul.mubr.f32.gmra.mrb[0].mxu0 %v3685
      %v3822 = vpop.f32.mrb[0].mxu0
      %v3823 = vadd.f32 0.0, %v3822
      %v3824 = vpop.f32.mrb[0].mxu0
      %3825 = vmatprep.mubr.f32.mxu0 0.0
      %3826 = vmatmul.mubr.f32.gmra.mrb[0].mxu0 %v3688
      %v3827 = vpop.f32.mrb[0].mxu0
      %v3828 = vadd.f32 0.0, %v3827
      %v3829 = vpop.f32.mrb[0].mxu0
      %3830 = vmatprep.mubr.f32.mxu0 0.0
      %3831 = vmatmul.mubr.f32.gmra.mrb[0].mxu0 %v3691
      %v3832 = vpop.f32.mrb[0].mxu0
      %v3833 = vadd.f32 0.0, %v3832
      %v3834 = vpop.f32.mrb[0].mxu0
      %3835 = vmatprep.mubr.f32.mxu0 0.0
      %3836 = vmatmul.mubr.f32.gmra.mrb[0].mxu0 %v3694
      %v3837 = vpop.f32.mrb[0].mxu0
      %v3838 = vadd.f32 0.0, %v3837
      %v3839 = vpop.f32.mrb[0].mxu0
      %3840 = vmatprep.mubr.f32.mxu0 0.0
      %3841 = vmatmul.mubr.f32.gmra.mrb[0].mxu0 %v3697
      %v3842 = vpop.f32.mrb[0].mxu0
      %v3843 = vadd.f32 0.0, %v3842
      %v3844 = vpop.f32.mrb[0].mxu0
      %3845 = vmatprep.mubr.f32.mxu0 0.0
      %3846 = vmatmul.mubr.f32.gmra.mrb[0].mxu0 %v3700
      %v3847 = vpop.f32.mrb[0].mxu0
      %v3848 = vadd.f32 0.0, %v3847
      %v3849 = vpop.f32.mrb[0].mxu0
      %3850 = vmatprep.mubr.f32.mxu0 0.0
      %3851 = vmatmul.mubr.f32.gmra.mrb[0].mxu0 %v3703
      %v3852 = vpop.f32.mrb[0].mxu0
      %v3853 = vadd.f32 0.0, %v3852
      %v3854 = vpop.f32.mrb[0].mxu0
      %3855 = vmatprep.mubr.f32.mxu0 0.0
      %3856 = vmatmul.mubr.f32.gmra.mrb[0].mxu0 %v3706
      %v3857 = vpop.f32.mrb[0].mxu0
      %v3858 = vadd.f32 0.0, %v3857
      %v3859 = vpop.f32.mrb[0].mxu0
      %3860 = vmatprep.mubr.f32.mxu0 0.0
      %3861 = vmatmul.mubr.f32.gmra.mrb[0].mxu0 %v3709
      %v3862 = vpop.f32.mrb[0].mxu0
      %v3863 = vadd.f32 0.0, %v3862
      %v3864 = vpop.f32.mrb[0].mxu0
      %3865 = vmatprep.mubr.f32.mxu0 0.0
      %3866 = vmatmul.mubr.f32.gmra.mrb[0].mxu0 %v3712
      %v3867 = vpop.f32.mrb[0].mxu0
      %v3868 = vadd.f32 0.0, %v3867
      %v3869 = vpop.f32.mrb[0].mxu0
      %3870 = vmatprep.mubr.f32.mxu0 0.0
      %3871 = vmatmul.mubr.f32.gmra.mrb[0].mxu0 %v3715
      %v3872 = vpop.f32.mrb[0].mxu0
      %v3873 = vadd.f32 0.0, %v3872
      %v3874 = vpop.f32.mrb[0].mxu0
      %3875 = vmatprep.mubr.f32.mxu0 0.0
      %3876 = vmatmul.mubr.f32.gmra.mrb[0].mxu0 %v3718
      %v3877 = vpop.f32.mrb[0].mxu0
      %v3878 = vadd.f32 0.0, %v3877
      %v3879 = vpop.f32.mrb[0].mxu0
      %3880 = vmatprep.mubr.f32.mxu0 0.0
      %3881 = vmatmul.mubr.f32.gmra.mrb[0].mxu0 %v3721
      %v3882 = vpop.f32.mrb[0].mxu0
      %v3883 = vadd.f32 0.0, %v3882
      %v3884 = vpop.f32.mrb[0].mxu0
      %3885 = vmatprep.mubr.f32.mxu0 0.0
      %3886 = vmatmul.mubr.f32.gmra.mrb[0].mxu0 %v3724
      %v3887 = vpop.f32.mrb[0].mxu0
      %v3888 = vadd.f32 0.0, %v3887
      %v3889 = vpop.f32.mrb[0].mxu0
      %3890 = vmatprep.mubr.f32.mxu0 0.0
      %3891 = vmatmul.mubr.f32.gmra.mrb[0].mxu0 %v3727
      %v3892 = vpop.f32.mrb[0].mxu0
      %v3893 = vadd.f32 0.0, %v3892
      %v3894 = vpop.f32.mrb[0].mxu0
      %3895 = vdwg.mxu0
      %v3896 = vadd.f32 %v3518, %v3798
      %v3897 = vadd.f32 %v3523, %v3803
      %v3898 = vadd.f32 %v3528, %v3808
      %v3899 = vadd.f32 %v3533, %v3813
      %v3900 = vadd.f32 %v3538, %v3818
      %v3901 = vadd.f32 %v3543, %v3823
      %v3902 = vadd.f32 %v3548, %v3828
      %v3903 = vadd.f32 %v3553, %v3833
      %v3904 = vadd.f32 %v3558, %v3838
      %v3905 = vadd.f32 %v3563, %v3843
      %v3906 = vadd.f32 %v3568, %v3848
      %v3907 = vadd.f32 %v3573, %v3853
      %v3908 = vadd.f32 %v3578, %v3858
      %v3909 = vadd.f32 %v3583, %v3863
      %v3910 = vadd.f32 %v3588, %v3868
      %v3911 = vadd.f32 %v3593, %v3873
      %v3912 = vadd.f32 %v3598, %v3878
      %v3913 = vadd.f32 %v3603, %v3883
      %v3914 = vadd.f32 %v3608, %v3888
      %v3915 = vadd.f32 %v3613, %v3893
      %s3916 = scalar_lea.vmem %s7, 480
      %v3917 = vld [vmem:[%s3916] sm:$0xff]
      %v3918 = vld [vmem:[%s3916 + $0x8] sm:$0xff]
      %v3919 = vld [vmem:[%s3916 + $0x10] sm:$0xff]
      %v3920 = vld [vmem:[%s3916 + $0x18] sm:$0xff]
      %v3921 = vld [vmem:[%s3916 + $0x20] sm:$0xff]
      %v3922 = vld [vmem:[%s3916 + $0x28] sm:$0xff]
      %v3923 = vld [vmem:[%s3916 + $0x30] sm:$0xff]
      %v3924 = vld [vmem:[%s3916 + $0x38] sm:$0xff]
      %v3925 = vld [vmem:[%s3916 + $0x40] sm:$0xff]
      %v3926 = vld [vmem:[%s3916 + $0x48] sm:$0xff]
      %v3927 = vld [vmem:[%s3916 + $0x50] sm:$0xff]
      %v3928 = vld [vmem:[%s3916 + $0x58] sm:$0xff]
      %v3929 = vld [vmem:[%s3916 + $0x60] sm:$0xff]
      %v3930 = vld [vmem:[%s3916 + $0x68] sm:$0xff]
      %v3931 = vld [vmem:[%s3916 + $0x70] sm:$0xff]
      %v3932 = vld [vmem:[%s3916 + $0x78] sm:$0xff]
      %v3933 = vld [vmem:[%s3916 + $0x80] sm:$0xff]
      %v3934 = vld [vmem:[%s3916 + $0x88] sm:$0xff]
      %v3935 = vld [vmem:[%s3916 + $0x90] sm:$0xff]
      %v3936 = vld [vmem:[%s3916 + $0x98] sm:$0xff]
      %3937 = vrot.lane.b32.xlu0 %v3066, 125
      %v3938 = vpop.permute.xlu0 %3937
      %3939 = vrot.lane.b32.xlu0 %v3067, 125
      %v3940 = vpop.permute.xlu0 %3939
      %3941 = vrot.lane.b32.xlu0 %v3068, 125
      %v3942 = vpop.permute.xlu0 %3941
      %3943 = vrot.lane.b32.xlu0 %v3069, 125
      %v3944 = vpop.permute.xlu0 %3943
      %3945 = vrot.lane.b32.xlu0 %v3070, 125
      %v3946 = vpop.permute.xlu0 %3945
      %3947 = vrot.lane.b32.xlu0 %v3071, 125
      %v3948 = vpop.permute.xlu0 %3947
      %3949 = vrot.lane.b32.xlu0 %v3072, 125
      %v3950 = vpop.permute.xlu0 %3949
      %3951 = vrot.lane.b32.xlu0 %v3073, 125
      %v3952 = vpop.permute.xlu0 %3951
      %3953 = vrot.lane.b32.xlu0 %v3074, 125
      %v3954 = vpop.permute.xlu0 %3953
      %3955 = vrot.lane.b32.xlu0 %v3075, 125
      %v3956 = vpop.permute.xlu0 %3955
      %3957 = vrot.lane.b32.xlu0 %v3076, 125
      %v3958 = vpop.permute.xlu0 %3957
      %v3970 = vsel %vm3161, %v3917, 0
      %v3973 = vsel %vm3161, %v3918, 0
      %v3976 = vsel %vm3161, %v3919, 0
      %v3979 = vsel %vm3161, %v3920, 0
      %v3982 = vsel %vm3161, %v3921, 0
      %v3985 = vsel %vm3161, %v3922, 0
      %v3988 = vsel %vm3161, %v3923, 0
      %v3991 = vsel %vm3161, %v3924, 0
      %v3994 = vsel %vm3161, %v3925, 0
      %v3997 = vsel %vm3161, %v3926, 0
      %v4000 = vsel %vm3161, %v3927, 0
      %v4003 = vsel %vm3161, %v3928, 0
      %v4006 = vsel %vm3161, %v3929, 0
      %v4009 = vsel %vm3161, %v3930, 0
      %v4012 = vsel %vm3161, %v3931, 0
      %v4015 = vsel %vm3161, %v3932, 0
      %v4018 = vsel %vm3161, %v3933, 0
      %v4021 = vsel %vm3161, %v3934, 0
      %v4024 = vsel %vm3161, %v3935, 0
      %v4027 = vsel %vm3161, %v3936, 0
      %v4029 = vsel %vm2343, %v3958, 0
      %4031 = vmatprep.subr.mxu0 0.0
      %4032 = vmatpush1.msra.mxu0 %v3938
      %4033 = vmatprep.subr.mxu0 0.0
      %4034 = vmatpush1.msra.mxu0 %v3940
      %4035 = vmatprep.subr.mxu0 0.0
      %4036 = vmatpush1.msra.mxu0 %v3942
      %4037 = vmatprep.subr.mxu0 0.0
      %4038 = vmatpush1.msra.mxu0 %v3944
      %4039 = vmatprep.subr.mxu0 0.0
      %4040 = vmatpush1.msra.mxu0 %v3946
      %4041 = vmatprep.subr.mxu0 0.0
      %4042 = vmatpush1.msra.mxu0 %v3948
      %4043 = vmatprep.subr.mxu0 0.0
      %4044 = vmatpush1.msra.mxu0 %v3950
      %4045 = vmatprep.subr.mxu0 0.0
      %4046 = vmatpush1.msra.mxu0 %v3952
      %4047 = vmatprep.subr.mxu0 0.0
      %4048 = vmatpush1.msra.mxu0 %v3954
      %4049 = vmatprep.subr.mxu0 0.0
      %4050 = vmatpush1.msra.mxu0 %v3956
      %4051 = vmatprep.subr.mxu0 0.0
      %4052 = vmatpush1.msra.mxu0 %v4029
      %4053 = vmatprep.subr.mxu0 0.0
      %4054 = vmatpush1.msra.mxu0 0.0
      %4055 = vmatprep.subr.mxu0 0.0
      %4056 = vmatpush1.msra.mxu0 0.0
      %4057 = vmatprep.subr.mxu0 0.0
      %4058 = vmatpush1.msra.mxu0 0.0
      %4059 = vmatprep.subr.mxu0 0.0
      %4060 = vmatpush1.msra.mxu0 0.0
      %4061 = vmatprep.subr.mxu0 0.0
      %4062 = vmatpush1.msra.mxu0 0.0
      %4063 = vmatprep.subr.mxu0 0.0
      %4064 = vmatpush1.msra.mxu0 0.0
      %4065 = vmatprep.subr.mxu0 0.0
      %4066 = vmatpush1.msra.mxu0 0.0
      %4067 = vmatprep.subr.mxu0 0.0
      %4068 = vmatpush1.msra.mxu0 0.0
      %4069 = vmatprep.subr.mxu0 0.0
      %4070 = vmatpush1.msra.mxu0 0.0
      %4071 = vmatprep.subr.mxu0 0.0
      %4072 = vmatpush1.msra.mxu0 0.0
      %4073 = vmatprep.subr.mxu0 0.0
      %4074 = vmatpush1.msra.mxu0 0.0
      %4075 = vmatprep.subr.mxu0 0.0
      %4076 = vmatpush1.msra.mxu0 0.0
      %4077 = vmatprep.subr.mxu0 0.0
      %4078 = vmatpush1.msra.mxu0 0.0
      %4079 = vmatprep.subr.mxu0 0.0
      %4080 = vmatpush1.msra.mxu0 0.0
      %4081 = vmatprep.subr.mxu0 0.0
      %4082 = vmatpush1.msra.mxu0 0.0
      %4083 = vmatprep.subr.mxu0 0.0
      %4084 = vmatpush1.msra.mxu0 0.0
      %4085 = vmatprep.subr.mxu0 0.0
      %4086 = vmatpush1.msra.mxu0 0.0
      %4087 = vmatprep.subr.mxu0 0.0
      %4088 = vmatpush1.msra.mxu0 0.0
      %4089 = vmatprep.subr.mxu0 0.0
      %4090 = vmatpush1.msra.mxu0 0.0
      %4091 = vmatprep.subr.mxu0 0.0
      %4092 = vmatpush1.msra.mxu0 0.0
      %4093 = vmatprep.subr.mxu0 0.0
      %4094 = vmatpush1.msra.mxu0 0.0
      %4095 = vmatprep.mubr.f32.mxu0 0.0
      %4096 = vmatmul.mubr.f32.gmra.mrb[0].mxu0 %v3970
      %v4097 = vpop.f32.mrb[0].mxu0
      %v4098 = vadd.f32 0.0, %v4097
      %v4099 = vpop.f32.mrb[0].mxu0
      %4100 = vmatprep.mubr.f32.mxu0 0.0
      %4101 = vmatmul.mubr.f32.gmra.mrb[0].mxu0 %v3973
      %v4102 = vpop.f32.mrb[0].mxu0
      %v4103 = vadd.f32 0.0, %v4102
      %v4104 = vpop.f32.mrb[0].mxu0
      %4105 = vmatprep.mubr.f32.mxu0 0.0
      %4106 = vmatmul.mubr.f32.gmra.mrb[0].mxu0 %v3976
      %v4107 = vpop.f32.mrb[0].mxu0
      %v4108 = vadd.f32 0.0, %v4107
      %v4109 = vpop.f32.mrb[0].mxu0
      %4110 = vmatprep.mubr.f32.mxu0 0.0
      %4111 = vmatmul.mubr.f32.gmra.mrb[0].mxu0 %v3979
      %v4112 = vpop.f32.mrb[0].mxu0
      %v4113 = vadd.f32 0.0, %v4112
      %v4114 = vpop.f32.mrb[0].mxu0
      %4115 = vmatprep.mubr.f32.mxu0 0.0
      %4116 = vmatmul.mubr.f32.gmra.mrb[0].mxu0 %v3982
      %v4117 = vpop.f32.mrb[0].mxu0
      %v4118 = vadd.f32 0.0, %v4117
      %v4119 = vpop.f32.mrb[0].mxu0
      %4120 = vmatprep.mubr.f32.mxu0 0.0
      %4121 = vmatmul.mubr.f32.gmra.mrb[0].mxu0 %v3985
      %v4122 = vpop.f32.mrb[0].mxu0
      %v4123 = vadd.f32 0.0, %v4122
      %v4124 = vpop.f32.mrb[0].mxu0
      %4125 = vmatprep.mubr.f32.mxu0 0.0
      %4126 = vmatmul.mubr.f32.gmra.mrb[0].mxu0 %v3988
      %v4127 = vpop.f32.mrb[0].mxu0
      %v4128 = vadd.f32 0.0, %v4127
      %v4129 = vpop.f32.mrb[0].mxu0
      %4130 = vmatprep.mubr.f32.mxu0 0.0
      %4131 = vmatmul.mubr.f32.gmra.mrb[0].mxu0 %v3991
      %v4132 = vpop.f32.mrb[0].mxu0
      %v4133 = vadd.f32 0.0, %v4132
      %v4134 = vpop.f32.mrb[0].mxu0
      %4135 = vmatprep.mubr.f32.mxu0 0.0
      %4136 = vmatmul.mubr.f32.gmra.mrb[0].mxu0 %v3994
      %v4137 = vpop.f32.mrb[0].mxu0
      %v4138 = vadd.f32 0.0, %v4137
      %v4139 = vpop.f32.mrb[0].mxu0
      %4140 = vmatprep.mubr.f32.mxu0 0.0
      %4141 = vmatmul.mubr.f32.gmra.mrb[0].mxu0 %v3997
      %v4142 = vpop.f32.mrb[0].mxu0
      %v4143 = vadd.f32 0.0, %v4142
      %v4144 = vpop.f32.mrb[0].mxu0
      %4145 = vmatprep.mubr.f32.mxu0 0.0
      %4146 = vmatmul.mubr.f32.gmra.mrb[0].mxu0 %v4000
      %v4147 = vpop.f32.mrb[0].mxu0
      %v4148 = vadd.f32 0.0, %v4147
      %v4149 = vpop.f32.mrb[0].mxu0
      %4150 = vmatprep.mubr.f32.mxu0 0.0
      %4151 = vmatmul.mubr.f32.gmra.mrb[0].mxu0 %v4003
      %v4152 = vpop.f32.mrb[0].mxu0
      %v4153 = vadd.f32 0.0, %v4152
      %v4154 = vpop.f32.mrb[0].mxu0
      %4155 = vmatprep.mubr.f32.mxu0 0.0
      %4156 = vmatmul.mubr.f32.gmra.mrb[0].mxu0 %v4006
      %v4157 = vpop.f32.mrb[0].mxu0
      %v4158 = vadd.f32 0.0, %v4157
      %v4159 = vpop.f32.mrb[0].mxu0
      %4160 = vmatprep.mubr.f32.mxu0 0.0
      %4161 = vmatmul.mubr.f32.gmra.mrb[0].mxu0 %v4009
      %v4162 = vpop.f32.mrb[0].mxu0
      %v4163 = vadd.f32 0.0, %v4162
      %v4164 = vpop.f32.mrb[0].mxu0
      %4165 = vmatprep.mubr.f32.mxu0 0.0
      %4166 = vmatmul.mubr.f32.gmra.mrb[0].mxu0 %v4012
      %v4167 = vpop.f32.mrb[0].mxu0
      %v4168 = vadd.f32 0.0, %v4167
      %v4169 = vpop.f32.mrb[0].mxu0
      %4170 = vmatprep.mubr.f32.mxu0 0.0
      %4171 = vmatmul.mubr.f32.gmra.mrb[0].mxu0 %v4015
      %v4172 = vpop.f32.mrb[0].mxu0
      %v4173 = vadd.f32 0.0, %v4172
      %v4174 = vpop.f32.mrb[0].mxu0
      %4175 = vmatprep.mubr.f32.mxu0 0.0
      %4176 = vmatmul.mubr.f32.gmra.mrb[0].mxu0 %v4018
      %v4177 = vpop.f32.mrb[0].mxu0
      %v4178 = vadd.f32 0.0, %v4177
      %v4179 = vpop.f32.mrb[0].mxu0
      %4180 = vmatprep.mubr.f32.mxu0 0.0
      %4181 = vmatmul.mubr.f32.gmra.mrb[0].mxu0 %v4021
      %v4182 = vpop.f32.mrb[0].mxu0
      %v4183 = vadd.f32 0.0, %v4182
      %v4184 = vpop.f32.mrb[0].mxu0
      %4185 = vmatprep.mubr.f32.mxu0 0.0
      %4186 = vmatmul.mubr.f32.gmra.mrb[0].mxu0 %v4024
      %v4187 = vpop.f32.mrb[0].mxu0
      %v4188 = vadd.f32 0.0, %v4187
      %v4189 = vpop.f32.mrb[0].mxu0
      %4190 = vmatprep.mubr.f32.mxu0 0.0
      %4191 = vmatmul.mubr.f32.gmra.mrb[0].mxu0 %v4027
      %v4192 = vpop.f32.mrb[0].mxu0
      %v4193 = vadd.f32 0.0, %v4192
      %v4194 = vpop.f32.mrb[0].mxu0
      %4195 = vdwg.mxu0
      %v4196 = vadd.f32 %v3896, %v4098
      %v4197 = vadd.f32 %v3897, %v4103
      %v4198 = vadd.f32 %v3898, %v4108
      %v4199 = vadd.f32 %v3899, %v4113
      %v4200 = vadd.f32 %v3900, %v4118
      %v4201 = vadd.f32 %v3901, %v4123
      %v4202 = vadd.f32 %v3902, %v4128
      %v4203 = vadd.f32 %v3903, %v4133
      %v4204 = vadd.f32 %v3904, %v4138
      %v4205 = vadd.f32 %v3905, %v4143
      %v4206 = vadd.f32 %v3906, %v4148
      %v4207 = vadd.f32 %v3907, %v4153
      %v4208 = vadd.f32 %v3908, %v4158
      %v4209 = vadd.f32 %v3909, %v4163
      %v4210 = vadd.f32 %v3910, %v4168
      %v4211 = vadd.f32 %v3911, %v4173
      %v4212 = vadd.f32 %v3912, %v4178
      %v4213 = vadd.f32 %v3913, %v4183
      %v4214 = vadd.f32 %v3914, %v4188
      %v4215 = vadd.f32 %v3915, %v4193
      %s4216 = scalar_lea.vmem %s7, 640
      %v4217 = vld [vmem:[%s4216] sm:$0xff]
      %v4218 = vld [vmem:[%s4216 + $0x8] sm:$0xff]
      %v4219 = vld [vmem:[%s4216 + $0x10] sm:$0xff]
      %v4220 = vld [vmem:[%s4216 + $0x18] sm:$0xff]
      %v4221 = vld [vmem:[%s4216 + $0x20] sm:$0xff]
      %v4222 = vld [vmem:[%s4216 + $0x28] sm:$0xff]
      %v4223 = vld [vmem:[%s4216 + $0x30] sm:$0xff]
      %v4224 = vld [vmem:[%s4216 + $0x38] sm:$0xff]
      %v4225 = vld [vmem:[%s4216 + $0x40] sm:$0xff]
      %v4226 = vld [vmem:[%s4216 + $0x48] sm:$0xff]
      %v4227 = vld [vmem:[%s4216 + $0x50] sm:$0xff]
      %v4228 = vld [vmem:[%s4216 + $0x58] sm:$0xff]
      %v4229 = vld [vmem:[%s4216 + $0x60] sm:$0xff]
      %v4230 = vld [vmem:[%s4216 + $0x68] sm:$0xff]
      %v4231 = vld [vmem:[%s4216 + $0x70] sm:$0xff]
      %v4232 = vld [vmem:[%s4216 + $0x78] sm:$0xff]
      %v4233 = vld [vmem:[%s4216 + $0x80] sm:$0xff]
      %v4234 = vld [vmem:[%s4216 + $0x88] sm:$0xff]
      %v4235 = vld [vmem:[%s4216 + $0x90] sm:$0xff]
      %v4236 = vld [vmem:[%s4216 + $0x98] sm:$0xff]
      %4237 = vrot.lane.b32.xlu0 %v3066, 124
      %v4238 = vpop.permute.xlu0 %4237
      %4239 = vrot.lane.b32.xlu0 %v3067, 124
      %v4240 = vpop.permute.xlu0 %4239
      %4241 = vrot.lane.b32.xlu0 %v3068, 124
      %v4242 = vpop.permute.xlu0 %4241
      %4243 = vrot.lane.b32.xlu0 %v3069, 124
      %v4244 = vpop.permute.xlu0 %4243
      %4245 = vrot.lane.b32.xlu0 %v3070, 124
      %v4246 = vpop.permute.xlu0 %4245
      %4247 = vrot.lane.b32.xlu0 %v3071, 124
      %v4248 = vpop.permute.xlu0 %4247
      %4249 = vrot.lane.b32.xlu0 %v3072, 124
      %v4250 = vpop.permute.xlu0 %4249
      %4251 = vrot.lane.b32.xlu0 %v3073, 124
      %v4252 = vpop.permute.xlu0 %4251
      %4253 = vrot.lane.b32.xlu0 %v3074, 124
      %v4254 = vpop.permute.xlu0 %4253
      %4255 = vrot.lane.b32.xlu0 %v3075, 124
      %v4256 = vpop.permute.xlu0 %4255
      %4257 = vrot.lane.b32.xlu0 %v3076, 124
      %v4258 = vpop.permute.xlu0 %4257
      %v4270 = vsel %vm3161, %v4217, 0
      %v4273 = vsel %vm3161, %v4218, 0
      %v4276 = vsel %vm3161, %v4219, 0
      %v4279 = vsel %vm3161, %v4220, 0
      %v4282 = vsel %vm3161, %v4221, 0
      %v4285 = vsel %vm3161, %v4222, 0
      %v4288 = vsel %vm3161, %v4223, 0
      %v4291 = vsel %vm3161, %v4224, 0
      %v4294 = vsel %vm3161, %v4225, 0
      %v4297 = vsel %vm3161, %v4226, 0
      %v4300 = vsel %vm3161, %v4227, 0
      %v4303 = vsel %vm3161, %v4228, 0
      %v4306 = vsel %vm3161, %v4229, 0
      %v4309 = vsel %vm3161, %v4230, 0
      %v4312 = vsel %vm3161, %v4231, 0
      %v4315 = vsel %vm3161, %v4232, 0
      %v4318 = vsel %vm3161, %v4233, 0
      %v4321 = vsel %vm3161, %v4234, 0
      %v4324 = vsel %vm3161, %v4235, 0
      %v4327 = vsel %vm3161, %v4236, 0
      %v4329 = vsel %vm2343, %v4258, 0
      %4331 = vmatprep.subr.mxu0 0.0
      %4332 = vmatpush1.msra.mxu0 %v4238
      %4333 = vmatprep.subr.mxu0 0.0
      %4334 = vmatpush1.msra.mxu0 %v4240
      %4335 = vmatprep.subr.mxu0 0.0
      %4336 = vmatpush1.msra.mxu0 %v4242
      %4337 = vmatprep.subr.mxu0 0.0
      %4338 = vmatpush1.msra.mxu0 %v4244
      %4339 = vmatprep.subr.mxu0 0.0
      %4340 = vmatpush1.msra.mxu0 %v4246
      %4341 = vmatprep.subr.mxu0 0.0
      %4342 = vmatpush1.msra.mxu0 %v4248
      %4343 = vmatprep.subr.mxu0 0.0
      %4344 = vmatpush1.msra.mxu0 %v4250
      %4345 = vmatprep.subr.mxu0 0.0
      %4346 = vmatpush1.msra.mxu0 %v4252
      %4347 = vmatprep.subr.mxu0 0.0
      %4348 = vmatpush1.msra.mxu0 %v4254
      %4349 = vmatprep.subr.mxu0 0.0
      %4350 = vmatpush1.msra.mxu0 %v4256
      %4351 = vmatprep.subr.mxu0 0.0
      %4352 = vmatpush1.msra.mxu0 %v4329
      %4353 = vmatprep.subr.mxu0 0.0
      %4354 = vmatpush1.msra.mxu0 0.0
      %4355 = vmatprep.subr.mxu0 0.0
      %4356 = vmatpush1.msra.mxu0 0.0
      %4357 = vmatprep.subr.mxu0 0.0
      %4358 = vmatpush1.msra.mxu0 0.0
      %4359 = vmatprep.subr.mxu0 0.0
      %4360 = vmatpush1.msra.mxu0 0.0
      %4361 = vmatprep.subr.mxu0 0.0
      %4362 = vmatpush1.msra.mxu0 0.0
      %4363 = vmatprep.subr.mxu0 0.0
      %4364 = vmatpush1.msra.mxu0 0.0
      %4365 = vmatprep.subr.mxu0 0.0
      %4366 = vmatpush1.msra.mxu0 0.0
      %4367 = vmatprep.subr.mxu0 0.0
      %4368 = vmatpush1.msra.mxu0 0.0
      %4369 = vmatprep.subr.mxu0 0.0
      %4370 = vmatpush1.msra.mxu0 0.0
      %4371 = vmatprep.subr.mxu0 0.0
      %4372 = vmatpush1.msra.mxu0 0.0
      %4373 = vmatprep.subr.mxu0 0.0
      %4374 = vmatpush1.msra.mxu0 0.0
      %4375 = vmatprep.subr.mxu0 0.0
      %4376 = vmatpush1.msra.mxu0 0.0
      %4377 = vmatprep.subr.mxu0 0.0
      %4378 = vmatpush1.msra.mxu0 0.0
      %4379 = vmatprep.subr.mxu0 0.0
      %4380 = vmatpush1.msra.mxu0 0.0
      %4381 = vmatprep.subr.mxu0 0.0
      %4382 = vmatpush1.msra.mxu0 0.0
      %4383 = vmatprep.subr.mxu0 0.0
      %4384 = vmatpush1.msra.mxu0 0.0
      %4385 = vmatprep.subr.mxu0 0.0
      %4386 = vmatpush1.msra.mxu0 0.0
      %4387 = vmatprep.subr.mxu0 0.0
      %4388 = vmatpush1.msra.mxu0 0.0
      %4389 = vmatprep.subr.mxu0 0.0
      %4390 = vmatpush1.msra.mxu0 0.0
      %4391 = vmatprep.subr.mxu0 0.0
      %4392 = vmatpush1.msra.mxu0 0.0
      %4393 = vmatprep.subr.mxu0 0.0
      %4394 = vmatpush1.msra.mxu0 0.0
      %4395 = vmatprep.mubr.f32.mxu0 0.0
      %4396 = vmatmul.mubr.f32.gmra.mrb[0].mxu0 %v4270
      %v4397 = vpop.f32.mrb[0].mxu0
      %v4398 = vadd.f32 0.0, %v4397
      %v4399 = vpop.f32.mrb[0].mxu0
      %4400 = vmatprep.mubr.f32.mxu0 0.0
      %4401 = vmatmul.mubr.f32.gmra.mrb[0].mxu0 %v4273
      %v4402 = vpop.f32.mrb[0].mxu0
      %v4403 = vadd.f32 0.0, %v4402
      %v4404 = vpop.f32.mrb[0].mxu0
      %4405 = vmatprep.mubr.f32.mxu0 0.0
      %4406 = vmatmul.mubr.f32.gmra.mrb[0].mxu0 %v4276
      %v4407 = vpop.f32.mrb[0].mxu0
      %v4408 = vadd.f32 0.0, %v4407
      %v4409 = vpop.f32.mrb[0].mxu0
      %4410 = vmatprep.mubr.f32.mxu0 0.0
      %4411 = vmatmul.mubr.f32.gmra.mrb[0].mxu0 %v4279
      %v4412 = vpop.f32.mrb[0].mxu0
      %v4413 = vadd.f32 0.0, %v4412
      %v4414 = vpop.f32.mrb[0].mxu0
      %4415 = vmatprep.mubr.f32.mxu0 0.0
      %4416 = vmatmul.mubr.f32.gmra.mrb[0].mxu0 %v4282
      %v4417 = vpop.f32.mrb[0].mxu0
      %v4418 = vadd.f32 0.0, %v4417
      %v4419 = vpop.f32.mrb[0].mxu0
      %4420 = vmatprep.mubr.f32.mxu0 0.0
      %4421 = vmatmul.mubr.f32.gmra.mrb[0].mxu0 %v4285
      %v4422 = vpop.f32.mrb[0].mxu0
      %v4423 = vadd.f32 0.0, %v4422
      %v4424 = vpop.f32.mrb[0].mxu0
      %4425 = vmatprep.mubr.f32.mxu0 0.0
      %4426 = vmatmul.mubr.f32.gmra.mrb[0].mxu0 %v4288
      %v4427 = vpop.f32.mrb[0].mxu0
      %v4428 = vadd.f32 0.0, %v4427
      %v4429 = vpop.f32.mrb[0].mxu0
      %4430 = vmatprep.mubr.f32.mxu0 0.0
      %4431 = vmatmul.mubr.f32.gmra.mrb[0].mxu0 %v4291
      %v4432 = vpop.f32.mrb[0].mxu0
      %v4433 = vadd.f32 0.0, %v4432
      %v4434 = vpop.f32.mrb[0].mxu0
      %4435 = vmatprep.mubr.f32.mxu0 0.0
      %4436 = vmatmul.mubr.f32.gmra.mrb[0].mxu0 %v4294
      %v4437 = vpop.f32.mrb[0].mxu0
      %v4438 = vadd.f32 0.0, %v4437
      %v4439 = vpop.f32.mrb[0].mxu0
      %4440 = vmatprep.mubr.f32.mxu0 0.0
      %4441 = vmatmul.mubr.f32.gmra.mrb[0].mxu0 %v4297
      %v4442 = vpop.f32.mrb[0].mxu0
      %v4443 = vadd.f32 0.0, %v4442
      %v4444 = vpop.f32.mrb[0].mxu0
      %4445 = vmatprep.mubr.f32.mxu0 0.0
      %4446 = vmatmul.mubr.f32.gmra.mrb[0].mxu0 %v4300
      %v4447 = vpop.f32.mrb[0].mxu0
      %v4448 = vadd.f32 0.0, %v4447
      %v4449 = vpop.f32.mrb[0].mxu0
      %4450 = vmatprep.mubr.f32.mxu0 0.0
      %4451 = vmatmul.mubr.f32.gmra.mrb[0].mxu0 %v4303
      %v4452 = vpop.f32.mrb[0].mxu0
      %v4453 = vadd.f32 0.0, %v4452
      %v4454 = vpop.f32.mrb[0].mxu0
      %4455 = vmatprep.mubr.f32.mxu0 0.0
      %4456 = vmatmul.mubr.f32.gmra.mrb[0].mxu0 %v4306
      %v4457 = vpop.f32.mrb[0].mxu0
      %v4458 = vadd.f32 0.0, %v4457
      %v4459 = vpop.f32.mrb[0].mxu0
      %4460 = vmatprep.mubr.f32.mxu0 0.0
      %4461 = vmatmul.mubr.f32.gmra.mrb[0].mxu0 %v4309
      %v4462 = vpop.f32.mrb[0].mxu0
      %v4463 = vadd.f32 0.0, %v4462
      %v4464 = vpop.f32.mrb[0].mxu0
      %4465 = vmatprep.mubr.f32.mxu0 0.0
      %4466 = vmatmul.mubr.f32.gmra.mrb[0].mxu0 %v4312
      %v4467 = vpop.f32.mrb[0].mxu0
      %v4468 = vadd.f32 0.0, %v4467
      %v4469 = vpop.f32.mrb[0].mxu0
      %4470 = vmatprep.mubr.f32.mxu0 0.0
      %4471 = vmatmul.mubr.f32.gmra.mrb[0].mxu0 %v4315
      %v4472 = vpop.f32.mrb[0].mxu0
      %v4473 = vadd.f32 0.0, %v4472
      %v4474 = vpop.f32.mrb[0].mxu0
      %4475 = vmatprep.mubr.f32.mxu0 0.0
      %4476 = vmatmul.mubr.f32.gmra.mrb[0].mxu0 %v4318
      %v4477 = vpop.f32.mrb[0].mxu0
      %v4478 = vadd.f32 0.0, %v4477
      %v4479 = vpop.f32.mrb[0].mxu0
      %4480 = vmatprep.mubr.f32.mxu0 0.0
      %4481 = vmatmul.mubr.f32.gmra.mrb[0].mxu0 %v4321
      %v4482 = vpop.f32.mrb[0].mxu0
      %v4483 = vadd.f32 0.0, %v4482
      %v4484 = vpop.f32.mrb[0].mxu0
      %4485 = vmatprep.mubr.f32.mxu0 0.0
      %4486 = vmatmul.mubr.f32.gmra.mrb[0].mxu0 %v4324
      %v4487 = vpop.f32.mrb[0].mxu0
      %v4488 = vadd.f32 0.0, %v4487
      %v4489 = vpop.f32.mrb[0].mxu0
      %4490 = vmatprep.mubr.f32.mxu0 0.0
      %4491 = vmatmul.mubr.f32.gmra.mrb[0].mxu0 %v4327
      %v4492 = vpop.f32.mrb[0].mxu0
      %v4493 = vadd.f32 0.0, %v4492
      %v4494 = vpop.f32.mrb[0].mxu0
      %4495 = vdwg.mxu0
      %v4496 = vadd.f32 %v4196, %v4398
      %v4497 = vadd.f32 %v4197, %v4403
      %v4498 = vadd.f32 %v4198, %v4408
      %v4499 = vadd.f32 %v4199, %v4413
      %v4500 = vadd.f32 %v4200, %v4418
      %v4501 = vadd.f32 %v4201, %v4423
      %v4502 = vadd.f32 %v4202, %v4428
      %v4503 = vadd.f32 %v4203, %v4433
      %v4504 = vadd.f32 %v4204, %v4438
      %v4505 = vadd.f32 %v4205, %v4443
      %v4506 = vadd.f32 %v4206, %v4448
      %v4507 = vadd.f32 %v4207, %v4453
      %v4508 = vadd.f32 %v4208, %v4458
      %v4509 = vadd.f32 %v4209, %v4463
      %v4510 = vadd.f32 %v4210, %v4468
      %v4511 = vadd.f32 %v4211, %v4473
      %v4512 = vadd.f32 %v4212, %v4478
      %v4513 = vadd.f32 %v4213, %v4483
      %v4514 = vadd.f32 %v4214, %v4488
      %v4515 = vadd.f32 %v4215, %v4493
      %v4516 = vld [vmem:[%s8] sm:$0xff]
      %v4517 = vld [vmem:[%s8 + $0x8] sm:$0xff]
      %v4518 = vld [vmem:[%s8 + $0x10] sm:$0xff]
      %v4519 = vld [vmem:[%s8 + $0x18] sm:$0xff]
      %v4520 = vld [vmem:[%s8 + $0x20] sm:$0xff]
      %v4521 = vld [vmem:[%s8 + $0x28] sm:$0xff]
      %v4522 = vld [vmem:[%s8 + $0x30] sm:$0xff]
      %v4523 = vld [vmem:[%s8 + $0x38] sm:$0xff]
      %v4524 = vld [vmem:[%s8 + $0x40] sm:$0xff]
      %v4525 = vld [vmem:[%s8 + $0x48] sm:$0xff]
      %v4526 = vld [vmem:[%s8 + $0x50] sm:$0xff]
      %v4527 = vld [vmem:[%s8 + $0x58] sm:$0xff]
      %v4528 = vld [vmem:[%s8 + $0x60] sm:$0xff]
      %v4529 = vld [vmem:[%s8 + $0x68] sm:$0xff]
      %v4530 = vld [vmem:[%s8 + $0x70] sm:$0xff]
      %v4531 = vld [vmem:[%s8 + $0x78] sm:$0xff]
      %v4532 = vld [vmem:[%s8 + $0x80] sm:$0xff]
      %v4533 = vld [vmem:[%s8 + $0x88] sm:$0xff]
      %v4534 = vld [vmem:[%s8 + $0x90] sm:$0xff]
      %v4535 = vld [vmem:[%s8 + $0x98] sm:$0xff]
      %4537 = vset.pattern.permute.xlu0 0
      %4538 = vperm.xlu0 %4537, %v4516
      %v4539 = vpop.permute.xlu0 %4538
      %4542 = vset.pattern.permute.xlu0 0
      %4543 = vperm.xlu0 %4542, %v4517
      %v4544 = vpop.permute.xlu0 %4543
      %4547 = vset.pattern.permute.xlu0 0
      %4548 = vperm.xlu0 %4547, %v4518
      %v4549 = vpop.permute.xlu0 %4548
      %4552 = vset.pattern.permute.xlu0 0
      %4553 = vperm.xlu0 %4552, %v4519
      %v4554 = vpop.permute.xlu0 %4553
      %4557 = vset.pattern.permute.xlu0 0
      %4558 = vperm.xlu0 %4557, %v4520
      %v4559 = vpop.permute.xlu0 %4558
      %4562 = vset.pattern.permute.xlu0 0
      %4563 = vperm.xlu0 %4562, %v4521
      %v4564 = vpop.permute.xlu0 %4563
      %4567 = vset.pattern.permute.xlu0 0
      %4568 = vperm.xlu0 %4567, %v4522
      %v4569 = vpop.permute.xlu0 %4568
      %4572 = vset.pattern.permute.xlu0 0
      %4573 = vperm.xlu0 %4572, %v4523
      %v4574 = vpop.permute.xlu0 %4573
      %4577 = vset.pattern.permute.xlu0 0
      %4578 = vperm.xlu0 %4577, %v4524
      %v4579 = vpop.permute.xlu0 %4578
      %4582 = vset.pattern.permute.xlu0 0
      %4583 = vperm.xlu0 %4582, %v4525
      %v4584 = vpop.permute.xlu0 %4583
      %4587 = vset.pattern.permute.xlu0 0
      %4588 = vperm.xlu0 %4587, %v4526
      %v4589 = vpop.permute.xlu0 %4588
      %4592 = vset.pattern.permute.xlu0 0
      %4593 = vperm.xlu0 %4592, %v4527
      %v4594 = vpop.permute.xlu0 %4593
      %4597 = vset.pattern.permute.xlu0 0
      %4598 = vperm.xlu0 %4597, %v4528
      %v4599 = vpop.permute.xlu0 %4598
      %4602 = vset.pattern.permute.xlu0 0
      %4603 = vperm.xlu0 %4602, %v4529
      %v4604 = vpop.permute.xlu0 %4603
      %4607 = vset.pattern.permute.xlu0 0
      %4608 = vperm.xlu0 %4607, %v4530
      %v4609 = vpop.permute.xlu0 %4608
      %4612 = vset.pattern.permute.xlu0 0
      %4613 = vperm.xlu0 %4612, %v4531
      %v4614 = vpop.permute.xlu0 %4613
      %4617 = vset.pattern.permute.xlu0 0
      %4618 = vperm.xlu0 %4617, %v4532
      %v4619 = vpop.permute.xlu0 %4618
      %4622 = vset.pattern.permute.xlu0 0
      %4623 = vperm.xlu0 %4622, %v4533
      %v4624 = vpop.permute.xlu0 %4623
      %4627 = vset.pattern.permute.xlu0 0
      %4628 = vperm.xlu0 %4627, %v4534
      %v4629 = vpop.permute.xlu0 %4628
      %4632 = vset.pattern.permute.xlu0 0
      %4633 = vperm.xlu0 %4632, %v4535
      %v4634 = vpop.permute.xlu0 %4633
      %v4636 = vadd.f32 %v4496, %v4539
      %v4637 = vadd.f32 %v4497, %v4544
      %v4638 = vadd.f32 %v4498, %v4549
      %v4639 = vadd.f32 %v4499, %v4554
      %v4640 = vadd.f32 %v4500, %v4559
      %v4641 = vadd.f32 %v4501, %v4564
      %v4642 = vadd.f32 %v4502, %v4569
      %v4643 = vadd.f32 %v4503, %v4574
      %v4644 = vadd.f32 %v4504, %v4579
      %v4645 = vadd.f32 %v4505, %v4584
      %v4646 = vadd.f32 %v4506, %v4589
      %v4647 = vadd.f32 %v4507, %v4594
      %v4648 = vadd.f32 %v4508, %v4599
      %v4649 = vadd.f32 %v4509, %v4604
      %v4650 = vadd.f32 %v4510, %v4609
      %v4651 = vadd.f32 %v4511, %v4614
      %v4652 = vadd.f32 %v4512, %v4619
      %v4653 = vadd.f32 %v4513, %v4624
      %v4654 = vadd.f32 %v4514, %v4629
      %v4655 = vadd.f32 %v4515, %v4634
      %v4656 = vmax.f32 %v4636, 0.0
      %v4657 = vmax.f32 %v4637, 0.0
      %v4658 = vmax.f32 %v4638, 0.0
      %v4659 = vmax.f32 %v4639, 0.0
      %v4660 = vmax.f32 %v4640, 0.0
      %v4661 = vmax.f32 %v4641, 0.0
      %v4662 = vmax.f32 %v4642, 0.0
      %v4663 = vmax.f32 %v4643, 0.0
      %v4664 = vmax.f32 %v4644, 0.0
      %v4665 = vmax.f32 %v4645, 0.0
      %v4666 = vmax.f32 %v4646, 0.0
      %v4667 = vmax.f32 %v4647, 0.0
      %v4668 = vmax.f32 %v4648, 0.0
      %v4669 = vmax.f32 %v4649, 0.0
      %v4670 = vmax.f32 %v4650, 0.0
      %v4671 = vmax.f32 %v4651, 0.0
      %v4672 = vmax.f32 %v4652, 0.0
      %v4673 = vmax.f32 %v4653, 0.0
      %v4674 = vmax.f32 %v4654, 0.0
      %v4675 = vmax.f32 %v4655, 0.0
      %v4676 = vld [vmem:[%s9] sm:$0xff]
      %v4677 = vld [vmem:[%s9 + $0x8] sm:$0x3]
      %vm4678 = vcmask 80896
      %v4680 = vsel %vm4678, %v4656, 0
      %v4683 = vsel %vm4678, %v4657, 0
      %v4686 = vsel %vm4678, %v4658, 0
      %v4689 = vsel %vm4678, %v4659, 0
      %v4692 = vsel %vm4678, %v4660, 0
      %v4695 = vsel %vm4678, %v4661, 0
      %v4698 = vsel %vm4678, %v4662, 0
      %v4701 = vsel %vm4678, %v4663, 0
      %v4704 = vsel %vm4678, %v4664, 0
      %v4707 = vsel %vm4678, %v4665, 0
      %v4710 = vsel %vm4678, %v4666, 0
      %v4713 = vsel %vm4678, %v4667, 0
      %v4716 = vsel %vm4678, %v4668, 0
      %v4719 = vsel %vm4678, %v4669, 0
      %v4722 = vsel %vm4678, %v4670, 0
      %v4725 = vsel %vm4678, %v4671, 0
      %v4728 = vsel %vm4678, %v4672, 0
      %v4731 = vsel %vm4678, %v4673, 0
      %v4734 = vsel %vm4678, %v4674, 0
      %v4737 = vsel %vm4678, %v4675, 0
      %vm4739 = vcmask 1041408
      %v4741 = vsel %vm4739, %v4677, 0
      %4743 = vmatprep.subr.mxu0 0.0
      %4744 = vmatpush1.msra.mxu0 %v4676
      %4745 = vmatprep.subr.mxu0 0.0
      %4746 = vmatpush1.msra.mxu0 %v4741
      %4747 = vmatprep.subr.mxu0 0.0
      %4748 = vmatpush1.msra.mxu0 0.0
      %4749 = vmatprep.subr.mxu0 0.0
      %4750 = vmatpush1.msra.mxu0 0.0
      %4751 = vmatprep.subr.mxu0 0.0
      %4752 = vmatpush1.msra.mxu0 0.0
      %4753 = vmatprep.subr.mxu0 0.0
      %4754 = vmatpush1.msra.mxu0 0.0
      %4755 = vmatprep.subr.mxu0 0.0
      %4756 = vmatpush1.msra.mxu0 0.0
      %4757 = vmatprep.subr.mxu0 0.0
      %4758 = vmatpush1.msra.mxu0 0.0
      %4759 = vmatprep.subr.mxu0 0.0
      %4760 = vmatpush1.msra.mxu0 0.0
      %4761 = vmatprep.subr.mxu0 0.0
      %4762 = vmatpush1.msra.mxu0 0.0
      %4763 = vmatprep.subr.mxu0 0.0
      %4764 = vmatpush1.msra.mxu0 0.0
      %4765 = vmatprep.subr.mxu0 0.0
      %4766 = vmatpush1.msra.mxu0 0.0
      %4767 = vmatprep.subr.mxu0 0.0
      %4768 = vmatpush1.msra.mxu0 0.0
      %4769 = vmatprep.subr.mxu0 0.0
      %4770 = vmatpush1.msra.mxu0 0.0
      %4771 = vmatprep.subr.mxu0 0.0
      %4772 = vmatpush1.msra.mxu0 0.0
      %4773 = vmatprep.subr.mxu0 0.0
      %4774 = vmatpush1.msra.mxu0 0.0
      %4775 = vmatprep.subr.mxu0 0.0
      %4776 = vmatpush1.msra.mxu0 0.0
      %4777 = vmatprep.subr.mxu0 0.0
      %4778 = vmatpush1.msra.mxu0 0.0
      %4779 = vmatprep.subr.mxu0 0.0
      %4780 = vmatpush1.msra.mxu0 0.0
      %4781 = vmatprep.subr.mxu0 0.0
      %4782 = vmatpush1.msra.mxu0 0.0
      %4783 = vmatprep.subr.mxu0 0.0
      %4784 = vmatpush1.msra.mxu0 0.0
      %4785 = vmatprep.subr.mxu0 0.0
      %4786 = vmatpush1.msra.mxu0 0.0
      %4787 = vmatprep.subr.mxu0 0.0
      %4788 = vmatpush1.msra.mxu0 0.0
      %4789 = vmatprep.subr.mxu0 0.0
      %4790 = vmatpush1.msra.mxu0 0.0
      %4791 = vmatprep.subr.mxu0 0.0
      %4792 = vmatpush1.msra.mxu0 0.0
      %4793 = vmatprep.subr.mxu0 0.0
      %4794 = vmatpush1.msra.mxu0 0.0
      %4795 = vmatprep.subr.mxu0 0.0
      %4796 = vmatpush1.msra.mxu0 0.0
      %4797 = vmatprep.subr.mxu0 0.0
      %4798 = vmatpush1.msra.mxu0 0.0
      %4799 = vmatprep.subr.mxu0 0.0
      %4800 = vmatpush1.msra.mxu0 0.0
      %4801 = vmatprep.subr.mxu0 0.0
      %4802 = vmatpush1.msra.mxu0 0.0
      %4803 = vmatprep.subr.mxu0 0.0
      %4804 = vmatpush1.msra.mxu0 0.0
      %4805 = vmatprep.subr.mxu0 0.0
      %4806 = vmatpush1.msra.mxu0 0.0
      %4807 = vmatprep.mubr.f32.mxu0 0.0
      %4808 = vmatmul.mubr.f32.gmra.mrb[0].mxu0 %v4680
      %v4809 = vpop.f32.mrb[0].mxu0
      %v4810 = vadd.f32 0.0, %v4809
      %v4811 = vpop.f32.mrb[0].mxu0
      %4812 = vmatprep.mubr.f32.mxu0 0.0
      %4813 = vmatmul.mubr.f32.gmra.mrb[0].mxu0 %v4683
      %v4814 = vpop.f32.mrb[0].mxu0
      %v4815 = vadd.f32 0.0, %v4814
      %v4816 = vpop.f32.mrb[0].mxu0
      %4817 = vmatprep.mubr.f32.mxu0 0.0
      %4818 = vmatmul.mubr.f32.gmra.mrb[0].mxu0 %v4686
      %v4819 = vpop.f32.mrb[0].mxu0
      %v4820 = vadd.f32 0.0, %v4819
      %v4821 = vpop.f32.mrb[0].mxu0
      %4822 = vmatprep.mubr.f32.mxu0 0.0
      %4823 = vmatmul.mubr.f32.gmra.mrb[0].mxu0 %v4689
      %v4824 = vpop.f32.mrb[0].mxu0
      %v4825 = vadd.f32 0.0, %v4824
      %v4826 = vpop.f32.mrb[0].mxu0
      %4827 = vmatprep.mubr.f32.mxu0 0.0
      %4828 = vmatmul.mubr.f32.gmra.mrb[0].mxu0 %v4692
      %v4829 = vpop.f32.mrb[0].mxu0
      %v4830 = vadd.f32 0.0, %v4829
      %v4831 = vpop.f32.mrb[0].mxu0
      %4832 = vmatprep.mubr.f32.mxu0 0.0
      %4833 = vmatmul.mubr.f32.gmra.mrb[0].mxu0 %v4695
      %v4834 = vpop.f32.mrb[0].mxu0
      %v4835 = vadd.f32 0.0, %v4834
      %v4836 = vpop.f32.mrb[0].mxu0
      %4837 = vmatprep.mubr.f32.mxu0 0.0
      %4838 = vmatmul.mubr.f32.gmra.mrb[0].mxu0 %v4698
      %v4839 = vpop.f32.mrb[0].mxu0
      %v4840 = vadd.f32 0.0, %v4839
      %v4841 = vpop.f32.mrb[0].mxu0
      %4842 = vmatprep.mubr.f32.mxu0 0.0
      %4843 = vmatmul.mubr.f32.gmra.mrb[0].mxu0 %v4701
      %v4844 = vpop.f32.mrb[0].mxu0
      %v4845 = vadd.f32 0.0, %v4844
      %v4846 = vpop.f32.mrb[0].mxu0
      %4847 = vmatprep.mubr.f32.mxu0 0.0
      %4848 = vmatmul.mubr.f32.gmra.mrb[0].mxu0 %v4704
      %v4849 = vpop.f32.mrb[0].mxu0
      %v4850 = vadd.f32 0.0, %v4849
      %v4851 = vpop.f32.mrb[0].mxu0
      %4852 = vmatprep.mubr.f32.mxu0 0.0
      %4853 = vmatmul.mubr.f32.gmra.mrb[0].mxu0 %v4707
      %v4854 = vpop.f32.mrb[0].mxu0
      %v4855 = vadd.f32 0.0, %v4854
      %v4856 = vpop.f32.mrb[0].mxu0
      %4857 = vmatprep.mubr.f32.mxu0 0.0
      %4858 = vmatmul.mubr.f32.gmra.mrb[0].mxu0 %v4710
      %v4859 = vpop.f32.mrb[0].mxu0
      %v4860 = vadd.f32 0.0, %v4859
      %v4861 = vpop.f32.mrb[0].mxu0
      %4862 = vmatprep.mubr.f32.mxu0 0.0
      %4863 = vmatmul.mubr.f32.gmra.mrb[0].mxu0 %v4713
      %v4864 = vpop.f32.mrb[0].mxu0
      %v4865 = vadd.f32 0.0, %v4864
      %v4866 = vpop.f32.mrb[0].mxu0
      %4867 = vmatprep.mubr.f32.mxu0 0.0
      %4868 = vmatmul.mubr.f32.gmra.mrb[0].mxu0 %v4716
      %v4869 = vpop.f32.mrb[0].mxu0
      %v4870 = vadd.f32 0.0, %v4869
      %v4871 = vpop.f32.mrb[0].mxu0
      %4872 = vmatprep.mubr.f32.mxu0 0.0
      %4873 = vmatmul.mubr.f32.gmra.mrb[0].mxu0 %v4719
      %v4874 = vpop.f32.mrb[0].mxu0
      %v4875 = vadd.f32 0.0, %v4874
      %v4876 = vpop.f32.mrb[0].mxu0
      %4877 = vmatprep.mubr.f32.mxu0 0.0
      %4878 = vmatmul.mubr.f32.gmra.mrb[0].mxu0 %v4722
      %v4879 = vpop.f32.mrb[0].mxu0
      %v4880 = vadd.f32 0.0, %v4879
      %v4881 = vpop.f32.mrb[0].mxu0
      %4882 = vmatprep.mubr.f32.mxu0 0.0
      %4883 = vmatmul.mubr.f32.gmra.mrb[0].mxu0 %v4725
      %v4884 = vpop.f32.mrb[0].mxu0
      %v4885 = vadd.f32 0.0, %v4884
      %v4886 = vpop.f32.mrb[0].mxu0
      %4887 = vmatprep.mubr.f32.mxu0 0.0
      %4888 = vmatmul.mubr.f32.gmra.mrb[0].mxu0 %v4728
      %v4889 = vpop.f32.mrb[0].mxu0
      %v4890 = vadd.f32 0.0, %v4889
      %v4891 = vpop.f32.mrb[0].mxu0
      %4892 = vmatprep.mubr.f32.mxu0 0.0
      %4893 = vmatmul.mubr.f32.gmra.mrb[0].mxu0 %v4731
      %v4894 = vpop.f32.mrb[0].mxu0
      %v4895 = vadd.f32 0.0, %v4894
      %v4896 = vpop.f32.mrb[0].mxu0
      %4897 = vmatprep.mubr.f32.mxu0 0.0
      %4898 = vmatmul.mubr.f32.gmra.mrb[0].mxu0 %v4734
      %v4899 = vpop.f32.mrb[0].mxu0
      %v4900 = vadd.f32 0.0, %v4899
      %v4901 = vpop.f32.mrb[0].mxu0
      %4902 = vmatprep.mubr.f32.mxu0 0.0
      %4903 = vmatmul.mubr.f32.gmra.mrb[0].mxu0 %v4737
      %v4904 = vpop.f32.mrb[0].mxu0
      %v4905 = vadd.f32 0.0, %v4904
      %v4906 = vpop.f32.mrb[0].mxu0
      %4907 = vdwg.mxu0
      %v4908 = vld [vmem:[%s10] sm:$0xff]
      %v4909 = vld [vmem:[%s10 + $0x8] sm:$0x3]
      %v4911 = vsel %vm4739, %v4909, 0
      %4913 = vmatprep.subr.mxu0 0.0
      %4914 = vmatpush1.msra.mxu0 %v4908
      %4915 = vmatprep.subr.mxu0 0.0
      %4916 = vmatpush1.msra.mxu0 %v4911
      %4917 = vmatprep.subr.mxu0 0.0
      %4918 = vmatpush1.msra.mxu0 0.0
      %4919 = vmatprep.subr.mxu0 0.0
      %4920 = vmatpush1.msra.mxu0 0.0
      %4921 = vmatprep.subr.mxu0 0.0
      %4922 = vmatpush1.msra.mxu0 0.0
      %4923 = vmatprep.subr.mxu0 0.0
      %4924 = vmatpush1.msra.mxu0 0.0
      %4925 = vmatprep.subr.mxu0 0.0
      %4926 = vmatpush1.msra.mxu0 0.0
      %4927 = vmatprep.subr.mxu0 0.0
      %4928 = vmatpush1.msra.mxu0 0.0
      %4929 = vmatprep.subr.mxu0 0.0
      %4930 = vmatpush1.msra.mxu0 0.0
      %4931 = vmatprep.subr.mxu0 0.0
      %4932 = vmatpush1.msra.mxu0 0.0
      %4933 = vmatprep.subr.mxu0 0.0
      %4934 = vmatpush1.msra.mxu0 0.0
      %4935 = vmatprep.subr.mxu0 0.0
      %4936 = vmatpush1.msra.mxu0 0.0
      %4937 = vmatprep.subr.mxu0 0.0
      %4938 = vmatpush1.msra.mxu0 0.0
      %4939 = vmatprep.subr.mxu0 0.0
      %4940 = vmatpush1.msra.mxu0 0.0
      %4941 = vmatprep.subr.mxu0 0.0
      %4942 = vmatpush1.msra.mxu0 0.0
      %4943 = vmatprep.subr.mxu0 0.0
      %4944 = vmatpush1.msra.mxu0 0.0
      %4945 = vmatprep.subr.mxu0 0.0
      %4946 = vmatpush1.msra.mxu0 0.0
      %4947 = vmatprep.subr.mxu0 0.0
      %4948 = vmatpush1.msra.mxu0 0.0
      %4949 = vmatprep.subr.mxu0 0.0
      %4950 = vmatpush1.msra.mxu0 0.0
      %4951 = vmatprep.subr.mxu0 0.0
      %4952 = vmatpush1.msra.mxu0 0.0
      %4953 = vmatprep.subr.mxu0 0.0
      %4954 = vmatpush1.msra.mxu0 0.0
      %4955 = vmatprep.subr.mxu0 0.0
      %4956 = vmatpush1.msra.mxu0 0.0
      %4957 = vmatprep.subr.mxu0 0.0
      %4958 = vmatpush1.msra.mxu0 0.0
      %4959 = vmatprep.subr.mxu0 0.0
      %4960 = vmatpush1.msra.mxu0 0.0
      %4961 = vmatprep.subr.mxu0 0.0
      %4962 = vmatpush1.msra.mxu0 0.0
      %4963 = vmatprep.subr.mxu0 0.0
      %4964 = vmatpush1.msra.mxu0 0.0
      %4965 = vmatprep.subr.mxu0 0.0
      %4966 = vmatpush1.msra.mxu0 0.0
      %4967 = vmatprep.subr.mxu0 0.0
      %4968 = vmatpush1.msra.mxu0 0.0
      %4969 = vmatprep.subr.mxu0 0.0
      %4970 = vmatpush1.msra.mxu0 0.0
      %4971 = vmatprep.subr.mxu0 0.0
      %4972 = vmatpush1.msra.mxu0 0.0
      %4973 = vmatprep.subr.mxu0 0.0
      %4974 = vmatpush1.msra.mxu0 0.0
      %4975 = vmatprep.subr.mxu0 0.0
      %4976 = vmatpush1.msra.mxu0 0.0
      %4977 = vmatprep.mubr.f32.mxu0 0.0
      %4978 = vmatmul.mubr.f32.gmra.mrb[0].mxu0 %v4680
      %v4979 = vpop.f32.mrb[0].mxu0
      %v4980 = vadd.f32 0.0, %v4979
      %v4981 = vpop.f32.mrb[0].mxu0
      %4982 = vmatprep.mubr.f32.mxu0 0.0
      %4983 = vmatmul.mubr.f32.gmra.mrb[0].mxu0 %v4683
      %v4984 = vpop.f32.mrb[0].mxu0
      %v4985 = vadd.f32 0.0, %v4984
      %v4986 = vpop.f32.mrb[0].mxu0
      %4987 = vmatprep.mubr.f32.mxu0 0.0
      %4988 = vmatmul.mubr.f32.gmra.mrb[0].mxu0 %v4686
      %v4989 = vpop.f32.mrb[0].mxu0
      %v4990 = vadd.f32 0.0, %v4989
      %v4991 = vpop.f32.mrb[0].mxu0
      %4992 = vmatprep.mubr.f32.mxu0 0.0
      %4993 = vmatmul.mubr.f32.gmra.mrb[0].mxu0 %v4689
      %v4994 = vpop.f32.mrb[0].mxu0
      %v4995 = vadd.f32 0.0, %v4994
      %v4996 = vpop.f32.mrb[0].mxu0
      %4997 = vmatprep.mubr.f32.mxu0 0.0
      %4998 = vmatmul.mubr.f32.gmra.mrb[0].mxu0 %v4692
      %v4999 = vpop.f32.mrb[0].mxu0
      %v5000 = vadd.f32 0.0, %v4999
      %v5001 = vpop.f32.mrb[0].mxu0
      %5002 = vmatprep.mubr.f32.mxu0 0.0
      %5003 = vmatmul.mubr.f32.gmra.mrb[0].mxu0 %v4695
      %v5004 = vpop.f32.mrb[0].mxu0
      %v5005 = vadd.f32 0.0, %v5004
      %v5006 = vpop.f32.mrb[0].mxu0
      %5007 = vmatprep.mubr.f32.mxu0 0.0
      %5008 = vmatmul.mubr.f32.gmra.mrb[0].mxu0 %v4698
      %v5009 = vpop.f32.mrb[0].mxu0
      %v5010 = vadd.f32 0.0, %v5009
      %v5011 = vpop.f32.mrb[0].mxu0
      %5012 = vmatprep.mubr.f32.mxu0 0.0
      %5013 = vmatmul.mubr.f32.gmra.mrb[0].mxu0 %v4701
      %v5014 = vpop.f32.mrb[0].mxu0
      %v5015 = vadd.f32 0.0, %v5014
      %v5016 = vpop.f32.mrb[0].mxu0
      %5017 = vmatprep.mubr.f32.mxu0 0.0
      %5018 = vmatmul.mubr.f32.gmra.mrb[0].mxu0 %v4704
      %v5019 = vpop.f32.mrb[0].mxu0
      %v5020 = vadd.f32 0.0, %v5019
      %v5021 = vpop.f32.mrb[0].mxu0
      %5022 = vmatprep.mubr.f32.mxu0 0.0
      %5023 = vmatmul.mubr.f32.gmra.mrb[0].mxu0 %v4707
      %v5024 = vpop.f32.mrb[0].mxu0
      %v5025 = vadd.f32 0.0, %v5024
      %v5026 = vpop.f32.mrb[0].mxu0
      %5027 = vmatprep.mubr.f32.mxu0 0.0
      %5028 = vmatmul.mubr.f32.gmra.mrb[0].mxu0 %v4710
      %v5029 = vpop.f32.mrb[0].mxu0
      %v5030 = vadd.f32 0.0, %v5029
      %v5031 = vpop.f32.mrb[0].mxu0
      %5032 = vmatprep.mubr.f32.mxu0 0.0
      %5033 = vmatmul.mubr.f32.gmra.mrb[0].mxu0 %v4713
      %v5034 = vpop.f32.mrb[0].mxu0
      %v5035 = vadd.f32 0.0, %v5034
      %v5036 = vpop.f32.mrb[0].mxu0
      %5037 = vmatprep.mubr.f32.mxu0 0.0
      %5038 = vmatmul.mubr.f32.gmra.mrb[0].mxu0 %v4716
      %v5039 = vpop.f32.mrb[0].mxu0
      %v5040 = vadd.f32 0.0, %v5039
      %v5041 = vpop.f32.mrb[0].mxu0
      %5042 = vmatprep.mubr.f32.mxu0 0.0
      %5043 = vmatmul.mubr.f32.gmra.mrb[0].mxu0 %v4719
      %v5044 = vpop.f32.mrb[0].mxu0
      %v5045 = vadd.f32 0.0, %v5044
      %v5046 = vpop.f32.mrb[0].mxu0
      %5047 = vmatprep.mubr.f32.mxu0 0.0
      %5048 = vmatmul.mubr.f32.gmra.mrb[0].mxu0 %v4722
      %v5049 = vpop.f32.mrb[0].mxu0
      %v5050 = vadd.f32 0.0, %v5049
      %v5051 = vpop.f32.mrb[0].mxu0
      %5052 = vmatprep.mubr.f32.mxu0 0.0
      %5053 = vmatmul.mubr.f32.gmra.mrb[0].mxu0 %v4725
      %v5054 = vpop.f32.mrb[0].mxu0
      %v5055 = vadd.f32 0.0, %v5054
      %v5056 = vpop.f32.mrb[0].mxu0
      %5057 = vmatprep.mubr.f32.mxu0 0.0
      %5058 = vmatmul.mubr.f32.gmra.mrb[0].mxu0 %v4728
      %v5059 = vpop.f32.mrb[0].mxu0
      %v5060 = vadd.f32 0.0, %v5059
      %v5061 = vpop.f32.mrb[0].mxu0
      %5062 = vmatprep.mubr.f32.mxu0 0.0
      %5063 = vmatmul.mubr.f32.gmra.mrb[0].mxu0 %v4731
      %v5064 = vpop.f32.mrb[0].mxu0
      %v5065 = vadd.f32 0.0, %v5064
      %v5066 = vpop.f32.mrb[0].mxu0
      %5067 = vmatprep.mubr.f32.mxu0 0.0
      %5068 = vmatmul.mubr.f32.gmra.mrb[0].mxu0 %v4734
      %v5069 = vpop.f32.mrb[0].mxu0
      %v5070 = vadd.f32 0.0, %v5069
      %v5071 = vpop.f32.mrb[0].mxu0
      %5072 = vmatprep.mubr.f32.mxu0 0.0
      %5073 = vmatmul.mubr.f32.gmra.mrb[0].mxu0 %v4737
      %v5074 = vpop.f32.mrb[0].mxu0
      %v5075 = vadd.f32 0.0, %v5074
      %v5076 = vpop.f32.mrb[0].mxu0
      %5077 = vdwg.mxu0
      %v5078 = vmax.f32 %v4810, %v4980
      %v5079 = vmax.f32 %v4815, %v4985
      %v5080 = vmax.f32 %v4820, %v4990
      %v5081 = vmax.f32 %v4825, %v4995
      %v5082 = vmax.f32 %v4830, %v5000
      %v5083 = vmax.f32 %v4835, %v5005
      %v5084 = vmax.f32 %v4840, %v5010
      %v5085 = vmax.f32 %v4845, %v5015
      %v5086 = vmax.f32 %v4850, %v5020
      %v5087 = vmax.f32 %v4855, %v5025
      %v5088 = vmax.f32 %v4860, %v5030
      %v5089 = vmax.f32 %v4865, %v5035
      %v5090 = vmax.f32 %v4870, %v5040
      %v5091 = vmax.f32 %v4875, %v5045
      %v5092 = vmax.f32 %v4880, %v5050
      %v5093 = vmax.f32 %v4885, %v5055
      %v5094 = vmax.f32 %v4890, %v5060
      %v5095 = vmax.f32 %v4895, %v5065
      %v5096 = vmax.f32 %v4900, %v5070
      %v5097 = vmax.f32 %v4905, %v5075
      %v5098 = vld [vmem:[%s11] sm:$0xff]
      %v5099 = vld [vmem:[%s11 + $0x8] sm:$0xff]
      %v5100 = vld [vmem:[%s11 + $0x10] sm:$0xff]
      %v5101 = vld [vmem:[%s11 + $0x18] sm:$0xff]
      %v5102 = vld [vmem:[%s11 + $0x20] sm:$0xff]
      %v5103 = vld [vmem:[%s11 + $0x28] sm:$0xff]
      %v5104 = vld [vmem:[%s11 + $0x30] sm:$0xff]
      %v5105 = vld [vmem:[%s11 + $0x38] sm:$0xff]
      %v5106 = vld [vmem:[%s11 + $0x40] sm:$0xff]
      %v5107 = vld [vmem:[%s11 + $0x48] sm:$0xff]
      %v5108 = vld [vmem:[%s11 + $0x50] sm:$0xff]
      %v5109 = vld [vmem:[%s11 + $0x58] sm:$0xff]
      %v5110 = vld [vmem:[%s11 + $0x60] sm:$0xff]
      %v5111 = vld [vmem:[%s11 + $0x68] sm:$0xff]
      %v5112 = vld [vmem:[%s11 + $0x70] sm:$0xff]
      %v5113 = vld [vmem:[%s11 + $0x78] sm:$0xff]
      %v5114 = vld [vmem:[%s11 + $0x80] sm:$0xff]
      %v5115 = vld [vmem:[%s11 + $0x88] sm:$0xff]
      %v5116 = vld [vmem:[%s11 + $0x90] sm:$0xff]
      %v5117 = vld [vmem:[%s11 + $0x98] sm:$0xff]
      %vm5118 = vcmask 261120
      %v5120 = vsel %vm5118, %v5099, 0
      %v5123 = vsel %vm5118, %v5101, 0
      %v5126 = vsel %vm5118, %v5103, 0
      %v5129 = vsel %vm5118, %v5105, 0
      %v5132 = vsel %vm5118, %v5107, 0
      %v5135 = vsel %vm5118, %v5109, 0
      %v5138 = vsel %vm5118, %v5111, 0
      %v5141 = vsel %vm5118, %v5113, 0
      %v5144 = vsel %vm5118, %v5115, 0
      %v5147 = vsel %vm5118, %v5117, 0
      %5149 = vmatprep.subr.mxu0 0.0
      %5150 = vmatpush1.msra.mxu0 %v5078
      %5151 = vmatprep.subr.mxu0 0.0
      %5152 = vmatpush1.msra.mxu0 %v5079
      %5153 = vmatprep.subr.mxu0 0.0
      %5154 = vmatpush1.msra.mxu0 %v5080
      %5155 = vmatprep.subr.mxu0 0.0
      %5156 = vmatpush1.msra.mxu0 %v5081
      %5157 = vmatprep.subr.mxu0 0.0
      %5158 = vmatpush1.msra.mxu0 %v5082
      %5159 = vmatprep.subr.mxu0 0.0
      %5160 = vmatpush1.msra.mxu0 %v5083
      %5161 = vmatprep.subr.mxu0 0.0
      %5162 = vmatpush1.msra.mxu0 %v5084
      %5163 = vmatprep.subr.mxu0 0.0
      %5164 = vmatpush1.msra.mxu0 %v5085
      %5165 = vmatprep.subr.mxu0 0.0
      %5166 = vmatpush1.msra.mxu0 %v5086
      %5167 = vmatprep.subr.mxu0 0.0
      %5168 = vmatpush1.msra.mxu0 %v5087
      %5169 = vmatprep.subr.mxu0 0.0
      %5170 = vmatpush1.msra.mxu0 %v5088
      %5171 = vmatprep.subr.mxu0 0.0
      %5172 = vmatpush1.msra.mxu0 %v5089
      %5173 = vmatprep.subr.mxu0 0.0
      %5174 = vmatpush1.msra.mxu0 %v5090
      %5175 = vmatprep.subr.mxu0 0.0
      %5176 = vmatpush1.msra.mxu0 %v5091
      %5177 = vmatprep.subr.mxu0 0.0
      %5178 = vmatpush1.msra.mxu0 %v5092
      %5179 = vmatprep.subr.mxu0 0.0
      %5180 = vmatpush1.msra.mxu0 %v5093
      %5181 = vmatprep.subr.mxu0 0.0
      %5182 = vmatpush1.msra.mxu0 %v5094
      %5183 = vmatprep.subr.mxu0 0.0
      %5184 = vmatpush1.msra.mxu0 %v5095
      %5185 = vmatprep.subr.mxu0 0.0
      %5186 = vmatpush1.msra.mxu0 %v5096
      %5187 = vmatprep.subr.mxu0 0.0
      %5188 = vmatpush1.msra.mxu0 %v5097
      %5189 = vmatprep.subr.mxu0 0.0
      %5190 = vmatpush1.msra.mxu0 0.0
      %5191 = vmatprep.subr.mxu0 0.0
      %5192 = vmatpush1.msra.mxu0 0.0
      %5193 = vmatprep.subr.mxu0 0.0
      %5194 = vmatpush1.msra.mxu0 0.0
      %5195 = vmatprep.subr.mxu0 0.0
      %5196 = vmatpush1.msra.mxu0 0.0
      %5197 = vmatprep.subr.mxu0 0.0
      %5198 = vmatpush1.msra.mxu0 0.0
      %5199 = vmatprep.subr.mxu0 0.0
      %5200 = vmatpush1.msra.mxu0 0.0
      %5201 = vmatprep.subr.mxu0 0.0
      %5202 = vmatpush1.msra.mxu0 0.0
      %5203 = vmatprep.subr.mxu0 0.0
      %5204 = vmatpush1.msra.mxu0 0.0
      %5205 = vmatprep.subr.mxu0 0.0
      %5206 = vmatpush1.msra.mxu0 0.0
      %5207 = vmatprep.subr.mxu0 0.0
      %5208 = vmatpush1.msra.mxu0 0.0
      %5209 = vmatprep.subr.mxu0 0.0
      %5210 = vmatpush1.msra.mxu0 0.0
      %5211 = vmatprep.subr.mxu0 0.0
      %5212 = vmatpush1.msra.mxu0 0.0
      %5213 = vmatprep.mubr.f32.mxu0 %v5120
      %5214 = vmatmul.mubr.f32.gmra.mrb[0].mxu0 %v5098
      %v5215 = vpop.f32.mrb[0].mxu0
      %v5216 = vadd.f32 0.0, %v5215
      %v5217 = vpop.f32.mrb[0].mxu0
      %5218 = vmatprep.mubr.f32.mxu0 %v5123
      %5219 = vmatmul.mubr.f32.gmra.mrb[0].mxu0 %v5100
      %v5220 = vpop.f32.mrb[0].mxu0
      %v5221 = vadd.f32 0.0, %v5220
      %v5222 = vpop.f32.mrb[0].mxu0
      %5223 = vmatprep.mubr.f32.mxu0 %v5126
      %5224 = vmatmul.mubr.f32.gmra.mrb[0].mxu0 %v5102
      %v5225 = vpop.f32.mrb[0].mxu0
      %v5226 = vadd.f32 0.0, %v5225
      %v5227 = vpop.f32.mrb[0].mxu0
      %5228 = vmatprep.mubr.f32.mxu0 %v5129
      %5229 = vmatmul.mubr.f32.gmra.mrb[0].mxu0 %v5104
      %v5230 = vpop.f32.mrb[0].mxu0
      %v5231 = vadd.f32 0.0, %v5230
      %v5232 = vpop.f32.mrb[0].mxu0
      %5233 = vmatprep.mubr.f32.mxu0 %v5132
      %5234 = vmatmul.mubr.f32.gmra.mrb[0].mxu0 %v5106
      %v5235 = vpop.f32.mrb[0].mxu0
      %v5236 = vadd.f32 0.0, %v5235
      %v5237 = vpop.f32.mrb[0].mxu0
      %5238 = vmatprep.mubr.f32.mxu0 %v5135
      %5239 = vmatmul.mubr.f32.gmra.mrb[0].mxu0 %v5108
      %v5240 = vpop.f32.mrb[0].mxu0
      %v5241 = vadd.f32 0.0, %v5240
      %v5242 = vpop.f32.mrb[0].mxu0
      %5243 = vmatprep.mubr.f32.mxu0 %v5138
      %5244 = vmatmul.mubr.f32.gmra.mrb[0].mxu0 %v5110
      %v5245 = vpop.f32.mrb[0].mxu0
      %v5246 = vadd.f32 0.0, %v5245
      %v5247 = vpop.f32.mrb[0].mxu0
      %5248 = vmatprep.mubr.f32.mxu0 %v5141
      %5249 = vmatmul.mubr.f32.gmra.mrb[0].mxu0 %v5112
      %v5250 = vpop.f32.mrb[0].mxu0
      %v5251 = vadd.f32 0.0, %v5250
      %v5252 = vpop.f32.mrb[0].mxu0
      %5253 = vmatprep.mubr.f32.mxu0 %v5144
      %5254 = vmatmul.mubr.f32.gmra.mrb[0].mxu0 %v5114
      %v5255 = vpop.f32.mrb[0].mxu0
      %v5256 = vadd.f32 0.0, %v5255
      %v5257 = vpop.f32.mrb[0].mxu0
      %5258 = vmatprep.mubr.f32.mxu0 %v5147
      %5259 = vmatmul.mubr.f32.gmra.mrb[0].mxu0 %v5116
      %v5260 = vpop.f32.mrb[0].mxu0
      %v5261 = vadd.f32 0.0, %v5260
      %v5262 = vpop.f32.mrb[0].mxu0
      %5263 = vdwg.mxu0
      %v5264 = vld [vmem:[%s12] sm:$0xff]
      %v5265 = vld [vmem:[%s12 + $0x8] sm:$0xff]
      %v5266 = vld [vmem:[%s12 + $0x10] sm:$0xff]
      %v5267 = vld [vmem:[%s12 + $0x18] sm:$0xff]
      %v5268 = vld [vmem:[%s12 + $0x20] sm:$0xff]
      %v5269 = vld [vmem:[%s12 + $0x28] sm:$0xff]
      %v5270 = vld [vmem:[%s12 + $0x30] sm:$0xff]
      %v5271 = vld [vmem:[%s12 + $0x38] sm:$0xff]
      %v5272 = vld [vmem:[%s12 + $0x40] sm:$0xff]
      %v5273 = vld [vmem:[%s12 + $0x48] sm:$0xff]
      %v5274 = vld [vmem:[%s12 + $0x50] sm:$0xff]
      %v5275 = vld [vmem:[%s12 + $0x58] sm:$0xff]
      %v5276 = vld [vmem:[%s12 + $0x60] sm:$0xff]
      %v5277 = vld [vmem:[%s12 + $0x68] sm:$0xff]
      %v5278 = vld [vmem:[%s12 + $0x70] sm:$0xff]
      %v5279 = vld [vmem:[%s12 + $0x78] sm:$0xff]
      %v5280 = vld [vmem:[%s12 + $0x80] sm:$0xff]
      %v5281 = vld [vmem:[%s12 + $0x88] sm:$0xff]
      %v5282 = vld [vmem:[%s12 + $0x90] sm:$0xff]
      %v5283 = vld [vmem:[%s12 + $0x98] sm:$0xff]
      %v5285 = vsel %vm5118, %v5265, 0
      %v5288 = vsel %vm5118, %v5267, 0
      %v5291 = vsel %vm5118, %v5269, 0
      %v5294 = vsel %vm5118, %v5271, 0
      %v5297 = vsel %vm5118, %v5273, 0
      %v5300 = vsel %vm5118, %v5275, 0
      %v5303 = vsel %vm5118, %v5277, 0
      %v5306 = vsel %vm5118, %v5279, 0
      %v5309 = vsel %vm5118, %v5281, 0
      %v5312 = vsel %vm5118, %v5283, 0
      %5314 = vmatprep.subr.mxu0 0.0
      %5315 = vmatpush1.msra.mxu0 %v5078
      %5316 = vmatprep.subr.mxu0 0.0
      %5317 = vmatpush1.msra.mxu0 %v5079
      %5318 = vmatprep.subr.mxu0 0.0
      %5319 = vmatpush1.msra.mxu0 %v5080
      %5320 = vmatprep.subr.mxu0 0.0
      %5321 = vmatpush1.msra.mxu0 %v5081
      %5322 = vmatprep.subr.mxu0 0.0
      %5323 = vmatpush1.msra.mxu0 %v5082
      %5324 = vmatprep.subr.mxu0 0.0
      %5325 = vmatpush1.msra.mxu0 %v5083
      %5326 = vmatprep.subr.mxu0 0.0
      %5327 = vmatpush1.msra.mxu0 %v5084
      %5328 = vmatprep.subr.mxu0 0.0
      %5329 = vmatpush1.msra.mxu0 %v5085
      %5330 = vmatprep.subr.mxu0 0.0
      %5331 = vmatpush1.msra.mxu0 %v5086
      %5332 = vmatprep.subr.mxu0 0.0
      %5333 = vmatpush1.msra.mxu0 %v5087
      %5334 = vmatprep.subr.mxu0 0.0
      %5335 = vmatpush1.msra.mxu0 %v5088
      %5336 = vmatprep.subr.mxu0 0.0
      %5337 = vmatpush1.msra.mxu0 %v5089
      %5338 = vmatprep.subr.mxu0 0.0
      %5339 = vmatpush1.msra.mxu0 %v5090
      %5340 = vmatprep.subr.mxu0 0.0
      %5341 = vmatpush1.msra.mxu0 %v5091
      %5342 = vmatprep.subr.mxu0 0.0
      %5343 = vmatpush1.msra.mxu0 %v5092
      %5344 = vmatprep.subr.mxu0 0.0
      %5345 = vmatpush1.msra.mxu0 %v5093
      %5346 = vmatprep.subr.mxu0 0.0
      %5347 = vmatpush1.msra.mxu0 %v5094
      %5348 = vmatprep.subr.mxu0 0.0
      %5349 = vmatpush1.msra.mxu0 %v5095
      %5350 = vmatprep.subr.mxu0 0.0
      %5351 = vmatpush1.msra.mxu0 %v5096
      %5352 = vmatprep.subr.mxu0 0.0
      %5353 = vmatpush1.msra.mxu0 %v5097
      %5354 = vmatprep.subr.mxu0 0.0
      %5355 = vmatpush1.msra.mxu0 0.0
      %5356 = vmatprep.subr.mxu0 0.0
      %5357 = vmatpush1.msra.mxu0 0.0
      %5358 = vmatprep.subr.mxu0 0.0
      %5359 = vmatpush1.msra.mxu0 0.0
      %5360 = vmatprep.subr.mxu0 0.0
      %5361 = vmatpush1.msra.mxu0 0.0
      %5362 = vmatprep.subr.mxu0 0.0
      %5363 = vmatpush1.msra.mxu0 0.0
      %5364 = vmatprep.subr.mxu0 0.0
      %5365 = vmatpush1.msra.mxu0 0.0
      %5366 = vmatprep.subr.mxu0 0.0
      %5367 = vmatpush1.msra.mxu0 0.0
      %5368 = vmatprep.subr.mxu0 0.0
      %5369 = vmatpush1.msra.mxu0 0.0
      %5370 = vmatprep.subr.mxu0 0.0
      %5371 = vmatpush1.msra.mxu0 0.0
      %5372 = vmatprep.subr.mxu0 0.0
      %5373 = vmatpush1.msra.mxu0 0.0
      %5374 = vmatprep.subr.mxu0 0.0
      %5375 = vmatpush1.msra.mxu0 0.0
      %5376 = vmatprep.subr.mxu0 0.0
      %5377 = vmatpush1.msra.mxu0 0.0
      %5378 = vmatprep.mubr.f32.mxu0 %v5285
      %5379 = vmatmul.mubr.f32.gmra.mrb[0].mxu0 %v5264
      %v5380 = vpop.f32.mrb[0].mxu0
      %v5381 = vadd.f32 0.0, %v5380
      %v5382 = vpop.f32.mrb[0].mxu0
      %5383 = vmatprep.mubr.f32.mxu0 %v5288
      %5384 = vmatmul.mubr.f32.gmra.mrb[0].mxu0 %v5266
      %v5385 = vpop.f32.mrb[0].mxu0
      %v5386 = vadd.f32 0.0, %v5385
      %v5387 = vpop.f32.mrb[0].mxu0
      %5388 = vmatprep.mubr.f32.mxu0 %v5291
      %5389 = vmatmul.mubr.f32.gmra.mrb[0].mxu0 %v5268
      %v5390 = vpop.f32.mrb[0].mxu0
      %v5391 = vadd.f32 0.0, %v5390
      %v5392 = vpop.f32.mrb[0].mxu0
      %5393 = vmatprep.mubr.f32.mxu0 %v5294
      %5394 = vmatmul.mubr.f32.gmra.mrb[0].mxu0 %v5270
      %v5395 = vpop.f32.mrb[0].mxu0
      %v5396 = vadd.f32 0.0, %v5395
      %v5397 = vpop.f32.mrb[0].mxu0
      %5398 = vmatprep.mubr.f32.mxu0 %v5297
      %5399 = vmatmul.mubr.f32.gmra.mrb[0].mxu0 %v5272
      %v5400 = vpop.f32.mrb[0].mxu0
      %v5401 = vadd.f32 0.0, %v5400
      %v5402 = vpop.f32.mrb[0].mxu0
      %5403 = vmatprep.mubr.f32.mxu0 %v5300
      %5404 = vmatmul.mubr.f32.gmra.mrb[0].mxu0 %v5274
      %v5405 = vpop.f32.mrb[0].mxu0
      %v5406 = vadd.f32 0.0, %v5405
      %v5407 = vpop.f32.mrb[0].mxu0
      %5408 = vmatprep.mubr.f32.mxu0 %v5303
      %5409 = vmatmul.mubr.f32.gmra.mrb[0].mxu0 %v5276
      %v5410 = vpop.f32.mrb[0].mxu0
      %v5411 = vadd.f32 0.0, %v5410
      %v5412 = vpop.f32.mrb[0].mxu0
      %5413 = vmatprep.mubr.f32.mxu0 %v5306
      %5414 = vmatmul.mubr.f32.gmra.mrb[0].mxu0 %v5278
      %v5415 = vpop.f32.mrb[0].mxu0
      %v5416 = vadd.f32 0.0, %v5415
      %v5417 = vpop.f32.mrb[0].mxu0
      %5418 = vmatprep.mubr.f32.mxu0 %v5309
      %5419 = vmatmul.mubr.f32.gmra.mrb[0].mxu0 %v5280
      %v5420 = vpop.f32.mrb[0].mxu0
      %v5421 = vadd.f32 0.0, %v5420
      %v5422 = vpop.f32.mrb[0].mxu0
      %5423 = vmatprep.mubr.f32.mxu0 %v5312
      %5424 = vmatmul.mubr.f32.gmra.mrb[0].mxu0 %v5282
      %v5425 = vpop.f32.mrb[0].mxu0
      %v5426 = vadd.f32 0.0, %v5425
      %v5427 = vpop.f32.mrb[0].mxu0
      %5428 = vdwg.mxu0
      %v5429 = vmax.f32 %v5216, %v5381
      %v5430 = vmax.f32 %v5221, %v5386
      %v5431 = vmax.f32 %v5226, %v5391
      %v5432 = vmax.f32 %v5231, %v5396
      %v5433 = vmax.f32 %v5236, %v5401
      %v5434 = vmax.f32 %v5241, %v5406
      %v5435 = vmax.f32 %v5246, %v5411
      %v5436 = vmax.f32 %v5251, %v5416
      %v5437 = vmax.f32 %v5256, %v5421
      %v5438 = vmax.f32 %v5261, %v5426
      %v5439 = vld [vmem:[%s13] sm:$0xff]
      %v5440 = vld [vmem:[%s13 + $0x8] sm:$0xff]
      %v5441 = vld [vmem:[%s13 + $0x10] sm:$0xff]
      %v5442 = vld [vmem:[%s13 + $0x18] sm:$0xff]
      %v5443 = vld [vmem:[%s13 + $0x20] sm:$0xff]
      %v5444 = vld [vmem:[%s13 + $0x28] sm:$0xff]
      %v5445 = vld [vmem:[%s13 + $0x30] sm:$0xff]
      %v5446 = vld [vmem:[%s13 + $0x38] sm:$0xff]
      %v5447 = vld [vmem:[%s13 + $0x40] sm:$0xff]
      %v5448 = vld [vmem:[%s13 + $0x48] sm:$0xff]
      %v5449 = vld [vmem:[%s13 + $0x50] sm:$0xff]
      %v5450 = vld [vmem:[%s13 + $0x58] sm:$0xff]
      %v5451 = vld [vmem:[%s13 + $0x60] sm:$0xff]
      %v5452 = vld [vmem:[%s13 + $0x68] sm:$0xff]
      %v5453 = vld [vmem:[%s13 + $0x70] sm:$0xff]
      %s5454 = scalar_lea.vmem %s13, 120
      %v5455 = vld [vmem:[%s5454] sm:$0xff]
      %v5456 = vld [vmem:[%s5454 + $0x8] sm:$0xff]
      %v5457 = vld [vmem:[%s5454 + $0x10] sm:$0xff]
      %v5458 = vld [vmem:[%s5454 + $0x18] sm:$0xff]
      %v5459 = vld [vmem:[%s5454 + $0x20] sm:$0xff]
      %v5460 = vld [vmem:[%s5454 + $0x28] sm:$0xff]
      %v5461 = vld [vmem:[%s5454 + $0x30] sm:$0xff]
      %v5462 = vld [vmem:[%s5454 + $0x38] sm:$0xff]
      %v5463 = vld [vmem:[%s5454 + $0x40] sm:$0xff]
      %v5464 = vld [vmem:[%s5454 + $0x48] sm:$0xff]
      %v5465 = vld [vmem:[%s5454 + $0x50] sm:$0xff]
      %v5466 = vld [vmem:[%s5454 + $0x58] sm:$0xff]
      %v5467 = vld [vmem:[%s5454 + $0x60] sm:$0xff]
      %v5468 = vld [vmem:[%s5454 + $0x68] sm:$0xff]
      %v5469 = vld [vmem:[%s5454 + $0x70] sm:$0xff]
      %5480 = vrot.lane.b32.xlu0 %v5429, 127
      %v5481 = vpop.permute.xlu0 %5480
      %5482 = vrot.lane.b32.xlu0 %v5430, 127
      %v5483 = vpop.permute.xlu0 %5482
      %5484 = vrot.lane.b32.xlu0 %v5431, 127
      %v5485 = vpop.permute.xlu0 %5484
      %5486 = vrot.lane.b32.xlu0 %v5432, 127
      %v5487 = vpop.permute.xlu0 %5486
      %5488 = vrot.lane.b32.xlu0 %v5433, 127
      %v5489 = vpop.permute.xlu0 %5488
      %5490 = vrot.lane.b32.xlu0 %v5434, 127
      %v5491 = vpop.permute.xlu0 %5490
      %5492 = vrot.lane.b32.xlu0 %v5435, 127
      %v5493 = vpop.permute.xlu0 %5492
      %5494 = vrot.lane.b32.xlu0 %v5436, 127
      %v5495 = vpop.permute.xlu0 %5494
      %5496 = vrot.lane.b32.xlu0 %v5437, 127
      %v5497 = vpop.permute.xlu0 %5496
      %5498 = vrot.lane.b32.xlu0 %v5438, 127
      %v5499 = vpop.permute.xlu0 %5498
      %vm5510 = vcmask 654336
      %v5512 = vsel %vm5510, %v5455, 0
      %v5515 = vsel %vm5510, %v5456, 0
      %v5518 = vsel %vm5510, %v5457, 0
      %v5521 = vsel %vm5510, %v5458, 0
      %v5524 = vsel %vm5510, %v5459, 0
      %v5527 = vsel %vm5510, %v5460, 0
      %v5530 = vsel %vm5510, %v5461, 0
      %v5533 = vsel %vm5510, %v5462, 0
      %v5536 = vsel %vm5510, %v5463, 0
      %v5539 = vsel %vm5510, %v5464, 0
      %v5542 = vsel %vm5510, %v5465, 0
      %v5545 = vsel %vm5510, %v5466, 0
      %v5548 = vsel %vm5510, %v5467, 0
      %v5551 = vsel %vm5510, %v5468, 0
      %v5554 = vsel %vm5510, %v5469, 0
      %5556 = vmatprep.subr.mxu0 0.0
      %5557 = vmatpush1.msra.mxu0 %v5481
      %5558 = vmatprep.subr.mxu0 0.0
      %5559 = vmatpush1.msra.mxu0 %v5483
      %5560 = vmatprep.subr.mxu0 0.0
      %5561 = vmatpush1.msra.mxu0 %v5485
      %5562 = vmatprep.subr.mxu0 0.0
      %5563 = vmatpush1.msra.mxu0 %v5487
      %5564 = vmatprep.subr.mxu0 0.0
      %5565 = vmatpush1.msra.mxu0 %v5489
      %5566 = vmatprep.subr.mxu0 0.0
      %5567 = vmatpush1.msra.mxu0 %v5491
      %5568 = vmatprep.subr.mxu0 0.0
      %5569 = vmatpush1.msra.mxu0 %v5493
      %5570 = vmatprep.subr.mxu0 0.0
      %5571 = vmatpush1.msra.mxu0 %v5495
      %5572 = vmatprep.subr.mxu0 0.0
      %5573 = vmatpush1.msra.mxu0 %v5497
      %5574 = vmatprep.subr.mxu0 0.0
      %5575 = vmatpush1.msra.mxu0 %v5499
      %5576 = vmatprep.subr.mxu0 0.0
      %5577 = vmatpush1.msra.mxu0 0.0
      %5578 = vmatprep.subr.mxu0 0.0
      %5579 = vmatpush1.msra.mxu0 0.0
      %5580 = vmatprep.subr.mxu0 0.0
      %5581 = vmatpush1.msra.mxu0 0.0
      %5582 = vmatprep.subr.mxu0 0.0
      %5583 = vmatpush1.msra.mxu0 0.0
      %5584 = vmatprep.subr.mxu0 0.0
      %5585 = vmatpush1.msra.mxu0 0.0
      %5586 = vmatprep.subr.mxu0 0.0
      %5587 = vmatpush1.msra.mxu0 0.0
      %5588 = vmatprep.subr.mxu0 0.0
      %5589 = vmatpush1.msra.mxu0 0.0
      %5590 = vmatprep.subr.mxu0 0.0
      %5591 = vmatpush1.msra.mxu0 0.0
      %5592 = vmatprep.subr.mxu0 0.0
      %5593 = vmatpush1.msra.mxu0 0.0
      %5594 = vmatprep.subr.mxu0 0.0
      %5595 = vmatpush1.msra.mxu0 0.0
      %5596 = vmatprep.subr.mxu0 0.0
      %5597 = vmatpush1.msra.mxu0 0.0
      %5598 = vmatprep.subr.mxu0 0.0
      %5599 = vmatpush1.msra.mxu0 0.0
      %5600 = vmatprep.subr.mxu0 0.0
      %5601 = vmatpush1.msra.mxu0 0.0
      %5602 = vmatprep.subr.mxu0 0.0
      %5603 = vmatpush1.msra.mxu0 0.0
      %5604 = vmatprep.subr.mxu0 0.0
      %5605 = vmatpush1.msra.mxu0 0.0
      %5606 = vmatprep.subr.mxu0 0.0
      %5607 = vmatpush1.msra.mxu0 0.0
      %5608 = vmatprep.subr.mxu0 0.0
      %5609 = vmatpush1.msra.mxu0 0.0
      %5610 = vmatprep.subr.mxu0 0.0
      %5611 = vmatpush1.msra.mxu0 0.0
      %5612 = vmatprep.subr.mxu0 0.0
      %5613 = vmatpush1.msra.mxu0 0.0
      %5614 = vmatprep.subr.mxu0 0.0
      %5615 = vmatpush1.msra.mxu0 0.0
      %5616 = vmatprep.subr.mxu0 0.0
      %5617 = vmatpush1.msra.mxu0 0.0
      %5618 = vmatprep.subr.mxu0 0.0
      %5619 = vmatpush1.msra.mxu0 0.0
      %5620 = vmatprep.mubr.f32.mxu0 0.0
      %5621 = vmatmul.mubr.f32.gmra.mrb[0].mxu0 %v5512
      %v5622 = vpop.f32.mrb[0].mxu0
      %v5623 = vadd.f32 0.0, %v5622
      %v5624 = vpop.f32.mrb[0].mxu0
      %5625 = vmatprep.mubr.f32.mxu0 0.0
      %5626 = vmatmul.mubr.f32.gmra.mrb[0].mxu0 %v5515
      %v5627 = vpop.f32.mrb[0].mxu0
      %v5628 = vadd.f32 0.0, %v5627
      %v5629 = vpop.f32.mrb[0].mxu0
      %5630 = vmatprep.mubr.f32.mxu0 0.0
      %5631 = vmatmul.mubr.f32.gmra.mrb[0].mxu0 %v5518
      %v5632 = vpop.f32.mrb[0].mxu0
      %v5633 = vadd.f32 0.0, %v5632
      %v5634 = vpop.f32.mrb[0].mxu0
      %5635 = vmatprep.mubr.f32.mxu0 0.0
      %5636 = vmatmul.mubr.f32.gmra.mrb[0].mxu0 %v5521
      %v5637 = vpop.f32.mrb[0].mxu0
      %v5638 = vadd.f32 0.0, %v5637
      %v5639 = vpop.f32.mrb[0].mxu0
      %5640 = vmatprep.mubr.f32.mxu0 0.0
      %5641 = vmatmul.mubr.f32.gmra.mrb[0].mxu0 %v5524
      %v5642 = vpop.f32.mrb[0].mxu0
      %v5643 = vadd.f32 0.0, %v5642
      %v5644 = vpop.f32.mrb[0].mxu0
      %5645 = vmatprep.mubr.f32.mxu0 0.0
      %5646 = vmatmul.mubr.f32.gmra.mrb[0].mxu0 %v5527
      %v5647 = vpop.f32.mrb[0].mxu0
      %v5648 = vadd.f32 0.0, %v5647
      %v5649 = vpop.f32.mrb[0].mxu0
      %5650 = vmatprep.mubr.f32.mxu0 0.0
      %5651 = vmatmul.mubr.f32.gmra.mrb[0].mxu0 %v5530
      %v5652 = vpop.f32.mrb[0].mxu0
      %v5653 = vadd.f32 0.0, %v5652
      %v5654 = vpop.f32.mrb[0].mxu0
      %5655 = vmatprep.mubr.f32.mxu0 0.0
      %5656 = vmatmul.mubr.f32.gmra.mrb[0].mxu0 %v5533
      %v5657 = vpop.f32.mrb[0].mxu0
      %v5658 = vadd.f32 0.0, %v5657
      %v5659 = vpop.f32.mrb[0].mxu0
      %5660 = vmatprep.mubr.f32.mxu0 0.0
      %5661 = vmatmul.mubr.f32.gmra.mrb[0].mxu0 %v5536
      %v5662 = vpop.f32.mrb[0].mxu0
      %v5663 = vadd.f32 0.0, %v5662
      %v5664 = vpop.f32.mrb[0].mxu0
      %5665 = vmatprep.mubr.f32.mxu0 0.0
      %5666 = vmatmul.mubr.f32.gmra.mrb[0].mxu0 %v5539
      %v5667 = vpop.f32.mrb[0].mxu0
      %v5668 = vadd.f32 0.0, %v5667
      %v5669 = vpop.f32.mrb[0].mxu0
      %5670 = vmatprep.mubr.f32.mxu0 0.0
      %5671 = vmatmul.mubr.f32.gmra.mrb[0].mxu0 %v5542
      %v5672 = vpop.f32.mrb[0].mxu0
      %v5673 = vadd.f32 0.0, %v5672
      %v5674 = vpop.f32.mrb[0].mxu0
      %5675 = vmatprep.mubr.f32.mxu0 0.0
      %5676 = vmatmul.mubr.f32.gmra.mrb[0].mxu0 %v5545
      %v5677 = vpop.f32.mrb[0].mxu0
      %v5678 = vadd.f32 0.0, %v5677
      %v5679 = vpop.f32.mrb[0].mxu0
      %5680 = vmatprep.mubr.f32.mxu0 0.0
      %5681 = vmatmul.mubr.f32.gmra.mrb[0].mxu0 %v5548
      %v5682 = vpop.f32.mrb[0].mxu0
      %v5683 = vadd.f32 0.0, %v5682
      %v5684 = vpop.f32.mrb[0].mxu0
      %5685 = vmatprep.mubr.f32.mxu0 0.0
      %5686 = vmatmul.mubr.f32.gmra.mrb[0].mxu0 %v5551
      %v5687 = vpop.f32.mrb[0].mxu0
      %v5688 = vadd.f32 0.0, %v5687
      %v5689 = vpop.f32.mrb[0].mxu0
      %5690 = vmatprep.mubr.f32.mxu0 0.0
      %5691 = vmatmul.mubr.f32.gmra.mrb[0].mxu0 %v5554
      %v5692 = vpop.f32.mrb[0].mxu0
      %v5693 = vadd.f32 0.0, %v5692
      %v5694 = vpop.f32.mrb[0].mxu0
      %5695 = vdwg.mxu0
      %v5697 = vsel %vm5510, %v5439, 0
      %v5700 = vsel %vm5510, %v5440, 0
      %v5703 = vsel %vm5510, %v5441, 0
      %v5706 = vsel %vm5510, %v5442, 0
      %v5709 = vsel %vm5510, %v5443, 0
      %v5712 = vsel %vm5510, %v5444, 0
      %v5715 = vsel %vm5510, %v5445, 0
      %v5718 = vsel %vm5510, %v5446, 0
      %v5721 = vsel %vm5510, %v5447, 0
      %v5724 = vsel %vm5510, %v5448, 0
      %v5727 = vsel %vm5510, %v5449, 0
      %v5730 = vsel %vm5510, %v5450, 0
      %v5733 = vsel %vm5510, %v5451, 0
      %v5736 = vsel %vm5510, %v5452, 0
      %v5739 = vsel %vm5510, %v5453, 0
      %5741 = vmatprep.subr.mxu0 0.0
      %5742 = vmatpush1.msra.mxu0 %v5429
      %5743 = vmatprep.subr.mxu0 0.0
      %5744 = vmatpush1.msra.mxu0 %v5430
      %5745 = vmatprep.subr.mxu0 0.0
      %5746 = vmatpush1.msra.mxu0 %v5431
      %5747 = vmatprep.subr.mxu0 0.0
      %5748 = vmatpush1.msra.mxu0 %v5432
      %5749 = vmatprep.subr.mxu0 0.0
      %5750 = vmatpush1.msra.mxu0 %v5433
      %5751 = vmatprep.subr.mxu0 0.0
      %5752 = vmatpush1.msra.mxu0 %v5434
      %5753 = vmatprep.subr.mxu0 0.0
      %5754 = vmatpush1.msra.mxu0 %v5435
      %5755 = vmatprep.subr.mxu0 0.0
      %5756 = vmatpush1.msra.mxu0 %v5436
      %5757 = vmatprep.subr.mxu0 0.0
      %5758 = vmatpush1.msra.mxu0 %v5437
      %5759 = vmatprep.subr.mxu0 0.0
      %5760 = vmatpush1.msra.mxu0 %v5438
      %5761 = vmatprep.subr.mxu0 0.0
      %5762 = vmatpush1.msra.mxu0 0.0
      %5763 = vmatprep.subr.mxu0 0.0
      %5764 = vmatpush1.msra.mxu0 0.0
      %5765 = vmatprep.subr.mxu0 0.0
      %5766 = vmatpush1.msra.mxu0 0.0
      %5767 = vmatprep.subr.mxu0 0.0
      %5768 = vmatpush1.msra.mxu0 0.0
      %5769 = vmatprep.subr.mxu0 0.0
      %5770 = vmatpush1.msra.mxu0 0.0
      %5771 = vmatprep.subr.mxu0 0.0
      %5772 = vmatpush1.msra.mxu0 0.0
      %5773 = vmatprep.subr.mxu0 0.0
      %5774 = vmatpush1.msra.mxu0 0.0
      %5775 = vmatprep.subr.mxu0 0.0
      %5776 = vmatpush1.msra.mxu0 0.0
      %5777 = vmatprep.subr.mxu0 0.0
      %5778 = vmatpush1.msra.mxu0 0.0
      %5779 = vmatprep.subr.mxu0 0.0
      %5780 = vmatpush1.msra.mxu0 0.0
      %5781 = vmatprep.subr.mxu0 0.0
      %5782 = vmatpush1.msra.mxu0 0.0
      %5783 = vmatprep.subr.mxu0 0.0
      %5784 = vmatpush1.msra.mxu0 0.0
      %5785 = vmatprep.subr.mxu0 0.0
      %5786 = vmatpush1.msra.mxu0 0.0
      %5787 = vmatprep.subr.mxu0 0.0
      %5788 = vmatpush1.msra.mxu0 0.0
      %5789 = vmatprep.subr.mxu0 0.0
      %5790 = vmatpush1.msra.mxu0 0.0
      %5791 = vmatprep.subr.mxu0 0.0
      %5792 = vmatpush1.msra.mxu0 0.0
      %5793 = vmatprep.subr.mxu0 0.0
      %5794 = vmatpush1.msra.mxu0 0.0
      %5795 = vmatprep.subr.mxu0 0.0
      %5796 = vmatpush1.msra.mxu0 0.0
      %5797 = vmatprep.subr.mxu0 0.0
      %5798 = vmatpush1.msra.mxu0 0.0
      %5799 = vmatprep.subr.mxu0 0.0
      %5800 = vmatpush1.msra.mxu0 0.0
      %5801 = vmatprep.subr.mxu0 0.0
      %5802 = vmatpush1.msra.mxu0 0.0
      %5803 = vmatprep.subr.mxu0 0.0
      %5804 = vmatpush1.msra.mxu0 0.0
      %5805 = vmatprep.mubr.f32.mxu0 0.0
      %5806 = vmatmul.mubr.f32.gmra.mrb[0].mxu0 %v5697
      %v5807 = vpop.f32.mrb[0].mxu0
      %v5808 = vadd.f32 %v5623, %v5807
      %v5809 = vpop.f32.mrb[0].mxu0
      %5810 = vmatprep.mubr.f32.mxu0 0.0
      %5811 = vmatmul.mubr.f32.gmra.mrb[0].mxu0 %v5700
      %v5812 = vpop.f32.mrb[0].mxu0
      %v5813 = vadd.f32 %v5628, %v5812
      %v5814 = vpop.f32.mrb[0].mxu0
      %5815 = vmatprep.mubr.f32.mxu0 0.0
      %5816 = vmatmul.mubr.f32.gmra.mrb[0].mxu0 %v5703
      %v5817 = vpop.f32.mrb[0].mxu0
      %v5818 = vadd.f32 %v5633, %v5817
      %v5819 = vpop.f32.mrb[0].mxu0
      %5820 = vmatprep.mubr.f32.mxu0 0.0
      %5821 = vmatmul.mubr.f32.gmra.mrb[0].mxu0 %v5706
      %v5822 = vpop.f32.mrb[0].mxu0
      %v5823 = vadd.f32 %v5638, %v5822
      %v5824 = vpop.f32.mrb[0].mxu0
      %5825 = vmatprep.mubr.f32.mxu0 0.0
      %5826 = vmatmul.mubr.f32.gmra.mrb[0].mxu0 %v5709
      %v5827 = vpop.f32.mrb[0].mxu0
      %v5828 = vadd.f32 %v5643, %v5827
      %v5829 = vpop.f32.mrb[0].mxu0
      %5830 = vmatprep.mubr.f32.mxu0 0.0
      %5831 = vmatmul.mubr.f32.gmra.mrb[0].mxu0 %v5712
      %v5832 = vpop.f32.mrb[0].mxu0
      %v5833 = vadd.f32 %v5648, %v5832
      %v5834 = vpop.f32.mrb[0].mxu0
      %5835 = vmatprep.mubr.f32.mxu0 0.0
      %5836 = vmatmul.mubr.f32.gmra.mrb[0].mxu0 %v5715
      %v5837 = vpop.f32.mrb[0].mxu0
      %v5838 = vadd.f32 %v5653, %v5837
      %v5839 = vpop.f32.mrb[0].mxu0
      %5840 = vmatprep.mubr.f32.mxu0 0.0
      %5841 = vmatmul.mubr.f32.gmra.mrb[0].mxu0 %v5718
      %v5842 = vpop.f32.mrb[0].mxu0
      %v5843 = vadd.f32 %v5658, %v5842
      %v5844 = vpop.f32.mrb[0].mxu0
      %5845 = vmatprep.mubr.f32.mxu0 0.0
      %5846 = vmatmul.mubr.f32.gmra.mrb[0].mxu0 %v5721
      %v5847 = vpop.f32.mrb[0].mxu0
      %v5848 = vadd.f32 %v5663, %v5847
      %v5849 = vpop.f32.mrb[0].mxu0
      %5850 = vmatprep.mubr.f32.mxu0 0.0
      %5851 = vmatmul.mubr.f32.gmra.mrb[0].mxu0 %v5724
      %v5852 = vpop.f32.mrb[0].mxu0
      %v5853 = vadd.f32 %v5668, %v5852
      %v5854 = vpop.f32.mrb[0].mxu0
      %5855 = vmatprep.mubr.f32.mxu0 0.0
      %5856 = vmatmul.mubr.f32.gmra.mrb[0].mxu0 %v5727
      %v5857 = vpop.f32.mrb[0].mxu0
      %v5858 = vadd.f32 %v5673, %v5857
      %v5859 = vpop.f32.mrb[0].mxu0
      %5860 = vmatprep.mubr.f32.mxu0 0.0
      %5861 = vmatmul.mubr.f32.gmra.mrb[0].mxu0 %v5730
      %v5862 = vpop.f32.mrb[0].mxu0
      %v5863 = vadd.f32 %v5678, %v5862
      %v5864 = vpop.f32.mrb[0].mxu0
      %5865 = vmatprep.mubr.f32.mxu0 0.0
      %5866 = vmatmul.mubr.f32.gmra.mrb[0].mxu0 %v5733
      %v5867 = vpop.f32.mrb[0].mxu0
      %v5868 = vadd.f32 %v5683, %v5867
      %v5869 = vpop.f32.mrb[0].mxu0
      %5870 = vmatprep.mubr.f32.mxu0 0.0
      %5871 = vmatmul.mubr.f32.gmra.mrb[0].mxu0 %v5736
      %v5872 = vpop.f32.mrb[0].mxu0
      %v5873 = vadd.f32 %v5688, %v5872
      %v5874 = vpop.f32.mrb[0].mxu0
      %5875 = vmatprep.mubr.f32.mxu0 0.0
      %5876 = vmatmul.mubr.f32.gmra.mrb[0].mxu0 %v5739
      %v5877 = vpop.f32.mrb[0].mxu0
      %v5878 = vadd.f32 %v5693, %v5877
      %v5879 = vpop.f32.mrb[0].mxu0
      %5880 = vdwg.mxu0
      %s5881 = scalar_lea.vmem %s13, 240
      %v5882 = vld [vmem:[%s5881] sm:$0xff]
      %v5883 = vld [vmem:[%s5881 + $0x8] sm:$0xff]
      %v5884 = vld [vmem:[%s5881 + $0x10] sm:$0xff]
      %v5885 = vld [vmem:[%s5881 + $0x18] sm:$0xff]
      %v5886 = vld [vmem:[%s5881 + $0x20] sm:$0xff]
      %v5887 = vld [vmem:[%s5881 + $0x28] sm:$0xff]
      %v5888 = vld [vmem:[%s5881 + $0x30] sm:$0xff]
      %v5889 = vld [vmem:[%s5881 + $0x38] sm:$0xff]
      %v5890 = vld [vmem:[%s5881 + $0x40] sm:$0xff]
      %v5891 = vld [vmem:[%s5881 + $0x48] sm:$0xff]
      %v5892 = vld [vmem:[%s5881 + $0x50] sm:$0xff]
      %v5893 = vld [vmem:[%s5881 + $0x58] sm:$0xff]
      %v5894 = vld [vmem:[%s5881 + $0x60] sm:$0xff]
      %v5895 = vld [vmem:[%s5881 + $0x68] sm:$0xff]
      %v5896 = vld [vmem:[%s5881 + $0x70] sm:$0xff]
      %5897 = vrot.lane.b32.xlu0 %v5429, 126
      %v5898 = vpop.permute.xlu0 %5897
      %5899 = vrot.lane.b32.xlu0 %v5430, 126
      %v5900 = vpop.permute.xlu0 %5899
      %5901 = vrot.lane.b32.xlu0 %v5431, 126
      %v5902 = vpop.permute.xlu0 %5901
      %5903 = vrot.lane.b32.xlu0 %v5432, 126
      %v5904 = vpop.permute.xlu0 %5903
      %5905 = vrot.lane.b32.xlu0 %v5433, 126
      %v5906 = vpop.permute.xlu0 %5905
      %5907 = vrot.lane.b32.xlu0 %v5434, 126
      %v5908 = vpop.permute.xlu0 %5907
      %5909 = vrot.lane.b32.xlu0 %v5435, 126
      %v5910 = vpop.permute.xlu0 %5909
      %5911 = vrot.lane.b32.xlu0 %v5436, 126
      %v5912 = vpop.permute.xlu0 %5911
      %5913 = vrot.lane.b32.xlu0 %v5437, 126
      %v5914 = vpop.permute.xlu0 %5913
      %5915 = vrot.lane.b32.xlu0 %v5438, 126
      %v5916 = vpop.permute.xlu0 %5915
      %v5928 = vsel %vm5510, %v5882, 0
      %v5931 = vsel %vm5510, %v5883, 0
      %v5934 = vsel %vm5510, %v5884, 0
      %v5937 = vsel %vm5510, %v5885, 0
      %v5940 = vsel %vm5510, %v5886, 0
      %v5943 = vsel %vm5510, %v5887, 0
      %v5946 = vsel %vm5510, %v5888, 0
      %v5949 = vsel %vm5510, %v5889, 0
      %v5952 = vsel %vm5510, %v5890, 0
      %v5955 = vsel %vm5510, %v5891, 0
      %v5958 = vsel %vm5510, %v5892, 0
      %v5961 = vsel %vm5510, %v5893, 0
      %v5964 = vsel %vm5510, %v5894, 0
      %v5967 = vsel %vm5510, %v5895, 0
      %v5970 = vsel %vm5510, %v5896, 0
      %5972 = vmatprep.subr.mxu0 0.0
      %5973 = vmatpush1.msra.mxu0 %v5898
      %5974 = vmatprep.subr.mxu0 0.0
      %5975 = vmatpush1.msra.mxu0 %v5900
      %5976 = vmatprep.subr.mxu0 0.0
      %5977 = vmatpush1.msra.mxu0 %v5902
      %5978 = vmatprep.subr.mxu0 0.0
      %5979 = vmatpush1.msra.mxu0 %v5904
      %5980 = vmatprep.subr.mxu0 0.0
      %5981 = vmatpush1.msra.mxu0 %v5906
      %5982 = vmatprep.subr.mxu0 0.0
      %5983 = vmatpush1.msra.mxu0 %v5908
      %5984 = vmatprep.subr.mxu0 0.0
      %5985 = vmatpush1.msra.mxu0 %v5910
      %5986 = vmatprep.subr.mxu0 0.0
      %5987 = vmatpush1.msra.mxu0 %v5912
      %5988 = vmatprep.subr.mxu0 0.0
      %5989 = vmatpush1.msra.mxu0 %v5914
      %5990 = vmatprep.subr.mxu0 0.0
      %5991 = vmatpush1.msra.mxu0 %v5916
      %5992 = vmatprep.subr.mxu0 0.0
      %5993 = vmatpush1.msra.mxu0 0.0
      %5994 = vmatprep.subr.mxu0 0.0
      %5995 = vmatpush1.msra.mxu0 0.0
      %5996 = vmatprep.subr.mxu0 0.0
      %5997 = vmatpush1.msra.mxu0 0.0
      %5998 = vmatprep.subr.mxu0 0.0
      %5999 = vmatpush1.msra.mxu0 0.0
      %6000 = vmatprep.subr.mxu0 0.0
      %6001 = vmatpush1.msra.mxu0 0.0
      %6002 = vmatprep.subr.mxu0 0.0
      %6003 = vmatpush1.msra.mxu0 0.0
      %6004 = vmatprep.subr.mxu0 0.0
      %6005 = vmatpush1.msra.mxu0 0.0
      %6006 = vmatprep.subr.mxu0 0.0
      %6007 = vmatpush1.msra.mxu0 0.0
      %6008 = vmatprep.subr.mxu0 0.0
      %6009 = vmatpush1.msra.mxu0 0.0
      %6010 = vmatprep.subr.mxu0 0.0
      %6011 = vmatpush1.msra.mxu0 0.0
      %6012 = vmatprep.subr.mxu0 0.0
      %6013 = vmatpush1.msra.mxu0 0.0
      %6014 = vmatprep.subr.mxu0 0.0
      %6015 = vmatpush1.msra.mxu0 0.0
      %6016 = vmatprep.subr.mxu0 0.0
      %6017 = vmatpush1.msra.mxu0 0.0
      %6018 = vmatprep.subr.mxu0 0.0
      %6019 = vmatpush1.msra.mxu0 0.0
      %6020 = vmatprep.subr.mxu0 0.0
      %6021 = vmatpush1.msra.mxu0 0.0
      %6022 = vmatprep.subr.mxu0 0.0
      %6023 = vmatpush1.msra.mxu0 0.0
      %6024 = vmatprep.subr.mxu0 0.0
      %6025 = vmatpush1.msra.mxu0 0.0
      %6026 = vmatprep.subr.mxu0 0.0
      %6027 = vmatpush1.msra.mxu0 0.0
      %6028 = vmatprep.subr.mxu0 0.0
      %6029 = vmatpush1.msra.mxu0 0.0
      %6030 = vmatprep.subr.mxu0 0.0
      %6031 = vmatpush1.msra.mxu0 0.0
      %6032 = vmatprep.subr.mxu0 0.0
      %6033 = vmatpush1.msra.mxu0 0.0
      %6034 = vmatprep.subr.mxu0 0.0
      %6035 = vmatpush1.msra.mxu0 0.0
      %6036 = vmatprep.mubr.f32.mxu0 0.0
      %6037 = vmatmul.mubr.f32.gmra.mrb[0].mxu0 %v5928
      %v6038 = vpop.f32.mrb[0].mxu0
      %v6039 = vadd.f32 0.0, %v6038
      %v6040 = vpop.f32.mrb[0].mxu0
      %6041 = vmatprep.mubr.f32.mxu0 0.0
      %6042 = vmatmul.mubr.f32.gmra.mrb[0].mxu0 %v5931
      %v6043 = vpop.f32.mrb[0].mxu0
      %v6044 = vadd.f32 0.0, %v6043
      %v6045 = vpop.f32.mrb[0].mxu0
      %6046 = vmatprep.mubr.f32.mxu0 0.0
      %6047 = vmatmul.mubr.f32.gmra.mrb[0].mxu0 %v5934
      %v6048 = vpop.f32.mrb[0].mxu0
      %v6049 = vadd.f32 0.0, %v6048
      %v6050 = vpop.f32.mrb[0].mxu0
      %6051 = vmatprep.mubr.f32.mxu0 0.0
      %6052 = vmatmul.mubr.f32.gmra.mrb[0].mxu0 %v5937
      %v6053 = vpop.f32.mrb[0].mxu0
      %v6054 = vadd.f32 0.0, %v6053
      %v6055 = vpop.f32.mrb[0].mxu0
      %6056 = vmatprep.mubr.f32.mxu0 0.0
      %6057 = vmatmul.mubr.f32.gmra.mrb[0].mxu0 %v5940
      %v6058 = vpop.f32.mrb[0].mxu0
      %v6059 = vadd.f32 0.0, %v6058
      %v6060 = vpop.f32.mrb[0].mxu0
      %6061 = vmatprep.mubr.f32.mxu0 0.0
      %6062 = vmatmul.mubr.f32.gmra.mrb[0].mxu0 %v5943
      %v6063 = vpop.f32.mrb[0].mxu0
      %v6064 = vadd.f32 0.0, %v6063
      %v6065 = vpop.f32.mrb[0].mxu0
      %6066 = vmatprep.mubr.f32.mxu0 0.0
      %6067 = vmatmul.mubr.f32.gmra.mrb[0].mxu0 %v5946
      %v6068 = vpop.f32.mrb[0].mxu0
      %v6069 = vadd.f32 0.0, %v6068
      %v6070 = vpop.f32.mrb[0].mxu0
      %6071 = vmatprep.mubr.f32.mxu0 0.0
      %6072 = vmatmul.mubr.f32.gmra.mrb[0].mxu0 %v5949
      %v6073 = vpop.f32.mrb[0].mxu0
      %v6074 = vadd.f32 0.0, %v6073
      %v6075 = vpop.f32.mrb[0].mxu0
      %6076 = vmatprep.mubr.f32.mxu0 0.0
      %6077 = vmatmul.mubr.f32.gmra.mrb[0].mxu0 %v5952
      %v6078 = vpop.f32.mrb[0].mxu0
      %v6079 = vadd.f32 0.0, %v6078
      %v6080 = vpop.f32.mrb[0].mxu0
      %6081 = vmatprep.mubr.f32.mxu0 0.0
      %6082 = vmatmul.mubr.f32.gmra.mrb[0].mxu0 %v5955
      %v6083 = vpop.f32.mrb[0].mxu0
      %v6084 = vadd.f32 0.0, %v6083
      %v6085 = vpop.f32.mrb[0].mxu0
      %6086 = vmatprep.mubr.f32.mxu0 0.0
      %6087 = vmatmul.mubr.f32.gmra.mrb[0].mxu0 %v5958
      %v6088 = vpop.f32.mrb[0].mxu0
      %v6089 = vadd.f32 0.0, %v6088
      %v6090 = vpop.f32.mrb[0].mxu0
      %6091 = vmatprep.mubr.f32.mxu0 0.0
      %6092 = vmatmul.mubr.f32.gmra.mrb[0].mxu0 %v5961
      %v6093 = vpop.f32.mrb[0].mxu0
      %v6094 = vadd.f32 0.0, %v6093
      %v6095 = vpop.f32.mrb[0].mxu0
      %6096 = vmatprep.mubr.f32.mxu0 0.0
      %6097 = vmatmul.mubr.f32.gmra.mrb[0].mxu0 %v5964
      %v6098 = vpop.f32.mrb[0].mxu0
      %v6099 = vadd.f32 0.0, %v6098
      %v6100 = vpop.f32.mrb[0].mxu0
      %6101 = vmatprep.mubr.f32.mxu0 0.0
      %6102 = vmatmul.mubr.f32.gmra.mrb[0].mxu0 %v5967
      %v6103 = vpop.f32.mrb[0].mxu0
      %v6104 = vadd.f32 0.0, %v6103
      %v6105 = vpop.f32.mrb[0].mxu0
      %6106 = vmatprep.mubr.f32.mxu0 0.0
      %6107 = vmatmul.mubr.f32.gmra.mrb[0].mxu0 %v5970
      %v6108 = vpop.f32.mrb[0].mxu0
      %v6109 = vadd.f32 0.0, %v6108
      %v6110 = vpop.f32.mrb[0].mxu0
      %6111 = vdwg.mxu0
      %v6112 = vadd.f32 %v5808, %v6039
      %v6113 = vadd.f32 %v5813, %v6044
      %v6114 = vadd.f32 %v5818, %v6049
      %v6115 = vadd.f32 %v5823, %v6054
      %v6116 = vadd.f32 %v5828, %v6059
      %v6117 = vadd.f32 %v5833, %v6064
      %v6118 = vadd.f32 %v5838, %v6069
      %v6119 = vadd.f32 %v5843, %v6074
      %v6120 = vadd.f32 %v5848, %v6079
      %v6121 = vadd.f32 %v5853, %v6084
      %v6122 = vadd.f32 %v5858, %v6089
      %v6123 = vadd.f32 %v5863, %v6094
      %v6124 = vadd.f32 %v5868, %v6099
      %v6125 = vadd.f32 %v5873, %v6104
      %v6126 = vadd.f32 %v5878, %v6109
      %s6127 = scalar_lea.vmem %s13, 360
      %v6128 = vld [vmem:[%s6127] sm:$0xff]
      %v6129 = vld [vmem:[%s6127 + $0x8] sm:$0xff]
      %v6130 = vld [vmem:[%s6127 + $0x10] sm:$0xff]
      %v6131 = vld [vmem:[%s6127 + $0x18] sm:$0xff]
      %v6132 = vld [vmem:[%s6127 + $0x20] sm:$0xff]
      %v6133 = vld [vmem:[%s6127 + $0x28] sm:$0xff]
      %v6134 = vld [vmem:[%s6127 + $0x30] sm:$0xff]
      %v6135 = vld [vmem:[%s6127 + $0x38] sm:$0xff]
      %v6136 = vld [vmem:[%s6127 + $0x40] sm:$0xff]
      %v6137 = vld [vmem:[%s6127 + $0x48] sm:$0xff]
      %v6138 = vld [vmem:[%s6127 + $0x50] sm:$0xff]
      %v6139 = vld [vmem:[%s6127 + $0x58] sm:$0xff]
      %v6140 = vld [vmem:[%s6127 + $0x60] sm:$0xff]
      %v6141 = vld [vmem:[%s6127 + $0x68] sm:$0xff]
      %v6142 = vld [vmem:[%s6127 + $0x70] sm:$0xff]
      %6143 = vrot.lane.b32.xlu0 %v5429, 125
      %v6144 = vpop.permute.xlu0 %6143
      %6145 = vrot.lane.b32.xlu0 %v5430, 125
      %v6146 = vpop.permute.xlu0 %6145
      %6147 = vrot.lane.b32.xlu0 %v5431, 125
      %v6148 = vpop.permute.xlu0 %6147
      %6149 = vrot.lane.b32.xlu0 %v5432, 125
      %v6150 = vpop.permute.xlu0 %6149
      %6151 = vrot.lane.b32.xlu0 %v5433, 125
      %v6152 = vpop.permute.xlu0 %6151
      %6153 = vrot.lane.b32.xlu0 %v5434, 125
      %v6154 = vpop.permute.xlu0 %6153
      %6155 = vrot.lane.b32.xlu0 %v5435, 125
      %v6156 = vpop.permute.xlu0 %6155
      %6157 = vrot.lane.b32.xlu0 %v5436, 125
      %v6158 = vpop.permute.xlu0 %6157
      %6159 = vrot.lane.b32.xlu0 %v5437, 125
      %v6160 = vpop.permute.xlu0 %6159
      %6161 = vrot.lane.b32.xlu0 %v5438, 125
      %v6162 = vpop.permute.xlu0 %6161
      %v6174 = vsel %vm5510, %v6128, 0
      %v6177 = vsel %vm5510, %v6129, 0
      %v6180 = vsel %vm5510, %v6130, 0
      %v6183 = vsel %vm5510, %v6131, 0
      %v6186 = vsel %vm5510, %v6132, 0
      %v6189 = vsel %vm5510, %v6133, 0
      %v6192 = vsel %vm5510, %v6134, 0
      %v6195 = vsel %vm5510, %v6135, 0
      %v6198 = vsel %vm5510, %v6136, 0
      %v6201 = vsel %vm5510, %v6137, 0
      %v6204 = vsel %vm5510, %v6138, 0
      %v6207 = vsel %vm5510, %v6139, 0
      %v6210 = vsel %vm5510, %v6140, 0
      %v6213 = vsel %vm5510, %v6141, 0
      %v6216 = vsel %vm5510, %v6142, 0
      %6218 = vmatprep.subr.mxu0 0.0
      %6219 = vmatpush1.msra.mxu0 %v6144
      %6220 = vmatprep.subr.mxu0 0.0
      %6221 = vmatpush1.msra.mxu0 %v6146
      %6222 = vmatprep.subr.mxu0 0.0
      %6223 = vmatpush1.msra.mxu0 %v6148
      %6224 = vmatprep.subr.mxu0 0.0
      %6225 = vmatpush1.msra.mxu0 %v6150
      %6226 = vmatprep.subr.mxu0 0.0
      %6227 = vmatpush1.msra.mxu0 %v6152
      %6228 = vmatprep.subr.mxu0 0.0
      %6229 = vmatpush1.msra.mxu0 %v6154
      %6230 = vmatprep.subr.mxu0 0.0
      %6231 = vmatpush1.msra.mxu0 %v6156
      %6232 = vmatprep.subr.mxu0 0.0
      %6233 = vmatpush1.msra.mxu0 %v6158
      %6234 = vmatprep.subr.mxu0 0.0
      %6235 = vmatpush1.msra.mxu0 %v6160
      %6236 = vmatprep.subr.mxu0 0.0
      %6237 = vmatpush1.msra.mxu0 %v6162
      %6238 = vmatprep.subr.mxu0 0.0
      %6239 = vmatpush1.msra.mxu0 0.0
      %6240 = vmatprep.subr.mxu0 0.0
      %6241 = vmatpush1.msra.mxu0 0.0
      %6242 = vmatprep.subr.mxu0 0.0
      %6243 = vmatpush1.msra.mxu0 0.0
      %6244 = vmatprep.subr.mxu0 0.0
      %6245 = vmatpush1.msra.mxu0 0.0
      %6246 = vmatprep.subr.mxu0 0.0
      %6247 = vmatpush1.msra.mxu0 0.0
      %6248 = vmatprep.subr.mxu0 0.0
      %6249 = vmatpush1.msra.mxu0 0.0
      %6250 = vmatprep.subr.mxu0 0.0
      %6251 = vmatpush1.msra.mxu0 0.0
      %6252 = vmatprep.subr.mxu0 0.0
      %6253 = vmatpush1.msra.mxu0 0.0
      %6254 = vmatprep.subr.mxu0 0.0
      %6255 = vmatpush1.msra.mxu0 0.0
      %6256 = vmatprep.subr.mxu0 0.0
      %6257 = vmatpush1.msra.mxu0 0.0
      %6258 = vmatprep.subr.mxu0 0.0
      %6259 = vmatpush1.msra.mxu0 0.0
      %6260 = vmatprep.subr.mxu0 0.0
      %6261 = vmatpush1.msra.mxu0 0.0
      %6262 = vmatprep.subr.mxu0 0.0
      %6263 = vmatpush1.msra.mxu0 0.0
      %6264 = vmatprep.subr.mxu0 0.0
      %6265 = vmatpush1.msra.mxu0 0.0
      %6266 = vmatprep.subr.mxu0 0.0
      %6267 = vmatpush1.msra.mxu0 0.0
      %6268 = vmatprep.subr.mxu0 0.0
      %6269 = vmatpush1.msra.mxu0 0.0
      %6270 = vmatprep.subr.mxu0 0.0
      %6271 = vmatpush1.msra.mxu0 0.0
      %6272 = vmatprep.subr.mxu0 0.0
      %6273 = vmatpush1.msra.mxu0 0.0
      %6274 = vmatprep.subr.mxu0 0.0
      %6275 = vmatpush1.msra.mxu0 0.0
      %6276 = vmatprep.subr.mxu0 0.0
      %6277 = vmatpush1.msra.mxu0 0.0
      %6278 = vmatprep.subr.mxu0 0.0
      %6279 = vmatpush1.msra.mxu0 0.0
      %6280 = vmatprep.subr.mxu0 0.0
      %6281 = vmatpush1.msra.mxu0 0.0
      %6282 = vmatprep.mubr.f32.mxu0 0.0
      %6283 = vmatmul.mubr.f32.gmra.mrb[0].mxu0 %v6174
      %v6284 = vpop.f32.mrb[0].mxu0
      %v6285 = vadd.f32 0.0, %v6284
      %v6286 = vpop.f32.mrb[0].mxu0
      %6287 = vmatprep.mubr.f32.mxu0 0.0
      %6288 = vmatmul.mubr.f32.gmra.mrb[0].mxu0 %v6177
      %v6289 = vpop.f32.mrb[0].mxu0
      %v6290 = vadd.f32 0.0, %v6289
      %v6291 = vpop.f32.mrb[0].mxu0
      %6292 = vmatprep.mubr.f32.mxu0 0.0
      %6293 = vmatmul.mubr.f32.gmra.mrb[0].mxu0 %v6180
      %v6294 = vpop.f32.mrb[0].mxu0
      %v6295 = vadd.f32 0.0, %v6294
      %v6296 = vpop.f32.mrb[0].mxu0
      %6297 = vmatprep.mubr.f32.mxu0 0.0
      %6298 = vmatmul.mubr.f32.gmra.mrb[0].mxu0 %v6183
      %v6299 = vpop.f32.mrb[0].mxu0
      %v6300 = vadd.f32 0.0, %v6299
      %v6301 = vpop.f32.mrb[0].mxu0
      %6302 = vmatprep.mubr.f32.mxu0 0.0
      %6303 = vmatmul.mubr.f32.gmra.mrb[0].mxu0 %v6186
      %v6304 = vpop.f32.mrb[0].mxu0
      %v6305 = vadd.f32 0.0, %v6304
      %v6306 = vpop.f32.mrb[0].mxu0
      %6307 = vmatprep.mubr.f32.mxu0 0.0
      %6308 = vmatmul.mubr.f32.gmra.mrb[0].mxu0 %v6189
      %v6309 = vpop.f32.mrb[0].mxu0
      %v6310 = vadd.f32 0.0, %v6309
      %v6311 = vpop.f32.mrb[0].mxu0
      %6312 = vmatprep.mubr.f32.mxu0 0.0
      %6313 = vmatmul.mubr.f32.gmra.mrb[0].mxu0 %v6192
      %v6314 = vpop.f32.mrb[0].mxu0
      %v6315 = vadd.f32 0.0, %v6314
      %v6316 = vpop.f32.mrb[0].mxu0
      %6317 = vmatprep.mubr.f32.mxu0 0.0
      %6318 = vmatmul.mubr.f32.gmra.mrb[0].mxu0 %v6195
      %v6319 = vpop.f32.mrb[0].mxu0
      %v6320 = vadd.f32 0.0, %v6319
      %v6321 = vpop.f32.mrb[0].mxu0
      %6322 = vmatprep.mubr.f32.mxu0 0.0
      %6323 = vmatmul.mubr.f32.gmra.mrb[0].mxu0 %v6198
      %v6324 = vpop.f32.mrb[0].mxu0
      %v6325 = vadd.f32 0.0, %v6324
      %v6326 = vpop.f32.mrb[0].mxu0
      %6327 = vmatprep.mubr.f32.mxu0 0.0
      %6328 = vmatmul.mubr.f32.gmra.mrb[0].mxu0 %v6201
      %v6329 = vpop.f32.mrb[0].mxu0
      %v6330 = vadd.f32 0.0, %v6329
      %v6331 = vpop.f32.mrb[0].mxu0
      %6332 = vmatprep.mubr.f32.mxu0 0.0
      %6333 = vmatmul.mubr.f32.gmra.mrb[0].mxu0 %v6204
      %v6334 = vpop.f32.mrb[0].mxu0
      %v6335 = vadd.f32 0.0, %v6334
      %v6336 = vpop.f32.mrb[0].mxu0
      %6337 = vmatprep.mubr.f32.mxu0 0.0
      %6338 = vmatmul.mubr.f32.gmra.mrb[0].mxu0 %v6207
      %v6339 = vpop.f32.mrb[0].mxu0
      %v6340 = vadd.f32 0.0, %v6339
      %v6341 = vpop.f32.mrb[0].mxu0
      %6342 = vmatprep.mubr.f32.mxu0 0.0
      %6343 = vmatmul.mubr.f32.gmra.mrb[0].mxu0 %v6210
      %v6344 = vpop.f32.mrb[0].mxu0
      %v6345 = vadd.f32 0.0, %v6344
      %v6346 = vpop.f32.mrb[0].mxu0
      %6347 = vmatprep.mubr.f32.mxu0 0.0
      %6348 = vmatmul.mubr.f32.gmra.mrb[0].mxu0 %v6213
      %v6349 = vpop.f32.mrb[0].mxu0
      %v6350 = vadd.f32 0.0, %v6349
      %v6351 = vpop.f32.mrb[0].mxu0
      %6352 = vmatprep.mubr.f32.mxu0 0.0
      %6353 = vmatmul.mubr.f32.gmra.mrb[0].mxu0 %v6216
      %v6354 = vpop.f32.mrb[0].mxu0
      %v6355 = vadd.f32 0.0, %v6354
      %v6356 = vpop.f32.mrb[0].mxu0
      %6357 = vdwg.mxu0
      %v6358 = vadd.f32 %v6112, %v6285
      %v6359 = vadd.f32 %v6113, %v6290
      %v6360 = vadd.f32 %v6114, %v6295
      %v6361 = vadd.f32 %v6115, %v6300
      %v6362 = vadd.f32 %v6116, %v6305
      %v6363 = vadd.f32 %v6117, %v6310
      %v6364 = vadd.f32 %v6118, %v6315
      %v6365 = vadd.f32 %v6119, %v6320
      %v6366 = vadd.f32 %v6120, %v6325
      %v6367 = vadd.f32 %v6121, %v6330
      %v6368 = vadd.f32 %v6122, %v6335
      %v6369 = vadd.f32 %v6123, %v6340
      %v6370 = vadd.f32 %v6124, %v6345
      %v6371 = vadd.f32 %v6125, %v6350
      %v6372 = vadd.f32 %v6126, %v6355
      %s6373 = scalar_lea.vmem %s13, 480
      %v6374 = vld [vmem:[%s6373] sm:$0xff]
      %v6375 = vld [vmem:[%s6373 + $0x8] sm:$0xff]
      %v6376 = vld [vmem:[%s6373 + $0x10] sm:$0xff]
      %v6377 = vld [vmem:[%s6373 + $0x18] sm:$0xff]
      %v6378 = vld [vmem:[%s6373 + $0x20] sm:$0xff]
      %v6379 = vld [vmem:[%s6373 + $0x28] sm:$0xff]
      %v6380 = vld [vmem:[%s6373 + $0x30] sm:$0xff]
      %v6381 = vld [vmem:[%s6373 + $0x38] sm:$0xff]
      %v6382 = vld [vmem:[%s6373 + $0x40] sm:$0xff]
      %v6383 = vld [vmem:[%s6373 + $0x48] sm:$0xff]
      %v6384 = vld [vmem:[%s6373 + $0x50] sm:$0xff]
      %v6385 = vld [vmem:[%s6373 + $0x58] sm:$0xff]
      %v6386 = vld [vmem:[%s6373 + $0x60] sm:$0xff]
      %v6387 = vld [vmem:[%s6373 + $0x68] sm:$0xff]
      %v6388 = vld [vmem:[%s6373 + $0x70] sm:$0xff]
      %6389 = vrot.lane.b32.xlu0 %v5429, 124
      %v6390 = vpop.permute.xlu0 %6389
      %6391 = vrot.lane.b32.xlu0 %v5430, 124
      %v6392 = vpop.permute.xlu0 %6391
      %6393 = vrot.lane.b32.xlu0 %v5431, 124
      %v6394 = vpop.permute.xlu0 %6393
      %6395 = vrot.lane.b32.xlu0 %v5432, 124
      %v6396 = vpop.permute.xlu0 %6395
      %6397 = vrot.lane.b32.xlu0 %v5433, 124
      %v6398 = vpop.permute.xlu0 %6397
      %6399 = vrot.lane.b32.xlu0 %v5434, 124
      %v6400 = vpop.permute.xlu0 %6399
      %6401 = vrot.lane.b32.xlu0 %v5435, 124
      %v6402 = vpop.permute.xlu0 %6401
      %6403 = vrot.lane.b32.xlu0 %v5436, 124
      %v6404 = vpop.permute.xlu0 %6403
      %6405 = vrot.lane.b32.xlu0 %v5437, 124
      %v6406 = vpop.permute.xlu0 %6405
      %6407 = vrot.lane.b32.xlu0 %v5438, 124
      %v6408 = vpop.permute.xlu0 %6407
      %v6420 = vsel %vm5510, %v6374, 0
      %v6423 = vsel %vm5510, %v6375, 0
      %v6426 = vsel %vm5510, %v6376, 0
      %v6429 = vsel %vm5510, %v6377, 0
      %v6432 = vsel %vm5510, %v6378, 0
      %v6435 = vsel %vm5510, %v6379, 0
      %v6438 = vsel %vm5510, %v6380, 0
      %v6441 = vsel %vm5510, %v6381, 0
      %v6444 = vsel %vm5510, %v6382, 0
      %v6447 = vsel %vm5510, %v6383, 0
      %v6450 = vsel %vm5510, %v6384, 0
      %v6453 = vsel %vm5510, %v6385, 0
      %v6456 = vsel %vm5510, %v6386, 0
      %v6459 = vsel %vm5510, %v6387, 0
      %v6462 = vsel %vm5510, %v6388, 0
      %6464 = vmatprep.subr.mxu0 0.0
      %6465 = vmatpush1.msra.mxu0 %v6390
      %6466 = vmatprep.subr.mxu0 0.0
      %6467 = vmatpush1.msra.mxu0 %v6392
      %6468 = vmatprep.subr.mxu0 0.0
      %6469 = vmatpush1.msra.mxu0 %v6394
      %6470 = vmatprep.subr.mxu0 0.0
      %6471 = vmatpush1.msra.mxu0 %v6396
      %6472 = vmatprep.subr.mxu0 0.0
      %6473 = vmatpush1.msra.mxu0 %v6398
      %6474 = vmatprep.subr.mxu0 0.0
      %6475 = vmatpush1.msra.mxu0 %v6400
      %6476 = vmatprep.subr.mxu0 0.0
      %6477 = vmatpush1.msra.mxu0 %v6402
      %6478 = vmatprep.subr.mxu0 0.0
      %6479 = vmatpush1.msra.mxu0 %v6404
      %6480 = vmatprep.subr.mxu0 0.0
      %6481 = vmatpush1.msra.mxu0 %v6406
      %6482 = vmatprep.subr.mxu0 0.0
      %6483 = vmatpush1.msra.mxu0 %v6408
      %6484 = vmatprep.subr.mxu0 0.0
      %6485 = vmatpush1.msra.mxu0 0.0
      %6486 = vmatprep.subr.mxu0 0.0
      %6487 = vmatpush1.msra.mxu0 0.0
      %6488 = vmatprep.subr.mxu0 0.0
      %6489 = vmatpush1.msra.mxu0 0.0
      %6490 = vmatprep.subr.mxu0 0.0
      %6491 = vmatpush1.msra.mxu0 0.0
      %6492 = vmatprep.subr.mxu0 0.0
      %6493 = vmatpush1.msra.mxu0 0.0
      %6494 = vmatprep.subr.mxu0 0.0
      %6495 = vmatpush1.msra.mxu0 0.0
      %6496 = vmatprep.subr.mxu0 0.0
      %6497 = vmatpush1.msra.mxu0 0.0
      %6498 = vmatprep.subr.mxu0 0.0
      %6499 = vmatpush1.msra.mxu0 0.0
      %6500 = vmatprep.subr.mxu0 0.0
      %6501 = vmatpush1.msra.mxu0 0.0
      %6502 = vmatprep.subr.mxu0 0.0
      %6503 = vmatpush1.msra.mxu0 0.0
      %6504 = vmatprep.subr.mxu0 0.0
      %6505 = vmatpush1.msra.mxu0 0.0
      %6506 = vmatprep.subr.mxu0 0.0
      %6507 = vmatpush1.msra.mxu0 0.0
      %6508 = vmatprep.subr.mxu0 0.0
      %6509 = vmatpush1.msra.mxu0 0.0
      %6510 = vmatprep.subr.mxu0 0.0
      %6511 = vmatpush1.msra.mxu0 0.0
      %6512 = vmatprep.subr.mxu0 0.0
      %6513 = vmatpush1.msra.mxu0 0.0
      %6514 = vmatprep.subr.mxu0 0.0
      %6515 = vmatpush1.msra.mxu0 0.0
      %6516 = vmatprep.subr.mxu0 0.0
      %6517 = vmatpush1.msra.mxu0 0.0
      %6518 = vmatprep.subr.mxu0 0.0
      %6519 = vmatpush1.msra.mxu0 0.0
      %6520 = vmatprep.subr.mxu0 0.0
      %6521 = vmatpush1.msra.mxu0 0.0
      %6522 = vmatprep.subr.mxu0 0.0
      %6523 = vmatpush1.msra.mxu0 0.0
      %6524 = vmatprep.subr.mxu0 0.0
      %6525 = vmatpush1.msra.mxu0 0.0
      %6526 = vmatprep.subr.mxu0 0.0
      %6527 = vmatpush1.msra.mxu0 0.0
      %6528 = vmatprep.mubr.f32.mxu0 0.0
      %6529 = vmatmul.mubr.f32.gmra.mrb[0].mxu0 %v6420
      %v6530 = vpop.f32.mrb[0].mxu0
      %v6531 = vadd.f32 0.0, %v6530
      %v6532 = vpop.f32.mrb[0].mxu0
      %6533 = vmatprep.mubr.f32.mxu0 0.0
      %6534 = vmatmul.mubr.f32.gmra.mrb[0].mxu0 %v6423
      %v6535 = vpop.f32.mrb[0].mxu0
      %v6536 = vadd.f32 0.0, %v6535
      %v6537 = vpop.f32.mrb[0].mxu0
      %6538 = vmatprep.mubr.f32.mxu0 0.0
      %6539 = vmatmul.mubr.f32.gmra.mrb[0].mxu0 %v6426
      %v6540 = vpop.f32.mrb[0].mxu0
      %v6541 = vadd.f32 0.0, %v6540
      %v6542 = vpop.f32.mrb[0].mxu0
      %6543 = vmatprep.mubr.f32.mxu0 0.0
      %6544 = vmatmul.mubr.f32.gmra.mrb[0].mxu0 %v6429
      %v6545 = vpop.f32.mrb[0].mxu0
      %v6546 = vadd.f32 0.0, %v6545
      %v6547 = vpop.f32.mrb[0].mxu0
      %6548 = vmatprep.mubr.f32.mxu0 0.0
      %6549 = vmatmul.mubr.f32.gmra.mrb[0].mxu0 %v6432
      %v6550 = vpop.f32.mrb[0].mxu0
      %v6551 = vadd.f32 0.0, %v6550
      %v6552 = vpop.f32.mrb[0].mxu0
      %6553 = vmatprep.mubr.f32.mxu0 0.0
      %6554 = vmatmul.mubr.f32.gmra.mrb[0].mxu0 %v6435
      %v6555 = vpop.f32.mrb[0].mxu0
      %v6556 = vadd.f32 0.0, %v6555
      %v6557 = vpop.f32.mrb[0].mxu0
      %6558 = vmatprep.mubr.f32.mxu0 0.0
      %6559 = vmatmul.mubr.f32.gmra.mrb[0].mxu0 %v6438
      %v6560 = vpop.f32.mrb[0].mxu0
      %v6561 = vadd.f32 0.0, %v6560
      %v6562 = vpop.f32.mrb[0].mxu0
      %6563 = vmatprep.mubr.f32.mxu0 0.0
      %6564 = vmatmul.mubr.f32.gmra.mrb[0].mxu0 %v6441
      %v6565 = vpop.f32.mrb[0].mxu0
      %v6566 = vadd.f32 0.0, %v6565
      %v6567 = vpop.f32.mrb[0].mxu0
      %6568 = vmatprep.mubr.f32.mxu0 0.0
      %6569 = vmatmul.mubr.f32.gmra.mrb[0].mxu0 %v6444
      %v6570 = vpop.f32.mrb[0].mxu0
      %v6571 = vadd.f32 0.0, %v6570
      %v6572 = vpop.f32.mrb[0].mxu0
      %6573 = vmatprep.mubr.f32.mxu0 0.0
      %6574 = vmatmul.mubr.f32.gmra.mrb[0].mxu0 %v6447
      %v6575 = vpop.f32.mrb[0].mxu0
      %v6576 = vadd.f32 0.0, %v6575
      %v6577 = vpop.f32.mrb[0].mxu0
      %6578 = vmatprep.mubr.f32.mxu0 0.0
      %6579 = vmatmul.mubr.f32.gmra.mrb[0].mxu0 %v6450
      %v6580 = vpop.f32.mrb[0].mxu0
      %v6581 = vadd.f32 0.0, %v6580
      %v6582 = vpop.f32.mrb[0].mxu0
      %6583 = vmatprep.mubr.f32.mxu0 0.0
      %6584 = vmatmul.mubr.f32.gmra.mrb[0].mxu0 %v6453
      %v6585 = vpop.f32.mrb[0].mxu0
      %v6586 = vadd.f32 0.0, %v6585
      %v6587 = vpop.f32.mrb[0].mxu0
      %6588 = vmatprep.mubr.f32.mxu0 0.0
      %6589 = vmatmul.mubr.f32.gmra.mrb[0].mxu0 %v6456
      %v6590 = vpop.f32.mrb[0].mxu0
      %v6591 = vadd.f32 0.0, %v6590
      %v6592 = vpop.f32.mrb[0].mxu0
      %6593 = vmatprep.mubr.f32.mxu0 0.0
      %6594 = vmatmul.mubr.f32.gmra.mrb[0].mxu0 %v6459
      %v6595 = vpop.f32.mrb[0].mxu0
      %v6596 = vadd.f32 0.0, %v6595
      %v6597 = vpop.f32.mrb[0].mxu0
      %6598 = vmatprep.mubr.f32.mxu0 0.0
      %6599 = vmatmul.mubr.f32.gmra.mrb[0].mxu0 %v6462
      %v6600 = vpop.f32.mrb[0].mxu0
      %v6601 = vadd.f32 0.0, %v6600
      %v6602 = vpop.f32.mrb[0].mxu0
      %6603 = vdwg.mxu0
      %v6604 = vadd.f32 %v6358, %v6531
      %v6605 = vadd.f32 %v6359, %v6536
      %v6606 = vadd.f32 %v6360, %v6541
      %v6607 = vadd.f32 %v6361, %v6546
      %v6608 = vadd.f32 %v6362, %v6551
      %v6609 = vadd.f32 %v6363, %v6556
      %v6610 = vadd.f32 %v6364, %v6561
      %v6611 = vadd.f32 %v6365, %v6566
      %v6612 = vadd.f32 %v6366, %v6571
      %v6613 = vadd.f32 %v6367, %v6576
      %v6614 = vadd.f32 %v6368, %v6581
      %v6615 = vadd.f32 %v6369, %v6586
      %v6616 = vadd.f32 %v6370, %v6591
      %v6617 = vadd.f32 %v6371, %v6596
      %v6618 = vadd.f32 %v6372, %v6601
      %v6619 = vld [vmem:[%s14] sm:$0xff]
      %v6620 = vld [vmem:[%s14 + $0x8] sm:$0xff]
      %v6621 = vld [vmem:[%s14 + $0x10] sm:$0xff]
      %v6622 = vld [vmem:[%s14 + $0x18] sm:$0xff]
      %v6623 = vld [vmem:[%s14 + $0x20] sm:$0xff]
      %v6624 = vld [vmem:[%s14 + $0x28] sm:$0xff]
      %v6625 = vld [vmem:[%s14 + $0x30] sm:$0xff]
      %v6626 = vld [vmem:[%s14 + $0x38] sm:$0xff]
      %v6627 = vld [vmem:[%s14 + $0x40] sm:$0xff]
      %v6628 = vld [vmem:[%s14 + $0x48] sm:$0xff]
      %v6629 = vld [vmem:[%s14 + $0x50] sm:$0xff]
      %v6630 = vld [vmem:[%s14 + $0x58] sm:$0xff]
      %v6631 = vld [vmem:[%s14 + $0x60] sm:$0xff]
      %v6632 = vld [vmem:[%s14 + $0x68] sm:$0xff]
      %v6633 = vld [vmem:[%s14 + $0x70] sm:$0xff]
      %v6634 = vadd.f32 %v6604, %v6619
      %v6635 = vadd.f32 %v6605, %v6620
      %v6636 = vadd.f32 %v6606, %v6621
      %v6637 = vadd.f32 %v6607, %v6622
      %v6638 = vadd.f32 %v6608, %v6623
      %v6639 = vadd.f32 %v6609, %v6624
      %v6640 = vadd.f32 %v6610, %v6625
      %v6641 = vadd.f32 %v6611, %v6626
      %v6642 = vadd.f32 %v6612, %v6627
      %v6643 = vadd.f32 %v6613, %v6628
      %v6644 = vadd.f32 %v6614, %v6629
      %v6645 = vadd.f32 %v6615, %v6630
      %v6646 = vadd.f32 %v6616, %v6631
      %v6647 = vadd.f32 %v6617, %v6632
      %v6648 = vadd.f32 %v6618, %v6633
      %v6649 = vmax.f32 %v6634, 0.0
      %v6650 = vmax.f32 %v6635, 0.0
      %v6651 = vmax.f32 %v6636, 0.0
      %v6652 = vmax.f32 %v6637, 0.0
      %v6653 = vmax.f32 %v6638, 0.0
      %v6654 = vmax.f32 %v6639, 0.0
      %v6655 = vmax.f32 %v6640, 0.0
      %v6656 = vmax.f32 %v6641, 0.0
      %v6657 = vmax.f32 %v6642, 0.0
      %v6658 = vmax.f32 %v6643, 0.0
      %v6659 = vmax.f32 %v6644, 0.0
      %v6660 = vmax.f32 %v6645, 0.0
      %v6661 = vmax.f32 %v6646, 0.0
      %v6662 = vmax.f32 %v6647, 0.0
      %v6663 = vmax.f32 %v6648, 0.0
      %v6664 = vld [vmem:[%s15] sm:$0xff]
      %v6665 = vld [vmem:[%s15 + $0x8] sm:$0xff]
      %v6666 = vld [vmem:[%s15 + $0x10] sm:$0xff]
      %v6667 = vld [vmem:[%s15 + $0x18] sm:$0xff]
      %v6668 = vld [vmem:[%s15 + $0x20] sm:$0xff]
      %v6669 = vld [vmem:[%s15 + $0x28] sm:$0xff]
      %v6670 = vld [vmem:[%s15 + $0x30] sm:$0xff]
      %v6671 = vld [vmem:[%s15 + $0x38] sm:$0xff]
      %v6672 = vld [vmem:[%s15 + $0x40] sm:$0xff]
      %v6673 = vld [vmem:[%s15 + $0x48] sm:$0xff]
      %v6674 = vld [vmem:[%s15 + $0x50] sm:$0xf]
      %v6675 = vld [vmem:[%s16] sm:$0xff]
      %v6676 = vld [vmem:[%s16 + $0x8] sm:$0xff]
      %v6677 = vld [vmem:[%s16 + $0x10] sm:$0xff]
      %v6678 = vld [vmem:[%s16 + $0x18] sm:$0xff]
      %v6679 = vld [vmem:[%s16 + $0x20] sm:$0xff]
      %v6680 = vld [vmem:[%s16 + $0x28] sm:$0xff]
      %v6681 = vld [vmem:[%s16 + $0x30] sm:$0xff]
      %v6682 = vld [vmem:[%s16 + $0x38] sm:$0xff]
      %v6683 = vld [vmem:[%s16 + $0x40] sm:$0xff]
      %v6684 = vld [vmem:[%s16 + $0x48] sm:$0xff]
      %v6685 = vld [vmem:[%s16 + $0x50] sm:$0xf]
      %vm6686 = vcmask 982016
      %v6688 = vsel %vm6686, %v6664, 0
      %v6691 = vsel %vm6686, %v6665, 0
      %v6694 = vsel %vm6686, %v6666, 0
      %v6697 = vsel %vm6686, %v6667, 0
      %v6700 = vsel %vm6686, %v6668, 0
      %v6703 = vsel %vm6686, %v6669, 0
      %v6706 = vsel %vm6686, %v6670, 0
      %v6709 = vsel %vm6686, %v6671, 0
      %v6712 = vsel %vm6686, %v6672, 0
      %v6715 = vsel %vm6686, %v6673, 0
      %v6718 = vsel %vm6686, %v6674, 0
      %6720 = vmatprep.subr.mxu0 0.0
      %6721 = vmatpush1.msra.mxu0 %v6649
      %6722 = vmatprep.subr.mxu0 0.0
      %6723 = vmatpush1.msra.mxu0 %v6650
      %6724 = vmatprep.subr.mxu0 0.0
      %6725 = vmatpush1.msra.mxu0 %v6651
      %6726 = vmatprep.subr.mxu0 0.0
      %6727 = vmatpush1.msra.mxu0 %v6652
      %6728 = vmatprep.subr.mxu0 0.0
      %6729 = vmatpush1.msra.mxu0 %v6653
      %6730 = vmatprep.subr.mxu0 0.0
      %6731 = vmatpush1.msra.mxu0 %v6654
      %6732 = vmatprep.subr.mxu0 0.0
      %6733 = vmatpush1.msra.mxu0 %v6655
      %6734 = vmatprep.subr.mxu0 0.0
      %6735 = vmatpush1.msra.mxu0 %v6656
      %6736 = vmatprep.subr.mxu0 0.0
      %6737 = vmatpush1.msra.mxu0 %v6657
      %6738 = vmatprep.subr.mxu0 0.0
      %6739 = vmatpush1.msra.mxu0 %v6658
      %6740 = vmatprep.subr.mxu0 0.0
      %6741 = vmatpush1.msra.mxu0 %v6659
      %6742 = vmatprep.subr.mxu0 0.0
      %6743 = vmatpush1.msra.mxu0 %v6660
      %6744 = vmatprep.subr.mxu0 0.0
      %6745 = vmatpush1.msra.mxu0 %v6661
      %6746 = vmatprep.subr.mxu0 0.0
      %6747 = vmatpush1.msra.mxu0 %v6662
      %6748 = vmatprep.subr.mxu0 0.0
      %6749 = vmatpush1.msra.mxu0 %v6663
      %6750 = vmatprep.subr.mxu0 0.0
      %6751 = vmatpush1.msra.mxu0 0.0
      %6752 = vmatprep.subr.mxu0 0.0
      %6753 = vmatpush1.msra.mxu0 0.0
      %6754 = vmatprep.subr.mxu0 0.0
      %6755 = vmatpush1.msra.mxu0 0.0
      %6756 = vmatprep.subr.mxu0 0.0
      %6757 = vmatpush1.msra.mxu0 0.0
      %6758 = vmatprep.subr.mxu0 0.0
      %6759 = vmatpush1.msra.mxu0 0.0
      %6760 = vmatprep.subr.mxu0 0.0
      %6761 = vmatpush1.msra.mxu0 0.0
      %6762 = vmatprep.subr.mxu0 0.0
      %6763 = vmatpush1.msra.mxu0 0.0
      %6764 = vmatprep.subr.mxu0 0.0
      %6765 = vmatpush1.msra.mxu0 0.0
      %6766 = vmatprep.subr.mxu0 0.0
      %6767 = vmatpush1.msra.mxu0 0.0
      %6768 = vmatprep.subr.mxu0 0.0
      %6769 = vmatpush1.msra.mxu0 0.0
      %6770 = vmatprep.subr.mxu0 0.0
      %6771 = vmatpush1.msra.mxu0 0.0
      %6772 = vmatprep.subr.mxu0 0.0
      %6773 = vmatpush1.msra.mxu0 0.0
      %6774 = vmatprep.subr.mxu0 0.0
      %6775 = vmatpush1.msra.mxu0 0.0
      %6776 = vmatprep.subr.mxu0 0.0
      %6777 = vmatpush1.msra.mxu0 0.0
      %6778 = vmatprep.subr.mxu0 0.0
      %6779 = vmatpush1.msra.mxu0 0.0
      %6780 = vmatprep.subr.mxu0 0.0
      %6781 = vmatpush1.msra.mxu0 0.0
      %6782 = vmatprep.subr.mxu0 0.0
      %6783 = vmatpush1.msra.mxu0 0.0
      %6784 = vmatprep.mubr.f32.mxu0 0.0
      %6785 = vmatmul.mubr.f32.gmra.mrb[0].mxu0 %v6688
      %v6786 = vpop.f32.mrb[0].mxu0
      %v6787 = vadd.f32 %v6675, %v6786
      %v6788 = vpop.f32.mrb[0].mxu0
      %6789 = vmatprep.mubr.f32.mxu0 0.0
      %6790 = vmatmul.mubr.f32.gmra.mrb[0].mxu0 %v6691
      %v6791 = vpop.f32.mrb[0].mxu0
      %v6792 = vadd.f32 %v6676, %v6791
      %v6793 = vpop.f32.mrb[0].mxu0
      %6794 = vmatprep.mubr.f32.mxu0 0.0
      %6795 = vmatmul.mubr.f32.gmra.mrb[0].mxu0 %v6694
      %v6796 = vpop.f32.mrb[0].mxu0
      %v6797 = vadd.f32 %v6677, %v6796
      %v6798 = vpop.f32.mrb[0].mxu0
      %6799 = vmatprep.mubr.f32.mxu0 0.0
      %6800 = vmatmul.mubr.f32.gmra.mrb[0].mxu0 %v6697
      %v6801 = vpop.f32.mrb[0].mxu0
      %v6802 = vadd.f32 %v6678, %v6801
      %v6803 = vpop.f32.mrb[0].mxu0
      %6804 = vmatprep.mubr.f32.mxu0 0.0
      %6805 = vmatmul.mubr.f32.gmra.mrb[0].mxu0 %v6700
      %v6806 = vpop.f32.mrb[0].mxu0
      %v6807 = vadd.f32 %v6679, %v6806
      %v6808 = vpop.f32.mrb[0].mxu0
      %6809 = vmatprep.mubr.f32.mxu0 0.0
      %6810 = vmatmul.mubr.f32.gmra.mrb[0].mxu0 %v6703
      %v6811 = vpop.f32.mrb[0].mxu0
      %v6812 = vadd.f32 %v6680, %v6811
      %v6813 = vpop.f32.mrb[0].mxu0
      %6814 = vmatprep.mubr.f32.mxu0 0.0
      %6815 = vmatmul.mubr.f32.gmra.mrb[0].mxu0 %v6706
      %v6816 = vpop.f32.mrb[0].mxu0
      %v6817 = vadd.f32 %v6681, %v6816
      %v6818 = vpop.f32.mrb[0].mxu0
      %6819 = vmatprep.mubr.f32.mxu0 0.0
      %6820 = vmatmul.mubr.f32.gmra.mrb[0].mxu0 %v6709
      %v6821 = vpop.f32.mrb[0].mxu0
      %v6822 = vadd.f32 %v6682, %v6821
      %v6823 = vpop.f32.mrb[0].mxu0
      %6824 = vmatprep.mubr.f32.mxu0 0.0
      %6825 = vmatmul.mubr.f32.gmra.mrb[0].mxu0 %v6712
      %v6826 = vpop.f32.mrb[0].mxu0
      %v6827 = vadd.f32 %v6683, %v6826
      %v6828 = vpop.f32.mrb[0].mxu0
      %6829 = vmatprep.mubr.f32.mxu0 0.0
      %6830 = vmatmul.mubr.f32.gmra.mrb[0].mxu0 %v6715
      %v6831 = vpop.f32.mrb[0].mxu0
      %v6832 = vadd.f32 %v6684, %v6831
      %v6833 = vpop.f32.mrb[0].mxu0
      %6834 = vmatprep.mubr.f32.mxu0 0.0
      %6835 = vmatmul.mubr.f32.gmra.mrb[0].mxu0 %v6718
      %v6836 = vpop.f32.mrb[0].mxu0
      %v6837 = vadd.f32 %v6685, %v6836
      %v6838 = vpop.f32.mrb[0].mxu0
      %6839 = vdwg.mxu0
      %v6840 = vmax.f32 %v6787, 0.0
      %v6841 = vmax.f32 %v6792, 0.0
      %v6842 = vmax.f32 %v6797, 0.0
      %v6843 = vmax.f32 %v6802, 0.0
      %v6844 = vmax.f32 %v6807, 0.0
      %v6845 = vmax.f32 %v6812, 0.0
      %v6846 = vmax.f32 %v6817, 0.0
      %v6847 = vmax.f32 %v6822, 0.0
      %v6848 = vmax.f32 %v6827, 0.0
      %v6849 = vmax.f32 %v6832, 0.0
      %v6850 = vmax.f32 %v6837, 0.0
      %v6851 = vld [vmem:[%s17] sm:$0xf]
      %v6852 = vld [vmem:[%s18] sm:$0xf]
      %v6854 = vsel %vm3161, %v6851, 0
      %v6857 = vsel %vm2343, %v6850, 0
      %6859 = vmatprep.subr.mxu0 0.0
      %6860 = vmatpush1.msra.mxu0 %v6840
      %6861 = vmatprep.subr.mxu0 0.0
      %6862 = vmatpush1.msra.mxu0 %v6841
      %6863 = vmatprep.subr.mxu0 0.0
      %6864 = vmatpush1.msra.mxu0 %v6842
      %6865 = vmatprep.subr.mxu0 0.0
      %6866 = vmatpush1.msra.mxu0 %v6843
      %6867 = vmatprep.subr.mxu0 0.0
      %6868 = vmatpush1.msra.mxu0 %v6844
      %6869 = vmatprep.subr.mxu0 0.0
      %6870 = vmatpush1.msra.mxu0 %v6845
      %6871 = vmatprep.subr.mxu0 0.0
      %6872 = vmatpush1.msra.mxu0 %v6846
      %6873 = vmatprep.subr.mxu0 0.0
      %6874 = vmatpush1.msra.mxu0 %v6847
      %6875 = vmatprep.subr.mxu0 0.0
      %6876 = vmatpush1.msra.mxu0 %v6848
      %6877 = vmatprep.subr.mxu0 0.0
      %6878 = vmatpush1.msra.mxu0 %v6849
      %6879 = vmatprep.subr.mxu0 0.0
      %6880 = vmatpush1.msra.mxu0 %v6857
      %6881 = vmatprep.subr.mxu0 0.0
      %6882 = vmatpush1.msra.mxu0 0.0
      %6883 = vmatprep.subr.mxu0 0.0
      %6884 = vmatpush1.msra.mxu0 0.0
      %6885 = vmatprep.subr.mxu0 0.0
      %6886 = vmatpush1.msra.mxu0 0.0
      %6887 = vmatprep.subr.mxu0 0.0
      %6888 = vmatpush1.msra.mxu0 0.0
      %6889 = vmatprep.subr.mxu0 0.0
      %6890 = vmatpush1.msra.mxu0 0.0
      %6891 = vmatprep.subr.mxu0 0.0
      %6892 = vmatpush1.msra.mxu0 0.0
      %6893 = vmatprep.subr.mxu0 0.0
      %6894 = vmatpush1.msra.mxu0 0.0
      %6895 = vmatprep.subr.mxu0 0.0
      %6896 = vmatpush1.msra.mxu0 0.0
      %6897 = vmatprep.subr.mxu0 0.0
      %6898 = vmatpush1.msra.mxu0 0.0
      %6899 = vmatprep.subr.mxu0 0.0
      %6900 = vmatpush1.msra.mxu0 0.0
      %6901 = vmatprep.subr.mxu0 0.0
      %6902 = vmatpush1.msra.mxu0 0.0
      %6903 = vmatprep.subr.mxu0 0.0
      %6904 = vmatpush1.msra.mxu0 0.0
      %6905 = vmatprep.subr.mxu0 0.0
      %6906 = vmatpush1.msra.mxu0 0.0
      %6907 = vmatprep.subr.mxu0 0.0
      %6908 = vmatpush1.msra.mxu0 0.0
      %6909 = vmatprep.subr.mxu0 0.0
      %6910 = vmatpush1.msra.mxu0 0.0
      %6911 = vmatprep.subr.mxu0 0.0
      %6912 = vmatpush1.msra.mxu0 0.0
      %6913 = vmatprep.subr.mxu0 0.0
      %6914 = vmatpush1.msra.mxu0 0.0
      %6915 = vmatprep.subr.mxu0 0.0
      %6916 = vmatpush1.msra.mxu0 0.0
      %6917 = vmatprep.subr.mxu0 0.0
      %6918 = vmatpush1.msra.mxu0 0.0
      %6919 = vmatprep.subr.mxu0 0.0
      %6920 = vmatpush1.msra.mxu0 0.0
      %6921 = vmatprep.subr.mxu0 0.0
      %6922 = vmatpush1.msra.mxu0 0.0
      %6923 = vmatprep.mubr.f32.mxu0 0.0
      %6924 = vmatmul.mubr.f32.gmra.mrb[0].mxu0 %v6854
      %v6925 = vpop.f32.mrb[0].mxu0
      %v6926 = vadd.f32 %v6852, %v6925
      %v6927 = vpop.f32.mrb[0].mxu0
      %6928 = vdwg.mxu0
      %vm6929 = vcmask 3072
      %6930 = vst.msk [vmem:[%s600] sm:$0xf] %vm6929, %v6926
      %p6931 = scmp.lt.s32.totalorder %s30, 1
      %s6932 = scalar_select %p6931, %s30, 1
      %s6933 = smul.addr %s6932, 4
      %s6934 = scalar_lea.vmem %s19, %s6933
      // Predicated region
      $region97: #{cnn_forward_pallas.1} parent=95 // pred_check
        %p6935 = pneg %p452
      $region98: #{cnn_forward_pallas.1} parent=95 // pred_check_branch
        %6937 = sbr.rel (%p6935) target = $region100
      $region99: #{cnn_forward_pallas.1} parent=95 // pred_region
        _
      $region100: #{cnn_forward_pallas.1} parent=95 // pred_fallthru
        _
    $region96: #{cnn_forward_pallas.1} parent=5 // pred_fallthru
      _
    %p6938 = scmp.le.s32.totalorder 2, %s25
    // Predicated region
    $region101: #{cnn_forward_pallas.1} parent=5 // pred_check
      %p6939 = pneg %p6938
    $region102: #{cnn_forward_pallas.1} parent=5 // pred_check_branch
      %6941 = sbr.rel (%p6939) target = $region104
    $region103: #{cnn_forward_pallas.1} parent=5 // pred_region
      %s6942 = ssub.s32 %s25, 2
      // Predicated region
      $region105: #{cnn_forward_pallas.1} parent=103 // pred_check
        %p6943 = pneg %p458
      $region106: #{cnn_forward_pallas.1} parent=103 // pred_check_branch
        %6945 = sbr.rel (%p6943) target = $region108
      $region107: #{cnn_forward_pallas.1} parent=103 // pred_region
        %p6946 = scmp.lt.s32.totalorder %s31, 1
        %s6947 = scalar_select %p6946, %s31, 1
        %s6948 = smul.addr %s6947, 4
        %s6949 = scalar_lea.vmem %s19, %s6948
      $region108: #{cnn_forward_pallas.1} parent=103 // pred_fallthru
        _
    $region104: #{cnn_forward_pallas.1} parent=5 // pred_fallthru
      _
  $region6: #{cnn_forward_pallas.1} parent=0 // loop_footer
    %s29 = sadd.s32 1, %s25
  $region7: #{cnn_forward_pallas.1} parent=0 // loop_footer_branch
    %24 = sbr.rel target = $region3
  $region8: #{cnn_forward_pallas.1} parent=0 // loop_exit
    _

</llo_original>
